<compile_context>
chip_gen: v7x
topology: tpu7x:2x2x1
jax: 0.10.0
libtpu: 0.0.40
codegen_flags: <defaults>
</compile_context>

<pallas_src>
import functools
import math

import jax
import jax.numpy as jnp
from jax import lax
from jax.experimental import pallas as pl
from jax.experimental.pallas import tpu as pltpu

_HIGH = lax.Precision.HIGHEST
_MLP_NAMES = ("mlp1", "mlp2", "mlp3", "mlp_out")


def _erf(x):
    # Abramowitz-Stegun 7.1.26 rational approximation (|err| < 1.5e-7), i.e.
    # float32-exact torch.nn.GELU() (erf form).  The single exp() goes to the
    # EUP slot; the small polynomial is VALU filler under MXU/DMA slack.
    a1, a2, a3, a4, a5 = (0.254829592, -0.284496736, 1.421413741,
                          -1.453152027, 1.061405429)
    p = 0.3275911
    sgn = jnp.where(x >= 0.0, 1.0, -1.0)
    ax = jnp.abs(x)
    t = 1.0 / (1.0 + p * ax)
    poly = ((((a5 * t + a4) * t + a3) * t + a2) * t + a1) * t
    return sgn * (1.0 - poly * jnp.exp(-ax * ax))


def _gelu(x):
    # exact (erf-form) GELU, matching torch.nn.GELU() default
    return 0.5 * x * (1.0 + _erf(x * (1.0 / math.sqrt(2.0))))


def _attention_kernel(num_heads, nb, seq, use_mask, *refs):
    if use_mask:
        (x_ref, mask_ref, wqkv_ref, bqkv_ref,
         w1_ref, b1_ref, w2_ref, b2_ref, w3_ref, b3_ref,
         w4_ref, b4_ref, o_ref) = refs
    else:
        (x_ref, wqkv_ref, bqkv_ref,
         w1_ref, b1_ref, w2_ref, b2_ref, w3_ref, b3_ref,
         w4_ref, b4_ref, o_ref) = refs
        mask_ref = None

    x2d = x_ref[...]                         # (nb*S, C) rows for this grid step
    S = seq
    C = x2d.shape[-1]
    hd = C // num_heads

    # Fused QKV projection: one (nb*S, C) @ (C, 3C) MXU pass; the attention
    # scale is already folded into the Q columns of wqkv/bqkv.
    qkv = (jnp.dot(x2d, wqkv_ref[...], precision=_HIGH,
                   preferred_element_type=jnp.float32) + bqkv_ref[...])   # (R, 3C)

    batch_rows = []
    for b in range(nb):                      # static, fully unrolled
        r0 = b * S
        if use_mask:
            # hoisted per batch element; reused by every head
            keep_f = jnp.broadcast_to(
                (mask_ref[b] > 0.5).astype(jnp.float32), (S, S))   # (S, S)
        head_outs = []
        for h in range(num_heads):           # static, fully unrolled
            q_h = qkv[r0:r0 + S, h * hd:(h + 1) * hd]          # scale pre-folded
            k_h = qkv[r0:r0 + S, C + h * hd:C + (h + 1) * hd]
            v_h = qkv[r0:r0 + S, 2 * C + h * hd:2 * C + (h + 1) * hd]
            # q @ k^T via contraction on the last dim of both (no XLU transpose)
            s = lax.dot_general(q_h, k_h,
                                dimension_numbers=(((1,), (1,)), ((), ())),
                                precision=_HIGH,
                                preferred_element_type=jnp.float32)   # (S, S)
            if use_mask:
                # finite-mask softmax == masked_fill(-inf).softmax() + NaN->0:
                # mask BEFORE the row max so masked scores cannot underflow the
                # kept entries; fully-masked rows -> denom 0 -> output 0.
                s_m = jnp.where(keep_f > 0.0, s, jnp.float32(-3.4e38))
                m = jnp.max(s_m, axis=-1, keepdims=True)
                e = jnp.exp(s_m - m) * keep_f
                denom = jnp.sum(e, axis=-1, keepdims=True)
                s = e / jnp.maximum(denom, jnp.float32(1e-30))
            # mask is None -> the PyTorch code applies NO softmax: raw scores @ v
            head_outs.append(jnp.dot(s, v_h, precision=_HIGH,
                                     preferred_element_type=jnp.float32))
        batch_rows.append(jnp.concatenate(head_outs, axis=-1))   # (S, C) in vregs
    attn_out = (batch_rows[0] if nb == 1
                else jnp.concatenate(batch_rows, axis=0))         # (nb*S, C)

    # MLP (layer_dims all == C for mlp_ratio=1): 3 x (Linear + GELU) + fc_out,
    # internal residual; dropout rate is 0 -> identity.
    h1 = _gelu(jnp.dot(attn_out, w1_ref[...], precision=_HIGH,
                       preferred_element_type=jnp.float32) + b1_ref[...])
    h2 = _gelu(jnp.dot(h1, w2_ref[...], precision=_HIGH,
                       preferred_element_type=jnp.float32) + b2_ref[...])
    h3 = _gelu(jnp.dot(h2, w3_ref[...], precision=_HIGH,
                       preferred_element_type=jnp.float32) + b3_ref[...])
    y = jnp.dot(h3, w4_ref[...], precision=_HIGH,
                preferred_element_type=jnp.float32) + b4_ref[...]
    mlp_out = y + attn_out                   # MLP's own residual connection

    # outer residual: x_out = attn_out + mlp(attn_out)   (attn_out appears twice,
    # exactly as in the PyTorch module; the block input x is NOT in any residual)
    o_ref[...] = (attn_out + mlp_out).astype(o_ref.dtype)


def _make_linear_params(key, in_dim, out_dim):
    kw, kb = jax.random.split(key)
    w = jax.random.normal(kw, (in_dim, out_dim), jnp.float32) * 0.02  # = W^T of nn.Linear
    b = jax.random.normal(kb, (1, out_dim), jnp.float32) * 0.01
    return w, b


def init_attention_params(key, dim):
    names = ("q", "k", "v") + _MLP_NAMES
    keys = jax.random.split(key, len(names))
    return {n: _make_linear_params(k, dim, dim) for n, k in zip(names, keys)}


def init_export_params(key, dim):
    kl, kt, kv = jax.random.split(key, 3)
    return {"l": init_attention_params(kl, dim),
            "t": init_attention_params(kt, dim),
            "v": init_attention_params(kv, dim)}


def _tensorcores_per_chip():
    # v7x has 2 TensorCores per chip; v5e/v6e have 1.  Heuristic only — a wrong
    # guess changes performance, never correctness.
    try:
        kind = jax.devices()[0].device_kind.lower()
    except Exception:
        return 1
    return 2 if ("v7" in kind or "7x" in kind) else 1


def attention_forward(params, x, num_heads, mask_keep=None, fuse_batch=None):
    B, S, C = x.shape
    hd = C // num_heads
    scale = hd ** (-0.5)
    use_mask = mask_keep is not None

    if fuse_batch is None:
        # single-TC chips: one grid step over all batch rows (avoids per-step
        # pipeline overhead); v7x keeps grid=(B,) so both cores do work.
        fuse_batch = (_tensorcores_per_chip() < 2) or (B == 1)

    nb = B if fuse_batch else 1
    grid = (1,) if fuse_batch else (B,)

    # Fuse q|k|v into one (C, 3C) weight and one (1, 3C) bias; fold the
    # attention scale into the Q columns so the kernel never multiplies by it.
    wq, bq = params["q"]
    wk, bk = params["k"]
    wv, bv = params["v"]
    wqkv = jnp.concatenate([wq * scale, wk, wv], axis=1)    # (C, 3C)
    bqkv = jnp.concatenate([bq * scale, bk, bv], axis=1)    # (1, 3C)

    x2d = x.reshape(B * S, C)                               # rows = batch*seq

    full2d = lambda b: (0, 0)
    row_map = (lambda b: (0, 0)) if fuse_batch else (lambda b: (b, 0))

    in_specs = [pl.BlockSpec((nb * S, C), row_map)]         # x rows for this step
    args = [x2d]
    if use_mask:
        mask3 = mask_keep.astype(jnp.float32).reshape(B, 1, S)
        mask_map = (lambda b: (0, 0, 0)) if fuse_batch else (lambda b: (b, 0, 0))
        in_specs.append(pl.BlockSpec((nb, 1, S), mask_map))  # keep-mask
        args.append(mask3)
    in_specs += [pl.BlockSpec((C, 3 * C), full2d),           # fused QKV weight
                 pl.BlockSpec((1, 3 * C), full2d)]           # fused QKV bias
    args += [wqkv, bqkv]
    for n in _MLP_NAMES:
        w, b = params[n]
        in_specs.append(pl.BlockSpec((C, C), full2d))        # weight (pre-transposed)
        in_specs.append(pl.BlockSpec((1, C), full2d))        # bias
        args.extend([w, b])

    kernel = functools.partial(_attention_kernel, num_heads, nb, S, use_mask)

    out2d = pl.pallas_call(
        kernel,
        out_shape=jax.ShapeDtypeStruct((B * S, C), x.dtype),
        grid_spec=pltpu.PrefetchScalarGridSpec(
            num_scalar_prefetch=0,
            grid=grid,
            in_specs=in_specs,
            out_specs=pl.BlockSpec((nb * S, C), row_map),
        ),
        compiler_params=pltpu.CompilerParams(
            dimension_semantics=("arbitrary",) if fuse_batch else ("parallel",)),
    )(*args)
    return out2d.reshape(B, S, C)


def export_forward(params, x, cross_modality, num_heads, mask_modality=None, mask=None):
    """Mirrors export.forward: picks one of three Attention blocks."""
    B, S, C = x.shape
    branch = params[cross_modality]
    mask_keep = None
    if mask is not None:
        m = mask.astype(bool)
        sel = {"a": m[:, :S],
               "t": m[:, S:2 * S],
               "v": m[:, 2 * S:3 * S]}[mask_modality]
        mask_keep = sel
    return attention_forward(branch, x, num_heads, mask_keep)


if __name__ == "__main__":
    B, S, C, H = 2, 8, 32, 4            # batch, seq, dim, num_heads (head_dim=8)
    key = jax.random.PRNGKey(0)
    kp, kx, km = jax.random.split(key, 3)

    params = init_export_params(kp, C)
    x = jax.random.normal(kx, (B, S, C), jnp.float32)
    mask = (jax.random.uniform(km, (B, 3 * S)) > 0.3).astype(jnp.int32)

    # masked-softmax path (mask given), branch 'l', modality 'a'
    out_masked = export_forward(params, x, "l", H, mask_modality="a", mask=mask)
    # mask=None path (PyTorch applies NO softmax in this case), branch 't'
    out_nomask = export_forward(params, x, "t", H)

    jax.block_until_ready((out_masked, out_nomask))
    assert out_masked.shape == (B, S, C) and out_nomask.shape == (B, S, C)
    assert out_masked.dtype == jnp.float32
    assert bool(jnp.all(jnp.isfinite(out_masked))) and bool(jnp.all(jnp.isfinite(out_nomask)))
    print("KERNEL_OK")
</pallas_src>

<mosaic_0001>
module attributes {stable_mosaic.version = 11 : i64} {
  func.func @_attention_kernel(%arg0: i32, %arg1: memref<16x32xf32, #tpu.memory_space<vmem>>, %arg2: memref<2x1x8xf32, #tpu.memory_space<vmem>>, %arg3: memref<32x96xf32, #tpu.memory_space<vmem>>, %arg4: memref<1x96xf32, #tpu.memory_space<vmem>>, %arg5: memref<32x32xf32, #tpu.memory_space<vmem>>, %arg6: memref<1x32xf32, #tpu.memory_space<vmem>>, %arg7: memref<32x32xf32, #tpu.memory_space<vmem>>, %arg8: memref<1x32xf32, #tpu.memory_space<vmem>>, %arg9: memref<32x32xf32, #tpu.memory_space<vmem>>, %arg10: memref<1x32xf32, #tpu.memory_space<vmem>>, %arg11: memref<32x32xf32, #tpu.memory_space<vmem>>, %arg12: memref<1x32xf32, #tpu.memory_space<vmem>>, %arg13: memref<16x32xf32, #tpu.memory_space<vmem>>) attributes {dimension_semantics = [#tpu.dimension_semantics<arbitrary>], iteration_bounds = array<i64: 1>, scalar_prefetch = 0 : i64, scratch_operands = 0 : i64, tpu.core_type = #tpu.core_type<tc>, window_params = [{pipeline_mode = #tpu.pipeline_mode<synchronous>, transform_indices = @transform_0, window_bounds = array<i64: 16, 32>}, {pipeline_mode = #tpu.pipeline_mode<synchronous>, transform_indices = @transform_1, window_bounds = array<i64: 2, 1, 8>}, {pipeline_mode = #tpu.pipeline_mode<synchronous>, transform_indices = @transform_2, window_bounds = array<i64: 32, 96>}, {pipeline_mode = #tpu.pipeline_mode<synchronous>, transform_indices = @transform_3, window_bounds = array<i64: 1, 96>}, {pipeline_mode = #tpu.pipeline_mode<synchronous>, transform_indices = @transform_4, window_bounds = array<i64: 32, 32>}, {pipeline_mode = #tpu.pipeline_mode<synchronous>, transform_indices = @transform_5, window_bounds = array<i64: 1, 32>}, {pipeline_mode = #tpu.pipeline_mode<synchronous>, transform_indices = @transform_6, window_bounds = array<i64: 32, 32>}, {pipeline_mode = #tpu.pipeline_mode<synchronous>, transform_indices = @transform_7, window_bounds = array<i64: 1, 32>}, {pipeline_mode = #tpu.pipeline_mode<synchronous>, transform_indices = @transform_8, window_bounds = array<i64: 32, 32>}, {pipeline_mode = #tpu.pipeline_mode<synchronous>, transform_indices = @transform_9, window_bounds = array<i64: 1, 32>}, {pipeline_mode = #tpu.pipeline_mode<synchronous>, transform_indices = @transform_10, window_bounds = array<i64: 32, 32>}, {pipeline_mode = #tpu.pipeline_mode<synchronous>, transform_indices = @transform_11, window_bounds = array<i64: 1, 32>}, {pipeline_mode = #tpu.pipeline_mode<synchronous>, transform_indices = @transform_12, window_bounds = array<i64: 16, 32>}]} {
    %c0 = arith.constant 0 : index
    %c0_0 = arith.constant 0 : index
    %0 = vector.load %arg1[%c0, %c0_0] : memref<16x32xf32, #tpu.memory_space<vmem>>, vector<16x32xf32>
    %c0_1 = arith.constant 0 : index
    %c0_2 = arith.constant 0 : index
    %1 = vector.load %arg3[%c0_1, %c0_2] : memref<32x96xf32, #tpu.memory_space<vmem>>, vector<32x96xf32>
    %cst = arith.constant dense<0.000000e+00> : vector<16x96xf32>
    %2 = tpu.matmul %0, %1, %cst {dimension_numbers = #tpu.dot_dimension_numbers<[1], [0], [0], [1], [0, 0, 1, 1], [], []>, precision = #tpu.contract_precision<fp32>} : vector<16x32xf32>, vector<32x96xf32>, vector<16x96xf32> -> vector<16x96xf32>
    %c0_3 = arith.constant 0 : index
    %c0_4 = arith.constant 0 : index
    %3 = vector.load %arg4[%c0_3, %c0_4] : memref<1x96xf32, #tpu.memory_space<vmem>>, vector<1x96xf32>
    %4 = vector.broadcast %3 : vector<1x96xf32> to vector<16x96xf32>
    %5 = arith.addf %2, %4 : vector<16x96xf32>
    %c0_5 = arith.constant 0 : index
    %c0_6 = arith.constant 0 : index
    %c0_7 = arith.constant 0 : index
    %6 = vector.load %arg2[%c0_5, %c0_6, %c0_7] : memref<2x1x8xf32, #tpu.memory_space<vmem>>, vector<1x1x8xf32>
    %7 = vector.shape_cast %6 : vector<1x1x8xf32> to vector<1x8xf32>
    %cst_8 = arith.constant 5.000000e-01 : f32
    %8 = vector.broadcast %cst_8 : f32 to vector<1x8xf32>
    %9 = arith.cmpf ogt, %7, %8 : vector<1x8xf32>
    %10 = arith.extui %9 : vector<1x8xi1> to vector<1x8xi32>
    %11 = arith.sitofp %10 : vector<1x8xi32> to vector<1x8xf32>
    %12 = vector.shape_cast %11 : vector<1x8xf32> to vector<1x8xf32>
    %13 = vector.broadcast %12 : vector<1x8xf32> to vector<8x8xf32>
    %14 = vector.extract_strided_slice %5 {offsets = [0, 0], sizes = [8, 8], strides = [1, 1]} : vector<16x96xf32> to vector<8x8xf32>
    %15 = vector.extract_strided_slice %5 {offsets = [0, 32], sizes = [8, 8], strides = [1, 1]} : vector<16x96xf32> to vector<8x8xf32>
    %16 = vector.extract_strided_slice %5 {offsets = [0, 64], sizes = [8, 8], strides = [1, 1]} : vector<16x96xf32> to vector<8x8xf32>
    %cst_9 = arith.constant dense<0.000000e+00> : vector<8x8xf32>
    %17 = tpu.matmul %14, %15, %cst_9 {dimension_numbers = #tpu.dot_dimension_numbers<[1], [1], [0], [0], [0, 0, 1, 0], [], []>, precision = #tpu.contract_precision<fp32>} : vector<8x8xf32>, vector<8x8xf32>, vector<8x8xf32> -> vector<8x8xf32>
    %cst_10 = arith.constant 0.000000e+00 : f32
    %18 = vector.broadcast %cst_10 : f32 to vector<8x8xf32>
    %19 = arith.cmpf ogt, %13, %18 : vector<8x8xf32>
    %cst_11 = arith.constant -3.400000e+38 : f32
    %20 = vector.broadcast %cst_11 : f32 to vector<8x8xf32>
    %21 = arith.select %19, %17, %20 : vector<8x8xi1>, vector<8x8xf32>
    %cst_12 = arith.constant dense<0xFF800000> : vector<8xf32>
    %22 = vector.multi_reduction <maximumf>, %21, %cst_12 [1] : vector<8x8xf32> to vector<8xf32>
    %23 = vector.shape_cast %22 : vector<8xf32> to vector<8x1xf32>
    %24 = vector.broadcast %23 : vector<8x1xf32> to vector<8x8xf32>
    %25 = arith.subf %21, %24 : vector<8x8xf32>
    %26 = math.exp %25 : vector<8x8xf32>
    %27 = arith.mulf %26, %13 : vector<8x8xf32>
    %cst_13 = arith.constant dense<0.000000e+00> : vector<8xf32>
    %28 = vector.multi_reduction <add>, %27, %cst_13 [1] : vector<8x8xf32> to vector<8xf32>
    %29 = vector.shape_cast %28 : vector<8xf32> to vector<8x1xf32>
    %cst_14 = arith.constant 1.000000e-30 : f32
    %30 = vector.broadcast %cst_14 : f32 to vector<8x1xf32>
    %31 = arith.maximumf %29, %30 : vector<8x1xf32>
    %32 = vector.broadcast %31 : vector<8x1xf32> to vector<8x8xf32>
    %33 = arith.divf %27, %32 : vector<8x8xf32>
    %cst_15 = arith.constant dense<0.000000e+00> : vector<8x8xf32>
    %34 = tpu.matmul %33, %16, %cst_15 {dimension_numbers = #tpu.dot_dimension_numbers<[1], [0], [0], [1], [0, 0, 1, 1], [], []>, precision = #tpu.contract_precision<fp32>} : vector<8x8xf32>, vector<8x8xf32>, vector<8x8xf32> -> vector<8x8xf32>
    %35 = vector.extract_strided_slice %5 {offsets = [0, 8], sizes = [8, 8], strides = [1, 1]} : vector<16x96xf32> to vector<8x8xf32>
    %36 = vector.extract_strided_slice %5 {offsets = [0, 40], sizes = [8, 8], strides = [1, 1]} : vector<16x96xf32> to vector<8x8xf32>
    %37 = vector.extract_strided_slice %5 {offsets = [0, 72], sizes = [8, 8], strides = [1, 1]} : vector<16x96xf32> to vector<8x8xf32>
    %cst_16 = arith.constant dense<0.000000e+00> : vector<8x8xf32>
    %38 = tpu.matmul %35, %36, %cst_16 {dimension_numbers = #tpu.dot_dimension_numbers<[1], [1], [0], [0], [0, 0, 1, 0], [], []>, precision = #tpu.contract_precision<fp32>} : vector<8x8xf32>, vector<8x8xf32>, vector<8x8xf32> -> vector<8x8xf32>
    %cst_17 = arith.constant 0.000000e+00 : f32
    %39 = vector.broadcast %cst_17 : f32 to vector<8x8xf32>
    %40 = arith.cmpf ogt, %13, %39 : vector<8x8xf32>
    %cst_18 = arith.constant -3.400000e+38 : f32
    %41 = vector.broadcast %cst_18 : f32 to vector<8x8xf32>
    %42 = arith.select %40, %38, %41 : vector<8x8xi1>, vector<8x8xf32>
    %cst_19 = arith.constant dense<0xFF800000> : vector<8xf32>
    %43 = vector.multi_reduction <maximumf>, %42, %cst_19 [1] : vector<8x8xf32> to vector<8xf32>
    %44 = vector.shape_cast %43 : vector<8xf32> to vector<8x1xf32>
    %45 = vector.broadcast %44 : vector<8x1xf32> to vector<8x8xf32>
    %46 = arith.subf %42, %45 : vector<8x8xf32>
    %47 = math.exp %46 : vector<8x8xf32>
    %48 = arith.mulf %47, %13 : vector<8x8xf32>
    %cst_20 = arith.constant dense<0.000000e+00> : vector<8xf32>
    %49 = vector.multi_reduction <add>, %48, %cst_20 [1] : vector<8x8xf32> to vector<8xf32>
    %50 = vector.shape_cast %49 : vector<8xf32> to vector<8x1xf32>
    %cst_21 = arith.constant 1.000000e-30 : f32
    %51 = vector.broadcast %cst_21 : f32 to vector<8x1xf32>
    %52 = arith.maximumf %50, %51 : vector<8x1xf32>
    %53 = vector.broadcast %52 : vector<8x1xf32> to vector<8x8xf32>
    %54 = arith.divf %48, %53 : vector<8x8xf32>
    %cst_22 = arith.constant dense<0.000000e+00> : vector<8x8xf32>
    %55 = tpu.matmul %54, %37, %cst_22 {dimension_numbers = #tpu.dot_dimension_numbers<[1], [0], [0], [1], [0, 0, 1, 1], [], []>, precision = #tpu.contract_precision<fp32>} : vector<8x8xf32>, vector<8x8xf32>, vector<8x8xf32> -> vector<8x8xf32>
    %56 = vector.extract_strided_slice %5 {offsets = [0, 16], sizes = [8, 8], strides = [1, 1]} : vector<16x96xf32> to vector<8x8xf32>
    %57 = vector.extract_strided_slice %5 {offsets = [0, 48], sizes = [8, 8], strides = [1, 1]} : vector<16x96xf32> to vector<8x8xf32>
    %58 = vector.extract_strided_slice %5 {offsets = [0, 80], sizes = [8, 8], strides = [1, 1]} : vector<16x96xf32> to vector<8x8xf32>
    %cst_23 = arith.constant dense<0.000000e+00> : vector<8x8xf32>
    %59 = tpu.matmul %56, %57, %cst_23 {dimension_numbers = #tpu.dot_dimension_numbers<[1], [1], [0], [0], [0, 0, 1, 0], [], []>, precision = #tpu.contract_precision<fp32>} : vector<8x8xf32>, vector<8x8xf32>, vector<8x8xf32> -> vector<8x8xf32>
    %cst_24 = arith.constant 0.000000e+00 : f32
    %60 = vector.broadcast %cst_24 : f32 to vector<8x8xf32>
    %61 = arith.cmpf ogt, %13, %60 : vector<8x8xf32>
    %cst_25 = arith.constant -3.400000e+38 : f32
    %62 = vector.broadcast %cst_25 : f32 to vector<8x8xf32>
    %63 = arith.select %61, %59, %62 : vector<8x8xi1>, vector<8x8xf32>
    %cst_26 = arith.constant dense<0xFF800000> : vector<8xf32>
    %64 = vector.multi_reduction <maximumf>, %63, %cst_26 [1] : vector<8x8xf32> to vector<8xf32>
    %65 = vector.shape_cast %64 : vector<8xf32> to vector<8x1xf32>
    %66 = vector.broadcast %65 : vector<8x1xf32> to vector<8x8xf32>
    %67 = arith.subf %63, %66 : vector<8x8xf32>
    %68 = math.exp %67 : vector<8x8xf32>
    %69 = arith.mulf %68, %13 : vector<8x8xf32>
    %cst_27 = arith.constant dense<0.000000e+00> : vector<8xf32>
    %70 = vector.multi_reduction <add>, %69, %cst_27 [1] : vector<8x8xf32> to vector<8xf32>
    %71 = vector.shape_cast %70 : vector<8xf32> to vector<8x1xf32>
    %cst_28 = arith.constant 1.000000e-30 : f32
    %72 = vector.broadcast %cst_28 : f32 to vector<8x1xf32>
    %73 = arith.maximumf %71, %72 : vector<8x1xf32>
    %74 = vector.broadcast %73 : vector<8x1xf32> to vector<8x8xf32>
    %75 = arith.divf %69, %74 : vector<8x8xf32>
    %cst_29 = arith.constant dense<0.000000e+00> : vector<8x8xf32>
    %76 = tpu.matmul %75, %58, %cst_29 {dimension_numbers = #tpu.dot_dimension_numbers<[1], [0], [0], [1], [0, 0, 1, 1], [], []>, precision = #tpu.contract_precision<fp32>} : vector<8x8xf32>, vector<8x8xf32>, vector<8x8xf32> -> vector<8x8xf32>
    %77 = vector.extract_strided_slice %5 {offsets = [0, 24], sizes = [8, 8], strides = [1, 1]} : vector<16x96xf32> to vector<8x8xf32>
    %78 = vector.extract_strided_slice %5 {offsets = [0, 56], sizes = [8, 8], strides = [1, 1]} : vector<16x96xf32> to vector<8x8xf32>
    %79 = vector.extract_strided_slice %5 {offsets = [0, 88], sizes = [8, 8], strides = [1, 1]} : vector<16x96xf32> to vector<8x8xf32>
    %cst_30 = arith.constant dense<0.000000e+00> : vector<8x8xf32>
    %80 = tpu.matmul %77, %78, %cst_30 {dimension_numbers = #tpu.dot_dimension_numbers<[1], [1], [0], [0], [0, 0, 1, 0], [], []>, precision = #tpu.contract_precision<fp32>} : vector<8x8xf32>, vector<8x8xf32>, vector<8x8xf32> -> vector<8x8xf32>
    %cst_31 = arith.constant 0.000000e+00 : f32
    %81 = vector.broadcast %cst_31 : f32 to vector<8x8xf32>
    %82 = arith.cmpf ogt, %13, %81 : vector<8x8xf32>
    %cst_32 = arith.constant -3.400000e+38 : f32
    %83 = vector.broadcast %cst_32 : f32 to vector<8x8xf32>
    %84 = arith.select %82, %80, %83 : vector<8x8xi1>, vector<8x8xf32>
    %cst_33 = arith.constant dense<0xFF800000> : vector<8xf32>
    %85 = vector.multi_reduction <maximumf>, %84, %cst_33 [1] : vector<8x8xf32> to vector<8xf32>
    %86 = vector.shape_cast %85 : vector<8xf32> to vector<8x1xf32>
    %87 = vector.broadcast %86 : vector<8x1xf32> to vector<8x8xf32>
    %88 = arith.subf %84, %87 : vector<8x8xf32>
    %89 = math.exp %88 : vector<8x8xf32>
    %90 = arith.mulf %89, %13 : vector<8x8xf32>
    %cst_34 = arith.constant dense<0.000000e+00> : vector<8xf32>
    %91 = vector.multi_reduction <add>, %90, %cst_34 [1] : vector<8x8xf32> to vector<8xf32>
    %92 = vector.shape_cast %91 : vector<8xf32> to vector<8x1xf32>
    %cst_35 = arith.constant 1.000000e-30 : f32
    %93 = vector.broadcast %cst_35 : f32 to vector<8x1xf32>
    %94 = arith.maximumf %92, %93 : vector<8x1xf32>
    %95 = vector.broadcast %94 : vector<8x1xf32> to vector<8x8xf32>
    %96 = arith.divf %90, %95 : vector<8x8xf32>
    %cst_36 = arith.constant dense<0.000000e+00> : vector<8x8xf32>
    %97 = tpu.matmul %96, %79, %cst_36 {dimension_numbers = #tpu.dot_dimension_numbers<[1], [0], [0], [1], [0, 0, 1, 1], [], []>, precision = #tpu.contract_precision<fp32>} : vector<8x8xf32>, vector<8x8xf32>, vector<8x8xf32> -> vector<8x8xf32>
    %98 = tpu.concatenate %34, %55, %76, %97 in 1 : vector<8x8xf32>, vector<8x8xf32>, vector<8x8xf32>, vector<8x8xf32> -> vector<8x32xf32>
    %c1 = arith.constant 1 : index
    %c0_37 = arith.constant 0 : index
    %c0_38 = arith.constant 0 : index
    %99 = vector.load %arg2[%c1, %c0_37, %c0_38] : memref<2x1x8xf32, #tpu.memory_space<vmem>>, vector<1x1x8xf32>
    %100 = vector.shape_cast %99 : vector<1x1x8xf32> to vector<1x8xf32>
    %cst_39 = arith.constant 5.000000e-01 : f32
    %101 = vector.broadcast %cst_39 : f32 to vector<1x8xf32>
    %102 = arith.cmpf ogt, %100, %101 : vector<1x8xf32>
    %103 = arith.extui %102 : vector<1x8xi1> to vector<1x8xi32>
    %104 = arith.sitofp %103 : vector<1x8xi32> to vector<1x8xf32>
    %105 = vector.shape_cast %104 : vector<1x8xf32> to vector<1x8xf32>
    %106 = vector.broadcast %105 : vector<1x8xf32> to vector<8x8xf32>
    %107 = vector.extract_strided_slice %5 {offsets = [8, 0], sizes = [8, 8], strides = [1, 1]} : vector<16x96xf32> to vector<8x8xf32>
    %108 = vector.extract_strided_slice %5 {offsets = [8, 32], sizes = [8, 8], strides = [1, 1]} : vector<16x96xf32> to vector<8x8xf32>
    %109 = vector.extract_strided_slice %5 {offsets = [8, 64], sizes = [8, 8], strides = [1, 1]} : vector<16x96xf32> to vector<8x8xf32>
    %cst_40 = arith.constant dense<0.000000e+00> : vector<8x8xf32>
    %110 = tpu.matmul %107, %108, %cst_40 {dimension_numbers = #tpu.dot_dimension_numbers<[1], [1], [0], [0], [0, 0, 1, 0], [], []>, precision = #tpu.contract_precision<fp32>} : vector<8x8xf32>, vector<8x8xf32>, vector<8x8xf32> -> vector<8x8xf32>
    %cst_41 = arith.constant 0.000000e+00 : f32
    %111 = vector.broadcast %cst_41 : f32 to vector<8x8xf32>
    %112 = arith.cmpf ogt, %106, %111 : vector<8x8xf32>
    %cst_42 = arith.constant -3.400000e+38 : f32
    %113 = vector.broadcast %cst_42 : f32 to vector<8x8xf32>
    %114 = arith.select %112, %110, %113 : vector<8x8xi1>, vector<8x8xf32>
    %cst_43 = arith.constant dense<0xFF800000> : vector<8xf32>
    %115 = vector.multi_reduction <maximumf>, %114, %cst_43 [1] : vector<8x8xf32> to vector<8xf32>
    %116 = vector.shape_cast %115 : vector<8xf32> to vector<8x1xf32>
    %117 = vector.broadcast %116 : vector<8x1xf32> to vector<8x8xf32>
    %118 = arith.subf %114, %117 : vector<8x8xf32>
    %119 = math.exp %118 : vector<8x8xf32>
    %120 = arith.mulf %119, %106 : vector<8x8xf32>
    %cst_44 = arith.constant dense<0.000000e+00> : vector<8xf32>
    %121 = vector.multi_reduction <add>, %120, %cst_44 [1] : vector<8x8xf32> to vector<8xf32>
    %122 = vector.shape_cast %121 : vector<8xf32> to vector<8x1xf32>
    %cst_45 = arith.constant 1.000000e-30 : f32
    %123 = vector.broadcast %cst_45 : f32 to vector<8x1xf32>
    %124 = arith.maximumf %122, %123 : vector<8x1xf32>
    %125 = vector.broadcast %124 : vector<8x1xf32> to vector<8x8xf32>
    %126 = arith.divf %120, %125 : vector<8x8xf32>
    %cst_46 = arith.constant dense<0.000000e+00> : vector<8x8xf32>
    %127 = tpu.matmul %126, %109, %cst_46 {dimension_numbers = #tpu.dot_dimension_numbers<[1], [0], [0], [1], [0, 0, 1, 1], [], []>, precision = #tpu.contract_precision<fp32>} : vector<8x8xf32>, vector<8x8xf32>, vector<8x8xf32> -> vector<8x8xf32>
    %128 = vector.extract_strided_slice %5 {offsets = [8, 8], sizes = [8, 8], strides = [1, 1]} : vector<16x96xf32> to vector<8x8xf32>
    %129 = vector.extract_strided_slice %5 {offsets = [8, 40], sizes = [8, 8], strides = [1, 1]} : vector<16x96xf32> to vector<8x8xf32>
    %130 = vector.extract_strided_slice %5 {offsets = [8, 72], sizes = [8, 8], strides = [1, 1]} : vector<16x96xf32> to vector<8x8xf32>
    %cst_47 = arith.constant dense<0.000000e+00> : vector<8x8xf32>
    %131 = tpu.matmul %128, %129, %cst_47 {dimension_numbers = #tpu.dot_dimension_numbers<[1], [1], [0], [0], [0, 0, 1, 0], [], []>, precision = #tpu.contract_precision<fp32>} : vector<8x8xf32>, vector<8x8xf32>, vector<8x8xf32> -> vector<8x8xf32>
    %cst_48 = arith.constant 0.000000e+00 : f32
    %132 = vector.broadcast %cst_48 : f32 to vector<8x8xf32>
    %133 = arith.cmpf ogt, %106, %132 : vector<8x8xf32>
    %cst_49 = arith.constant -3.400000e+38 : f32
    %134 = vector.broadcast %cst_49 : f32 to vector<8x8xf32>
    %135 = arith.select %133, %131, %134 : vector<8x8xi1>, vector<8x8xf32>
    %cst_50 = arith.constant dense<0xFF800000> : vector<8xf32>
    %136 = vector.multi_reduction <maximumf>, %135, %cst_50 [1] : vector<8x8xf32> to vector<8xf32>
    %137 = vector.shape_cast %136 : vector<8xf32> to vector<8x1xf32>
    %138 = vector.broadcast %137 : vector<8x1xf32> to vector<8x8xf32>
    %139 = arith.subf %135, %138 : vector<8x8xf32>
    %140 = math.exp %139 : vector<8x8xf32>
    %141 = arith.mulf %140, %106 : vector<8x8xf32>
    %cst_51 = arith.constant dense<0.000000e+00> : vector<8xf32>
    %142 = vector.multi_reduction <add>, %141, %cst_51 [1] : vector<8x8xf32> to vector<8xf32>
    %143 = vector.shape_cast %142 : vector<8xf32> to vector<8x1xf32>
    %cst_52 = arith.constant 1.000000e-30 : f32
    %144 = vector.broadcast %cst_52 : f32 to vector<8x1xf32>
    %145 = arith.maximumf %143, %144 : vector<8x1xf32>
    %146 = vector.broadcast %145 : vector<8x1xf32> to vector<8x8xf32>
    %147 = arith.divf %141, %146 : vector<8x8xf32>
    %cst_53 = arith.constant dense<0.000000e+00> : vector<8x8xf32>
    %148 = tpu.matmul %147, %130, %cst_53 {dimension_numbers = #tpu.dot_dimension_numbers<[1], [0], [0], [1], [0, 0, 1, 1], [], []>, precision = #tpu.contract_precision<fp32>} : vector<8x8xf32>, vector<8x8xf32>, vector<8x8xf32> -> vector<8x8xf32>
    %149 = vector.extract_strided_slice %5 {offsets = [8, 16], sizes = [8, 8], strides = [1, 1]} : vector<16x96xf32> to vector<8x8xf32>
    %150 = vector.extract_strided_slice %5 {offsets = [8, 48], sizes = [8, 8], strides = [1, 1]} : vector<16x96xf32> to vector<8x8xf32>
    %151 = vector.extract_strided_slice %5 {offsets = [8, 80], sizes = [8, 8], strides = [1, 1]} : vector<16x96xf32> to vector<8x8xf32>
    %cst_54 = arith.constant dense<0.000000e+00> : vector<8x8xf32>
    %152 = tpu.matmul %149, %150, %cst_54 {dimension_numbers = #tpu.dot_dimension_numbers<[1], [1], [0], [0], [0, 0, 1, 0], [], []>, precision = #tpu.contract_precision<fp32>} : vector<8x8xf32>, vector<8x8xf32>, vector<8x8xf32> -> vector<8x8xf32>
    %cst_55 = arith.constant 0.000000e+00 : f32
    %153 = vector.broadcast %cst_55 : f32 to vector<8x8xf32>
    %154 = arith.cmpf ogt, %106, %153 : vector<8x8xf32>
    %cst_56 = arith.constant -3.400000e+38 : f32
    %155 = vector.broadcast %cst_56 : f32 to vector<8x8xf32>
    %156 = arith.select %154, %152, %155 : vector<8x8xi1>, vector<8x8xf32>
    %cst_57 = arith.constant dense<0xFF800000> : vector<8xf32>
    %157 = vector.multi_reduction <maximumf>, %156, %cst_57 [1] : vector<8x8xf32> to vector<8xf32>
    %158 = vector.shape_cast %157 : vector<8xf32> to vector<8x1xf32>
    %159 = vector.broadcast %158 : vector<8x1xf32> to vector<8x8xf32>
    %160 = arith.subf %156, %159 : vector<8x8xf32>
    %161 = math.exp %160 : vector<8x8xf32>
    %162 = arith.mulf %161, %106 : vector<8x8xf32>
    %cst_58 = arith.constant dense<0.000000e+00> : vector<8xf32>
    %163 = vector.multi_reduction <add>, %162, %cst_58 [1] : vector<8x8xf32> to vector<8xf32>
    %164 = vector.shape_cast %163 : vector<8xf32> to vector<8x1xf32>
    %cst_59 = arith.constant 1.000000e-30 : f32
    %165 = vector.broadcast %cst_59 : f32 to vector<8x1xf32>
    %166 = arith.maximumf %164, %165 : vector<8x1xf32>
    %167 = vector.broadcast %166 : vector<8x1xf32> to vector<8x8xf32>
    %168 = arith.divf %162, %167 : vector<8x8xf32>
    %cst_60 = arith.constant dense<0.000000e+00> : vector<8x8xf32>
    %169 = tpu.matmul %168, %151, %cst_60 {dimension_numbers = #tpu.dot_dimension_numbers<[1], [0], [0], [1], [0, 0, 1, 1], [], []>, precision = #tpu.contract_precision<fp32>} : vector<8x8xf32>, vector<8x8xf32>, vector<8x8xf32> -> vector<8x8xf32>
    %170 = vector.extract_strided_slice %5 {offsets = [8, 24], sizes = [8, 8], strides = [1, 1]} : vector<16x96xf32> to vector<8x8xf32>
    %171 = vector.extract_strided_slice %5 {offsets = [8, 56], sizes = [8, 8], strides = [1, 1]} : vector<16x96xf32> to vector<8x8xf32>
    %172 = vector.extract_strided_slice %5 {offsets = [8, 88], sizes = [8, 8], strides = [1, 1]} : vector<16x96xf32> to vector<8x8xf32>
    %cst_61 = arith.constant dense<0.000000e+00> : vector<8x8xf32>
    %173 = tpu.matmul %170, %171, %cst_61 {dimension_numbers = #tpu.dot_dimension_numbers<[1], [1], [0], [0], [0, 0, 1, 0], [], []>, precision = #tpu.contract_precision<fp32>} : vector<8x8xf32>, vector<8x8xf32>, vector<8x8xf32> -> vector<8x8xf32>
    %cst_62 = arith.constant 0.000000e+00 : f32
    %174 = vector.broadcast %cst_62 : f32 to vector<8x8xf32>
    %175 = arith.cmpf ogt, %106, %174 : vector<8x8xf32>
    %cst_63 = arith.constant -3.400000e+38 : f32
    %176 = vector.broadcast %cst_63 : f32 to vector<8x8xf32>
    %177 = arith.select %175, %173, %176 : vector<8x8xi1>, vector<8x8xf32>
    %cst_64 = arith.constant dense<0xFF800000> : vector<8xf32>
    %178 = vector.multi_reduction <maximumf>, %177, %cst_64 [1] : vector<8x8xf32> to vector<8xf32>
    %179 = vector.shape_cast %178 : vector<8xf32> to vector<8x1xf32>
    %180 = vector.broadcast %179 : vector<8x1xf32> to vector<8x8xf32>
    %181 = arith.subf %177, %180 : vector<8x8xf32>
    %182 = math.exp %181 : vector<8x8xf32>
    %183 = arith.mulf %182, %106 : vector<8x8xf32>
    %cst_65 = arith.constant dense<0.000000e+00> : vector<8xf32>
    %184 = vector.multi_reduction <add>, %183, %cst_65 [1] : vector<8x8xf32> to vector<8xf32>
    %185 = vector.shape_cast %184 : vector<8xf32> to vector<8x1xf32>
    %cst_66 = arith.constant 1.000000e-30 : f32
    %186 = vector.broadcast %cst_66 : f32 to vector<8x1xf32>
    %187 = arith.maximumf %185, %186 : vector<8x1xf32>
    %188 = vector.broadcast %187 : vector<8x1xf32> to vector<8x8xf32>
    %189 = arith.divf %183, %188 : vector<8x8xf32>
    %cst_67 = arith.constant dense<0.000000e+00> : vector<8x8xf32>
    %190 = tpu.matmul %189, %172, %cst_67 {dimension_numbers = #tpu.dot_dimension_numbers<[1], [0], [0], [1], [0, 0, 1, 1], [], []>, precision = #tpu.contract_precision<fp32>} : vector<8x8xf32>, vector<8x8xf32>, vector<8x8xf32> -> vector<8x8xf32>
    %191 = tpu.concatenate %127, %148, %169, %190 in 1 : vector<8x8xf32>, vector<8x8xf32>, vector<8x8xf32>, vector<8x8xf32> -> vector<8x32xf32>
    %192 = tpu.concatenate %98, %191 in 0 : vector<8x32xf32>, vector<8x32xf32> -> vector<16x32xf32>
    %c0_68 = arith.constant 0 : index
    %c0_69 = arith.constant 0 : index
    %193 = vector.load %arg5[%c0_68, %c0_69] : memref<32x32xf32, #tpu.memory_space<vmem>>, vector<32x32xf32>
    %cst_70 = arith.constant dense<0.000000e+00> : vector<16x32xf32>
    %194 = tpu.matmul %192, %193, %cst_70 {dimension_numbers = #tpu.dot_dimension_numbers<[1], [0], [0], [1], [0, 0, 1, 1], [], []>, precision = #tpu.contract_precision<fp32>} : vector<16x32xf32>, vector<32x32xf32>, vector<16x32xf32> -> vector<16x32xf32>
    %c0_71 = arith.constant 0 : index
    %c0_72 = arith.constant 0 : index
    %195 = vector.load %arg6[%c0_71, %c0_72] : memref<1x32xf32, #tpu.memory_space<vmem>>, vector<1x32xf32>
    %196 = vector.broadcast %195 : vector<1x32xf32> to vector<16x32xf32>
    %197 = arith.addf %194, %196 : vector<16x32xf32>
    %cst_73 = arith.constant 5.000000e-01 : f32
    %198 = vector.broadcast %cst_73 : f32 to vector<16x32xf32>
    %199 = arith.mulf %198, %197 : vector<16x32xf32>
    %cst_74 = arith.constant 0.707106769 : f32
    %200 = vector.broadcast %cst_74 : f32 to vector<16x32xf32>
    %201 = arith.mulf %197, %200 : vector<16x32xf32>
    %cst_75 = arith.constant 0.000000e+00 : f32
    %202 = vector.broadcast %cst_75 : f32 to vector<16x32xf32>
    %203 = arith.cmpf oge, %201, %202 : vector<16x32xf32>
    %cst_76 = arith.constant 1.000000e+00 : f32
    %cst_77 = arith.constant -1.000000e+00 : f32
    %204 = vector.broadcast %cst_76 : f32 to vector<16x32xf32>
    %205 = vector.broadcast %cst_77 : f32 to vector<16x32xf32>
    %206 = arith.select %203, %204, %205 : vector<16x32xi1>, vector<16x32xf32>
    %207 = math.absf %201 : vector<16x32xf32>
    %cst_78 = arith.constant 0.327591091 : f32
    %208 = vector.broadcast %cst_78 : f32 to vector<16x32xf32>
    %209 = arith.mulf %208, %207 : vector<16x32xf32>
    %cst_79 = arith.constant 1.000000e+00 : f32
    %210 = vector.broadcast %cst_79 : f32 to vector<16x32xf32>
    %211 = arith.addf %210, %209 : vector<16x32xf32>
    %cst_80 = arith.constant 1.000000e+00 : f32
    %212 = vector.broadcast %cst_80 : f32 to vector<16x32xf32>
    %213 = arith.divf %212, %211 : vector<16x32xf32>
    %cst_81 = arith.constant 1.06140542 : f32
    %214 = vector.broadcast %cst_81 : f32 to vector<16x32xf32>
    %215 = arith.mulf %214, %213 : vector<16x32xf32>
    %cst_82 = arith.constant -1.45315206 : f32
    %216 = vector.broadcast %cst_82 : f32 to vector<16x32xf32>
    %217 = arith.addf %215, %216 : vector<16x32xf32>
    %218 = arith.mulf %217, %213 : vector<16x32xf32>
    %cst_83 = arith.constant 1.42141378 : f32
    %219 = vector.broadcast %cst_83 : f32 to vector<16x32xf32>
    %220 = arith.addf %218, %219 : vector<16x32xf32>
    %221 = arith.mulf %220, %213 : vector<16x32xf32>
    %cst_84 = arith.constant -0.284496725 : f32
    %222 = vector.broadcast %cst_84 : f32 to vector<16x32xf32>
    %223 = arith.addf %221, %222 : vector<16x32xf32>
    %224 = arith.mulf %223, %213 : vector<16x32xf32>
    %cst_85 = arith.constant 0.254829586 : f32
    %225 = vector.broadcast %cst_85 : f32 to vector<16x32xf32>
    %226 = arith.addf %224, %225 : vector<16x32xf32>
    %227 = arith.mulf %226, %213 : vector<16x32xf32>
    %cst_86 = arith.constant 0.000000e+00 : f32
    %228 = vector.broadcast %cst_86 : f32 to vector<16x32xf32>
    %229 = arith.subf %228, %207 : vector<16x32xf32>
    %230 = arith.mulf %229, %207 : vector<16x32xf32>
    %231 = math.exp %230 : vector<16x32xf32>
    %232 = arith.mulf %227, %231 : vector<16x32xf32>
    %cst_87 = arith.constant 1.000000e+00 : f32
    %233 = vector.broadcast %cst_87 : f32 to vector<16x32xf32>
    %234 = arith.subf %233, %232 : vector<16x32xf32>
    %235 = arith.mulf %206, %234 : vector<16x32xf32>
    %cst_88 = arith.constant 1.000000e+00 : f32
    %236 = vector.broadcast %cst_88 : f32 to vector<16x32xf32>
    %237 = arith.addf %236, %235 : vector<16x32xf32>
    %238 = arith.mulf %199, %237 : vector<16x32xf32>
    %c0_89 = arith.constant 0 : index
    %c0_90 = arith.constant 0 : index
    %239 = vector.load %arg7[%c0_89, %c0_90] : memref<32x32xf32, #tpu.memory_space<vmem>>, vector<32x32xf32>
    %cst_91 = arith.constant dense<0.000000e+00> : vector<16x32xf32>
    %240 = tpu.matmul %238, %239, %cst_91 {dimension_numbers = #tpu.dot_dimension_numbers<[1], [0], [0], [1], [0, 0, 1, 1], [], []>, precision = #tpu.contract_precision<fp32>} : vector<16x32xf32>, vector<32x32xf32>, vector<16x32xf32> -> vector<16x32xf32>
    %c0_92 = arith.constant 0 : index
    %c0_93 = arith.constant 0 : index
    %241 = vector.load %arg8[%c0_92, %c0_93] : memref<1x32xf32, #tpu.memory_space<vmem>>, vector<1x32xf32>
    %242 = vector.broadcast %241 : vector<1x32xf32> to vector<16x32xf32>
    %243 = arith.addf %240, %242 : vector<16x32xf32>
    %cst_94 = arith.constant 5.000000e-01 : f32
    %244 = vector.broadcast %cst_94 : f32 to vector<16x32xf32>
    %245 = arith.mulf %244, %243 : vector<16x32xf32>
    %cst_95 = arith.constant 0.707106769 : f32
    %246 = vector.broadcast %cst_95 : f32 to vector<16x32xf32>
    %247 = arith.mulf %243, %246 : vector<16x32xf32>
    %cst_96 = arith.constant 0.000000e+00 : f32
    %248 = vector.broadcast %cst_96 : f32 to vector<16x32xf32>
    %249 = arith.cmpf oge, %247, %248 : vector<16x32xf32>
    %cst_97 = arith.constant 1.000000e+00 : f32
    %cst_98 = arith.constant -1.000000e+00 : f32
    %250 = vector.broadcast %cst_97 : f32 to vector<16x32xf32>
    %251 = vector.broadcast %cst_98 : f32 to vector<16x32xf32>
    %252 = arith.select %249, %250, %251 : vector<16x32xi1>, vector<16x32xf32>
    %253 = math.absf %247 : vector<16x32xf32>
    %cst_99 = arith.constant 0.327591091 : f32
    %254 = vector.broadcast %cst_99 : f32 to vector<16x32xf32>
    %255 = arith.mulf %254, %253 : vector<16x32xf32>
    %cst_100 = arith.constant 1.000000e+00 : f32
    %256 = vector.broadcast %cst_100 : f32 to vector<16x32xf32>
    %257 = arith.addf %256, %255 : vector<16x32xf32>
    %cst_101 = arith.constant 1.000000e+00 : f32
    %258 = vector.broadcast %cst_101 : f32 to vector<16x32xf32>
    %259 = arith.divf %258, %257 : vector<16x32xf32>
    %cst_102 = arith.constant 1.06140542 : f32
    %260 = vector.broadcast %cst_102 : f32 to vector<16x32xf32>
    %261 = arith.mulf %260, %259 : vector<16x32xf32>
    %cst_103 = arith.constant -1.45315206 : f32
    %262 = vector.broadcast %cst_103 : f32 to vector<16x32xf32>
    %263 = arith.addf %261, %262 : vector<16x32xf32>
    %264 = arith.mulf %263, %259 : vector<16x32xf32>
    %cst_104 = arith.constant 1.42141378 : f32
    %265 = vector.broadcast %cst_104 : f32 to vector<16x32xf32>
    %266 = arith.addf %264, %265 : vector<16x32xf32>
    %267 = arith.mulf %266, %259 : vector<16x32xf32>
    %cst_105 = arith.constant -0.284496725 : f32
    %268 = vector.broadcast %cst_105 : f32 to vector<16x32xf32>
    %269 = arith.addf %267, %268 : vector<16x32xf32>
    %270 = arith.mulf %269, %259 : vector<16x32xf32>
    %cst_106 = arith.constant 0.254829586 : f32
    %271 = vector.broadcast %cst_106 : f32 to vector<16x32xf32>
    %272 = arith.addf %270, %271 : vector<16x32xf32>
    %273 = arith.mulf %272, %259 : vector<16x32xf32>
    %cst_107 = arith.constant 0.000000e+00 : f32
    %274 = vector.broadcast %cst_107 : f32 to vector<16x32xf32>
    %275 = arith.subf %274, %253 : vector<16x32xf32>
    %276 = arith.mulf %275, %253 : vector<16x32xf32>
    %277 = math.exp %276 : vector<16x32xf32>
    %278 = arith.mulf %273, %277 : vector<16x32xf32>
    %cst_108 = arith.constant 1.000000e+00 : f32
    %279 = vector.broadcast %cst_108 : f32 to vector<16x32xf32>
    %280 = arith.subf %279, %278 : vector<16x32xf32>
    %281 = arith.mulf %252, %280 : vector<16x32xf32>
    %cst_109 = arith.constant 1.000000e+00 : f32
    %282 = vector.broadcast %cst_109 : f32 to vector<16x32xf32>
    %283 = arith.addf %282, %281 : vector<16x32xf32>
    %284 = arith.mulf %245, %283 : vector<16x32xf32>
    %c0_110 = arith.constant 0 : index
    %c0_111 = arith.constant 0 : index
    %285 = vector.load %arg9[%c0_110, %c0_111] : memref<32x32xf32, #tpu.memory_space<vmem>>, vector<32x32xf32>
    %cst_112 = arith.constant dense<0.000000e+00> : vector<16x32xf32>
    %286 = tpu.matmul %284, %285, %cst_112 {dimension_numbers = #tpu.dot_dimension_numbers<[1], [0], [0], [1], [0, 0, 1, 1], [], []>, precision = #tpu.contract_precision<fp32>} : vector<16x32xf32>, vector<32x32xf32>, vector<16x32xf32> -> vector<16x32xf32>
    %c0_113 = arith.constant 0 : index
    %c0_114 = arith.constant 0 : index
    %287 = vector.load %arg10[%c0_113, %c0_114] : memref<1x32xf32, #tpu.memory_space<vmem>>, vector<1x32xf32>
    %288 = vector.broadcast %287 : vector<1x32xf32> to vector<16x32xf32>
    %289 = arith.addf %286, %288 : vector<16x32xf32>
    %cst_115 = arith.constant 5.000000e-01 : f32
    %290 = vector.broadcast %cst_115 : f32 to vector<16x32xf32>
    %291 = arith.mulf %290, %289 : vector<16x32xf32>
    %cst_116 = arith.constant 0.707106769 : f32
    %292 = vector.broadcast %cst_116 : f32 to vector<16x32xf32>
    %293 = arith.mulf %289, %292 : vector<16x32xf32>
    %cst_117 = arith.constant 0.000000e+00 : f32
    %294 = vector.broadcast %cst_117 : f32 to vector<16x32xf32>
    %295 = arith.cmpf oge, %293, %294 : vector<16x32xf32>
    %cst_118 = arith.constant 1.000000e+00 : f32
    %cst_119 = arith.constant -1.000000e+00 : f32
    %296 = vector.broadcast %cst_118 : f32 to vector<16x32xf32>
    %297 = vector.broadcast %cst_119 : f32 to vector<16x32xf32>
    %298 = arith.select %295, %296, %297 : vector<16x32xi1>, vector<16x32xf32>
    %299 = math.absf %293 : vector<16x32xf32>
    %cst_120 = arith.constant 0.327591091 : f32
    %300 = vector.broadcast %cst_120 : f32 to vector<16x32xf32>
    %301 = arith.mulf %300, %299 : vector<16x32xf32>
    %cst_121 = arith.constant 1.000000e+00 : f32
    %302 = vector.broadcast %cst_121 : f32 to vector<16x32xf32>
    %303 = arith.addf %302, %301 : vector<16x32xf32>
    %cst_122 = arith.constant 1.000000e+00 : f32
    %304 = vector.broadcast %cst_122 : f32 to vector<16x32xf32>
    %305 = arith.divf %304, %303 : vector<16x32xf32>
    %cst_123 = arith.constant 1.06140542 : f32
    %306 = vector.broadcast %cst_123 : f32 to vector<16x32xf32>
    %307 = arith.mulf %306, %305 : vector<16x32xf32>
    %cst_124 = arith.constant -1.45315206 : f32
    %308 = vector.broadcast %cst_124 : f32 to vector<16x32xf32>
    %309 = arith.addf %307, %308 : vector<16x32xf32>
    %310 = arith.mulf %309, %305 : vector<16x32xf32>
    %cst_125 = arith.constant 1.42141378 : f32
    %311 = vector.broadcast %cst_125 : f32 to vector<16x32xf32>
    %312 = arith.addf %310, %311 : vector<16x32xf32>
    %313 = arith.mulf %312, %305 : vector<16x32xf32>
    %cst_126 = arith.constant -0.284496725 : f32
    %314 = vector.broadcast %cst_126 : f32 to vector<16x32xf32>
    %315 = arith.addf %313, %314 : vector<16x32xf32>
    %316 = arith.mulf %315, %305 : vector<16x32xf32>
    %cst_127 = arith.constant 0.254829586 : f32
    %317 = vector.broadcast %cst_127 : f32 to vector<16x32xf32>
    %318 = arith.addf %316, %317 : vector<16x32xf32>
    %319 = arith.mulf %318, %305 : vector<16x32xf32>
    %cst_128 = arith.constant 0.000000e+00 : f32
    %320 = vector.broadcast %cst_128 : f32 to vector<16x32xf32>
    %321 = arith.subf %320, %299 : vector<16x32xf32>
    %322 = arith.mulf %321, %299 : vector<16x32xf32>
    %323 = math.exp %322 : vector<16x32xf32>
    %324 = arith.mulf %319, %323 : vector<16x32xf32>
    %cst_129 = arith.constant 1.000000e+00 : f32
    %325 = vector.broadcast %cst_129 : f32 to vector<16x32xf32>
    %326 = arith.subf %325, %324 : vector<16x32xf32>
    %327 = arith.mulf %298, %326 : vector<16x32xf32>
    %cst_130 = arith.constant 1.000000e+00 : f32
    %328 = vector.broadcast %cst_130 : f32 to vector<16x32xf32>
    %329 = arith.addf %328, %327 : vector<16x32xf32>
    %330 = arith.mulf %291, %329 : vector<16x32xf32>
    %c0_131 = arith.constant 0 : index
    %c0_132 = arith.constant 0 : index
    %331 = vector.load %arg11[%c0_131, %c0_132] : memref<32x32xf32, #tpu.memory_space<vmem>>, vector<32x32xf32>
    %cst_133 = arith.constant dense<0.000000e+00> : vector<16x32xf32>
    %332 = tpu.matmul %330, %331, %cst_133 {dimension_numbers = #tpu.dot_dimension_numbers<[1], [0], [0], [1], [0, 0, 1, 1], [], []>, precision = #tpu.contract_precision<fp32>} : vector<16x32xf32>, vector<32x32xf32>, vector<16x32xf32> -> vector<16x32xf32>
    %c0_134 = arith.constant 0 : index
    %c0_135 = arith.constant 0 : index
    %333 = vector.load %arg12[%c0_134, %c0_135] : memref<1x32xf32, #tpu.memory_space<vmem>>, vector<1x32xf32>
    %334 = vector.broadcast %333 : vector<1x32xf32> to vector<16x32xf32>
    %335 = arith.addf %332, %334 : vector<16x32xf32>
    %336 = arith.addf %335, %192 : vector<16x32xf32>
    %337 = arith.addf %192, %336 : vector<16x32xf32>
    %c0_136 = arith.constant 0 : index
    %c0_137 = arith.constant 0 : index
    %338 = vector.load %arg13[%c0_136, %c0_137] : memref<16x32xf32, #tpu.memory_space<vmem>>, vector<16x32xf32>
    tpu.vector_store %arg13[%c0_136, %c0_137], %337 {strides = array<i32>} : memref<16x32xf32, #tpu.memory_space<vmem>>, vector<16x32xf32>,
    return
  }
  func.func @transform_0(%arg0: i32) -> (i32, i32) {
    %c0_i32 = arith.constant 0 : i32
    %c0_i32_0 = arith.constant 0 : i32
    %c0_i32_1 = arith.constant 0 : i32
    return %c0_i32, %c0_i32_0 : i32, i32
  }
  func.func @transform_1(%arg0: i32) -> (i32, i32, i32) {
    %c0_i32 = arith.constant 0 : i32
    %c0_i32_0 = arith.constant 0 : i32
    %c0_i32_1 = arith.constant 0 : i32
    %c0_i32_2 = arith.constant 0 : i32
    return %c0_i32, %c0_i32_0, %c0_i32_1 : i32, i32, i32
  }
  func.func @transform_2(%arg0: i32) -> (i32, i32) {
    %c0_i32 = arith.constant 0 : i32
    %c0_i32_0 = arith.constant 0 : i32
    %c0_i32_1 = arith.constant 0 : i32
    return %c0_i32, %c0_i32_0 : i32, i32
  }
  func.func @transform_3(%arg0: i32) -> (i32, i32) {
    %c0_i32 = arith.constant 0 : i32
    %c0_i32_0 = arith.constant 0 : i32
    %c0_i32_1 = arith.constant 0 : i32
    return %c0_i32, %c0_i32_0 : i32, i32
  }
  func.func @transform_4(%arg0: i32) -> (i32, i32) {
    %c0_i32 = arith.constant 0 : i32
    %c0_i32_0 = arith.constant 0 : i32
    %c0_i32_1 = arith.constant 0 : i32
    return %c0_i32, %c0_i32_0 : i32, i32
  }
  func.func @transform_5(%arg0: i32) -> (i32, i32) {
    %c0_i32 = arith.constant 0 : i32
    %c0_i32_0 = arith.constant 0 : i32
    %c0_i32_1 = arith.constant 0 : i32
    return %c0_i32, %c0_i32_0 : i32, i32
  }
  func.func @transform_6(%arg0: i32) -> (i32, i32) {
    %c0_i32 = arith.constant 0 : i32
    %c0_i32_0 = arith.constant 0 : i32
    %c0_i32_1 = arith.constant 0 : i32
    return %c0_i32, %c0_i32_0 : i32, i32
  }
  func.func @transform_7(%arg0: i32) -> (i32, i32) {
    %c0_i32 = arith.constant 0 : i32
    %c0_i32_0 = arith.constant 0 : i32
    %c0_i32_1 = arith.constant 0 : i32
    return %c0_i32, %c0_i32_0 : i32, i32
  }
  func.func @transform_8(%arg0: i32) -> (i32, i32) {
    %c0_i32 = arith.constant 0 : i32
    %c0_i32_0 = arith.constant 0 : i32
    %c0_i32_1 = arith.constant 0 : i32
    return %c0_i32, %c0_i32_0 : i32, i32
  }
  func.func @transform_9(%arg0: i32) -> (i32, i32) {
    %c0_i32 = arith.constant 0 : i32
    %c0_i32_0 = arith.constant 0 : i32
    %c0_i32_1 = arith.constant 0 : i32
    return %c0_i32, %c0_i32_0 : i32, i32
  }
  func.func @transform_10(%arg0: i32) -> (i32, i32) {
    %c0_i32 = arith.constant 0 : i32
    %c0_i32_0 = arith.constant 0 : i32
    %c0_i32_1 = arith.constant 0 : i32
    return %c0_i32, %c0_i32_0 : i32, i32
  }
  func.func @transform_11(%arg0: i32) -> (i32, i32) {
    %c0_i32 = arith.constant 0 : i32
    %c0_i32_0 = arith.constant 0 : i32
    %c0_i32_1 = arith.constant 0 : i32
    return %c0_i32, %c0_i32_0 : i32, i32
  }
  func.func @transform_12(%arg0: i32) -> (i32, i32) {
    %c0_i32 = arith.constant 0 : i32
    %c0_i32_0 = arith.constant 0 : i32
    %c0_i32_1 = arith.constant 0 : i32
    return %c0_i32, %c0_i32_0 : i32, i32
  }
}

</mosaic_0001>

<llo_original>
// kernel: tpu_custom_call.1
$region0: #{tpu_custom_call.1}
  #allocation0 [shape = 'u32[]', space=smem, size = 0x4, offset = 0x4, fixed_abs, tag = 'smem constant byte address 0x4 - core index']
  #allocation1 [shape = 'u32[144,128]{1,0:T(1,128)}', space=vmem, size = 0x12000, scoped, tag = 'internal scratch']
  %s0 = inlined_call_operand.hbm [shape: f32[16,32], index: 0, kind: input, shape index: {}]
  %s1 = inlined_call_operand.vmem [shape: f32[2,1,8], index: 1, kind: input, shape index: {}]
  %s2 = inlined_call_operand.hbm [shape: f32[32,96], index: 2, kind: input, shape index: {}]
  %s3 = inlined_call_operand.vmem [shape: f32[1,96], index: 3, kind: input, shape index: {}]
  %s4 = inlined_call_operand.hbm [shape: f32[32,32], index: 4, kind: input, shape index: {}]
  %s5 = inlined_call_operand.vmem [shape: f32[1,32], index: 5, kind: input, shape index: {}]
  %s6 = inlined_call_operand.hbm [shape: f32[32,32], index: 6, kind: input, shape index: {}]
  %s7 = inlined_call_operand.vmem [shape: f32[1,32], index: 7, kind: input, shape index: {}]
  %s8 = inlined_call_operand.hbm [shape: f32[32,32], index: 8, kind: input, shape index: {}]
  %s9 = inlined_call_operand.hbm [shape: f32[1,32], index: 9, kind: input, shape index: {}]
  %s10 = inlined_call_operand.vmem [shape: f32[32,32], index: 10, kind: input, shape index: {}]
  %s11 = inlined_call_operand.vmem [shape: f32[1,32], index: 11, kind: input, shape index: {}]
  %s12 = inlined_call_operand.hbm [shape: f32[16,32], index: 12, kind: output, shape index: {}]
  %s13 = sld [smem:[#allocation0]]
  $region82: #{tpu_custom_call.1} parent=0
    _
  %s15 = ssub.s32 1, %s13
  %s16 = scalar_select 0, %s15, %s13
  $region1: #{tpu_custom_call.1} parent=0
    #allocation2 [shape = 'u8[8192]{0}', space=vmem, size = 0x2000, scoped, tag = 'input window, operand 0, single buffered']
    #allocation3 [shape = 's32[1]{0}', space=sflag, size = 0x4, scoped, tag = 'scoped memory for tpu_custom_call.1']
    #allocation4 [shape = 's32[1]{0}', space=sflag, size = 0x4, scoped, tag = 'scoped memory for tpu_custom_call.1']
    #allocation5 [shape = 'u8[16384]{0}', space=vmem, size = 0x4000, scoped, tag = 'input window, operand 2, single buffered']
    #allocation6 [shape = 's32[1]{0}', space=sflag, size = 0x4, scoped, tag = 'scoped memory for tpu_custom_call.1']
    #allocation7 [shape = 'u8[16384]{0}', space=vmem, size = 0x4000, scoped, tag = 'input window, operand 4, single buffered']
    #allocation8 [shape = 'u8[16384]{0}', space=vmem, size = 0x4000, scoped, tag = 'input window, operand 6, single buffered']
    #allocation9 [shape = 's32[1]{0}', space=sflag, size = 0x4, scoped, tag = 'scoped memory for tpu_custom_call.1']
    #allocation10 [shape = 'u8[16384]{0}', space=vmem, size = 0x4000, scoped, tag = 'input window, operand 8, single buffered']
    #allocation11 [shape = 'u8[512]{0}', space=vmem, size = 0x400, scoped, tag = 'input window, operand 9, single buffered']
    #allocation12 [shape = 's32[1]{0}', space=sflag, size = 0x4, scoped, tag = 'scoped memory for tpu_custom_call.1']
    #allocation13 [shape = 'u8[8192]{0}', space=vmem, size = 0x2000, scoped, tag = 'output window, operand 0, single buffered']
    %17 = vsyncpa [#allocation3], 0
    %18 = vsyncpa [#allocation6], 0
    %19 = vsyncpa [#allocation9], 0
    %20 = vsyncpa [#allocation12], 0
    %21 = vsyncpa [#allocation4], 0
    // Predicated region
    $region2: #{tpu_custom_call.1} parent=1 // pred_check
      _
    $region3: #{tpu_custom_call.1} parent=1 // pred_check_branch
      %23 = sbr.rel (0) target = $region5
    $region4: #{tpu_custom_call.1} parent=1 // pred_region
      %s25 = ssub.s32 256, 256
      %26 = vsyncadd [#allocation3], %s25
      %s27 = sshll.u32 [#allocation2], 4
      %s28 = int_to_ptr.vmem [resolvable:$true] %s27
      %33 = dma.hbm_to_vmem [thread:$0]  %s0, 256, %s28, [#allocation3], 128, 128, 8
    $region5: #{tpu_custom_call.1} parent=1 // pred_fallthru
      _
    // Predicated region
    $region6: #{tpu_custom_call.1} parent=1 // pred_check
      _
    $region7: #{tpu_custom_call.1} parent=1 // pred_check_branch
      %35 = sbr.rel (0) target = $region9
    $region8: #{tpu_custom_call.1} parent=1 // pred_region
      _
    $region9: #{tpu_custom_call.1} parent=1 // pred_fallthru
      _
    // Predicated region
    $region10: #{tpu_custom_call.1} parent=1 // pred_check
      _
    $region11: #{tpu_custom_call.1} parent=1 // pred_check_branch
      %37 = sbr.rel (0) target = $region13
    $region12: #{tpu_custom_call.1} parent=1 // pred_region
      %s39 = ssub.s32 512, 512
      %40 = vsyncadd [#allocation6], %s39
      %s41 = sshll.u32 [#allocation5], 4
      %s42 = int_to_ptr.vmem [resolvable:$true] %s41
      %47 = dma.hbm_to_vmem [thread:$0]  %s2, 512, %s42, [#allocation6], 128, 128, 8
    $region13: #{tpu_custom_call.1} parent=1 // pred_fallthru
      _
    // Predicated region
    $region14: #{tpu_custom_call.1} parent=1 // pred_check
      _
    $region15: #{tpu_custom_call.1} parent=1 // pred_check_branch
      %49 = sbr.rel (0) target = $region17
    $region16: #{tpu_custom_call.1} parent=1 // pred_region
      _
    $region17: #{tpu_custom_call.1} parent=1 // pred_fallthru
      _
    // Predicated region
    $region18: #{tpu_custom_call.1} parent=1 // pred_check
      _
    $region19: #{tpu_custom_call.1} parent=1 // pred_check_branch
      %51 = sbr.rel (0) target = $region21
    $region20: #{tpu_custom_call.1} parent=1 // pred_region
      %s53 = ssub.s32 512, 512
      %54 = vsyncadd [#allocation6], %s53
      %s55 = sshll.u32 [#allocation7], 4
      %s56 = int_to_ptr.vmem [resolvable:$true] %s55
      %61 = dma.hbm_to_vmem [thread:$0]  %s4, 512, %s56, [#allocation6], 128, 128, 8
    $region21: #{tpu_custom_call.1} parent=1 // pred_fallthru
      _
    // Predicated region
    $region22: #{tpu_custom_call.1} parent=1 // pred_check
      _
    $region23: #{tpu_custom_call.1} parent=1 // pred_check_branch
      %63 = sbr.rel (0) target = $region25
    $region24: #{tpu_custom_call.1} parent=1 // pred_region
      _
    $region25: #{tpu_custom_call.1} parent=1 // pred_fallthru
      _
    // Predicated region
    $region26: #{tpu_custom_call.1} parent=1 // pred_check
      _
    $region27: #{tpu_custom_call.1} parent=1 // pred_check_branch
      %65 = sbr.rel (0) target = $region29
    $region28: #{tpu_custom_call.1} parent=1 // pred_region
      %s67 = ssub.s32 512, 512
      %68 = vsyncadd [#allocation9], %s67
      %s69 = sshll.u32 [#allocation8], 4
      %s70 = int_to_ptr.vmem [resolvable:$true] %s69
      %75 = dma.hbm_to_vmem [thread:$0]  %s6, 512, %s70, [#allocation9], 128, 128, 8
    $region29: #{tpu_custom_call.1} parent=1 // pred_fallthru
      _
    // Predicated region
    $region30: #{tpu_custom_call.1} parent=1 // pred_check
      _
    $region31: #{tpu_custom_call.1} parent=1 // pred_check_branch
      %77 = sbr.rel (0) target = $region33
    $region32: #{tpu_custom_call.1} parent=1 // pred_region
      _
    $region33: #{tpu_custom_call.1} parent=1 // pred_fallthru
      _
    // Predicated region
    $region34: #{tpu_custom_call.1} parent=1 // pred_check
      _
    $region35: #{tpu_custom_call.1} parent=1 // pred_check_branch
      %79 = sbr.rel (0) target = $region37
    $region36: #{tpu_custom_call.1} parent=1 // pred_region
      %s81 = ssub.s32 512, 512
      %82 = vsyncadd [#allocation9], %s81
      %s83 = sshll.u32 [#allocation10], 4
      %s84 = int_to_ptr.vmem [resolvable:$true] %s83
      %89 = dma.hbm_to_vmem [thread:$0]  %s8, 512, %s84, [#allocation9], 128, 128, 8
    $region37: #{tpu_custom_call.1} parent=1 // pred_fallthru
      _
    // Predicated region
    $region38: #{tpu_custom_call.1} parent=1 // pred_check
      _
    $region39: #{tpu_custom_call.1} parent=1 // pred_check_branch
      %91 = sbr.rel (0) target = $region41
    $region40: #{tpu_custom_call.1} parent=1 // pred_region
      %s93 = ssub.s32 16, 16
      %94 = vsyncadd [#allocation12], %s93
      %s96 = sshll.u32 [#allocation11], 4
      %s97 = int_to_ptr.vmem [resolvable:$true] %s96
      %99 = dma.hbm_to_vmem [thread:$0]  %s9, 16, %s97, [#allocation12]
    $region41: #{tpu_custom_call.1} parent=1 // pred_fallthru
      _
    // Predicated region
    $region42: #{tpu_custom_call.1} parent=1 // pred_check
      _
    $region43: #{tpu_custom_call.1} parent=1 // pred_check_branch
      %101 = sbr.rel (0) target = $region45
    $region44: #{tpu_custom_call.1} parent=1 // pred_region
      _
    $region45: #{tpu_custom_call.1} parent=1 // pred_fallthru
      _
    // Predicated region
    $region46: #{tpu_custom_call.1} parent=1 // pred_check
      _
    $region47: #{tpu_custom_call.1} parent=1 // pred_check_branch
      %103 = sbr.rel (0) target = $region49
    $region48: #{tpu_custom_call.1} parent=1 // pred_region
      _
    $region49: #{tpu_custom_call.1} parent=1 // pred_fallthru
      _
    // Predicated region
    $region50: #{tpu_custom_call.1} parent=1 // pred_check
      _
    $region51: #{tpu_custom_call.1} parent=1 // pred_check_branch
      %105 = sbr.rel (0) target = $region53
    $region52: #{tpu_custom_call.1} parent=1 // pred_region
      %106 = dma.done [#allocation3], 256
    $region53: #{tpu_custom_call.1} parent=1 // pred_fallthru
      _
    // Predicated region
    $region54: #{tpu_custom_call.1} parent=1 // pred_check
      _
    $region55: #{tpu_custom_call.1} parent=1 // pred_check_branch
      %108 = sbr.rel (0) target = $region57
    $region56: #{tpu_custom_call.1} parent=1 // pred_region
      %109 = dma.done [#allocation6], 512
    $region57: #{tpu_custom_call.1} parent=1 // pred_fallthru
      _
    // Predicated region
    $region58: #{tpu_custom_call.1} parent=1 // pred_check
      _
    $region59: #{tpu_custom_call.1} parent=1 // pred_check_branch
      %111 = sbr.rel (0) target = $region61
    $region60: #{tpu_custom_call.1} parent=1 // pred_region
      %112 = dma.done [#allocation6], 512
    $region61: #{tpu_custom_call.1} parent=1 // pred_fallthru
      _
    // Predicated region
    $region62: #{tpu_custom_call.1} parent=1 // pred_check
      _
    $region63: #{tpu_custom_call.1} parent=1 // pred_check_branch
      %114 = sbr.rel (0) target = $region65
    $region64: #{tpu_custom_call.1} parent=1 // pred_region
      %115 = dma.done [#allocation9], 512
    $region65: #{tpu_custom_call.1} parent=1 // pred_fallthru
      _
    // Predicated region
    $region66: #{tpu_custom_call.1} parent=1 // pred_check
      _
    $region67: #{tpu_custom_call.1} parent=1 // pred_check_branch
      %117 = sbr.rel (0) target = $region69
    $region68: #{tpu_custom_call.1} parent=1 // pred_region
      %118 = dma.done [#allocation9], 512
    $region69: #{tpu_custom_call.1} parent=1 // pred_fallthru
      _
    // Predicated region
    $region70: #{tpu_custom_call.1} parent=1 // pred_check
      _
    $region71: #{tpu_custom_call.1} parent=1 // pred_check_branch
      %120 = sbr.rel (0) target = $region73
    $region72: #{tpu_custom_call.1} parent=1 // pred_region
      %121 = dma.done [#allocation12], 16
    $region73: #{tpu_custom_call.1} parent=1 // pred_fallthru
      _
    %v122 = vld [vmem:[#allocation2] sm:$0xff]
    %v123 = vld [vmem:[#allocation2 + $0x8] sm:$0xff]
    %v124 = vld [vmem:[#allocation5] sm:$0xff]
    %v125 = vld [vmem:[#allocation5 + $0x8] sm:$0xff]
    %v126 = vld [vmem:[#allocation5 + $0x10] sm:$0xff]
    %v127 = vld [vmem:[#allocation5 + $0x18] sm:$0xff]
    %v128 = vld [vmem:[%s3] sm:$0x1]
    %v130 = vlaneseq
    %v131 = vshrl.u32 %v130, 7
    %v132 = vsub.s32 0, %v131
    %v133 = vrot.slane %v128, %v132
    %vm135 = vcmask 261120
    %v137 = vsel %vm135, %v122, 0
    %v140 = vsel %vm135, %v123, 0
    %142 = vmatprep.subr.mxu0 0.0
    %v143 = vand.u32 %v124, 4294901760
    %144 = vmatpush1.msra.mxu0 %v143
    %145 = vmatprep.subr.mxu0 0.0
    %v146 = vand.u32 %v125, 4294901760
    %147 = vmatpush1.msra.mxu0 %v146
    %148 = vmatprep.subr.mxu0 0.0
    %v149 = vand.u32 %v126, 4294901760
    %150 = vmatpush1.msra.mxu0 %v149
    %151 = vmatprep.subr.mxu0 0.0
    %v152 = vand.u32 %v127, 4294901760
    %153 = vmatpush1.msra.mxu0 %v152
    %154 = vmatprep.subr.mxu0 0.0
    %155 = vmatpush1.msra.mxu0 0.0
    %156 = vmatprep.subr.mxu0 0.0
    %157 = vmatpush1.msra.mxu0 0.0
    %158 = vmatprep.subr.mxu0 0.0
    %159 = vmatpush1.msra.mxu0 0.0
    %160 = vmatprep.subr.mxu0 0.0
    %161 = vmatpush1.msra.mxu0 0.0
    %162 = vmatprep.subr.mxu0 0.0
    %163 = vmatpush1.msra.mxu0 0.0
    %164 = vmatprep.subr.mxu0 0.0
    %165 = vmatpush1.msra.mxu0 0.0
    %166 = vmatprep.subr.mxu0 0.0
    %167 = vmatpush1.msra.mxu0 0.0
    %168 = vmatprep.subr.mxu0 0.0
    %169 = vmatpush1.msra.mxu0 0.0
    %170 = vmatprep.subr.mxu0 0.0
    %171 = vmatpush1.msra.mxu0 0.0
    %172 = vmatprep.subr.mxu0 0.0
    %173 = vmatpush1.msra.mxu0 0.0
    %174 = vmatprep.subr.mxu0 0.0
    %175 = vmatpush1.msra.mxu0 0.0
    %176 = vmatprep.subr.mxu0 0.0
    %177 = vmatpush1.msra.mxu0 0.0
    %178 = vmatprep.subr.mxu0 0.0
    %179 = vmatpush1.msra.mxu0 0.0
    %180 = vmatprep.subr.mxu0 0.0
    %181 = vmatpush1.msra.mxu0 0.0
    %182 = vmatprep.subr.mxu0 0.0
    %183 = vmatpush1.msra.mxu0 0.0
    %184 = vmatprep.subr.mxu0 0.0
    %185 = vmatpush1.msra.mxu0 0.0
    %186 = vmatprep.subr.mxu0 0.0
    %187 = vmatpush1.msra.mxu0 0.0
    %188 = vmatprep.subr.mxu0 0.0
    %189 = vmatpush1.msra.mxu0 0.0
    %190 = vmatprep.subr.mxu0 0.0
    %191 = vmatpush1.msra.mxu0 0.0
    %192 = vmatprep.subr.mxu0 0.0
    %193 = vmatpush1.msra.mxu0 0.0
    %194 = vmatprep.subr.mxu0 0.0
    %195 = vmatpush1.msra.mxu0 0.0
    %196 = vmatprep.subr.mxu0 0.0
    %197 = vmatpush1.msra.mxu0 0.0
    %198 = vmatprep.subr.mxu0 0.0
    %199 = vmatpush1.msra.mxu0 0.0
    %200 = vmatprep.subr.mxu0 0.0
    %201 = vmatpush1.msra.mxu0 0.0
    %202 = vmatprep.subr.mxu0 0.0
    %203 = vmatpush1.msra.mxu0 0.0
    %204 = vmatprep.subr.mxu0 0.0
    %205 = vmatpush1.msra.mxu0 0.0
    %206 = vmatprep.subr.mxu0 0.0
    %207 = vmatpush1.msra.mxu0 0.0
    %208 = vmatprep.subr.mxu0 0.0
    %209 = vmatpush1.msra.mxu0 0.0
    %210 = vmatprep.mubr.f32.mxu0 0.0
    %v211 = vand.u32 %v137, 4294901760
    %v212 = vsub.f32 %v137, %v211
    %v213 = vand.u32 %v212, 4294901760
    %v214 = vsub.f32 %v212, %v213
    %v215 = vand.u32 %v214, 4294901760
    %216 = vmatmul.mubr.f32.gmra.mrb[0].mxu0 %v215
    %v217 = vpop.f32.mrb[0].mxu0
    %v218 = vadd.f32 %v133, %v217
    %v219 = vpop.f32.mrb[0].mxu0
    %220 = vmatprep.mubr.f32.mxu0 0.0
    %v221 = vand.u32 %v140, 4294901760
    %v222 = vsub.f32 %v140, %v221
    %v223 = vand.u32 %v222, 4294901760
    %v224 = vsub.f32 %v222, %v223
    %v225 = vand.u32 %v224, 4294901760
    %226 = vmatmul.mubr.f32.gmra.mrb[0].mxu0 %v225
    %v227 = vpop.f32.mrb[0].mxu0
    %v228 = vadd.f32 %v133, %v227
    %v229 = vpop.f32.mrb[0].mxu0
    %230 = vdwg.mxu0
    %231 = vmatprep.subr.mxu0 0.0
    %v232 = vand.u32 %v124, 4294901760
    %v233 = vsub.f32 %v124, %v232
    %v234 = vand.u32 %v233, 4294901760
    %v235 = vsub.f32 %v233, %v234
    %v236 = vand.u32 %v235, 4294901760
    %237 = vmatpush1.msra.mxu0 %v236
    %238 = vmatprep.subr.mxu0 0.0
    %v239 = vand.u32 %v125, 4294901760
    %v240 = vsub.f32 %v125, %v239
    %v241 = vand.u32 %v240, 4294901760
    %v242 = vsub.f32 %v240, %v241
    %v243 = vand.u32 %v242, 4294901760
    %244 = vmatpush1.msra.mxu0 %v243
    %245 = vmatprep.subr.mxu0 0.0
    %v246 = vand.u32 %v126, 4294901760
    %v247 = vsub.f32 %v126, %v246
    %v248 = vand.u32 %v247, 4294901760
    %v249 = vsub.f32 %v247, %v248
    %v250 = vand.u32 %v249, 4294901760
    %251 = vmatpush1.msra.mxu0 %v250
    %252 = vmatprep.subr.mxu0 0.0
    %v253 = vand.u32 %v127, 4294901760
    %v254 = vsub.f32 %v127, %v253
    %v255 = vand.u32 %v254, 4294901760
    %v256 = vsub.f32 %v254, %v255
    %v257 = vand.u32 %v256, 4294901760
    %258 = vmatpush1.msra.mxu0 %v257
    %259 = vmatprep.subr.mxu0 0.0
    %260 = vmatpush1.msra.mxu0 0.0
    %261 = vmatprep.subr.mxu0 0.0
    %262 = vmatpush1.msra.mxu0 0.0
    %263 = vmatprep.subr.mxu0 0.0
    %264 = vmatpush1.msra.mxu0 0.0
    %265 = vmatprep.subr.mxu0 0.0
    %266 = vmatpush1.msra.mxu0 0.0
    %267 = vmatprep.subr.mxu0 0.0
    %268 = vmatpush1.msra.mxu0 0.0
    %269 = vmatprep.subr.mxu0 0.0
    %270 = vmatpush1.msra.mxu0 0.0
    %271 = vmatprep.subr.mxu0 0.0
    %272 = vmatpush1.msra.mxu0 0.0
    %273 = vmatprep.subr.mxu0 0.0
    %274 = vmatpush1.msra.mxu0 0.0
    %275 = vmatprep.subr.mxu0 0.0
    %276 = vmatpush1.msra.mxu0 0.0
    %277 = vmatprep.subr.mxu0 0.0
    %278 = vmatpush1.msra.mxu0 0.0
    %279 = vmatprep.subr.mxu0 0.0
    %280 = vmatpush1.msra.mxu0 0.0
    %281 = vmatprep.subr.mxu0 0.0
    %282 = vmatpush1.msra.mxu0 0.0
    %283 = vmatprep.subr.mxu0 0.0
    %284 = vmatpush1.msra.mxu0 0.0
    %285 = vmatprep.subr.mxu0 0.0
    %286 = vmatpush1.msra.mxu0 0.0
    %287 = vmatprep.subr.mxu0 0.0
    %288 = vmatpush1.msra.mxu0 0.0
    %289 = vmatprep.subr.mxu0 0.0
    %290 = vmatpush1.msra.mxu0 0.0
    %291 = vmatprep.subr.mxu0 0.0
    %292 = vmatpush1.msra.mxu0 0.0
    %293 = vmatprep.subr.mxu0 0.0
    %294 = vmatpush1.msra.mxu0 0.0
    %295 = vmatprep.subr.mxu0 0.0
    %296 = vmatpush1.msra.mxu0 0.0
    %297 = vmatprep.subr.mxu0 0.0
    %298 = vmatpush1.msra.mxu0 0.0
    %299 = vmatprep.subr.mxu0 0.0
    %300 = vmatpush1.msra.mxu0 0.0
    %301 = vmatprep.subr.mxu0 0.0
    %302 = vmatpush1.msra.mxu0 0.0
    %303 = vmatprep.subr.mxu0 0.0
    %304 = vmatpush1.msra.mxu0 0.0
    %305 = vmatprep.subr.mxu0 0.0
    %306 = vmatpush1.msra.mxu0 0.0
    %307 = vmatprep.subr.mxu0 0.0
    %308 = vmatpush1.msra.mxu0 0.0
    %309 = vmatprep.subr.mxu0 0.0
    %310 = vmatpush1.msra.mxu0 0.0
    %311 = vmatprep.subr.mxu0 0.0
    %312 = vmatpush1.msra.mxu0 0.0
    %313 = vmatprep.subr.mxu0 0.0
    %314 = vmatpush1.msra.mxu0 0.0
    %315 = vmatprep.mubr.f32.mxu0 0.0
    %v316 = vand.u32 %v137, 4294901760
    %317 = vmatmul.mubr.f32.gmra.mrb[0].mxu0 %v316
    %v318 = vpop.f32.mrb[0].mxu0
    %v319 = vadd.f32 %v218, %v318
    %v320 = vpop.f32.mrb[0].mxu0
    %321 = vmatprep.mubr.f32.mxu0 0.0
    %v322 = vand.u32 %v140, 4294901760
    %323 = vmatmul.mubr.f32.gmra.mrb[0].mxu0 %v322
    %v324 = vpop.f32.mrb[0].mxu0
    %v325 = vadd.f32 %v228, %v324
    %v326 = vpop.f32.mrb[0].mxu0
    %327 = vdwg.mxu0
    %328 = vmatprep.subr.mxu0 0.0
    %v329 = vand.u32 %v124, 4294901760
    %v330 = vsub.f32 %v124, %v329
    %331 = vmatpush1.msra.mxu0 %v330
    %332 = vmatprep.subr.mxu0 0.0
    %v333 = vand.u32 %v125, 4294901760
    %v334 = vsub.f32 %v125, %v333
    %335 = vmatpush1.msra.mxu0 %v334
    %336 = vmatprep.subr.mxu0 0.0
    %v337 = vand.u32 %v126, 4294901760
    %v338 = vsub.f32 %v126, %v337
    %339 = vmatpush1.msra.mxu0 %v338
    %340 = vmatprep.subr.mxu0 0.0
    %v341 = vand.u32 %v127, 4294901760
    %v342 = vsub.f32 %v127, %v341
    %343 = vmatpush1.msra.mxu0 %v342
    %344 = vmatprep.subr.mxu0 0.0
    %345 = vmatpush1.msra.mxu0 0.0
    %346 = vmatprep.subr.mxu0 0.0
    %347 = vmatpush1.msra.mxu0 0.0
    %348 = vmatprep.subr.mxu0 0.0
    %349 = vmatpush1.msra.mxu0 0.0
    %350 = vmatprep.subr.mxu0 0.0
    %351 = vmatpush1.msra.mxu0 0.0
    %352 = vmatprep.subr.mxu0 0.0
    %353 = vmatpush1.msra.mxu0 0.0
    %354 = vmatprep.subr.mxu0 0.0
    %355 = vmatpush1.msra.mxu0 0.0
    %356 = vmatprep.subr.mxu0 0.0
    %357 = vmatpush1.msra.mxu0 0.0
    %358 = vmatprep.subr.mxu0 0.0
    %359 = vmatpush1.msra.mxu0 0.0
    %360 = vmatprep.subr.mxu0 0.0
    %361 = vmatpush1.msra.mxu0 0.0
    %362 = vmatprep.subr.mxu0 0.0
    %363 = vmatpush1.msra.mxu0 0.0
    %364 = vmatprep.subr.mxu0 0.0
    %365 = vmatpush1.msra.mxu0 0.0
    %366 = vmatprep.subr.mxu0 0.0
    %367 = vmatpush1.msra.mxu0 0.0
    %368 = vmatprep.subr.mxu0 0.0
    %369 = vmatpush1.msra.mxu0 0.0
    %370 = vmatprep.subr.mxu0 0.0
    %371 = vmatpush1.msra.mxu0 0.0
    %372 = vmatprep.subr.mxu0 0.0
    %373 = vmatpush1.msra.mxu0 0.0
    %374 = vmatprep.subr.mxu0 0.0
    %375 = vmatpush1.msra.mxu0 0.0
    %376 = vmatprep.subr.mxu0 0.0
    %377 = vmatpush1.msra.mxu0 0.0
    %378 = vmatprep.subr.mxu0 0.0
    %379 = vmatpush1.msra.mxu0 0.0
    %380 = vmatprep.subr.mxu0 0.0
    %381 = vmatpush1.msra.mxu0 0.0
    %382 = vmatprep.subr.mxu0 0.0
    %383 = vmatpush1.msra.mxu0 0.0
    %384 = vmatprep.subr.mxu0 0.0
    %385 = vmatpush1.msra.mxu0 0.0
    %386 = vmatprep.subr.mxu0 0.0
    %387 = vmatpush1.msra.mxu0 0.0
    %388 = vmatprep.subr.mxu0 0.0
    %389 = vmatpush1.msra.mxu0 0.0
    %390 = vmatprep.subr.mxu0 0.0
    %391 = vmatpush1.msra.mxu0 0.0
    %392 = vmatprep.subr.mxu0 0.0
    %393 = vmatpush1.msra.mxu0 0.0
    %394 = vmatprep.subr.mxu0 0.0
    %395 = vmatpush1.msra.mxu0 0.0
    %396 = vmatprep.subr.mxu0 0.0
    %397 = vmatpush1.msra.mxu0 0.0
    %398 = vmatprep.subr.mxu0 0.0
    %399 = vmatpush1.msra.mxu0 0.0
    %400 = vmatprep.mubr.f32.mxu0 0.0
    %v401 = vand.u32 %v137, 4294901760
    %v402 = vsub.f32 %v137, %v401
    %403 = vmatmul.mubr.f32.gmra.mrb[0].mxu0 %v402
    %v404 = vpop.f32.mrb[0].mxu0
    %v405 = vadd.f32 %v319, %v404
    %v406 = vpop.f32.mrb[0].mxu0
    %407 = vmatprep.mubr.f32.mxu0 0.0
    %v408 = vand.u32 %v140, 4294901760
    %v409 = vsub.f32 %v140, %v408
    %410 = vmatmul.mubr.f32.gmra.mrb[0].mxu0 %v409
    %v411 = vpop.f32.mrb[0].mxu0
    %v412 = vadd.f32 %v325, %v411
    %v413 = vpop.f32.mrb[0].mxu0
    %414 = vdwg.mxu0
    %415 = vmatprep.subr.mxu0 0.0
    %v416 = vand.u32 %v124, 4294901760
    %417 = vmatpush1.msra.mxu0 %v416
    %418 = vmatprep.subr.mxu0 0.0
    %v419 = vand.u32 %v125, 4294901760
    %420 = vmatpush1.msra.mxu0 %v419
    %421 = vmatprep.subr.mxu0 0.0
    %v422 = vand.u32 %v126, 4294901760
    %423 = vmatpush1.msra.mxu0 %v422
    %424 = vmatprep.subr.mxu0 0.0
    %v425 = vand.u32 %v127, 4294901760
    %426 = vmatpush1.msra.mxu0 %v425
    %427 = vmatprep.subr.mxu0 0.0
    %428 = vmatpush1.msra.mxu0 0.0
    %429 = vmatprep.subr.mxu0 0.0
    %430 = vmatpush1.msra.mxu0 0.0
    %431 = vmatprep.subr.mxu0 0.0
    %432 = vmatpush1.msra.mxu0 0.0
    %433 = vmatprep.subr.mxu0 0.0
    %434 = vmatpush1.msra.mxu0 0.0
    %435 = vmatprep.subr.mxu0 0.0
    %436 = vmatpush1.msra.mxu0 0.0
    %437 = vmatprep.subr.mxu0 0.0
    %438 = vmatpush1.msra.mxu0 0.0
    %439 = vmatprep.subr.mxu0 0.0
    %440 = vmatpush1.msra.mxu0 0.0
    %441 = vmatprep.subr.mxu0 0.0
    %442 = vmatpush1.msra.mxu0 0.0
    %443 = vmatprep.subr.mxu0 0.0
    %444 = vmatpush1.msra.mxu0 0.0
    %445 = vmatprep.subr.mxu0 0.0
    %446 = vmatpush1.msra.mxu0 0.0
    %447 = vmatprep.subr.mxu0 0.0
    %448 = vmatpush1.msra.mxu0 0.0
    %449 = vmatprep.subr.mxu0 0.0
    %450 = vmatpush1.msra.mxu0 0.0
    %451 = vmatprep.subr.mxu0 0.0
    %452 = vmatpush1.msra.mxu0 0.0
    %453 = vmatprep.subr.mxu0 0.0
    %454 = vmatpush1.msra.mxu0 0.0
    %455 = vmatprep.subr.mxu0 0.0
    %456 = vmatpush1.msra.mxu0 0.0
    %457 = vmatprep.subr.mxu0 0.0
    %458 = vmatpush1.msra.mxu0 0.0
    %459 = vmatprep.subr.mxu0 0.0
    %460 = vmatpush1.msra.mxu0 0.0
    %461 = vmatprep.subr.mxu0 0.0
    %462 = vmatpush1.msra.mxu0 0.0
    %463 = vmatprep.subr.mxu0 0.0
    %464 = vmatpush1.msra.mxu0 0.0
    %465 = vmatprep.subr.mxu0 0.0
    %466 = vmatpush1.msra.mxu0 0.0
    %467 = vmatprep.subr.mxu0 0.0
    %468 = vmatpush1.msra.mxu0 0.0
    %469 = vmatprep.subr.mxu0 0.0
    %470 = vmatpush1.msra.mxu0 0.0
    %471 = vmatprep.subr.mxu0 0.0
    %472 = vmatpush1.msra.mxu0 0.0
    %473 = vmatprep.subr.mxu0 0.0
    %474 = vmatpush1.msra.mxu0 0.0
    %475 = vmatprep.subr.mxu0 0.0
    %476 = vmatpush1.msra.mxu0 0.0
    %477 = vmatprep.subr.mxu0 0.0
    %478 = vmatpush1.msra.mxu0 0.0
    %479 = vmatprep.subr.mxu0 0.0
    %480 = vmatpush1.msra.mxu0 0.0
    %481 = vmatprep.subr.mxu0 0.0
    %482 = vmatpush1.msra.mxu0 0.0
    %483 = vmatprep.mubr.f32.mxu0 0.0
    %v484 = vand.u32 %v137, 4294901760
    %v485 = vsub.f32 %v137, %v484
    %v486 = vand.u32 %v485, 4294901760
    %487 = vmatmul.mubr.f32.gmra.mrb[0].mxu0 %v486
    %v488 = vpop.f32.mrb[0].mxu0
    %v489 = vadd.f32 %v405, %v488
    %v490 = vpop.f32.mrb[0].mxu0
    %491 = vmatprep.mubr.f32.mxu0 0.0
    %v492 = vand.u32 %v140, 4294901760
    %v493 = vsub.f32 %v140, %v492
    %v494 = vand.u32 %v493, 4294901760
    %495 = vmatmul.mubr.f32.gmra.mrb[0].mxu0 %v494
    %v496 = vpop.f32.mrb[0].mxu0
    %v497 = vadd.f32 %v412, %v496
    %v498 = vpop.f32.mrb[0].mxu0
    %499 = vdwg.mxu0
    %500 = vmatprep.subr.mxu0 0.0
    %v501 = vand.u32 %v124, 4294901760
    %v502 = vsub.f32 %v124, %v501
    %v503 = vand.u32 %v502, 4294901760
    %504 = vmatpush1.msra.mxu0 %v503
    %505 = vmatprep.subr.mxu0 0.0
    %v506 = vand.u32 %v125, 4294901760
    %v507 = vsub.f32 %v125, %v506
    %v508 = vand.u32 %v507, 4294901760
    %509 = vmatpush1.msra.mxu0 %v508
    %510 = vmatprep.subr.mxu0 0.0
    %v511 = vand.u32 %v126, 4294901760
    %v512 = vsub.f32 %v126, %v511
    %v513 = vand.u32 %v512, 4294901760
    %514 = vmatpush1.msra.mxu0 %v513
    %515 = vmatprep.subr.mxu0 0.0
    %v516 = vand.u32 %v127, 4294901760
    %v517 = vsub.f32 %v127, %v516
    %v518 = vand.u32 %v517, 4294901760
    %519 = vmatpush1.msra.mxu0 %v518
    %520 = vmatprep.subr.mxu0 0.0
    %521 = vmatpush1.msra.mxu0 0.0
    %522 = vmatprep.subr.mxu0 0.0
    %523 = vmatpush1.msra.mxu0 0.0
    %524 = vmatprep.subr.mxu0 0.0
    %525 = vmatpush1.msra.mxu0 0.0
    %526 = vmatprep.subr.mxu0 0.0
    %527 = vmatpush1.msra.mxu0 0.0
    %528 = vmatprep.subr.mxu0 0.0
    %529 = vmatpush1.msra.mxu0 0.0
    %530 = vmatprep.subr.mxu0 0.0
    %531 = vmatpush1.msra.mxu0 0.0
    %532 = vmatprep.subr.mxu0 0.0
    %533 = vmatpush1.msra.mxu0 0.0
    %534 = vmatprep.subr.mxu0 0.0
    %535 = vmatpush1.msra.mxu0 0.0
    %536 = vmatprep.subr.mxu0 0.0
    %537 = vmatpush1.msra.mxu0 0.0
    %538 = vmatprep.subr.mxu0 0.0
    %539 = vmatpush1.msra.mxu0 0.0
    %540 = vmatprep.subr.mxu0 0.0
    %541 = vmatpush1.msra.mxu0 0.0
    %542 = vmatprep.subr.mxu0 0.0
    %543 = vmatpush1.msra.mxu0 0.0
    %544 = vmatprep.subr.mxu0 0.0
    %545 = vmatpush1.msra.mxu0 0.0
    %546 = vmatprep.subr.mxu0 0.0
    %547 = vmatpush1.msra.mxu0 0.0
    %548 = vmatprep.subr.mxu0 0.0
    %549 = vmatpush1.msra.mxu0 0.0
    %550 = vmatprep.subr.mxu0 0.0
    %551 = vmatpush1.msra.mxu0 0.0
    %552 = vmatprep.subr.mxu0 0.0
    %553 = vmatpush1.msra.mxu0 0.0
    %554 = vmatprep.subr.mxu0 0.0
    %555 = vmatpush1.msra.mxu0 0.0
    %556 = vmatprep.subr.mxu0 0.0
    %557 = vmatpush1.msra.mxu0 0.0
    %558 = vmatprep.subr.mxu0 0.0
    %559 = vmatpush1.msra.mxu0 0.0
    %560 = vmatprep.subr.mxu0 0.0
    %561 = vmatpush1.msra.mxu0 0.0
    %562 = vmatprep.subr.mxu0 0.0
    %563 = vmatpush1.msra.mxu0 0.0
    %564 = vmatprep.subr.mxu0 0.0
    %565 = vmatpush1.msra.mxu0 0.0
    %566 = vmatprep.subr.mxu0 0.0
    %567 = vmatpush1.msra.mxu0 0.0
    %568 = vmatprep.subr.mxu0 0.0
    %569 = vmatpush1.msra.mxu0 0.0
    %570 = vmatprep.subr.mxu0 0.0
    %571 = vmatpush1.msra.mxu0 0.0
    %572 = vmatprep.subr.mxu0 0.0
    %573 = vmatpush1.msra.mxu0 0.0
    %574 = vmatprep.subr.mxu0 0.0
    %575 = vmatpush1.msra.mxu0 0.0
    %576 = vmatprep.mubr.f32.mxu0 0.0
    %v577 = vand.u32 %v137, 4294901760
    %578 = vmatmul.mubr.f32.gmra.mrb[0].mxu0 %v577
    %v579 = vpop.f32.mrb[0].mxu0
    %v580 = vadd.f32 %v489, %v579
    %v581 = vpop.f32.mrb[0].mxu0
    %582 = vmatprep.mubr.f32.mxu0 0.0
    %v583 = vand.u32 %v140, 4294901760
    %584 = vmatmul.mubr.f32.gmra.mrb[0].mxu0 %v583
    %v585 = vpop.f32.mrb[0].mxu0
    %v586 = vadd.f32 %v497, %v585
    %v587 = vpop.f32.mrb[0].mxu0
    %588 = vdwg.mxu0
    %589 = vmatprep.subr.mxu0 0.0
    %v590 = vand.u32 %v124, 4294901760
    %591 = vmatpush1.msra.mxu0 %v590
    %592 = vmatprep.subr.mxu0 0.0
    %v593 = vand.u32 %v125, 4294901760
    %594 = vmatpush1.msra.mxu0 %v593
    %595 = vmatprep.subr.mxu0 0.0
    %v596 = vand.u32 %v126, 4294901760
    %597 = vmatpush1.msra.mxu0 %v596
    %598 = vmatprep.subr.mxu0 0.0
    %v599 = vand.u32 %v127, 4294901760
    %600 = vmatpush1.msra.mxu0 %v599
    %601 = vmatprep.subr.mxu0 0.0
    %602 = vmatpush1.msra.mxu0 0.0
    %603 = vmatprep.subr.mxu0 0.0
    %604 = vmatpush1.msra.mxu0 0.0
    %605 = vmatprep.subr.mxu0 0.0
    %606 = vmatpush1.msra.mxu0 0.0
    %607 = vmatprep.subr.mxu0 0.0
    %608 = vmatpush1.msra.mxu0 0.0
    %609 = vmatprep.subr.mxu0 0.0
    %610 = vmatpush1.msra.mxu0 0.0
    %611 = vmatprep.subr.mxu0 0.0
    %612 = vmatpush1.msra.mxu0 0.0
    %613 = vmatprep.subr.mxu0 0.0
    %614 = vmatpush1.msra.mxu0 0.0
    %615 = vmatprep.subr.mxu0 0.0
    %616 = vmatpush1.msra.mxu0 0.0
    %617 = vmatprep.subr.mxu0 0.0
    %618 = vmatpush1.msra.mxu0 0.0
    %619 = vmatprep.subr.mxu0 0.0
    %620 = vmatpush1.msra.mxu0 0.0
    %621 = vmatprep.subr.mxu0 0.0
    %622 = vmatpush1.msra.mxu0 0.0
    %623 = vmatprep.subr.mxu0 0.0
    %624 = vmatpush1.msra.mxu0 0.0
    %625 = vmatprep.subr.mxu0 0.0
    %626 = vmatpush1.msra.mxu0 0.0
    %627 = vmatprep.subr.mxu0 0.0
    %628 = vmatpush1.msra.mxu0 0.0
    %629 = vmatprep.subr.mxu0 0.0
    %630 = vmatpush1.msra.mxu0 0.0
    %631 = vmatprep.subr.mxu0 0.0
    %632 = vmatpush1.msra.mxu0 0.0
    %633 = vmatprep.subr.mxu0 0.0
    %634 = vmatpush1.msra.mxu0 0.0
    %635 = vmatprep.subr.mxu0 0.0
    %636 = vmatpush1.msra.mxu0 0.0
    %637 = vmatprep.subr.mxu0 0.0
    %638 = vmatpush1.msra.mxu0 0.0
    %639 = vmatprep.subr.mxu0 0.0
    %640 = vmatpush1.msra.mxu0 0.0
    %641 = vmatprep.subr.mxu0 0.0
    %642 = vmatpush1.msra.mxu0 0.0
    %643 = vmatprep.subr.mxu0 0.0
    %644 = vmatpush1.msra.mxu0 0.0
    %645 = vmatprep.subr.mxu0 0.0
    %646 = vmatpush1.msra.mxu0 0.0
    %647 = vmatprep.subr.mxu0 0.0
    %648 = vmatpush1.msra.mxu0 0.0
    %649 = vmatprep.subr.mxu0 0.0
    %650 = vmatpush1.msra.mxu0 0.0
    %651 = vmatprep.subr.mxu0 0.0
    %652 = vmatpush1.msra.mxu0 0.0
    %653 = vmatprep.subr.mxu0 0.0
    %654 = vmatpush1.msra.mxu0 0.0
    %655 = vmatprep.subr.mxu0 0.0
    %656 = vmatpush1.msra.mxu0 0.0
    %657 = vmatprep.mubr.f32.mxu0 0.0
    %v658 = vand.u32 %v137, 4294901760
    %659 = vmatmul.mubr.f32.gmra.mrb[0].mxu0 %v658
    %v660 = vpop.f32.mrb[0].mxu0
    %v661 = vadd.f32 %v580, %v660
    %v662 = vpop.f32.mrb[0].mxu0
    %663 = vmatprep.mubr.f32.mxu0 0.0
    %v664 = vand.u32 %v140, 4294901760
    %665 = vmatmul.mubr.f32.gmra.mrb[0].mxu0 %v664
    %v666 = vpop.f32.mrb[0].mxu0
    %v667 = vadd.f32 %v586, %v666
    %v668 = vpop.f32.mrb[0].mxu0
    %669 = vdwg.mxu0
    %v670 = vld [vmem:[%s1] sm:$0x1]
    %vm671 = vcmp.gt.f32.partialorder %v670, 0.5
    %v672 = vsel %vm671, 1, 0
    %v673 = vcvt.s32.f32 %v672
    %v675 = vlaneseq
    %v676 = vshrl.u32 %v675, 7
    %v677 = vsub.s32 0, %v676
    %v678 = vrot.slane %v673, %v677
    %681 = vrot.lane.b32.xlu0 %v661, 96
    %v682 = vpop.permute.xlu0 %681
    %vm683 = vcmask 64512
    %v684 = vsel %vm683, %v661, 0
    %v686 = vsel %vm683, %v682, 0
    %688 = vmatprep.subr.mxu0 0.0
    %v689 = vand.u32 %v686, 4294901760
    %690 = vmatpush1.xpose.msra.mxu0 %v689
    %691 = vmatprep.subr.mxu0 0.0
    %692 = vmatpush1.xpose.msra.mxu0 0.0
    %693 = vmatprep.subr.mxu0 0.0
    %694 = vmatpush1.xpose.msra.mxu0 0.0
    %695 = vmatprep.subr.mxu0 0.0
    %696 = vmatpush1.xpose.msra.mxu0 0.0
    %697 = vmatprep.subr.mxu0 0.0
    %698 = vmatpush1.xpose.msra.mxu0 0.0
    %699 = vmatprep.subr.mxu0 0.0
    %700 = vmatpush1.xpose.msra.mxu0 0.0
    %701 = vmatprep.subr.mxu0 0.0
    %702 = vmatpush1.xpose.msra.mxu0 0.0
    %703 = vmatprep.subr.mxu0 0.0
    %704 = vmatpush1.xpose.msra.mxu0 0.0
    %705 = vmatprep.subr.mxu0 0.0
    %706 = vmatpush1.xpose.msra.mxu0 0.0
    %707 = vmatprep.subr.mxu0 0.0
    %708 = vmatpush1.xpose.msra.mxu0 0.0
    %709 = vmatprep.subr.mxu0 0.0
    %710 = vmatpush1.xpose.msra.mxu0 0.0
    %711 = vmatprep.subr.mxu0 0.0
    %712 = vmatpush1.xpose.msra.mxu0 0.0
    %713 = vmatprep.subr.mxu0 0.0
    %714 = vmatpush1.xpose.msra.mxu0 0.0
    %715 = vmatprep.subr.mxu0 0.0
    %716 = vmatpush1.xpose.msra.mxu0 0.0
    %717 = vmatprep.subr.mxu0 0.0
    %718 = vmatpush1.xpose.msra.mxu0 0.0
    %719 = vmatprep.subr.mxu0 0.0
    %720 = vmatpush1.xpose.msra.mxu0 0.0
    %721 = vmatprep.subr.mxu0 0.0
    %722 = vmatpush1.xpose.msra.mxu0 0.0
    %723 = vmatprep.subr.mxu0 0.0
    %724 = vmatpush1.xpose.msra.mxu0 0.0
    %725 = vmatprep.subr.mxu0 0.0
    %726 = vmatpush1.xpose.msra.mxu0 0.0
    %727 = vmatprep.subr.mxu0 0.0
    %728 = vmatpush1.xpose.msra.mxu0 0.0
    %729 = vmatprep.subr.mxu0 0.0
    %730 = vmatpush1.xpose.msra.mxu0 0.0
    %731 = vmatprep.subr.mxu0 0.0
    %732 = vmatpush1.xpose.msra.mxu0 0.0
    %733 = vmatprep.subr.mxu0 0.0
    %734 = vmatpush1.xpose.msra.mxu0 0.0
    %735 = vmatprep.subr.mxu0 0.0
    %736 = vmatpush1.xpose.msra.mxu0 0.0
    %737 = vmatprep.subr.mxu0 0.0
    %738 = vmatpush1.xpose.msra.mxu0 0.0
    %739 = vmatprep.subr.mxu0 0.0
    %740 = vmatpush1.xpose.msra.mxu0 0.0
    %741 = vmatprep.subr.mxu0 0.0
    %742 = vmatpush1.xpose.msra.mxu0 0.0
    %743 = vmatprep.subr.mxu0 0.0
    %744 = vmatpush1.xpose.msra.mxu0 0.0
    %745 = vmatprep.subr.mxu0 0.0
    %746 = vmatpush1.xpose.msra.mxu0 0.0
    %747 = vmatprep.subr.mxu0 0.0
    %748 = vmatpush1.xpose.msra.mxu0 0.0
    %749 = vmatprep.subr.mxu0 0.0
    %750 = vmatpush1.xpose.msra.mxu0 0.0
    %751 = vmatprep.subr.mxu0 0.0
    %752 = vmatpush1.xpose.msra.mxu0 0.0
    %753 = vmatprep.mubr.f32.mxu0 0.0
    %v754 = vand.u32 %v684, 4294901760
    %v755 = vsub.f32 %v684, %v754
    %v756 = vand.u32 %v755, 4294901760
    %v757 = vsub.f32 %v755, %v756
    %v758 = vand.u32 %v757, 4294901760
    %759 = vmatmul.mubr.f32.gmra.mrb[0].mxu0 %v758
    %v760 = vpop.f32.mrb[0].mxu0
    %v761 = vadd.f32 0.0, %v760
    %v762 = vpop.f32.mrb[0].mxu0
    %763 = vdwg.mxu0
    %764 = vmatprep.subr.mxu0 0.0
    %v765 = vand.u32 %v686, 4294901760
    %v766 = vsub.f32 %v686, %v765
    %v767 = vand.u32 %v766, 4294901760
    %v768 = vsub.f32 %v766, %v767
    %v769 = vand.u32 %v768, 4294901760
    %770 = vmatpush1.xpose.msra.mxu0 %v769
    %771 = vmatprep.subr.mxu0 0.0
    %772 = vmatpush1.xpose.msra.mxu0 0.0
    %773 = vmatprep.subr.mxu0 0.0
    %774 = vmatpush1.xpose.msra.mxu0 0.0
    %775 = vmatprep.subr.mxu0 0.0
    %776 = vmatpush1.xpose.msra.mxu0 0.0
    %777 = vmatprep.subr.mxu0 0.0
    %778 = vmatpush1.xpose.msra.mxu0 0.0
    %779 = vmatprep.subr.mxu0 0.0
    %780 = vmatpush1.xpose.msra.mxu0 0.0
    %781 = vmatprep.subr.mxu0 0.0
    %782 = vmatpush1.xpose.msra.mxu0 0.0
    %783 = vmatprep.subr.mxu0 0.0
    %784 = vmatpush1.xpose.msra.mxu0 0.0
    %785 = vmatprep.subr.mxu0 0.0
    %786 = vmatpush1.xpose.msra.mxu0 0.0
    %787 = vmatprep.subr.mxu0 0.0
    %788 = vmatpush1.xpose.msra.mxu0 0.0
    %789 = vmatprep.subr.mxu0 0.0
    %790 = vmatpush1.xpose.msra.mxu0 0.0
    %791 = vmatprep.subr.mxu0 0.0
    %792 = vmatpush1.xpose.msra.mxu0 0.0
    %793 = vmatprep.subr.mxu0 0.0
    %794 = vmatpush1.xpose.msra.mxu0 0.0
    %795 = vmatprep.subr.mxu0 0.0
    %796 = vmatpush1.xpose.msra.mxu0 0.0
    %797 = vmatprep.subr.mxu0 0.0
    %798 = vmatpush1.xpose.msra.mxu0 0.0
    %799 = vmatprep.subr.mxu0 0.0
    %800 = vmatpush1.xpose.msra.mxu0 0.0
    %801 = vmatprep.subr.mxu0 0.0
    %802 = vmatpush1.xpose.msra.mxu0 0.0
    %803 = vmatprep.subr.mxu0 0.0
    %804 = vmatpush1.xpose.msra.mxu0 0.0
    %805 = vmatprep.subr.mxu0 0.0
    %806 = vmatpush1.xpose.msra.mxu0 0.0
    %807 = vmatprep.subr.mxu0 0.0
    %808 = vmatpush1.xpose.msra.mxu0 0.0
    %809 = vmatprep.subr.mxu0 0.0
    %810 = vmatpush1.xpose.msra.mxu0 0.0
    %811 = vmatprep.subr.mxu0 0.0
    %812 = vmatpush1.xpose.msra.mxu0 0.0
    %813 = vmatprep.subr.mxu0 0.0
    %814 = vmatpush1.xpose.msra.mxu0 0.0
    %815 = vmatprep.subr.mxu0 0.0
    %816 = vmatpush1.xpose.msra.mxu0 0.0
    %817 = vmatprep.subr.mxu0 0.0
    %818 = vmatpush1.xpose.msra.mxu0 0.0
    %819 = vmatprep.subr.mxu0 0.0
    %820 = vmatpush1.xpose.msra.mxu0 0.0
    %821 = vmatprep.subr.mxu0 0.0
    %822 = vmatpush1.xpose.msra.mxu0 0.0
    %823 = vmatprep.subr.mxu0 0.0
    %824 = vmatpush1.xpose.msra.mxu0 0.0
    %825 = vmatprep.subr.mxu0 0.0
    %826 = vmatpush1.xpose.msra.mxu0 0.0
    %827 = vmatprep.subr.mxu0 0.0
    %828 = vmatpush1.xpose.msra.mxu0 0.0
    %829 = vmatprep.subr.mxu0 0.0
    %830 = vmatpush1.xpose.msra.mxu0 0.0
    %831 = vmatprep.subr.mxu0 0.0
    %832 = vmatpush1.xpose.msra.mxu0 0.0
    %833 = vmatprep.mubr.f32.mxu0 0.0
    %v834 = vand.u32 %v684, 4294901760
    %835 = vmatmul.mubr.f32.gmra.mrb[0].mxu0 %v834
    %v836 = vpop.f32.mrb[0].mxu0
    %v837 = vadd.f32 %v761, %v836
    %v838 = vpop.f32.mrb[0].mxu0
    %839 = vdwg.mxu0
    %840 = vmatprep.subr.mxu0 0.0
    %v841 = vand.u32 %v686, 4294901760
    %v842 = vsub.f32 %v686, %v841
    %843 = vmatpush1.xpose.msra.mxu0 %v842
    %844 = vmatprep.subr.mxu0 0.0
    %845 = vmatpush1.xpose.msra.mxu0 0.0
    %846 = vmatprep.subr.mxu0 0.0
    %847 = vmatpush1.xpose.msra.mxu0 0.0
    %848 = vmatprep.subr.mxu0 0.0
    %849 = vmatpush1.xpose.msra.mxu0 0.0
    %850 = vmatprep.subr.mxu0 0.0
    %851 = vmatpush1.xpose.msra.mxu0 0.0
    %852 = vmatprep.subr.mxu0 0.0
    %853 = vmatpush1.xpose.msra.mxu0 0.0
    %854 = vmatprep.subr.mxu0 0.0
    %855 = vmatpush1.xpose.msra.mxu0 0.0
    %856 = vmatprep.subr.mxu0 0.0
    %857 = vmatpush1.xpose.msra.mxu0 0.0
    %858 = vmatprep.subr.mxu0 0.0
    %859 = vmatpush1.xpose.msra.mxu0 0.0
    %860 = vmatprep.subr.mxu0 0.0
    %861 = vmatpush1.xpose.msra.mxu0 0.0
    %862 = vmatprep.subr.mxu0 0.0
    %863 = vmatpush1.xpose.msra.mxu0 0.0
    %864 = vmatprep.subr.mxu0 0.0
    %865 = vmatpush1.xpose.msra.mxu0 0.0
    %866 = vmatprep.subr.mxu0 0.0
    %867 = vmatpush1.xpose.msra.mxu0 0.0
    %868 = vmatprep.subr.mxu0 0.0
    %869 = vmatpush1.xpose.msra.mxu0 0.0
    %870 = vmatprep.subr.mxu0 0.0
    %871 = vmatpush1.xpose.msra.mxu0 0.0
    %872 = vmatprep.subr.mxu0 0.0
    %873 = vmatpush1.xpose.msra.mxu0 0.0
    %874 = vmatprep.subr.mxu0 0.0
    %875 = vmatpush1.xpose.msra.mxu0 0.0
    %876 = vmatprep.subr.mxu0 0.0
    %877 = vmatpush1.xpose.msra.mxu0 0.0
    %878 = vmatprep.subr.mxu0 0.0
    %879 = vmatpush1.xpose.msra.mxu0 0.0
    %880 = vmatprep.subr.mxu0 0.0
    %881 = vmatpush1.xpose.msra.mxu0 0.0
    %882 = vmatprep.subr.mxu0 0.0
    %883 = vmatpush1.xpose.msra.mxu0 0.0
    %884 = vmatprep.subr.mxu0 0.0
    %885 = vmatpush1.xpose.msra.mxu0 0.0
    %886 = vmatprep.subr.mxu0 0.0
    %887 = vmatpush1.xpose.msra.mxu0 0.0
    %888 = vmatprep.subr.mxu0 0.0
    %889 = vmatpush1.xpose.msra.mxu0 0.0
    %890 = vmatprep.subr.mxu0 0.0
    %891 = vmatpush1.xpose.msra.mxu0 0.0
    %892 = vmatprep.subr.mxu0 0.0
    %893 = vmatpush1.xpose.msra.mxu0 0.0
    %894 = vmatprep.subr.mxu0 0.0
    %895 = vmatpush1.xpose.msra.mxu0 0.0
    %896 = vmatprep.subr.mxu0 0.0
    %897 = vmatpush1.xpose.msra.mxu0 0.0
    %898 = vmatprep.subr.mxu0 0.0
    %899 = vmatpush1.xpose.msra.mxu0 0.0
    %900 = vmatprep.subr.mxu0 0.0
    %901 = vmatpush1.xpose.msra.mxu0 0.0
    %902 = vmatprep.subr.mxu0 0.0
    %903 = vmatpush1.xpose.msra.mxu0 0.0
    %904 = vmatprep.subr.mxu0 0.0
    %905 = vmatpush1.xpose.msra.mxu0 0.0
    %906 = vmatprep.mubr.f32.mxu0 0.0
    %v907 = vand.u32 %v684, 4294901760
    %v908 = vsub.f32 %v684, %v907
    %909 = vmatmul.mubr.f32.gmra.mrb[0].mxu0 %v908
    %v910 = vpop.f32.mrb[0].mxu0
    %v911 = vadd.f32 %v837, %v910
    %v912 = vpop.f32.mrb[0].mxu0
    %913 = vdwg.mxu0
    %914 = vmatprep.subr.mxu0 0.0
    %v915 = vand.u32 %v686, 4294901760
    %916 = vmatpush1.xpose.msra.mxu0 %v915
    %917 = vmatprep.subr.mxu0 0.0
    %918 = vmatpush1.xpose.msra.mxu0 0.0
    %919 = vmatprep.subr.mxu0 0.0
    %920 = vmatpush1.xpose.msra.mxu0 0.0
    %921 = vmatprep.subr.mxu0 0.0
    %922 = vmatpush1.xpose.msra.mxu0 0.0
    %923 = vmatprep.subr.mxu0 0.0
    %924 = vmatpush1.xpose.msra.mxu0 0.0
    %925 = vmatprep.subr.mxu0 0.0
    %926 = vmatpush1.xpose.msra.mxu0 0.0
    %927 = vmatprep.subr.mxu0 0.0
    %928 = vmatpush1.xpose.msra.mxu0 0.0
    %929 = vmatprep.subr.mxu0 0.0
    %930 = vmatpush1.xpose.msra.mxu0 0.0
    %931 = vmatprep.subr.mxu0 0.0
    %932 = vmatpush1.xpose.msra.mxu0 0.0
    %933 = vmatprep.subr.mxu0 0.0
    %934 = vmatpush1.xpose.msra.mxu0 0.0
    %935 = vmatprep.subr.mxu0 0.0
    %936 = vmatpush1.xpose.msra.mxu0 0.0
    %937 = vmatprep.subr.mxu0 0.0
    %938 = vmatpush1.xpose.msra.mxu0 0.0
    %939 = vmatprep.subr.mxu0 0.0
    %940 = vmatpush1.xpose.msra.mxu0 0.0
    %941 = vmatprep.subr.mxu0 0.0
    %942 = vmatpush1.xpose.msra.mxu0 0.0
    %943 = vmatprep.subr.mxu0 0.0
    %944 = vmatpush1.xpose.msra.mxu0 0.0
    %945 = vmatprep.subr.mxu0 0.0
    %946 = vmatpush1.xpose.msra.mxu0 0.0
    %947 = vmatprep.subr.mxu0 0.0
    %948 = vmatpush1.xpose.msra.mxu0 0.0
    %949 = vmatprep.subr.mxu0 0.0
    %950 = vmatpush1.xpose.msra.mxu0 0.0
    %951 = vmatprep.subr.mxu0 0.0
    %952 = vmatpush1.xpose.msra.mxu0 0.0
    %953 = vmatprep.subr.mxu0 0.0
    %954 = vmatpush1.xpose.msra.mxu0 0.0
    %955 = vmatprep.subr.mxu0 0.0
    %956 = vmatpush1.xpose.msra.mxu0 0.0
    %957 = vmatprep.subr.mxu0 0.0
    %958 = vmatpush1.xpose.msra.mxu0 0.0
    %959 = vmatprep.subr.mxu0 0.0
    %960 = vmatpush1.xpose.msra.mxu0 0.0
    %961 = vmatprep.subr.mxu0 0.0
    %962 = vmatpush1.xpose.msra.mxu0 0.0
    %963 = vmatprep.subr.mxu0 0.0
    %964 = vmatpush1.xpose.msra.mxu0 0.0
    %965 = vmatprep.subr.mxu0 0.0
    %966 = vmatpush1.xpose.msra.mxu0 0.0
    %967 = vmatprep.subr.mxu0 0.0
    %968 = vmatpush1.xpose.msra.mxu0 0.0
    %969 = vmatprep.subr.mxu0 0.0
    %970 = vmatpush1.xpose.msra.mxu0 0.0
    %971 = vmatprep.subr.mxu0 0.0
    %972 = vmatpush1.xpose.msra.mxu0 0.0
    %973 = vmatprep.subr.mxu0 0.0
    %974 = vmatpush1.xpose.msra.mxu0 0.0
    %975 = vmatprep.subr.mxu0 0.0
    %976 = vmatpush1.xpose.msra.mxu0 0.0
    %977 = vmatprep.subr.mxu0 0.0
    %978 = vmatpush1.xpose.msra.mxu0 0.0
    %979 = vmatprep.mubr.f32.mxu0 0.0
    %v980 = vand.u32 %v684, 4294901760
    %v981 = vsub.f32 %v684, %v980
    %v982 = vand.u32 %v981, 4294901760
    %983 = vmatmul.mubr.f32.gmra.mrb[0].mxu0 %v982
    %v984 = vpop.f32.mrb[0].mxu0
    %v985 = vadd.f32 %v911, %v984
    %v986 = vpop.f32.mrb[0].mxu0
    %987 = vdwg.mxu0
    %988 = vmatprep.subr.mxu0 0.0
    %v989 = vand.u32 %v686, 4294901760
    %v990 = vsub.f32 %v686, %v989
    %v991 = vand.u32 %v990, 4294901760
    %992 = vmatpush1.xpose.msra.mxu0 %v991
    %993 = vmatprep.subr.mxu0 0.0
    %994 = vmatpush1.xpose.msra.mxu0 0.0
    %995 = vmatprep.subr.mxu0 0.0
    %996 = vmatpush1.xpose.msra.mxu0 0.0
    %997 = vmatprep.subr.mxu0 0.0
    %998 = vmatpush1.xpose.msra.mxu0 0.0
    %999 = vmatprep.subr.mxu0 0.0
    %1000 = vmatpush1.xpose.msra.mxu0 0.0
    %1001 = vmatprep.subr.mxu0 0.0
    %1002 = vmatpush1.xpose.msra.mxu0 0.0
    %1003 = vmatprep.subr.mxu0 0.0
    %1004 = vmatpush1.xpose.msra.mxu0 0.0
    %1005 = vmatprep.subr.mxu0 0.0
    %1006 = vmatpush1.xpose.msra.mxu0 0.0
    %1007 = vmatprep.subr.mxu0 0.0
    %1008 = vmatpush1.xpose.msra.mxu0 0.0
    %1009 = vmatprep.subr.mxu0 0.0
    %1010 = vmatpush1.xpose.msra.mxu0 0.0
    %1011 = vmatprep.subr.mxu0 0.0
    %1012 = vmatpush1.xpose.msra.mxu0 0.0
    %1013 = vmatprep.subr.mxu0 0.0
    %1014 = vmatpush1.xpose.msra.mxu0 0.0
    %1015 = vmatprep.subr.mxu0 0.0
    %1016 = vmatpush1.xpose.msra.mxu0 0.0
    %1017 = vmatprep.subr.mxu0 0.0
    %1018 = vmatpush1.xpose.msra.mxu0 0.0
    %1019 = vmatprep.subr.mxu0 0.0
    %1020 = vmatpush1.xpose.msra.mxu0 0.0
    %1021 = vmatprep.subr.mxu0 0.0
    %1022 = vmatpush1.xpose.msra.mxu0 0.0
    %1023 = vmatprep.subr.mxu0 0.0
    %1024 = vmatpush1.xpose.msra.mxu0 0.0
    %1025 = vmatprep.subr.mxu0 0.0
    %1026 = vmatpush1.xpose.msra.mxu0 0.0
    %1027 = vmatprep.subr.mxu0 0.0
    %1028 = vmatpush1.xpose.msra.mxu0 0.0
    %1029 = vmatprep.subr.mxu0 0.0
    %1030 = vmatpush1.xpose.msra.mxu0 0.0
    %1031 = vmatprep.subr.mxu0 0.0
    %1032 = vmatpush1.xpose.msra.mxu0 0.0
    %1033 = vmatprep.subr.mxu0 0.0
    %1034 = vmatpush1.xpose.msra.mxu0 0.0
    %1035 = vmatprep.subr.mxu0 0.0
    %1036 = vmatpush1.xpose.msra.mxu0 0.0
    %1037 = vmatprep.subr.mxu0 0.0
    %1038 = vmatpush1.xpose.msra.mxu0 0.0
    %1039 = vmatprep.subr.mxu0 0.0
    %1040 = vmatpush1.xpose.msra.mxu0 0.0
    %1041 = vmatprep.subr.mxu0 0.0
    %1042 = vmatpush1.xpose.msra.mxu0 0.0
    %1043 = vmatprep.subr.mxu0 0.0
    %1044 = vmatpush1.xpose.msra.mxu0 0.0
    %1045 = vmatprep.subr.mxu0 0.0
    %1046 = vmatpush1.xpose.msra.mxu0 0.0
    %1047 = vmatprep.subr.mxu0 0.0
    %1048 = vmatpush1.xpose.msra.mxu0 0.0
    %1049 = vmatprep.subr.mxu0 0.0
    %1050 = vmatpush1.xpose.msra.mxu0 0.0
    %1051 = vmatprep.subr.mxu0 0.0
    %1052 = vmatpush1.xpose.msra.mxu0 0.0
    %1053 = vmatprep.subr.mxu0 0.0
    %1054 = vmatpush1.xpose.msra.mxu0 0.0
    %1055 = vmatprep.mubr.f32.mxu0 0.0
    %v1056 = vand.u32 %v684, 4294901760
    %1057 = vmatmul.mubr.f32.gmra.mrb[0].mxu0 %v1056
    %v1058 = vpop.f32.mrb[0].mxu0
    %v1059 = vadd.f32 %v985, %v1058
    %v1060 = vpop.f32.mrb[0].mxu0
    %1061 = vdwg.mxu0
    %1062 = vmatprep.subr.mxu0 0.0
    %v1063 = vand.u32 %v686, 4294901760
    %1064 = vmatpush1.xpose.msra.mxu0 %v1063
    %1065 = vmatprep.subr.mxu0 0.0
    %1066 = vmatpush1.xpose.msra.mxu0 0.0
    %1067 = vmatprep.subr.mxu0 0.0
    %1068 = vmatpush1.xpose.msra.mxu0 0.0
    %1069 = vmatprep.subr.mxu0 0.0
    %1070 = vmatpush1.xpose.msra.mxu0 0.0
    %1071 = vmatprep.subr.mxu0 0.0
    %1072 = vmatpush1.xpose.msra.mxu0 0.0
    %1073 = vmatprep.subr.mxu0 0.0
    %1074 = vmatpush1.xpose.msra.mxu0 0.0
    %1075 = vmatprep.subr.mxu0 0.0
    %1076 = vmatpush1.xpose.msra.mxu0 0.0
    %1077 = vmatprep.subr.mxu0 0.0
    %1078 = vmatpush1.xpose.msra.mxu0 0.0
    %1079 = vmatprep.subr.mxu0 0.0
    %1080 = vmatpush1.xpose.msra.mxu0 0.0
    %1081 = vmatprep.subr.mxu0 0.0
    %1082 = vmatpush1.xpose.msra.mxu0 0.0
    %1083 = vmatprep.subr.mxu0 0.0
    %1084 = vmatpush1.xpose.msra.mxu0 0.0
    %1085 = vmatprep.subr.mxu0 0.0
    %1086 = vmatpush1.xpose.msra.mxu0 0.0
    %1087 = vmatprep.subr.mxu0 0.0
    %1088 = vmatpush1.xpose.msra.mxu0 0.0
    %1089 = vmatprep.subr.mxu0 0.0
    %1090 = vmatpush1.xpose.msra.mxu0 0.0
    %1091 = vmatprep.subr.mxu0 0.0
    %1092 = vmatpush1.xpose.msra.mxu0 0.0
    %1093 = vmatprep.subr.mxu0 0.0
    %1094 = vmatpush1.xpose.msra.mxu0 0.0
    %1095 = vmatprep.subr.mxu0 0.0
    %1096 = vmatpush1.xpose.msra.mxu0 0.0
    %1097 = vmatprep.subr.mxu0 0.0
    %1098 = vmatpush1.xpose.msra.mxu0 0.0
    %1099 = vmatprep.subr.mxu0 0.0
    %1100 = vmatpush1.xpose.msra.mxu0 0.0
    %1101 = vmatprep.subr.mxu0 0.0
    %1102 = vmatpush1.xpose.msra.mxu0 0.0
    %1103 = vmatprep.subr.mxu0 0.0
    %1104 = vmatpush1.xpose.msra.mxu0 0.0
    %1105 = vmatprep.subr.mxu0 0.0
    %1106 = vmatpush1.xpose.msra.mxu0 0.0
    %1107 = vmatprep.subr.mxu0 0.0
    %1108 = vmatpush1.xpose.msra.mxu0 0.0
    %1109 = vmatprep.subr.mxu0 0.0
    %1110 = vmatpush1.xpose.msra.mxu0 0.0
    %1111 = vmatprep.subr.mxu0 0.0
    %1112 = vmatpush1.xpose.msra.mxu0 0.0
    %1113 = vmatprep.subr.mxu0 0.0
    %1114 = vmatpush1.xpose.msra.mxu0 0.0
    %1115 = vmatprep.subr.mxu0 0.0
    %1116 = vmatpush1.xpose.msra.mxu0 0.0
    %1117 = vmatprep.subr.mxu0 0.0
    %1118 = vmatpush1.xpose.msra.mxu0 0.0
    %1119 = vmatprep.subr.mxu0 0.0
    %1120 = vmatpush1.xpose.msra.mxu0 0.0
    %1121 = vmatprep.subr.mxu0 0.0
    %1122 = vmatpush1.xpose.msra.mxu0 0.0
    %1123 = vmatprep.subr.mxu0 0.0
    %1124 = vmatpush1.xpose.msra.mxu0 0.0
    %1125 = vmatprep.subr.mxu0 0.0
    %1126 = vmatpush1.xpose.msra.mxu0 0.0
    %1127 = vmatprep.mubr.f32.mxu0 0.0
    %v1128 = vand.u32 %v684, 4294901760
    %1129 = vmatmul.mubr.f32.gmra.mrb[0].mxu0 %v1128
    %v1130 = vpop.f32.mrb[0].mxu0
    %v1131 = vadd.f32 %v1059, %v1130
    %v1132 = vpop.f32.mrb[0].mxu0
    %1133 = vdwg.mxu0
    %vm1134 = vcmp.gt.f32.partialorder %v678, 0.0
    %v1135 = vsel %vm1134, %v1131, -3.4e+38
    %v1136 = vsel %vm683, %v1135, -inf
    %1137 = vmax.xlane.f32.xlu0 %v1136
    %v1138 = vpop.xlane.xlu0 %1137
    %v1139 = vsub.f32 %v1135, %v1138
    %v1140 = vmul.f32 %v1139, 1.442695
    %v1141 = vpow.pop %v1140
    %v1142 = vmul.f32 %v1141, %v678
    %v1143 = vsel %vm683, %v1142, 0.0
    %1144 = vadd.xlane.f32.xlu0 %v1143
    %v1145 = vpop.xlane.xlu0 %1144
    %v1146 = vmax.f32 %v1145, 1e-30
    %v1147 = vrcp.pop %v1146
    %v1148 = vmul.f32 %v1142, %v1147
    %1149 = vrot.lane.b32.xlu0 %v661, 64
    %v1150 = vpop.permute.xlu0 %1149
    %v1153 = vsel %vm683, %v1148, 0
    %1155 = vmatprep.subr.mxu0 0.0
    %v1156 = vand.u32 %v1150, 4294901760
    %1157 = vmatpush1.msra.mxu0 %v1156
    %1158 = vmatprep.subr.mxu0 0.0
    %1159 = vmatpush1.msra.mxu0 0.0
    %1160 = vmatprep.subr.mxu0 0.0
    %1161 = vmatpush1.msra.mxu0 0.0
    %1162 = vmatprep.subr.mxu0 0.0
    %1163 = vmatpush1.msra.mxu0 0.0
    %1164 = vmatprep.subr.mxu0 0.0
    %1165 = vmatpush1.msra.mxu0 0.0
    %1166 = vmatprep.subr.mxu0 0.0
    %1167 = vmatpush1.msra.mxu0 0.0
    %1168 = vmatprep.subr.mxu0 0.0
    %1169 = vmatpush1.msra.mxu0 0.0
    %1170 = vmatprep.subr.mxu0 0.0
    %1171 = vmatpush1.msra.mxu0 0.0
    %1172 = vmatprep.subr.mxu0 0.0
    %1173 = vmatpush1.msra.mxu0 0.0
    %1174 = vmatprep.subr.mxu0 0.0
    %1175 = vmatpush1.msra.mxu0 0.0
    %1176 = vmatprep.subr.mxu0 0.0
    %1177 = vmatpush1.msra.mxu0 0.0
    %1178 = vmatprep.subr.mxu0 0.0
    %1179 = vmatpush1.msra.mxu0 0.0
    %1180 = vmatprep.subr.mxu0 0.0
    %1181 = vmatpush1.msra.mxu0 0.0
    %1182 = vmatprep.subr.mxu0 0.0
    %1183 = vmatpush1.msra.mxu0 0.0
    %1184 = vmatprep.subr.mxu0 0.0
    %1185 = vmatpush1.msra.mxu0 0.0
    %1186 = vmatprep.subr.mxu0 0.0
    %1187 = vmatpush1.msra.mxu0 0.0
    %1188 = vmatprep.subr.mxu0 0.0
    %1189 = vmatpush1.msra.mxu0 0.0
    %1190 = vmatprep.subr.mxu0 0.0
    %1191 = vmatpush1.msra.mxu0 0.0
    %1192 = vmatprep.subr.mxu0 0.0
    %1193 = vmatpush1.msra.mxu0 0.0
    %1194 = vmatprep.subr.mxu0 0.0
    %1195 = vmatpush1.msra.mxu0 0.0
    %1196 = vmatprep.subr.mxu0 0.0
    %1197 = vmatpush1.msra.mxu0 0.0
    %1198 = vmatprep.subr.mxu0 0.0
    %1199 = vmatpush1.msra.mxu0 0.0
    %1200 = vmatprep.subr.mxu0 0.0
    %1201 = vmatpush1.msra.mxu0 0.0
    %1202 = vmatprep.subr.mxu0 0.0
    %1203 = vmatpush1.msra.mxu0 0.0
    %1204 = vmatprep.subr.mxu0 0.0
    %1205 = vmatpush1.msra.mxu0 0.0
    %1206 = vmatprep.subr.mxu0 0.0
    %1207 = vmatpush1.msra.mxu0 0.0
    %1208 = vmatprep.subr.mxu0 0.0
    %1209 = vmatpush1.msra.mxu0 0.0
    %1210 = vmatprep.subr.mxu0 0.0
    %1211 = vmatpush1.msra.mxu0 0.0
    %1212 = vmatprep.subr.mxu0 0.0
    %1213 = vmatpush1.msra.mxu0 0.0
    %1214 = vmatprep.subr.mxu0 0.0
    %1215 = vmatpush1.msra.mxu0 0.0
    %1216 = vmatprep.subr.mxu0 0.0
    %1217 = vmatpush1.msra.mxu0 0.0
    %1218 = vmatprep.subr.mxu0 0.0
    %1219 = vmatpush1.msra.mxu0 0.0
    %1220 = vmatprep.mubr.f32.mxu0 0.0
    %v1221 = vand.u32 %v1153, 4294901760
    %v1222 = vsub.f32 %v1153, %v1221
    %v1223 = vand.u32 %v1222, 4294901760
    %v1224 = vsub.f32 %v1222, %v1223
    %v1225 = vand.u32 %v1224, 4294901760
    %1226 = vmatmul.mubr.f32.gmra.mrb[0].mxu0 %v1225
    %v1227 = vpop.f32.mrb[0].mxu0
    %v1228 = vadd.f32 0.0, %v1227
    %v1229 = vpop.f32.mrb[0].mxu0
    %1230 = vdwg.mxu0
    %1231 = vmatprep.subr.mxu0 0.0
    %v1232 = vand.u32 %v1150, 4294901760
    %v1233 = vsub.f32 %v1150, %v1232
    %v1234 = vand.u32 %v1233, 4294901760
    %v1235 = vsub.f32 %v1233, %v1234
    %v1236 = vand.u32 %v1235, 4294901760
    %1237 = vmatpush1.msra.mxu0 %v1236
    %1238 = vmatprep.subr.mxu0 0.0
    %1239 = vmatpush1.msra.mxu0 0.0
    %1240 = vmatprep.subr.mxu0 0.0
    %1241 = vmatpush1.msra.mxu0 0.0
    %1242 = vmatprep.subr.mxu0 0.0
    %1243 = vmatpush1.msra.mxu0 0.0
    %1244 = vmatprep.subr.mxu0 0.0
    %1245 = vmatpush1.msra.mxu0 0.0
    %1246 = vmatprep.subr.mxu0 0.0
    %1247 = vmatpush1.msra.mxu0 0.0
    %1248 = vmatprep.subr.mxu0 0.0
    %1249 = vmatpush1.msra.mxu0 0.0
    %1250 = vmatprep.subr.mxu0 0.0
    %1251 = vmatpush1.msra.mxu0 0.0
    %1252 = vmatprep.subr.mxu0 0.0
    %1253 = vmatpush1.msra.mxu0 0.0
    %1254 = vmatprep.subr.mxu0 0.0
    %1255 = vmatpush1.msra.mxu0 0.0
    %1256 = vmatprep.subr.mxu0 0.0
    %1257 = vmatpush1.msra.mxu0 0.0
    %1258 = vmatprep.subr.mxu0 0.0
    %1259 = vmatpush1.msra.mxu0 0.0
    %1260 = vmatprep.subr.mxu0 0.0
    %1261 = vmatpush1.msra.mxu0 0.0
    %1262 = vmatprep.subr.mxu0 0.0
    %1263 = vmatpush1.msra.mxu0 0.0
    %1264 = vmatprep.subr.mxu0 0.0
    %1265 = vmatpush1.msra.mxu0 0.0
    %1266 = vmatprep.subr.mxu0 0.0
    %1267 = vmatpush1.msra.mxu0 0.0
    %1268 = vmatprep.subr.mxu0 0.0
    %1269 = vmatpush1.msra.mxu0 0.0
    %1270 = vmatprep.subr.mxu0 0.0
    %1271 = vmatpush1.msra.mxu0 0.0
    %1272 = vmatprep.subr.mxu0 0.0
    %1273 = vmatpush1.msra.mxu0 0.0
    %1274 = vmatprep.subr.mxu0 0.0
    %1275 = vmatpush1.msra.mxu0 0.0
    %1276 = vmatprep.subr.mxu0 0.0
    %1277 = vmatpush1.msra.mxu0 0.0
    %1278 = vmatprep.subr.mxu0 0.0
    %1279 = vmatpush1.msra.mxu0 0.0
    %1280 = vmatprep.subr.mxu0 0.0
    %1281 = vmatpush1.msra.mxu0 0.0
    %1282 = vmatprep.subr.mxu0 0.0
    %1283 = vmatpush1.msra.mxu0 0.0
    %1284 = vmatprep.subr.mxu0 0.0
    %1285 = vmatpush1.msra.mxu0 0.0
    %1286 = vmatprep.subr.mxu0 0.0
    %1287 = vmatpush1.msra.mxu0 0.0
    %1288 = vmatprep.subr.mxu0 0.0
    %1289 = vmatpush1.msra.mxu0 0.0
    %1290 = vmatprep.subr.mxu0 0.0
    %1291 = vmatpush1.msra.mxu0 0.0
    %1292 = vmatprep.subr.mxu0 0.0
    %1293 = vmatpush1.msra.mxu0 0.0
    %1294 = vmatprep.subr.mxu0 0.0
    %1295 = vmatpush1.msra.mxu0 0.0
    %1296 = vmatprep.subr.mxu0 0.0
    %1297 = vmatpush1.msra.mxu0 0.0
    %1298 = vmatprep.subr.mxu0 0.0
    %1299 = vmatpush1.msra.mxu0 0.0
    %1300 = vmatprep.mubr.f32.mxu0 0.0
    %v1301 = vand.u32 %v1153, 4294901760
    %1302 = vmatmul.mubr.f32.gmra.mrb[0].mxu0 %v1301
    %v1303 = vpop.f32.mrb[0].mxu0
    %v1304 = vadd.f32 %v1228, %v1303
    %v1305 = vpop.f32.mrb[0].mxu0
    %1306 = vdwg.mxu0
    %1307 = vmatprep.subr.mxu0 0.0
    %v1308 = vand.u32 %v1150, 4294901760
    %v1309 = vsub.f32 %v1150, %v1308
    %1310 = vmatpush1.msra.mxu0 %v1309
    %1311 = vmatprep.subr.mxu0 0.0
    %1312 = vmatpush1.msra.mxu0 0.0
    %1313 = vmatprep.subr.mxu0 0.0
    %1314 = vmatpush1.msra.mxu0 0.0
    %1315 = vmatprep.subr.mxu0 0.0
    %1316 = vmatpush1.msra.mxu0 0.0
    %1317 = vmatprep.subr.mxu0 0.0
    %1318 = vmatpush1.msra.mxu0 0.0
    %1319 = vmatprep.subr.mxu0 0.0
    %1320 = vmatpush1.msra.mxu0 0.0
    %1321 = vmatprep.subr.mxu0 0.0
    %1322 = vmatpush1.msra.mxu0 0.0
    %1323 = vmatprep.subr.mxu0 0.0
    %1324 = vmatpush1.msra.mxu0 0.0
    %1325 = vmatprep.subr.mxu0 0.0
    %1326 = vmatpush1.msra.mxu0 0.0
    %1327 = vmatprep.subr.mxu0 0.0
    %1328 = vmatpush1.msra.mxu0 0.0
    %1329 = vmatprep.subr.mxu0 0.0
    %1330 = vmatpush1.msra.mxu0 0.0
    %1331 = vmatprep.subr.mxu0 0.0
    %1332 = vmatpush1.msra.mxu0 0.0
    %1333 = vmatprep.subr.mxu0 0.0
    %1334 = vmatpush1.msra.mxu0 0.0
    %1335 = vmatprep.subr.mxu0 0.0
    %1336 = vmatpush1.msra.mxu0 0.0
    %1337 = vmatprep.subr.mxu0 0.0
    %1338 = vmatpush1.msra.mxu0 0.0
    %1339 = vmatprep.subr.mxu0 0.0
    %1340 = vmatpush1.msra.mxu0 0.0
    %1341 = vmatprep.subr.mxu0 0.0
    %1342 = vmatpush1.msra.mxu0 0.0
    %1343 = vmatprep.subr.mxu0 0.0
    %1344 = vmatpush1.msra.mxu0 0.0
    %1345 = vmatprep.subr.mxu0 0.0
    %1346 = vmatpush1.msra.mxu0 0.0
    %1347 = vmatprep.subr.mxu0 0.0
    %1348 = vmatpush1.msra.mxu0 0.0
    %1349 = vmatprep.subr.mxu0 0.0
    %1350 = vmatpush1.msra.mxu0 0.0
    %1351 = vmatprep.subr.mxu0 0.0
    %1352 = vmatpush1.msra.mxu0 0.0
    %1353 = vmatprep.subr.mxu0 0.0
    %1354 = vmatpush1.msra.mxu0 0.0
    %1355 = vmatprep.subr.mxu0 0.0
    %1356 = vmatpush1.msra.mxu0 0.0
    %1357 = vmatprep.subr.mxu0 0.0
    %1358 = vmatpush1.msra.mxu0 0.0
    %1359 = vmatprep.subr.mxu0 0.0
    %1360 = vmatpush1.msra.mxu0 0.0
    %1361 = vmatprep.subr.mxu0 0.0
    %1362 = vmatpush1.msra.mxu0 0.0
    %1363 = vmatprep.subr.mxu0 0.0
    %1364 = vmatpush1.msra.mxu0 0.0
    %1365 = vmatprep.subr.mxu0 0.0
    %1366 = vmatpush1.msra.mxu0 0.0
    %1367 = vmatprep.subr.mxu0 0.0
    %1368 = vmatpush1.msra.mxu0 0.0
    %1369 = vmatprep.subr.mxu0 0.0
    %1370 = vmatpush1.msra.mxu0 0.0
    %1371 = vmatprep.subr.mxu0 0.0
    %1372 = vmatpush1.msra.mxu0 0.0
    %1373 = vmatprep.mubr.f32.mxu0 0.0
    %v1374 = vand.u32 %v1153, 4294901760
    %v1375 = vsub.f32 %v1153, %v1374
    %1376 = vmatmul.mubr.f32.gmra.mrb[0].mxu0 %v1375
    %v1377 = vpop.f32.mrb[0].mxu0
    %v1378 = vadd.f32 %v1304, %v1377
    %v1379 = vpop.f32.mrb[0].mxu0
    %1380 = vdwg.mxu0
    %1381 = vmatprep.subr.mxu0 0.0
    %v1382 = vand.u32 %v1150, 4294901760
    %1383 = vmatpush1.msra.mxu0 %v1382
    %1384 = vmatprep.subr.mxu0 0.0
    %1385 = vmatpush1.msra.mxu0 0.0
    %1386 = vmatprep.subr.mxu0 0.0
    %1387 = vmatpush1.msra.mxu0 0.0
    %1388 = vmatprep.subr.mxu0 0.0
    %1389 = vmatpush1.msra.mxu0 0.0
    %1390 = vmatprep.subr.mxu0 0.0
    %1391 = vmatpush1.msra.mxu0 0.0
    %1392 = vmatprep.subr.mxu0 0.0
    %1393 = vmatpush1.msra.mxu0 0.0
    %1394 = vmatprep.subr.mxu0 0.0
    %1395 = vmatpush1.msra.mxu0 0.0
    %1396 = vmatprep.subr.mxu0 0.0
    %1397 = vmatpush1.msra.mxu0 0.0
    %1398 = vmatprep.subr.mxu0 0.0
    %1399 = vmatpush1.msra.mxu0 0.0
    %1400 = vmatprep.subr.mxu0 0.0
    %1401 = vmatpush1.msra.mxu0 0.0
    %1402 = vmatprep.subr.mxu0 0.0
    %1403 = vmatpush1.msra.mxu0 0.0
    %1404 = vmatprep.subr.mxu0 0.0
    %1405 = vmatpush1.msra.mxu0 0.0
    %1406 = vmatprep.subr.mxu0 0.0
    %1407 = vmatpush1.msra.mxu0 0.0
    %1408 = vmatprep.subr.mxu0 0.0
    %1409 = vmatpush1.msra.mxu0 0.0
    %1410 = vmatprep.subr.mxu0 0.0
    %1411 = vmatpush1.msra.mxu0 0.0
    %1412 = vmatprep.subr.mxu0 0.0
    %1413 = vmatpush1.msra.mxu0 0.0
    %1414 = vmatprep.subr.mxu0 0.0
    %1415 = vmatpush1.msra.mxu0 0.0
    %1416 = vmatprep.subr.mxu0 0.0
    %1417 = vmatpush1.msra.mxu0 0.0
    %1418 = vmatprep.subr.mxu0 0.0
    %1419 = vmatpush1.msra.mxu0 0.0
    %1420 = vmatprep.subr.mxu0 0.0
    %1421 = vmatpush1.msra.mxu0 0.0
    %1422 = vmatprep.subr.mxu0 0.0
    %1423 = vmatpush1.msra.mxu0 0.0
    %1424 = vmatprep.subr.mxu0 0.0
    %1425 = vmatpush1.msra.mxu0 0.0
    %1426 = vmatprep.subr.mxu0 0.0
    %1427 = vmatpush1.msra.mxu0 0.0
    %1428 = vmatprep.subr.mxu0 0.0
    %1429 = vmatpush1.msra.mxu0 0.0
    %1430 = vmatprep.subr.mxu0 0.0
    %1431 = vmatpush1.msra.mxu0 0.0
    %1432 = vmatprep.subr.mxu0 0.0
    %1433 = vmatpush1.msra.mxu0 0.0
    %1434 = vmatprep.subr.mxu0 0.0
    %1435 = vmatpush1.msra.mxu0 0.0
    %1436 = vmatprep.subr.mxu0 0.0
    %1437 = vmatpush1.msra.mxu0 0.0
    %1438 = vmatprep.subr.mxu0 0.0
    %1439 = vmatpush1.msra.mxu0 0.0
    %1440 = vmatprep.subr.mxu0 0.0
    %1441 = vmatpush1.msra.mxu0 0.0
    %1442 = vmatprep.subr.mxu0 0.0
    %1443 = vmatpush1.msra.mxu0 0.0
    %1444 = vmatprep.subr.mxu0 0.0
    %1445 = vmatpush1.msra.mxu0 0.0
    %1446 = vmatprep.mubr.f32.mxu0 0.0
    %v1447 = vand.u32 %v1153, 4294901760
    %v1448 = vsub.f32 %v1153, %v1447
    %v1449 = vand.u32 %v1448, 4294901760
    %1450 = vmatmul.mubr.f32.gmra.mrb[0].mxu0 %v1449
    %v1451 = vpop.f32.mrb[0].mxu0
    %v1452 = vadd.f32 %v1378, %v1451
    %v1453 = vpop.f32.mrb[0].mxu0
    %1454 = vdwg.mxu0
    %1455 = vmatprep.subr.mxu0 0.0
    %v1456 = vand.u32 %v1150, 4294901760
    %v1457 = vsub.f32 %v1150, %v1456
    %v1458 = vand.u32 %v1457, 4294901760
    %1459 = vmatpush1.msra.mxu0 %v1458
    %1460 = vmatprep.subr.mxu0 0.0
    %1461 = vmatpush1.msra.mxu0 0.0
    %1462 = vmatprep.subr.mxu0 0.0
    %1463 = vmatpush1.msra.mxu0 0.0
    %1464 = vmatprep.subr.mxu0 0.0
    %1465 = vmatpush1.msra.mxu0 0.0
    %1466 = vmatprep.subr.mxu0 0.0
    %1467 = vmatpush1.msra.mxu0 0.0
    %1468 = vmatprep.subr.mxu0 0.0
    %1469 = vmatpush1.msra.mxu0 0.0
    %1470 = vmatprep.subr.mxu0 0.0
    %1471 = vmatpush1.msra.mxu0 0.0
    %1472 = vmatprep.subr.mxu0 0.0
    %1473 = vmatpush1.msra.mxu0 0.0
    %1474 = vmatprep.subr.mxu0 0.0
    %1475 = vmatpush1.msra.mxu0 0.0
    %1476 = vmatprep.subr.mxu0 0.0
    %1477 = vmatpush1.msra.mxu0 0.0
    %1478 = vmatprep.subr.mxu0 0.0
    %1479 = vmatpush1.msra.mxu0 0.0
    %1480 = vmatprep.subr.mxu0 0.0
    %1481 = vmatpush1.msra.mxu0 0.0
    %1482 = vmatprep.subr.mxu0 0.0
    %1483 = vmatpush1.msra.mxu0 0.0
    %1484 = vmatprep.subr.mxu0 0.0
    %1485 = vmatpush1.msra.mxu0 0.0
    %1486 = vmatprep.subr.mxu0 0.0
    %1487 = vmatpush1.msra.mxu0 0.0
    %1488 = vmatprep.subr.mxu0 0.0
    %1489 = vmatpush1.msra.mxu0 0.0
    %1490 = vmatprep.subr.mxu0 0.0
    %1491 = vmatpush1.msra.mxu0 0.0
    %1492 = vmatprep.subr.mxu0 0.0
    %1493 = vmatpush1.msra.mxu0 0.0
    %1494 = vmatprep.subr.mxu0 0.0
    %1495 = vmatpush1.msra.mxu0 0.0
    %1496 = vmatprep.subr.mxu0 0.0
    %1497 = vmatpush1.msra.mxu0 0.0
    %1498 = vmatprep.subr.mxu0 0.0
    %1499 = vmatpush1.msra.mxu0 0.0
    %1500 = vmatprep.subr.mxu0 0.0
    %1501 = vmatpush1.msra.mxu0 0.0
    %1502 = vmatprep.subr.mxu0 0.0
    %1503 = vmatpush1.msra.mxu0 0.0
    %1504 = vmatprep.subr.mxu0 0.0
    %1505 = vmatpush1.msra.mxu0 0.0
    %1506 = vmatprep.subr.mxu0 0.0
    %1507 = vmatpush1.msra.mxu0 0.0
    %1508 = vmatprep.subr.mxu0 0.0
    %1509 = vmatpush1.msra.mxu0 0.0
    %1510 = vmatprep.subr.mxu0 0.0
    %1511 = vmatpush1.msra.mxu0 0.0
    %1512 = vmatprep.subr.mxu0 0.0
    %1513 = vmatpush1.msra.mxu0 0.0
    %1514 = vmatprep.subr.mxu0 0.0
    %1515 = vmatpush1.msra.mxu0 0.0
    %1516 = vmatprep.subr.mxu0 0.0
    %1517 = vmatpush1.msra.mxu0 0.0
    %1518 = vmatprep.subr.mxu0 0.0
    %1519 = vmatpush1.msra.mxu0 0.0
    %1520 = vmatprep.subr.mxu0 0.0
    %1521 = vmatpush1.msra.mxu0 0.0
    %1522 = vmatprep.mubr.f32.mxu0 0.0
    %v1523 = vand.u32 %v1153, 4294901760
    %1524 = vmatmul.mubr.f32.gmra.mrb[0].mxu0 %v1523
    %v1525 = vpop.f32.mrb[0].mxu0
    %v1526 = vadd.f32 %v1452, %v1525
    %v1527 = vpop.f32.mrb[0].mxu0
    %1528 = vdwg.mxu0
    %1529 = vmatprep.subr.mxu0 0.0
    %v1530 = vand.u32 %v1150, 4294901760
    %1531 = vmatpush1.msra.mxu0 %v1530
    %1532 = vmatprep.subr.mxu0 0.0
    %1533 = vmatpush1.msra.mxu0 0.0
    %1534 = vmatprep.subr.mxu0 0.0
    %1535 = vmatpush1.msra.mxu0 0.0
    %1536 = vmatprep.subr.mxu0 0.0
    %1537 = vmatpush1.msra.mxu0 0.0
    %1538 = vmatprep.subr.mxu0 0.0
    %1539 = vmatpush1.msra.mxu0 0.0
    %1540 = vmatprep.subr.mxu0 0.0
    %1541 = vmatpush1.msra.mxu0 0.0
    %1542 = vmatprep.subr.mxu0 0.0
    %1543 = vmatpush1.msra.mxu0 0.0
    %1544 = vmatprep.subr.mxu0 0.0
    %1545 = vmatpush1.msra.mxu0 0.0
    %1546 = vmatprep.subr.mxu0 0.0
    %1547 = vmatpush1.msra.mxu0 0.0
    %1548 = vmatprep.subr.mxu0 0.0
    %1549 = vmatpush1.msra.mxu0 0.0
    %1550 = vmatprep.subr.mxu0 0.0
    %1551 = vmatpush1.msra.mxu0 0.0
    %1552 = vmatprep.subr.mxu0 0.0
    %1553 = vmatpush1.msra.mxu0 0.0
    %1554 = vmatprep.subr.mxu0 0.0
    %1555 = vmatpush1.msra.mxu0 0.0
    %1556 = vmatprep.subr.mxu0 0.0
    %1557 = vmatpush1.msra.mxu0 0.0
    %1558 = vmatprep.subr.mxu0 0.0
    %1559 = vmatpush1.msra.mxu0 0.0
    %1560 = vmatprep.subr.mxu0 0.0
    %1561 = vmatpush1.msra.mxu0 0.0
    %1562 = vmatprep.subr.mxu0 0.0
    %1563 = vmatpush1.msra.mxu0 0.0
    %1564 = vmatprep.subr.mxu0 0.0
    %1565 = vmatpush1.msra.mxu0 0.0
    %1566 = vmatprep.subr.mxu0 0.0
    %1567 = vmatpush1.msra.mxu0 0.0
    %1568 = vmatprep.subr.mxu0 0.0
    %1569 = vmatpush1.msra.mxu0 0.0
    %1570 = vmatprep.subr.mxu0 0.0
    %1571 = vmatpush1.msra.mxu0 0.0
    %1572 = vmatprep.subr.mxu0 0.0
    %1573 = vmatpush1.msra.mxu0 0.0
    %1574 = vmatprep.subr.mxu0 0.0
    %1575 = vmatpush1.msra.mxu0 0.0
    %1576 = vmatprep.subr.mxu0 0.0
    %1577 = vmatpush1.msra.mxu0 0.0
    %1578 = vmatprep.subr.mxu0 0.0
    %1579 = vmatpush1.msra.mxu0 0.0
    %1580 = vmatprep.subr.mxu0 0.0
    %1581 = vmatpush1.msra.mxu0 0.0
    %1582 = vmatprep.subr.mxu0 0.0
    %1583 = vmatpush1.msra.mxu0 0.0
    %1584 = vmatprep.subr.mxu0 0.0
    %1585 = vmatpush1.msra.mxu0 0.0
    %1586 = vmatprep.subr.mxu0 0.0
    %1587 = vmatpush1.msra.mxu0 0.0
    %1588 = vmatprep.subr.mxu0 0.0
    %1589 = vmatpush1.msra.mxu0 0.0
    %1590 = vmatprep.subr.mxu0 0.0
    %1591 = vmatpush1.msra.mxu0 0.0
    %1592 = vmatprep.subr.mxu0 0.0
    %1593 = vmatpush1.msra.mxu0 0.0
    %1594 = vmatprep.mubr.f32.mxu0 0.0
    %v1595 = vand.u32 %v1153, 4294901760
    %1596 = vmatmul.mubr.f32.gmra.mrb[0].mxu0 %v1595
    %v1597 = vpop.f32.mrb[0].mxu0
    %v1598 = vadd.f32 %v1526, %v1597
    %v1599 = vpop.f32.mrb[0].mxu0
    %1600 = vdwg.mxu0
    %1601 = vrot.lane.b32.xlu0 %v661, 120
    %v1602 = vpop.permute.xlu0 %1601
    %1603 = vrot.lane.b32.xlu0 %v661, 88
    %v1604 = vpop.permute.xlu0 %1603
    %v1605 = vsel %vm683, %v1602, 0
    %v1607 = vsel %vm683, %v1604, 0
    %1609 = vmatprep.subr.mxu0 0.0
    %v1610 = vand.u32 %v1607, 4294901760
    %1611 = vmatpush1.xpose.msra.mxu0 %v1610
    %1612 = vmatprep.subr.mxu0 0.0
    %1613 = vmatpush1.xpose.msra.mxu0 0.0
    %1614 = vmatprep.subr.mxu0 0.0
    %1615 = vmatpush1.xpose.msra.mxu0 0.0
    %1616 = vmatprep.subr.mxu0 0.0
    %1617 = vmatpush1.xpose.msra.mxu0 0.0
    %1618 = vmatprep.subr.mxu0 0.0
    %1619 = vmatpush1.xpose.msra.mxu0 0.0
    %1620 = vmatprep.subr.mxu0 0.0
    %1621 = vmatpush1.xpose.msra.mxu0 0.0
    %1622 = vmatprep.subr.mxu0 0.0
    %1623 = vmatpush1.xpose.msra.mxu0 0.0
    %1624 = vmatprep.subr.mxu0 0.0
    %1625 = vmatpush1.xpose.msra.mxu0 0.0
    %1626 = vmatprep.subr.mxu0 0.0
    %1627 = vmatpush1.xpose.msra.mxu0 0.0
    %1628 = vmatprep.subr.mxu0 0.0
    %1629 = vmatpush1.xpose.msra.mxu0 0.0
    %1630 = vmatprep.subr.mxu0 0.0
    %1631 = vmatpush1.xpose.msra.mxu0 0.0
    %1632 = vmatprep.subr.mxu0 0.0
    %1633 = vmatpush1.xpose.msra.mxu0 0.0
    %1634 = vmatprep.subr.mxu0 0.0
    %1635 = vmatpush1.xpose.msra.mxu0 0.0
    %1636 = vmatprep.subr.mxu0 0.0
    %1637 = vmatpush1.xpose.msra.mxu0 0.0
    %1638 = vmatprep.subr.mxu0 0.0
    %1639 = vmatpush1.xpose.msra.mxu0 0.0
    %1640 = vmatprep.subr.mxu0 0.0
    %1641 = vmatpush1.xpose.msra.mxu0 0.0
    %1642 = vmatprep.subr.mxu0 0.0
    %1643 = vmatpush1.xpose.msra.mxu0 0.0
    %1644 = vmatprep.subr.mxu0 0.0
    %1645 = vmatpush1.xpose.msra.mxu0 0.0
    %1646 = vmatprep.subr.mxu0 0.0
    %1647 = vmatpush1.xpose.msra.mxu0 0.0
    %1648 = vmatprep.subr.mxu0 0.0
    %1649 = vmatpush1.xpose.msra.mxu0 0.0
    %1650 = vmatprep.subr.mxu0 0.0
    %1651 = vmatpush1.xpose.msra.mxu0 0.0
    %1652 = vmatprep.subr.mxu0 0.0
    %1653 = vmatpush1.xpose.msra.mxu0 0.0
    %1654 = vmatprep.subr.mxu0 0.0
    %1655 = vmatpush1.xpose.msra.mxu0 0.0
    %1656 = vmatprep.subr.mxu0 0.0
    %1657 = vmatpush1.xpose.msra.mxu0 0.0
    %1658 = vmatprep.subr.mxu0 0.0
    %1659 = vmatpush1.xpose.msra.mxu0 0.0
    %1660 = vmatprep.subr.mxu0 0.0
    %1661 = vmatpush1.xpose.msra.mxu0 0.0
    %1662 = vmatprep.subr.mxu0 0.0
    %1663 = vmatpush1.xpose.msra.mxu0 0.0
    %1664 = vmatprep.subr.mxu0 0.0
    %1665 = vmatpush1.xpose.msra.mxu0 0.0
    %1666 = vmatprep.subr.mxu0 0.0
    %1667 = vmatpush1.xpose.msra.mxu0 0.0
    %1668 = vmatprep.subr.mxu0 0.0
    %1669 = vmatpush1.xpose.msra.mxu0 0.0
    %1670 = vmatprep.subr.mxu0 0.0
    %1671 = vmatpush1.xpose.msra.mxu0 0.0
    %1672 = vmatprep.subr.mxu0 0.0
    %1673 = vmatpush1.xpose.msra.mxu0 0.0
    %1674 = vmatprep.mubr.f32.mxu0 0.0
    %v1675 = vand.u32 %v1605, 4294901760
    %v1676 = vsub.f32 %v1605, %v1675
    %v1677 = vand.u32 %v1676, 4294901760
    %v1678 = vsub.f32 %v1676, %v1677
    %v1679 = vand.u32 %v1678, 4294901760
    %1680 = vmatmul.mubr.f32.gmra.mrb[0].mxu0 %v1679
    %v1681 = vpop.f32.mrb[0].mxu0
    %v1682 = vadd.f32 0.0, %v1681
    %v1683 = vpop.f32.mrb[0].mxu0
    %1684 = vdwg.mxu0
    %1685 = vmatprep.subr.mxu0 0.0
    %v1686 = vand.u32 %v1607, 4294901760
    %v1687 = vsub.f32 %v1607, %v1686
    %v1688 = vand.u32 %v1687, 4294901760
    %v1689 = vsub.f32 %v1687, %v1688
    %v1690 = vand.u32 %v1689, 4294901760
    %1691 = vmatpush1.xpose.msra.mxu0 %v1690
    %1692 = vmatprep.subr.mxu0 0.0
    %1693 = vmatpush1.xpose.msra.mxu0 0.0
    %1694 = vmatprep.subr.mxu0 0.0
    %1695 = vmatpush1.xpose.msra.mxu0 0.0
    %1696 = vmatprep.subr.mxu0 0.0
    %1697 = vmatpush1.xpose.msra.mxu0 0.0
    %1698 = vmatprep.subr.mxu0 0.0
    %1699 = vmatpush1.xpose.msra.mxu0 0.0
    %1700 = vmatprep.subr.mxu0 0.0
    %1701 = vmatpush1.xpose.msra.mxu0 0.0
    %1702 = vmatprep.subr.mxu0 0.0
    %1703 = vmatpush1.xpose.msra.mxu0 0.0
    %1704 = vmatprep.subr.mxu0 0.0
    %1705 = vmatpush1.xpose.msra.mxu0 0.0
    %1706 = vmatprep.subr.mxu0 0.0
    %1707 = vmatpush1.xpose.msra.mxu0 0.0
    %1708 = vmatprep.subr.mxu0 0.0
    %1709 = vmatpush1.xpose.msra.mxu0 0.0
    %1710 = vmatprep.subr.mxu0 0.0
    %1711 = vmatpush1.xpose.msra.mxu0 0.0
    %1712 = vmatprep.subr.mxu0 0.0
    %1713 = vmatpush1.xpose.msra.mxu0 0.0
    %1714 = vmatprep.subr.mxu0 0.0
    %1715 = vmatpush1.xpose.msra.mxu0 0.0
    %1716 = vmatprep.subr.mxu0 0.0
    %1717 = vmatpush1.xpose.msra.mxu0 0.0
    %1718 = vmatprep.subr.mxu0 0.0
    %1719 = vmatpush1.xpose.msra.mxu0 0.0
    %1720 = vmatprep.subr.mxu0 0.0
    %1721 = vmatpush1.xpose.msra.mxu0 0.0
    %1722 = vmatprep.subr.mxu0 0.0
    %1723 = vmatpush1.xpose.msra.mxu0 0.0
    %1724 = vmatprep.subr.mxu0 0.0
    %1725 = vmatpush1.xpose.msra.mxu0 0.0
    %1726 = vmatprep.subr.mxu0 0.0
    %1727 = vmatpush1.xpose.msra.mxu0 0.0
    %1728 = vmatprep.subr.mxu0 0.0
    %1729 = vmatpush1.xpose.msra.mxu0 0.0
    %1730 = vmatprep.subr.mxu0 0.0
    %1731 = vmatpush1.xpose.msra.mxu0 0.0
    %1732 = vmatprep.subr.mxu0 0.0
    %1733 = vmatpush1.xpose.msra.mxu0 0.0
    %1734 = vmatprep.subr.mxu0 0.0
    %1735 = vmatpush1.xpose.msra.mxu0 0.0
    %1736 = vmatprep.subr.mxu0 0.0
    %1737 = vmatpush1.xpose.msra.mxu0 0.0
    %1738 = vmatprep.subr.mxu0 0.0
    %1739 = vmatpush1.xpose.msra.mxu0 0.0
    %1740 = vmatprep.subr.mxu0 0.0
    %1741 = vmatpush1.xpose.msra.mxu0 0.0
    %1742 = vmatprep.subr.mxu0 0.0
    %1743 = vmatpush1.xpose.msra.mxu0 0.0
    %1744 = vmatprep.subr.mxu0 0.0
    %1745 = vmatpush1.xpose.msra.mxu0 0.0
    %1746 = vmatprep.subr.mxu0 0.0
    %1747 = vmatpush1.xpose.msra.mxu0 0.0
    %1748 = vmatprep.subr.mxu0 0.0
    %1749 = vmatpush1.xpose.msra.mxu0 0.0
    %1750 = vmatprep.subr.mxu0 0.0
    %1751 = vmatpush1.xpose.msra.mxu0 0.0
    %1752 = vmatprep.subr.mxu0 0.0
    %1753 = vmatpush1.xpose.msra.mxu0 0.0
    %1754 = vmatprep.mubr.f32.mxu0 0.0
    %v1755 = vand.u32 %v1605, 4294901760
    %1756 = vmatmul.mubr.f32.gmra.mrb[0].mxu0 %v1755
    %v1757 = vpop.f32.mrb[0].mxu0
    %v1758 = vadd.f32 %v1682, %v1757
    %v1759 = vpop.f32.mrb[0].mxu0
    %1760 = vdwg.mxu0
    %1761 = vmatprep.subr.mxu0 0.0
    %v1762 = vand.u32 %v1607, 4294901760
    %v1763 = vsub.f32 %v1607, %v1762
    %1764 = vmatpush1.xpose.msra.mxu0 %v1763
    %1765 = vmatprep.subr.mxu0 0.0
    %1766 = vmatpush1.xpose.msra.mxu0 0.0
    %1767 = vmatprep.subr.mxu0 0.0
    %1768 = vmatpush1.xpose.msra.mxu0 0.0
    %1769 = vmatprep.subr.mxu0 0.0
    %1770 = vmatpush1.xpose.msra.mxu0 0.0
    %1771 = vmatprep.subr.mxu0 0.0
    %1772 = vmatpush1.xpose.msra.mxu0 0.0
    %1773 = vmatprep.subr.mxu0 0.0
    %1774 = vmatpush1.xpose.msra.mxu0 0.0
    %1775 = vmatprep.subr.mxu0 0.0
    %1776 = vmatpush1.xpose.msra.mxu0 0.0
    %1777 = vmatprep.subr.mxu0 0.0
    %1778 = vmatpush1.xpose.msra.mxu0 0.0
    %1779 = vmatprep.subr.mxu0 0.0
    %1780 = vmatpush1.xpose.msra.mxu0 0.0
    %1781 = vmatprep.subr.mxu0 0.0
    %1782 = vmatpush1.xpose.msra.mxu0 0.0
    %1783 = vmatprep.subr.mxu0 0.0
    %1784 = vmatpush1.xpose.msra.mxu0 0.0
    %1785 = vmatprep.subr.mxu0 0.0
    %1786 = vmatpush1.xpose.msra.mxu0 0.0
    %1787 = vmatprep.subr.mxu0 0.0
    %1788 = vmatpush1.xpose.msra.mxu0 0.0
    %1789 = vmatprep.subr.mxu0 0.0
    %1790 = vmatpush1.xpose.msra.mxu0 0.0
    %1791 = vmatprep.subr.mxu0 0.0
    %1792 = vmatpush1.xpose.msra.mxu0 0.0
    %1793 = vmatprep.subr.mxu0 0.0
    %1794 = vmatpush1.xpose.msra.mxu0 0.0
    %1795 = vmatprep.subr.mxu0 0.0
    %1796 = vmatpush1.xpose.msra.mxu0 0.0
    %1797 = vmatprep.subr.mxu0 0.0
    %1798 = vmatpush1.xpose.msra.mxu0 0.0
    %1799 = vmatprep.subr.mxu0 0.0
    %1800 = vmatpush1.xpose.msra.mxu0 0.0
    %1801 = vmatprep.subr.mxu0 0.0
    %1802 = vmatpush1.xpose.msra.mxu0 0.0
    %1803 = vmatprep.subr.mxu0 0.0
    %1804 = vmatpush1.xpose.msra.mxu0 0.0
    %1805 = vmatprep.subr.mxu0 0.0
    %1806 = vmatpush1.xpose.msra.mxu0 0.0
    %1807 = vmatprep.subr.mxu0 0.0
    %1808 = vmatpush1.xpose.msra.mxu0 0.0
    %1809 = vmatprep.subr.mxu0 0.0
    %1810 = vmatpush1.xpose.msra.mxu0 0.0
    %1811 = vmatprep.subr.mxu0 0.0
    %1812 = vmatpush1.xpose.msra.mxu0 0.0
    %1813 = vmatprep.subr.mxu0 0.0
    %1814 = vmatpush1.xpose.msra.mxu0 0.0
    %1815 = vmatprep.subr.mxu0 0.0
    %1816 = vmatpush1.xpose.msra.mxu0 0.0
    %1817 = vmatprep.subr.mxu0 0.0
    %1818 = vmatpush1.xpose.msra.mxu0 0.0
    %1819 = vmatprep.subr.mxu0 0.0
    %1820 = vmatpush1.xpose.msra.mxu0 0.0
    %1821 = vmatprep.subr.mxu0 0.0
    %1822 = vmatpush1.xpose.msra.mxu0 0.0
    %1823 = vmatprep.subr.mxu0 0.0
    %1824 = vmatpush1.xpose.msra.mxu0 0.0
    %1825 = vmatprep.subr.mxu0 0.0
    %1826 = vmatpush1.xpose.msra.mxu0 0.0
    %1827 = vmatprep.mubr.f32.mxu0 0.0
    %v1828 = vand.u32 %v1605, 4294901760
    %v1829 = vsub.f32 %v1605, %v1828
    %1830 = vmatmul.mubr.f32.gmra.mrb[0].mxu0 %v1829
    %v1831 = vpop.f32.mrb[0].mxu0
    %v1832 = vadd.f32 %v1758, %v1831
    %v1833 = vpop.f32.mrb[0].mxu0
    %1834 = vdwg.mxu0
    %1835 = vmatprep.subr.mxu0 0.0
    %v1836 = vand.u32 %v1607, 4294901760
    %1837 = vmatpush1.xpose.msra.mxu0 %v1836
    %1838 = vmatprep.subr.mxu0 0.0
    %1839 = vmatpush1.xpose.msra.mxu0 0.0
    %1840 = vmatprep.subr.mxu0 0.0
    %1841 = vmatpush1.xpose.msra.mxu0 0.0
    %1842 = vmatprep.subr.mxu0 0.0
    %1843 = vmatpush1.xpose.msra.mxu0 0.0
    %1844 = vmatprep.subr.mxu0 0.0
    %1845 = vmatpush1.xpose.msra.mxu0 0.0
    %1846 = vmatprep.subr.mxu0 0.0
    %1847 = vmatpush1.xpose.msra.mxu0 0.0
    %1848 = vmatprep.subr.mxu0 0.0
    %1849 = vmatpush1.xpose.msra.mxu0 0.0
    %1850 = vmatprep.subr.mxu0 0.0
    %1851 = vmatpush1.xpose.msra.mxu0 0.0
    %1852 = vmatprep.subr.mxu0 0.0
    %1853 = vmatpush1.xpose.msra.mxu0 0.0
    %1854 = vmatprep.subr.mxu0 0.0
    %1855 = vmatpush1.xpose.msra.mxu0 0.0
    %1856 = vmatprep.subr.mxu0 0.0
    %1857 = vmatpush1.xpose.msra.mxu0 0.0
    %1858 = vmatprep.subr.mxu0 0.0
    %1859 = vmatpush1.xpose.msra.mxu0 0.0
    %1860 = vmatprep.subr.mxu0 0.0
    %1861 = vmatpush1.xpose.msra.mxu0 0.0
    %1862 = vmatprep.subr.mxu0 0.0
    %1863 = vmatpush1.xpose.msra.mxu0 0.0
    %1864 = vmatprep.subr.mxu0 0.0
    %1865 = vmatpush1.xpose.msra.mxu0 0.0
    %1866 = vmatprep.subr.mxu0 0.0
    %1867 = vmatpush1.xpose.msra.mxu0 0.0
    %1868 = vmatprep.subr.mxu0 0.0
    %1869 = vmatpush1.xpose.msra.mxu0 0.0
    %1870 = vmatprep.subr.mxu0 0.0
    %1871 = vmatpush1.xpose.msra.mxu0 0.0
    %1872 = vmatprep.subr.mxu0 0.0
    %1873 = vmatpush1.xpose.msra.mxu0 0.0
    %1874 = vmatprep.subr.mxu0 0.0
    %1875 = vmatpush1.xpose.msra.mxu0 0.0
    %1876 = vmatprep.subr.mxu0 0.0
    %1877 = vmatpush1.xpose.msra.mxu0 0.0
    %1878 = vmatprep.subr.mxu0 0.0
    %1879 = vmatpush1.xpose.msra.mxu0 0.0
    %1880 = vmatprep.subr.mxu0 0.0
    %1881 = vmatpush1.xpose.msra.mxu0 0.0
    %1882 = vmatprep.subr.mxu0 0.0
    %1883 = vmatpush1.xpose.msra.mxu0 0.0
    %1884 = vmatprep.subr.mxu0 0.0
    %1885 = vmatpush1.xpose.msra.mxu0 0.0
    %1886 = vmatprep.subr.mxu0 0.0
    %1887 = vmatpush1.xpose.msra.mxu0 0.0
    %1888 = vmatprep.subr.mxu0 0.0
    %1889 = vmatpush1.xpose.msra.mxu0 0.0
    %1890 = vmatprep.subr.mxu0 0.0
    %1891 = vmatpush1.xpose.msra.mxu0 0.0
    %1892 = vmatprep.subr.mxu0 0.0
    %1893 = vmatpush1.xpose.msra.mxu0 0.0
    %1894 = vmatprep.subr.mxu0 0.0
    %1895 = vmatpush1.xpose.msra.mxu0 0.0
    %1896 = vmatprep.subr.mxu0 0.0
    %1897 = vmatpush1.xpose.msra.mxu0 0.0
    %1898 = vmatprep.subr.mxu0 0.0
    %1899 = vmatpush1.xpose.msra.mxu0 0.0
    %1900 = vmatprep.mubr.f32.mxu0 0.0
    %v1901 = vand.u32 %v1605, 4294901760
    %v1902 = vsub.f32 %v1605, %v1901
    %v1903 = vand.u32 %v1902, 4294901760
    %1904 = vmatmul.mubr.f32.gmra.mrb[0].mxu0 %v1903
    %v1905 = vpop.f32.mrb[0].mxu0
    %v1906 = vadd.f32 %v1832, %v1905
    %v1907 = vpop.f32.mrb[0].mxu0
    %1908 = vdwg.mxu0
    %1909 = vmatprep.subr.mxu0 0.0
    %v1910 = vand.u32 %v1607, 4294901760
    %v1911 = vsub.f32 %v1607, %v1910
    %v1912 = vand.u32 %v1911, 4294901760
    %1913 = vmatpush1.xpose.msra.mxu0 %v1912
    %1914 = vmatprep.subr.mxu0 0.0
    %1915 = vmatpush1.xpose.msra.mxu0 0.0
    %1916 = vmatprep.subr.mxu0 0.0
    %1917 = vmatpush1.xpose.msra.mxu0 0.0
    %1918 = vmatprep.subr.mxu0 0.0
    %1919 = vmatpush1.xpose.msra.mxu0 0.0
    %1920 = vmatprep.subr.mxu0 0.0
    %1921 = vmatpush1.xpose.msra.mxu0 0.0
    %1922 = vmatprep.subr.mxu0 0.0
    %1923 = vmatpush1.xpose.msra.mxu0 0.0
    %1924 = vmatprep.subr.mxu0 0.0
    %1925 = vmatpush1.xpose.msra.mxu0 0.0
    %1926 = vmatprep.subr.mxu0 0.0
    %1927 = vmatpush1.xpose.msra.mxu0 0.0
    %1928 = vmatprep.subr.mxu0 0.0
    %1929 = vmatpush1.xpose.msra.mxu0 0.0
    %1930 = vmatprep.subr.mxu0 0.0
    %1931 = vmatpush1.xpose.msra.mxu0 0.0
    %1932 = vmatprep.subr.mxu0 0.0
    %1933 = vmatpush1.xpose.msra.mxu0 0.0
    %1934 = vmatprep.subr.mxu0 0.0
    %1935 = vmatpush1.xpose.msra.mxu0 0.0
    %1936 = vmatprep.subr.mxu0 0.0
    %1937 = vmatpush1.xpose.msra.mxu0 0.0
    %1938 = vmatprep.subr.mxu0 0.0
    %1939 = vmatpush1.xpose.msra.mxu0 0.0
    %1940 = vmatprep.subr.mxu0 0.0
    %1941 = vmatpush1.xpose.msra.mxu0 0.0
    %1942 = vmatprep.subr.mxu0 0.0
    %1943 = vmatpush1.xpose.msra.mxu0 0.0
    %1944 = vmatprep.subr.mxu0 0.0
    %1945 = vmatpush1.xpose.msra.mxu0 0.0
    %1946 = vmatprep.subr.mxu0 0.0
    %1947 = vmatpush1.xpose.msra.mxu0 0.0
    %1948 = vmatprep.subr.mxu0 0.0
    %1949 = vmatpush1.xpose.msra.mxu0 0.0
    %1950 = vmatprep.subr.mxu0 0.0
    %1951 = vmatpush1.xpose.msra.mxu0 0.0
    %1952 = vmatprep.subr.mxu0 0.0
    %1953 = vmatpush1.xpose.msra.mxu0 0.0
    %1954 = vmatprep.subr.mxu0 0.0
    %1955 = vmatpush1.xpose.msra.mxu0 0.0
    %1956 = vmatprep.subr.mxu0 0.0
    %1957 = vmatpush1.xpose.msra.mxu0 0.0
    %1958 = vmatprep.subr.mxu0 0.0
    %1959 = vmatpush1.xpose.msra.mxu0 0.0
    %1960 = vmatprep.subr.mxu0 0.0
    %1961 = vmatpush1.xpose.msra.mxu0 0.0
    %1962 = vmatprep.subr.mxu0 0.0
    %1963 = vmatpush1.xpose.msra.mxu0 0.0
    %1964 = vmatprep.subr.mxu0 0.0
    %1965 = vmatpush1.xpose.msra.mxu0 0.0
    %1966 = vmatprep.subr.mxu0 0.0
    %1967 = vmatpush1.xpose.msra.mxu0 0.0
    %1968 = vmatprep.subr.mxu0 0.0
    %1969 = vmatpush1.xpose.msra.mxu0 0.0
    %1970 = vmatprep.subr.mxu0 0.0
    %1971 = vmatpush1.xpose.msra.mxu0 0.0
    %1972 = vmatprep.subr.mxu0 0.0
    %1973 = vmatpush1.xpose.msra.mxu0 0.0
    %1974 = vmatprep.subr.mxu0 0.0
    %1975 = vmatpush1.xpose.msra.mxu0 0.0
    %1976 = vmatprep.mubr.f32.mxu0 0.0
    %v1977 = vand.u32 %v1605, 4294901760
    %1978 = vmatmul.mubr.f32.gmra.mrb[0].mxu0 %v1977
    %v1979 = vpop.f32.mrb[0].mxu0
    %v1980 = vadd.f32 %v1906, %v1979
    %v1981 = vpop.f32.mrb[0].mxu0
    %1982 = vdwg.mxu0
    %1983 = vmatprep.subr.mxu0 0.0
    %v1984 = vand.u32 %v1607, 4294901760
    %1985 = vmatpush1.xpose.msra.mxu0 %v1984
    %1986 = vmatprep.subr.mxu0 0.0
    %1987 = vmatpush1.xpose.msra.mxu0 0.0
    %1988 = vmatprep.subr.mxu0 0.0
    %1989 = vmatpush1.xpose.msra.mxu0 0.0
    %1990 = vmatprep.subr.mxu0 0.0
    %1991 = vmatpush1.xpose.msra.mxu0 0.0
    %1992 = vmatprep.subr.mxu0 0.0
    %1993 = vmatpush1.xpose.msra.mxu0 0.0
    %1994 = vmatprep.subr.mxu0 0.0
    %1995 = vmatpush1.xpose.msra.mxu0 0.0
    %1996 = vmatprep.subr.mxu0 0.0
    %1997 = vmatpush1.xpose.msra.mxu0 0.0
    %1998 = vmatprep.subr.mxu0 0.0
    %1999 = vmatpush1.xpose.msra.mxu0 0.0
    %2000 = vmatprep.subr.mxu0 0.0
    %2001 = vmatpush1.xpose.msra.mxu0 0.0
    %2002 = vmatprep.subr.mxu0 0.0
    %2003 = vmatpush1.xpose.msra.mxu0 0.0
    %2004 = vmatprep.subr.mxu0 0.0
    %2005 = vmatpush1.xpose.msra.mxu0 0.0
    %2006 = vmatprep.subr.mxu0 0.0
    %2007 = vmatpush1.xpose.msra.mxu0 0.0
    %2008 = vmatprep.subr.mxu0 0.0
    %2009 = vmatpush1.xpose.msra.mxu0 0.0
    %2010 = vmatprep.subr.mxu0 0.0
    %2011 = vmatpush1.xpose.msra.mxu0 0.0
    %2012 = vmatprep.subr.mxu0 0.0
    %2013 = vmatpush1.xpose.msra.mxu0 0.0
    %2014 = vmatprep.subr.mxu0 0.0
    %2015 = vmatpush1.xpose.msra.mxu0 0.0
    %2016 = vmatprep.subr.mxu0 0.0
    %2017 = vmatpush1.xpose.msra.mxu0 0.0
    %2018 = vmatprep.subr.mxu0 0.0
    %2019 = vmatpush1.xpose.msra.mxu0 0.0
    %2020 = vmatprep.subr.mxu0 0.0
    %2021 = vmatpush1.xpose.msra.mxu0 0.0
    %2022 = vmatprep.subr.mxu0 0.0
    %2023 = vmatpush1.xpose.msra.mxu0 0.0
    %2024 = vmatprep.subr.mxu0 0.0
    %2025 = vmatpush1.xpose.msra.mxu0 0.0
    %2026 = vmatprep.subr.mxu0 0.0
    %2027 = vmatpush1.xpose.msra.mxu0 0.0
    %2028 = vmatprep.subr.mxu0 0.0
    %2029 = vmatpush1.xpose.msra.mxu0 0.0
    %2030 = vmatprep.subr.mxu0 0.0
    %2031 = vmatpush1.xpose.msra.mxu0 0.0
    %2032 = vmatprep.subr.mxu0 0.0
    %2033 = vmatpush1.xpose.msra.mxu0 0.0
    %2034 = vmatprep.subr.mxu0 0.0
    %2035 = vmatpush1.xpose.msra.mxu0 0.0
    %2036 = vmatprep.subr.mxu0 0.0
    %2037 = vmatpush1.xpose.msra.mxu0 0.0
    %2038 = vmatprep.subr.mxu0 0.0
    %2039 = vmatpush1.xpose.msra.mxu0 0.0
    %2040 = vmatprep.subr.mxu0 0.0
    %2041 = vmatpush1.xpose.msra.mxu0 0.0
    %2042 = vmatprep.subr.mxu0 0.0
    %2043 = vmatpush1.xpose.msra.mxu0 0.0
    %2044 = vmatprep.subr.mxu0 0.0
    %2045 = vmatpush1.xpose.msra.mxu0 0.0
    %2046 = vmatprep.subr.mxu0 0.0
    %2047 = vmatpush1.xpose.msra.mxu0 0.0
    %2048 = vmatprep.mubr.f32.mxu0 0.0
    %v2049 = vand.u32 %v1605, 4294901760
    %2050 = vmatmul.mubr.f32.gmra.mrb[0].mxu0 %v2049
    %v2051 = vpop.f32.mrb[0].mxu0
    %v2052 = vadd.f32 %v1980, %v2051
    %v2053 = vpop.f32.mrb[0].mxu0
    %2054 = vdwg.mxu0
    %v2055 = vsel %vm1134, %v2052, -3.4e+38
    %v2056 = vsel %vm683, %v2055, -inf
    %2057 = vmax.xlane.f32.xlu0 %v2056
    %v2058 = vpop.xlane.xlu0 %2057
    %v2059 = vsub.f32 %v2055, %v2058
    %v2060 = vmul.f32 %v2059, 1.442695
    %v2061 = vpow.pop %v2060
    %v2062 = vmul.f32 %v2061, %v678
    %v2063 = vsel %vm683, %v2062, 0.0
    %2064 = vadd.xlane.f32.xlu0 %v2063
    %v2065 = vpop.xlane.xlu0 %2064
    %v2066 = vmax.f32 %v2065, 1e-30
    %v2067 = vrcp.pop %v2066
    %v2068 = vmul.f32 %v2062, %v2067
    %2069 = vrot.lane.b32.xlu0 %v661, 56
    %v2070 = vpop.permute.xlu0 %2069
    %v2073 = vsel %vm683, %v2068, 0
    %2075 = vmatprep.subr.mxu0 0.0
    %v2076 = vand.u32 %v2070, 4294901760
    %2077 = vmatpush1.msra.mxu0 %v2076
    %2078 = vmatprep.subr.mxu0 0.0
    %2079 = vmatpush1.msra.mxu0 0.0
    %2080 = vmatprep.subr.mxu0 0.0
    %2081 = vmatpush1.msra.mxu0 0.0
    %2082 = vmatprep.subr.mxu0 0.0
    %2083 = vmatpush1.msra.mxu0 0.0
    %2084 = vmatprep.subr.mxu0 0.0
    %2085 = vmatpush1.msra.mxu0 0.0
    %2086 = vmatprep.subr.mxu0 0.0
    %2087 = vmatpush1.msra.mxu0 0.0
    %2088 = vmatprep.subr.mxu0 0.0
    %2089 = vmatpush1.msra.mxu0 0.0
    %2090 = vmatprep.subr.mxu0 0.0
    %2091 = vmatpush1.msra.mxu0 0.0
    %2092 = vmatprep.subr.mxu0 0.0
    %2093 = vmatpush1.msra.mxu0 0.0
    %2094 = vmatprep.subr.mxu0 0.0
    %2095 = vmatpush1.msra.mxu0 0.0
    %2096 = vmatprep.subr.mxu0 0.0
    %2097 = vmatpush1.msra.mxu0 0.0
    %2098 = vmatprep.subr.mxu0 0.0
    %2099 = vmatpush1.msra.mxu0 0.0
    %2100 = vmatprep.subr.mxu0 0.0
    %2101 = vmatpush1.msra.mxu0 0.0
    %2102 = vmatprep.subr.mxu0 0.0
    %2103 = vmatpush1.msra.mxu0 0.0
    %2104 = vmatprep.subr.mxu0 0.0
    %2105 = vmatpush1.msra.mxu0 0.0
    %2106 = vmatprep.subr.mxu0 0.0
    %2107 = vmatpush1.msra.mxu0 0.0
    %2108 = vmatprep.subr.mxu0 0.0
    %2109 = vmatpush1.msra.mxu0 0.0
    %2110 = vmatprep.subr.mxu0 0.0
    %2111 = vmatpush1.msra.mxu0 0.0
    %2112 = vmatprep.subr.mxu0 0.0
    %2113 = vmatpush1.msra.mxu0 0.0
    %2114 = vmatprep.subr.mxu0 0.0
    %2115 = vmatpush1.msra.mxu0 0.0
    %2116 = vmatprep.subr.mxu0 0.0
    %2117 = vmatpush1.msra.mxu0 0.0
    %2118 = vmatprep.subr.mxu0 0.0
    %2119 = vmatpush1.msra.mxu0 0.0
    %2120 = vmatprep.subr.mxu0 0.0
    %2121 = vmatpush1.msra.mxu0 0.0
    %2122 = vmatprep.subr.mxu0 0.0
    %2123 = vmatpush1.msra.mxu0 0.0
    %2124 = vmatprep.subr.mxu0 0.0
    %2125 = vmatpush1.msra.mxu0 0.0
    %2126 = vmatprep.subr.mxu0 0.0
    %2127 = vmatpush1.msra.mxu0 0.0
    %2128 = vmatprep.subr.mxu0 0.0
    %2129 = vmatpush1.msra.mxu0 0.0
    %2130 = vmatprep.subr.mxu0 0.0
    %2131 = vmatpush1.msra.mxu0 0.0
    %2132 = vmatprep.subr.mxu0 0.0
    %2133 = vmatpush1.msra.mxu0 0.0
    %2134 = vmatprep.subr.mxu0 0.0
    %2135 = vmatpush1.msra.mxu0 0.0
    %2136 = vmatprep.subr.mxu0 0.0
    %2137 = vmatpush1.msra.mxu0 0.0
    %2138 = vmatprep.subr.mxu0 0.0
    %2139 = vmatpush1.msra.mxu0 0.0
    %2140 = vmatprep.mubr.f32.mxu0 0.0
    %v2141 = vand.u32 %v2073, 4294901760
    %v2142 = vsub.f32 %v2073, %v2141
    %v2143 = vand.u32 %v2142, 4294901760
    %v2144 = vsub.f32 %v2142, %v2143
    %v2145 = vand.u32 %v2144, 4294901760
    %2146 = vmatmul.mubr.f32.gmra.mrb[0].mxu0 %v2145
    %v2147 = vpop.f32.mrb[0].mxu0
    %v2148 = vadd.f32 0.0, %v2147
    %v2149 = vpop.f32.mrb[0].mxu0
    %2150 = vdwg.mxu0
    %2151 = vmatprep.subr.mxu0 0.0
    %v2152 = vand.u32 %v2070, 4294901760
    %v2153 = vsub.f32 %v2070, %v2152
    %v2154 = vand.u32 %v2153, 4294901760
    %v2155 = vsub.f32 %v2153, %v2154
    %v2156 = vand.u32 %v2155, 4294901760
    %2157 = vmatpush1.msra.mxu0 %v2156
    %2158 = vmatprep.subr.mxu0 0.0
    %2159 = vmatpush1.msra.mxu0 0.0
    %2160 = vmatprep.subr.mxu0 0.0
    %2161 = vmatpush1.msra.mxu0 0.0
    %2162 = vmatprep.subr.mxu0 0.0
    %2163 = vmatpush1.msra.mxu0 0.0
    %2164 = vmatprep.subr.mxu0 0.0
    %2165 = vmatpush1.msra.mxu0 0.0
    %2166 = vmatprep.subr.mxu0 0.0
    %2167 = vmatpush1.msra.mxu0 0.0
    %2168 = vmatprep.subr.mxu0 0.0
    %2169 = vmatpush1.msra.mxu0 0.0
    %2170 = vmatprep.subr.mxu0 0.0
    %2171 = vmatpush1.msra.mxu0 0.0
    %2172 = vmatprep.subr.mxu0 0.0
    %2173 = vmatpush1.msra.mxu0 0.0
    %2174 = vmatprep.subr.mxu0 0.0
    %2175 = vmatpush1.msra.mxu0 0.0
    %2176 = vmatprep.subr.mxu0 0.0
    %2177 = vmatpush1.msra.mxu0 0.0
    %2178 = vmatprep.subr.mxu0 0.0
    %2179 = vmatpush1.msra.mxu0 0.0
    %2180 = vmatprep.subr.mxu0 0.0
    %2181 = vmatpush1.msra.mxu0 0.0
    %2182 = vmatprep.subr.mxu0 0.0
    %2183 = vmatpush1.msra.mxu0 0.0
    %2184 = vmatprep.subr.mxu0 0.0
    %2185 = vmatpush1.msra.mxu0 0.0
    %2186 = vmatprep.subr.mxu0 0.0
    %2187 = vmatpush1.msra.mxu0 0.0
    %2188 = vmatprep.subr.mxu0 0.0
    %2189 = vmatpush1.msra.mxu0 0.0
    %2190 = vmatprep.subr.mxu0 0.0
    %2191 = vmatpush1.msra.mxu0 0.0
    %2192 = vmatprep.subr.mxu0 0.0
    %2193 = vmatpush1.msra.mxu0 0.0
    %2194 = vmatprep.subr.mxu0 0.0
    %2195 = vmatpush1.msra.mxu0 0.0
    %2196 = vmatprep.subr.mxu0 0.0
    %2197 = vmatpush1.msra.mxu0 0.0
    %2198 = vmatprep.subr.mxu0 0.0
    %2199 = vmatpush1.msra.mxu0 0.0
    %2200 = vmatprep.subr.mxu0 0.0
    %2201 = vmatpush1.msra.mxu0 0.0
    %2202 = vmatprep.subr.mxu0 0.0
    %2203 = vmatpush1.msra.mxu0 0.0
    %2204 = vmatprep.subr.mxu0 0.0
    %2205 = vmatpush1.msra.mxu0 0.0
    %2206 = vmatprep.subr.mxu0 0.0
    %2207 = vmatpush1.msra.mxu0 0.0
    %2208 = vmatprep.subr.mxu0 0.0
    %2209 = vmatpush1.msra.mxu0 0.0
    %2210 = vmatprep.subr.mxu0 0.0
    %2211 = vmatpush1.msra.mxu0 0.0
    %2212 = vmatprep.subr.mxu0 0.0
    %2213 = vmatpush1.msra.mxu0 0.0
    %2214 = vmatprep.subr.mxu0 0.0
    %2215 = vmatpush1.msra.mxu0 0.0
    %2216 = vmatprep.subr.mxu0 0.0
    %2217 = vmatpush1.msra.mxu0 0.0
    %2218 = vmatprep.subr.mxu0 0.0
    %2219 = vmatpush1.msra.mxu0 0.0
    %2220 = vmatprep.mubr.f32.mxu0 0.0
    %v2221 = vand.u32 %v2073, 4294901760
    %2222 = vmatmul.mubr.f32.gmra.mrb[0].mxu0 %v2221
    %v2223 = vpop.f32.mrb[0].mxu0
    %v2224 = vadd.f32 %v2148, %v2223
    %v2225 = vpop.f32.mrb[0].mxu0
    %2226 = vdwg.mxu0
    %2227 = vmatprep.subr.mxu0 0.0
    %v2228 = vand.u32 %v2070, 4294901760
    %v2229 = vsub.f32 %v2070, %v2228
    %2230 = vmatpush1.msra.mxu0 %v2229
    %2231 = vmatprep.subr.mxu0 0.0
    %2232 = vmatpush1.msra.mxu0 0.0
    %2233 = vmatprep.subr.mxu0 0.0
    %2234 = vmatpush1.msra.mxu0 0.0
    %2235 = vmatprep.subr.mxu0 0.0
    %2236 = vmatpush1.msra.mxu0 0.0
    %2237 = vmatprep.subr.mxu0 0.0
    %2238 = vmatpush1.msra.mxu0 0.0
    %2239 = vmatprep.subr.mxu0 0.0
    %2240 = vmatpush1.msra.mxu0 0.0
    %2241 = vmatprep.subr.mxu0 0.0
    %2242 = vmatpush1.msra.mxu0 0.0
    %2243 = vmatprep.subr.mxu0 0.0
    %2244 = vmatpush1.msra.mxu0 0.0
    %2245 = vmatprep.subr.mxu0 0.0
    %2246 = vmatpush1.msra.mxu0 0.0
    %2247 = vmatprep.subr.mxu0 0.0
    %2248 = vmatpush1.msra.mxu0 0.0
    %2249 = vmatprep.subr.mxu0 0.0
    %2250 = vmatpush1.msra.mxu0 0.0
    %2251 = vmatprep.subr.mxu0 0.0
    %2252 = vmatpush1.msra.mxu0 0.0
    %2253 = vmatprep.subr.mxu0 0.0
    %2254 = vmatpush1.msra.mxu0 0.0
    %2255 = vmatprep.subr.mxu0 0.0
    %2256 = vmatpush1.msra.mxu0 0.0
    %2257 = vmatprep.subr.mxu0 0.0
    %2258 = vmatpush1.msra.mxu0 0.0
    %2259 = vmatprep.subr.mxu0 0.0
    %2260 = vmatpush1.msra.mxu0 0.0
    %2261 = vmatprep.subr.mxu0 0.0
    %2262 = vmatpush1.msra.mxu0 0.0
    %2263 = vmatprep.subr.mxu0 0.0
    %2264 = vmatpush1.msra.mxu0 0.0
    %2265 = vmatprep.subr.mxu0 0.0
    %2266 = vmatpush1.msra.mxu0 0.0
    %2267 = vmatprep.subr.mxu0 0.0
    %2268 = vmatpush1.msra.mxu0 0.0
    %2269 = vmatprep.subr.mxu0 0.0
    %2270 = vmatpush1.msra.mxu0 0.0
    %2271 = vmatprep.subr.mxu0 0.0
    %2272 = vmatpush1.msra.mxu0 0.0
    %2273 = vmatprep.subr.mxu0 0.0
    %2274 = vmatpush1.msra.mxu0 0.0
    %2275 = vmatprep.subr.mxu0 0.0
    %2276 = vmatpush1.msra.mxu0 0.0
    %2277 = vmatprep.subr.mxu0 0.0
    %2278 = vmatpush1.msra.mxu0 0.0
    %2279 = vmatprep.subr.mxu0 0.0
    %2280 = vmatpush1.msra.mxu0 0.0
    %2281 = vmatprep.subr.mxu0 0.0
    %2282 = vmatpush1.msra.mxu0 0.0
    %2283 = vmatprep.subr.mxu0 0.0
    %2284 = vmatpush1.msra.mxu0 0.0
    %2285 = vmatprep.subr.mxu0 0.0
    %2286 = vmatpush1.msra.mxu0 0.0
    %2287 = vmatprep.subr.mxu0 0.0
    %2288 = vmatpush1.msra.mxu0 0.0
    %2289 = vmatprep.subr.mxu0 0.0
    %2290 = vmatpush1.msra.mxu0 0.0
    %2291 = vmatprep.subr.mxu0 0.0
    %2292 = vmatpush1.msra.mxu0 0.0
    %2293 = vmatprep.mubr.f32.mxu0 0.0
    %v2294 = vand.u32 %v2073, 4294901760
    %v2295 = vsub.f32 %v2073, %v2294
    %2296 = vmatmul.mubr.f32.gmra.mrb[0].mxu0 %v2295
    %v2297 = vpop.f32.mrb[0].mxu0
    %v2298 = vadd.f32 %v2224, %v2297
    %v2299 = vpop.f32.mrb[0].mxu0
    %2300 = vdwg.mxu0
    %2301 = vmatprep.subr.mxu0 0.0
    %v2302 = vand.u32 %v2070, 4294901760
    %2303 = vmatpush1.msra.mxu0 %v2302
    %2304 = vmatprep.subr.mxu0 0.0
    %2305 = vmatpush1.msra.mxu0 0.0
    %2306 = vmatprep.subr.mxu0 0.0
    %2307 = vmatpush1.msra.mxu0 0.0
    %2308 = vmatprep.subr.mxu0 0.0
    %2309 = vmatpush1.msra.mxu0 0.0
    %2310 = vmatprep.subr.mxu0 0.0
    %2311 = vmatpush1.msra.mxu0 0.0
    %2312 = vmatprep.subr.mxu0 0.0
    %2313 = vmatpush1.msra.mxu0 0.0
    %2314 = vmatprep.subr.mxu0 0.0
    %2315 = vmatpush1.msra.mxu0 0.0
    %2316 = vmatprep.subr.mxu0 0.0
    %2317 = vmatpush1.msra.mxu0 0.0
    %2318 = vmatprep.subr.mxu0 0.0
    %2319 = vmatpush1.msra.mxu0 0.0
    %2320 = vmatprep.subr.mxu0 0.0
    %2321 = vmatpush1.msra.mxu0 0.0
    %2322 = vmatprep.subr.mxu0 0.0
    %2323 = vmatpush1.msra.mxu0 0.0
    %2324 = vmatprep.subr.mxu0 0.0
    %2325 = vmatpush1.msra.mxu0 0.0
    %2326 = vmatprep.subr.mxu0 0.0
    %2327 = vmatpush1.msra.mxu0 0.0
    %2328 = vmatprep.subr.mxu0 0.0
    %2329 = vmatpush1.msra.mxu0 0.0
    %2330 = vmatprep.subr.mxu0 0.0
    %2331 = vmatpush1.msra.mxu0 0.0
    %2332 = vmatprep.subr.mxu0 0.0
    %2333 = vmatpush1.msra.mxu0 0.0
    %2334 = vmatprep.subr.mxu0 0.0
    %2335 = vmatpush1.msra.mxu0 0.0
    %2336 = vmatprep.subr.mxu0 0.0
    %2337 = vmatpush1.msra.mxu0 0.0
    %2338 = vmatprep.subr.mxu0 0.0
    %2339 = vmatpush1.msra.mxu0 0.0
    %2340 = vmatprep.subr.mxu0 0.0
    %2341 = vmatpush1.msra.mxu0 0.0
    %2342 = vmatprep.subr.mxu0 0.0
    %2343 = vmatpush1.msra.mxu0 0.0
    %2344 = vmatprep.subr.mxu0 0.0
    %2345 = vmatpush1.msra.mxu0 0.0
    %2346 = vmatprep.subr.mxu0 0.0
    %2347 = vmatpush1.msra.mxu0 0.0
    %2348 = vmatprep.subr.mxu0 0.0
    %2349 = vmatpush1.msra.mxu0 0.0
    %2350 = vmatprep.subr.mxu0 0.0
    %2351 = vmatpush1.msra.mxu0 0.0
    %2352 = vmatprep.subr.mxu0 0.0
    %2353 = vmatpush1.msra.mxu0 0.0
    %2354 = vmatprep.subr.mxu0 0.0
    %2355 = vmatpush1.msra.mxu0 0.0
    %2356 = vmatprep.subr.mxu0 0.0
    %2357 = vmatpush1.msra.mxu0 0.0
    %2358 = vmatprep.subr.mxu0 0.0
    %2359 = vmatpush1.msra.mxu0 0.0
    %2360 = vmatprep.subr.mxu0 0.0
    %2361 = vmatpush1.msra.mxu0 0.0
    %2362 = vmatprep.subr.mxu0 0.0
    %2363 = vmatpush1.msra.mxu0 0.0
    %2364 = vmatprep.subr.mxu0 0.0
    %2365 = vmatpush1.msra.mxu0 0.0
    %2366 = vmatprep.mubr.f32.mxu0 0.0
    %v2367 = vand.u32 %v2073, 4294901760
    %v2368 = vsub.f32 %v2073, %v2367
    %v2369 = vand.u32 %v2368, 4294901760
    %2370 = vmatmul.mubr.f32.gmra.mrb[0].mxu0 %v2369
    %v2371 = vpop.f32.mrb[0].mxu0
    %v2372 = vadd.f32 %v2298, %v2371
    %v2373 = vpop.f32.mrb[0].mxu0
    %2374 = vdwg.mxu0
    %2375 = vmatprep.subr.mxu0 0.0
    %v2376 = vand.u32 %v2070, 4294901760
    %v2377 = vsub.f32 %v2070, %v2376
    %v2378 = vand.u32 %v2377, 4294901760
    %2379 = vmatpush1.msra.mxu0 %v2378
    %2380 = vmatprep.subr.mxu0 0.0
    %2381 = vmatpush1.msra.mxu0 0.0
    %2382 = vmatprep.subr.mxu0 0.0
    %2383 = vmatpush1.msra.mxu0 0.0
    %2384 = vmatprep.subr.mxu0 0.0
    %2385 = vmatpush1.msra.mxu0 0.0
    %2386 = vmatprep.subr.mxu0 0.0
    %2387 = vmatpush1.msra.mxu0 0.0
    %2388 = vmatprep.subr.mxu0 0.0
    %2389 = vmatpush1.msra.mxu0 0.0
    %2390 = vmatprep.subr.mxu0 0.0
    %2391 = vmatpush1.msra.mxu0 0.0
    %2392 = vmatprep.subr.mxu0 0.0
    %2393 = vmatpush1.msra.mxu0 0.0
    %2394 = vmatprep.subr.mxu0 0.0
    %2395 = vmatpush1.msra.mxu0 0.0
    %2396 = vmatprep.subr.mxu0 0.0
    %2397 = vmatpush1.msra.mxu0 0.0
    %2398 = vmatprep.subr.mxu0 0.0
    %2399 = vmatpush1.msra.mxu0 0.0
    %2400 = vmatprep.subr.mxu0 0.0
    %2401 = vmatpush1.msra.mxu0 0.0
    %2402 = vmatprep.subr.mxu0 0.0
    %2403 = vmatpush1.msra.mxu0 0.0
    %2404 = vmatprep.subr.mxu0 0.0
    %2405 = vmatpush1.msra.mxu0 0.0
    %2406 = vmatprep.subr.mxu0 0.0
    %2407 = vmatpush1.msra.mxu0 0.0
    %2408 = vmatprep.subr.mxu0 0.0
    %2409 = vmatpush1.msra.mxu0 0.0
    %2410 = vmatprep.subr.mxu0 0.0
    %2411 = vmatpush1.msra.mxu0 0.0
    %2412 = vmatprep.subr.mxu0 0.0
    %2413 = vmatpush1.msra.mxu0 0.0
    %2414 = vmatprep.subr.mxu0 0.0
    %2415 = vmatpush1.msra.mxu0 0.0
    %2416 = vmatprep.subr.mxu0 0.0
    %2417 = vmatpush1.msra.mxu0 0.0
    %2418 = vmatprep.subr.mxu0 0.0
    %2419 = vmatpush1.msra.mxu0 0.0
    %2420 = vmatprep.subr.mxu0 0.0
    %2421 = vmatpush1.msra.mxu0 0.0
    %2422 = vmatprep.subr.mxu0 0.0
    %2423 = vmatpush1.msra.mxu0 0.0
    %2424 = vmatprep.subr.mxu0 0.0
    %2425 = vmatpush1.msra.mxu0 0.0
    %2426 = vmatprep.subr.mxu0 0.0
    %2427 = vmatpush1.msra.mxu0 0.0
    %2428 = vmatprep.subr.mxu0 0.0
    %2429 = vmatpush1.msra.mxu0 0.0
    %2430 = vmatprep.subr.mxu0 0.0
    %2431 = vmatpush1.msra.mxu0 0.0
    %2432 = vmatprep.subr.mxu0 0.0
    %2433 = vmatpush1.msra.mxu0 0.0
    %2434 = vmatprep.subr.mxu0 0.0
    %2435 = vmatpush1.msra.mxu0 0.0
    %2436 = vmatprep.subr.mxu0 0.0
    %2437 = vmatpush1.msra.mxu0 0.0
    %2438 = vmatprep.subr.mxu0 0.0
    %2439 = vmatpush1.msra.mxu0 0.0
    %2440 = vmatprep.subr.mxu0 0.0
    %2441 = vmatpush1.msra.mxu0 0.0
    %2442 = vmatprep.mubr.f32.mxu0 0.0
    %v2443 = vand.u32 %v2073, 4294901760
    %2444 = vmatmul.mubr.f32.gmra.mrb[0].mxu0 %v2443
    %v2445 = vpop.f32.mrb[0].mxu0
    %v2446 = vadd.f32 %v2372, %v2445
    %v2447 = vpop.f32.mrb[0].mxu0
    %2448 = vdwg.mxu0
    %2449 = vmatprep.subr.mxu0 0.0
    %v2450 = vand.u32 %v2070, 4294901760
    %2451 = vmatpush1.msra.mxu0 %v2450
    %2452 = vmatprep.subr.mxu0 0.0
    %2453 = vmatpush1.msra.mxu0 0.0
    %2454 = vmatprep.subr.mxu0 0.0
    %2455 = vmatpush1.msra.mxu0 0.0
    %2456 = vmatprep.subr.mxu0 0.0
    %2457 = vmatpush1.msra.mxu0 0.0
    %2458 = vmatprep.subr.mxu0 0.0
    %2459 = vmatpush1.msra.mxu0 0.0
    %2460 = vmatprep.subr.mxu0 0.0
    %2461 = vmatpush1.msra.mxu0 0.0
    %2462 = vmatprep.subr.mxu0 0.0
    %2463 = vmatpush1.msra.mxu0 0.0
    %2464 = vmatprep.subr.mxu0 0.0
    %2465 = vmatpush1.msra.mxu0 0.0
    %2466 = vmatprep.subr.mxu0 0.0
    %2467 = vmatpush1.msra.mxu0 0.0
    %2468 = vmatprep.subr.mxu0 0.0
    %2469 = vmatpush1.msra.mxu0 0.0
    %2470 = vmatprep.subr.mxu0 0.0
    %2471 = vmatpush1.msra.mxu0 0.0
    %2472 = vmatprep.subr.mxu0 0.0
    %2473 = vmatpush1.msra.mxu0 0.0
    %2474 = vmatprep.subr.mxu0 0.0
    %2475 = vmatpush1.msra.mxu0 0.0
    %2476 = vmatprep.subr.mxu0 0.0
    %2477 = vmatpush1.msra.mxu0 0.0
    %2478 = vmatprep.subr.mxu0 0.0
    %2479 = vmatpush1.msra.mxu0 0.0
    %2480 = vmatprep.subr.mxu0 0.0
    %2481 = vmatpush1.msra.mxu0 0.0
    %2482 = vmatprep.subr.mxu0 0.0
    %2483 = vmatpush1.msra.mxu0 0.0
    %2484 = vmatprep.subr.mxu0 0.0
    %2485 = vmatpush1.msra.mxu0 0.0
    %2486 = vmatprep.subr.mxu0 0.0
    %2487 = vmatpush1.msra.mxu0 0.0
    %2488 = vmatprep.subr.mxu0 0.0
    %2489 = vmatpush1.msra.mxu0 0.0
    %2490 = vmatprep.subr.mxu0 0.0
    %2491 = vmatpush1.msra.mxu0 0.0
    %2492 = vmatprep.subr.mxu0 0.0
    %2493 = vmatpush1.msra.mxu0 0.0
    %2494 = vmatprep.subr.mxu0 0.0
    %2495 = vmatpush1.msra.mxu0 0.0
    %2496 = vmatprep.subr.mxu0 0.0
    %2497 = vmatpush1.msra.mxu0 0.0
    %2498 = vmatprep.subr.mxu0 0.0
    %2499 = vmatpush1.msra.mxu0 0.0
    %2500 = vmatprep.subr.mxu0 0.0
    %2501 = vmatpush1.msra.mxu0 0.0
    %2502 = vmatprep.subr.mxu0 0.0
    %2503 = vmatpush1.msra.mxu0 0.0
    %2504 = vmatprep.subr.mxu0 0.0
    %2505 = vmatpush1.msra.mxu0 0.0
    %2506 = vmatprep.subr.mxu0 0.0
    %2507 = vmatpush1.msra.mxu0 0.0
    %2508 = vmatprep.subr.mxu0 0.0
    %2509 = vmatpush1.msra.mxu0 0.0
    %2510 = vmatprep.subr.mxu0 0.0
    %2511 = vmatpush1.msra.mxu0 0.0
    %2512 = vmatprep.subr.mxu0 0.0
    %2513 = vmatpush1.msra.mxu0 0.0
    %2514 = vmatprep.mubr.f32.mxu0 0.0
    %v2515 = vand.u32 %v2073, 4294901760
    %2516 = vmatmul.mubr.f32.gmra.mrb[0].mxu0 %v2515
    %v2517 = vpop.f32.mrb[0].mxu0
    %v2518 = vadd.f32 %v2446, %v2517
    %v2519 = vpop.f32.mrb[0].mxu0
    %2520 = vdwg.mxu0
    %2521 = vrot.lane.b32.xlu0 %v661, 112
    %v2522 = vpop.permute.xlu0 %2521
    %2523 = vrot.lane.b32.xlu0 %v661, 80
    %v2524 = vpop.permute.xlu0 %2523
    %v2525 = vsel %vm683, %v2522, 0
    %v2527 = vsel %vm683, %v2524, 0
    %2529 = vmatprep.subr.mxu0 0.0
    %v2530 = vand.u32 %v2527, 4294901760
    %2531 = vmatpush1.xpose.msra.mxu0 %v2530
    %2532 = vmatprep.subr.mxu0 0.0
    %2533 = vmatpush1.xpose.msra.mxu0 0.0
    %2534 = vmatprep.subr.mxu0 0.0
    %2535 = vmatpush1.xpose.msra.mxu0 0.0
    %2536 = vmatprep.subr.mxu0 0.0
    %2537 = vmatpush1.xpose.msra.mxu0 0.0
    %2538 = vmatprep.subr.mxu0 0.0
    %2539 = vmatpush1.xpose.msra.mxu0 0.0
    %2540 = vmatprep.subr.mxu0 0.0
    %2541 = vmatpush1.xpose.msra.mxu0 0.0
    %2542 = vmatprep.subr.mxu0 0.0
    %2543 = vmatpush1.xpose.msra.mxu0 0.0
    %2544 = vmatprep.subr.mxu0 0.0
    %2545 = vmatpush1.xpose.msra.mxu0 0.0
    %2546 = vmatprep.subr.mxu0 0.0
    %2547 = vmatpush1.xpose.msra.mxu0 0.0
    %2548 = vmatprep.subr.mxu0 0.0
    %2549 = vmatpush1.xpose.msra.mxu0 0.0
    %2550 = vmatprep.subr.mxu0 0.0
    %2551 = vmatpush1.xpose.msra.mxu0 0.0
    %2552 = vmatprep.subr.mxu0 0.0
    %2553 = vmatpush1.xpose.msra.mxu0 0.0
    %2554 = vmatprep.subr.mxu0 0.0
    %2555 = vmatpush1.xpose.msra.mxu0 0.0
    %2556 = vmatprep.subr.mxu0 0.0
    %2557 = vmatpush1.xpose.msra.mxu0 0.0
    %2558 = vmatprep.subr.mxu0 0.0
    %2559 = vmatpush1.xpose.msra.mxu0 0.0
    %2560 = vmatprep.subr.mxu0 0.0
    %2561 = vmatpush1.xpose.msra.mxu0 0.0
    %2562 = vmatprep.subr.mxu0 0.0
    %2563 = vmatpush1.xpose.msra.mxu0 0.0
    %2564 = vmatprep.subr.mxu0 0.0
    %2565 = vmatpush1.xpose.msra.mxu0 0.0
    %2566 = vmatprep.subr.mxu0 0.0
    %2567 = vmatpush1.xpose.msra.mxu0 0.0
    %2568 = vmatprep.subr.mxu0 0.0
    %2569 = vmatpush1.xpose.msra.mxu0 0.0
    %2570 = vmatprep.subr.mxu0 0.0
    %2571 = vmatpush1.xpose.msra.mxu0 0.0
    %2572 = vmatprep.subr.mxu0 0.0
    %2573 = vmatpush1.xpose.msra.mxu0 0.0
    %2574 = vmatprep.subr.mxu0 0.0
    %2575 = vmatpush1.xpose.msra.mxu0 0.0
    %2576 = vmatprep.subr.mxu0 0.0
    %2577 = vmatpush1.xpose.msra.mxu0 0.0
    %2578 = vmatprep.subr.mxu0 0.0
    %2579 = vmatpush1.xpose.msra.mxu0 0.0
    %2580 = vmatprep.subr.mxu0 0.0
    %2581 = vmatpush1.xpose.msra.mxu0 0.0
    %2582 = vmatprep.subr.mxu0 0.0
    %2583 = vmatpush1.xpose.msra.mxu0 0.0
    %2584 = vmatprep.subr.mxu0 0.0
    %2585 = vmatpush1.xpose.msra.mxu0 0.0
    %2586 = vmatprep.subr.mxu0 0.0
    %2587 = vmatpush1.xpose.msra.mxu0 0.0
    %2588 = vmatprep.subr.mxu0 0.0
    %2589 = vmatpush1.xpose.msra.mxu0 0.0
    %2590 = vmatprep.subr.mxu0 0.0
    %2591 = vmatpush1.xpose.msra.mxu0 0.0
    %2592 = vmatprep.subr.mxu0 0.0
    %2593 = vmatpush1.xpose.msra.mxu0 0.0
    %2594 = vmatprep.mubr.f32.mxu0 0.0
    %v2595 = vand.u32 %v2525, 4294901760
    %v2596 = vsub.f32 %v2525, %v2595
    %v2597 = vand.u32 %v2596, 4294901760
    %v2598 = vsub.f32 %v2596, %v2597
    %v2599 = vand.u32 %v2598, 4294901760
    %2600 = vmatmul.mubr.f32.gmra.mrb[0].mxu0 %v2599
    %v2601 = vpop.f32.mrb[0].mxu0
    %v2602 = vadd.f32 0.0, %v2601
    %v2603 = vpop.f32.mrb[0].mxu0
    %2604 = vdwg.mxu0
    %2605 = vmatprep.subr.mxu0 0.0
    %v2606 = vand.u32 %v2527, 4294901760
    %v2607 = vsub.f32 %v2527, %v2606
    %v2608 = vand.u32 %v2607, 4294901760
    %v2609 = vsub.f32 %v2607, %v2608
    %v2610 = vand.u32 %v2609, 4294901760
    %2611 = vmatpush1.xpose.msra.mxu0 %v2610
    %2612 = vmatprep.subr.mxu0 0.0
    %2613 = vmatpush1.xpose.msra.mxu0 0.0
    %2614 = vmatprep.subr.mxu0 0.0
    %2615 = vmatpush1.xpose.msra.mxu0 0.0
    %2616 = vmatprep.subr.mxu0 0.0
    %2617 = vmatpush1.xpose.msra.mxu0 0.0
    %2618 = vmatprep.subr.mxu0 0.0
    %2619 = vmatpush1.xpose.msra.mxu0 0.0
    %2620 = vmatprep.subr.mxu0 0.0
    %2621 = vmatpush1.xpose.msra.mxu0 0.0
    %2622 = vmatprep.subr.mxu0 0.0
    %2623 = vmatpush1.xpose.msra.mxu0 0.0
    %2624 = vmatprep.subr.mxu0 0.0
    %2625 = vmatpush1.xpose.msra.mxu0 0.0
    %2626 = vmatprep.subr.mxu0 0.0
    %2627 = vmatpush1.xpose.msra.mxu0 0.0
    %2628 = vmatprep.subr.mxu0 0.0
    %2629 = vmatpush1.xpose.msra.mxu0 0.0
    %2630 = vmatprep.subr.mxu0 0.0
    %2631 = vmatpush1.xpose.msra.mxu0 0.0
    %2632 = vmatprep.subr.mxu0 0.0
    %2633 = vmatpush1.xpose.msra.mxu0 0.0
    %2634 = vmatprep.subr.mxu0 0.0
    %2635 = vmatpush1.xpose.msra.mxu0 0.0
    %2636 = vmatprep.subr.mxu0 0.0
    %2637 = vmatpush1.xpose.msra.mxu0 0.0
    %2638 = vmatprep.subr.mxu0 0.0
    %2639 = vmatpush1.xpose.msra.mxu0 0.0
    %2640 = vmatprep.subr.mxu0 0.0
    %2641 = vmatpush1.xpose.msra.mxu0 0.0
    %2642 = vmatprep.subr.mxu0 0.0
    %2643 = vmatpush1.xpose.msra.mxu0 0.0
    %2644 = vmatprep.subr.mxu0 0.0
    %2645 = vmatpush1.xpose.msra.mxu0 0.0
    %2646 = vmatprep.subr.mxu0 0.0
    %2647 = vmatpush1.xpose.msra.mxu0 0.0
    %2648 = vmatprep.subr.mxu0 0.0
    %2649 = vmatpush1.xpose.msra.mxu0 0.0
    %2650 = vmatprep.subr.mxu0 0.0
    %2651 = vmatpush1.xpose.msra.mxu0 0.0
    %2652 = vmatprep.subr.mxu0 0.0
    %2653 = vmatpush1.xpose.msra.mxu0 0.0
    %2654 = vmatprep.subr.mxu0 0.0
    %2655 = vmatpush1.xpose.msra.mxu0 0.0
    %2656 = vmatprep.subr.mxu0 0.0
    %2657 = vmatpush1.xpose.msra.mxu0 0.0
    %2658 = vmatprep.subr.mxu0 0.0
    %2659 = vmatpush1.xpose.msra.mxu0 0.0
    %2660 = vmatprep.subr.mxu0 0.0
    %2661 = vmatpush1.xpose.msra.mxu0 0.0
    %2662 = vmatprep.subr.mxu0 0.0
    %2663 = vmatpush1.xpose.msra.mxu0 0.0
    %2664 = vmatprep.subr.mxu0 0.0
    %2665 = vmatpush1.xpose.msra.mxu0 0.0
    %2666 = vmatprep.subr.mxu0 0.0
    %2667 = vmatpush1.xpose.msra.mxu0 0.0
    %2668 = vmatprep.subr.mxu0 0.0
    %2669 = vmatpush1.xpose.msra.mxu0 0.0
    %2670 = vmatprep.subr.mxu0 0.0
    %2671 = vmatpush1.xpose.msra.mxu0 0.0
    %2672 = vmatprep.subr.mxu0 0.0
    %2673 = vmatpush1.xpose.msra.mxu0 0.0
    %2674 = vmatprep.mubr.f32.mxu0 0.0
    %v2675 = vand.u32 %v2525, 4294901760
    %2676 = vmatmul.mubr.f32.gmra.mrb[0].mxu0 %v2675
    %v2677 = vpop.f32.mrb[0].mxu0
    %v2678 = vadd.f32 %v2602, %v2677
    %v2679 = vpop.f32.mrb[0].mxu0
    %2680 = vdwg.mxu0
    %2681 = vmatprep.subr.mxu0 0.0
    %v2682 = vand.u32 %v2527, 4294901760
    %v2683 = vsub.f32 %v2527, %v2682
    %2684 = vmatpush1.xpose.msra.mxu0 %v2683
    %2685 = vmatprep.subr.mxu0 0.0
    %2686 = vmatpush1.xpose.msra.mxu0 0.0
    %2687 = vmatprep.subr.mxu0 0.0
    %2688 = vmatpush1.xpose.msra.mxu0 0.0
    %2689 = vmatprep.subr.mxu0 0.0
    %2690 = vmatpush1.xpose.msra.mxu0 0.0
    %2691 = vmatprep.subr.mxu0 0.0
    %2692 = vmatpush1.xpose.msra.mxu0 0.0
    %2693 = vmatprep.subr.mxu0 0.0
    %2694 = vmatpush1.xpose.msra.mxu0 0.0
    %2695 = vmatprep.subr.mxu0 0.0
    %2696 = vmatpush1.xpose.msra.mxu0 0.0
    %2697 = vmatprep.subr.mxu0 0.0
    %2698 = vmatpush1.xpose.msra.mxu0 0.0
    %2699 = vmatprep.subr.mxu0 0.0
    %2700 = vmatpush1.xpose.msra.mxu0 0.0
    %2701 = vmatprep.subr.mxu0 0.0
    %2702 = vmatpush1.xpose.msra.mxu0 0.0
    %2703 = vmatprep.subr.mxu0 0.0
    %2704 = vmatpush1.xpose.msra.mxu0 0.0
    %2705 = vmatprep.subr.mxu0 0.0
    %2706 = vmatpush1.xpose.msra.mxu0 0.0
    %2707 = vmatprep.subr.mxu0 0.0
    %2708 = vmatpush1.xpose.msra.mxu0 0.0
    %2709 = vmatprep.subr.mxu0 0.0
    %2710 = vmatpush1.xpose.msra.mxu0 0.0
    %2711 = vmatprep.subr.mxu0 0.0
    %2712 = vmatpush1.xpose.msra.mxu0 0.0
    %2713 = vmatprep.subr.mxu0 0.0
    %2714 = vmatpush1.xpose.msra.mxu0 0.0
    %2715 = vmatprep.subr.mxu0 0.0
    %2716 = vmatpush1.xpose.msra.mxu0 0.0
    %2717 = vmatprep.subr.mxu0 0.0
    %2718 = vmatpush1.xpose.msra.mxu0 0.0
    %2719 = vmatprep.subr.mxu0 0.0
    %2720 = vmatpush1.xpose.msra.mxu0 0.0
    %2721 = vmatprep.subr.mxu0 0.0
    %2722 = vmatpush1.xpose.msra.mxu0 0.0
    %2723 = vmatprep.subr.mxu0 0.0
    %2724 = vmatpush1.xpose.msra.mxu0 0.0
    %2725 = vmatprep.subr.mxu0 0.0
    %2726 = vmatpush1.xpose.msra.mxu0 0.0
    %2727 = vmatprep.subr.mxu0 0.0
    %2728 = vmatpush1.xpose.msra.mxu0 0.0
    %2729 = vmatprep.subr.mxu0 0.0
    %2730 = vmatpush1.xpose.msra.mxu0 0.0
    %2731 = vmatprep.subr.mxu0 0.0
    %2732 = vmatpush1.xpose.msra.mxu0 0.0
    %2733 = vmatprep.subr.mxu0 0.0
    %2734 = vmatpush1.xpose.msra.mxu0 0.0
    %2735 = vmatprep.subr.mxu0 0.0
    %2736 = vmatpush1.xpose.msra.mxu0 0.0
    %2737 = vmatprep.subr.mxu0 0.0
    %2738 = vmatpush1.xpose.msra.mxu0 0.0
    %2739 = vmatprep.subr.mxu0 0.0
    %2740 = vmatpush1.xpose.msra.mxu0 0.0
    %2741 = vmatprep.subr.mxu0 0.0
    %2742 = vmatpush1.xpose.msra.mxu0 0.0
    %2743 = vmatprep.subr.mxu0 0.0
    %2744 = vmatpush1.xpose.msra.mxu0 0.0
    %2745 = vmatprep.subr.mxu0 0.0
    %2746 = vmatpush1.xpose.msra.mxu0 0.0
    %2747 = vmatprep.mubr.f32.mxu0 0.0
    %v2748 = vand.u32 %v2525, 4294901760
    %v2749 = vsub.f32 %v2525, %v2748
    %2750 = vmatmul.mubr.f32.gmra.mrb[0].mxu0 %v2749
    %v2751 = vpop.f32.mrb[0].mxu0
    %v2752 = vadd.f32 %v2678, %v2751
    %v2753 = vpop.f32.mrb[0].mxu0
    %2754 = vdwg.mxu0
    %2755 = vmatprep.subr.mxu0 0.0
    %v2756 = vand.u32 %v2527, 4294901760
    %2757 = vmatpush1.xpose.msra.mxu0 %v2756
    %2758 = vmatprep.subr.mxu0 0.0
    %2759 = vmatpush1.xpose.msra.mxu0 0.0
    %2760 = vmatprep.subr.mxu0 0.0
    %2761 = vmatpush1.xpose.msra.mxu0 0.0
    %2762 = vmatprep.subr.mxu0 0.0
    %2763 = vmatpush1.xpose.msra.mxu0 0.0
    %2764 = vmatprep.subr.mxu0 0.0
    %2765 = vmatpush1.xpose.msra.mxu0 0.0
    %2766 = vmatprep.subr.mxu0 0.0
    %2767 = vmatpush1.xpose.msra.mxu0 0.0
    %2768 = vmatprep.subr.mxu0 0.0
    %2769 = vmatpush1.xpose.msra.mxu0 0.0
    %2770 = vmatprep.subr.mxu0 0.0
    %2771 = vmatpush1.xpose.msra.mxu0 0.0
    %2772 = vmatprep.subr.mxu0 0.0
    %2773 = vmatpush1.xpose.msra.mxu0 0.0
    %2774 = vmatprep.subr.mxu0 0.0
    %2775 = vmatpush1.xpose.msra.mxu0 0.0
    %2776 = vmatprep.subr.mxu0 0.0
    %2777 = vmatpush1.xpose.msra.mxu0 0.0
    %2778 = vmatprep.subr.mxu0 0.0
    %2779 = vmatpush1.xpose.msra.mxu0 0.0
    %2780 = vmatprep.subr.mxu0 0.0
    %2781 = vmatpush1.xpose.msra.mxu0 0.0
    %2782 = vmatprep.subr.mxu0 0.0
    %2783 = vmatpush1.xpose.msra.mxu0 0.0
    %2784 = vmatprep.subr.mxu0 0.0
    %2785 = vmatpush1.xpose.msra.mxu0 0.0
    %2786 = vmatprep.subr.mxu0 0.0
    %2787 = vmatpush1.xpose.msra.mxu0 0.0
    %2788 = vmatprep.subr.mxu0 0.0
    %2789 = vmatpush1.xpose.msra.mxu0 0.0
    %2790 = vmatprep.subr.mxu0 0.0
    %2791 = vmatpush1.xpose.msra.mxu0 0.0
    %2792 = vmatprep.subr.mxu0 0.0
    %2793 = vmatpush1.xpose.msra.mxu0 0.0
    %2794 = vmatprep.subr.mxu0 0.0
    %2795 = vmatpush1.xpose.msra.mxu0 0.0
    %2796 = vmatprep.subr.mxu0 0.0
    %2797 = vmatpush1.xpose.msra.mxu0 0.0
    %2798 = vmatprep.subr.mxu0 0.0
    %2799 = vmatpush1.xpose.msra.mxu0 0.0
    %2800 = vmatprep.subr.mxu0 0.0
    %2801 = vmatpush1.xpose.msra.mxu0 0.0
    %2802 = vmatprep.subr.mxu0 0.0
    %2803 = vmatpush1.xpose.msra.mxu0 0.0
    %2804 = vmatprep.subr.mxu0 0.0
    %2805 = vmatpush1.xpose.msra.mxu0 0.0
    %2806 = vmatprep.subr.mxu0 0.0
    %2807 = vmatpush1.xpose.msra.mxu0 0.0
    %2808 = vmatprep.subr.mxu0 0.0
    %2809 = vmatpush1.xpose.msra.mxu0 0.0
    %2810 = vmatprep.subr.mxu0 0.0
    %2811 = vmatpush1.xpose.msra.mxu0 0.0
    %2812 = vmatprep.subr.mxu0 0.0
    %2813 = vmatpush1.xpose.msra.mxu0 0.0
    %2814 = vmatprep.subr.mxu0 0.0
    %2815 = vmatpush1.xpose.msra.mxu0 0.0
    %2816 = vmatprep.subr.mxu0 0.0
    %2817 = vmatpush1.xpose.msra.mxu0 0.0
    %2818 = vmatprep.subr.mxu0 0.0
    %2819 = vmatpush1.xpose.msra.mxu0 0.0
    %2820 = vmatprep.mubr.f32.mxu0 0.0
    %v2821 = vand.u32 %v2525, 4294901760
    %v2822 = vsub.f32 %v2525, %v2821
    %v2823 = vand.u32 %v2822, 4294901760
    %2824 = vmatmul.mubr.f32.gmra.mrb[0].mxu0 %v2823
    %v2825 = vpop.f32.mrb[0].mxu0
    %v2826 = vadd.f32 %v2752, %v2825
    %v2827 = vpop.f32.mrb[0].mxu0
    %2828 = vdwg.mxu0
    %2829 = vmatprep.subr.mxu0 0.0
    %v2830 = vand.u32 %v2527, 4294901760
    %v2831 = vsub.f32 %v2527, %v2830
    %v2832 = vand.u32 %v2831, 4294901760
    %2833 = vmatpush1.xpose.msra.mxu0 %v2832
    %2834 = vmatprep.subr.mxu0 0.0
    %2835 = vmatpush1.xpose.msra.mxu0 0.0
    %2836 = vmatprep.subr.mxu0 0.0
    %2837 = vmatpush1.xpose.msra.mxu0 0.0
    %2838 = vmatprep.subr.mxu0 0.0
    %2839 = vmatpush1.xpose.msra.mxu0 0.0
    %2840 = vmatprep.subr.mxu0 0.0
    %2841 = vmatpush1.xpose.msra.mxu0 0.0
    %2842 = vmatprep.subr.mxu0 0.0
    %2843 = vmatpush1.xpose.msra.mxu0 0.0
    %2844 = vmatprep.subr.mxu0 0.0
    %2845 = vmatpush1.xpose.msra.mxu0 0.0
    %2846 = vmatprep.subr.mxu0 0.0
    %2847 = vmatpush1.xpose.msra.mxu0 0.0
    %2848 = vmatprep.subr.mxu0 0.0
    %2849 = vmatpush1.xpose.msra.mxu0 0.0
    %2850 = vmatprep.subr.mxu0 0.0
    %2851 = vmatpush1.xpose.msra.mxu0 0.0
    %2852 = vmatprep.subr.mxu0 0.0
    %2853 = vmatpush1.xpose.msra.mxu0 0.0
    %2854 = vmatprep.subr.mxu0 0.0
    %2855 = vmatpush1.xpose.msra.mxu0 0.0
    %2856 = vmatprep.subr.mxu0 0.0
    %2857 = vmatpush1.xpose.msra.mxu0 0.0
    %2858 = vmatprep.subr.mxu0 0.0
    %2859 = vmatpush1.xpose.msra.mxu0 0.0
    %2860 = vmatprep.subr.mxu0 0.0
    %2861 = vmatpush1.xpose.msra.mxu0 0.0
    %2862 = vmatprep.subr.mxu0 0.0
    %2863 = vmatpush1.xpose.msra.mxu0 0.0
    %2864 = vmatprep.subr.mxu0 0.0
    %2865 = vmatpush1.xpose.msra.mxu0 0.0
    %2866 = vmatprep.subr.mxu0 0.0
    %2867 = vmatpush1.xpose.msra.mxu0 0.0
    %2868 = vmatprep.subr.mxu0 0.0
    %2869 = vmatpush1.xpose.msra.mxu0 0.0
    %2870 = vmatprep.subr.mxu0 0.0
    %2871 = vmatpush1.xpose.msra.mxu0 0.0
    %2872 = vmatprep.subr.mxu0 0.0
    %2873 = vmatpush1.xpose.msra.mxu0 0.0
    %2874 = vmatprep.subr.mxu0 0.0
    %2875 = vmatpush1.xpose.msra.mxu0 0.0
    %2876 = vmatprep.subr.mxu0 0.0
    %2877 = vmatpush1.xpose.msra.mxu0 0.0
    %2878 = vmatprep.subr.mxu0 0.0
    %2879 = vmatpush1.xpose.msra.mxu0 0.0
    %2880 = vmatprep.subr.mxu0 0.0
    %2881 = vmatpush1.xpose.msra.mxu0 0.0
    %2882 = vmatprep.subr.mxu0 0.0
    %2883 = vmatpush1.xpose.msra.mxu0 0.0
    %2884 = vmatprep.subr.mxu0 0.0
    %2885 = vmatpush1.xpose.msra.mxu0 0.0
    %2886 = vmatprep.subr.mxu0 0.0
    %2887 = vmatpush1.xpose.msra.mxu0 0.0
    %2888 = vmatprep.subr.mxu0 0.0
    %2889 = vmatpush1.xpose.msra.mxu0 0.0
    %2890 = vmatprep.subr.mxu0 0.0
    %2891 = vmatpush1.xpose.msra.mxu0 0.0
    %2892 = vmatprep.subr.mxu0 0.0
    %2893 = vmatpush1.xpose.msra.mxu0 0.0
    %2894 = vmatprep.subr.mxu0 0.0
    %2895 = vmatpush1.xpose.msra.mxu0 0.0
    %2896 = vmatprep.mubr.f32.mxu0 0.0
    %v2897 = vand.u32 %v2525, 4294901760
    %2898 = vmatmul.mubr.f32.gmra.mrb[0].mxu0 %v2897
    %v2899 = vpop.f32.mrb[0].mxu0
    %v2900 = vadd.f32 %v2826, %v2899
    %v2901 = vpop.f32.mrb[0].mxu0
    %2902 = vdwg.mxu0
    %2903 = vmatprep.subr.mxu0 0.0
    %v2904 = vand.u32 %v2527, 4294901760
    %2905 = vmatpush1.xpose.msra.mxu0 %v2904
    %2906 = vmatprep.subr.mxu0 0.0
    %2907 = vmatpush1.xpose.msra.mxu0 0.0
    %2908 = vmatprep.subr.mxu0 0.0
    %2909 = vmatpush1.xpose.msra.mxu0 0.0
    %2910 = vmatprep.subr.mxu0 0.0
    %2911 = vmatpush1.xpose.msra.mxu0 0.0
    %2912 = vmatprep.subr.mxu0 0.0
    %2913 = vmatpush1.xpose.msra.mxu0 0.0
    %2914 = vmatprep.subr.mxu0 0.0
    %2915 = vmatpush1.xpose.msra.mxu0 0.0
    %2916 = vmatprep.subr.mxu0 0.0
    %2917 = vmatpush1.xpose.msra.mxu0 0.0
    %2918 = vmatprep.subr.mxu0 0.0
    %2919 = vmatpush1.xpose.msra.mxu0 0.0
    %2920 = vmatprep.subr.mxu0 0.0
    %2921 = vmatpush1.xpose.msra.mxu0 0.0
    %2922 = vmatprep.subr.mxu0 0.0
    %2923 = vmatpush1.xpose.msra.mxu0 0.0
    %2924 = vmatprep.subr.mxu0 0.0
    %2925 = vmatpush1.xpose.msra.mxu0 0.0
    %2926 = vmatprep.subr.mxu0 0.0
    %2927 = vmatpush1.xpose.msra.mxu0 0.0
    %2928 = vmatprep.subr.mxu0 0.0
    %2929 = vmatpush1.xpose.msra.mxu0 0.0
    %2930 = vmatprep.subr.mxu0 0.0
    %2931 = vmatpush1.xpose.msra.mxu0 0.0
    %2932 = vmatprep.subr.mxu0 0.0
    %2933 = vmatpush1.xpose.msra.mxu0 0.0
    %2934 = vmatprep.subr.mxu0 0.0
    %2935 = vmatpush1.xpose.msra.mxu0 0.0
    %2936 = vmatprep.subr.mxu0 0.0
    %2937 = vmatpush1.xpose.msra.mxu0 0.0
    %2938 = vmatprep.subr.mxu0 0.0
    %2939 = vmatpush1.xpose.msra.mxu0 0.0
    %2940 = vmatprep.subr.mxu0 0.0
    %2941 = vmatpush1.xpose.msra.mxu0 0.0
    %2942 = vmatprep.subr.mxu0 0.0
    %2943 = vmatpush1.xpose.msra.mxu0 0.0
    %2944 = vmatprep.subr.mxu0 0.0
    %2945 = vmatpush1.xpose.msra.mxu0 0.0
    %2946 = vmatprep.subr.mxu0 0.0
    %2947 = vmatpush1.xpose.msra.mxu0 0.0
    %2948 = vmatprep.subr.mxu0 0.0
    %2949 = vmatpush1.xpose.msra.mxu0 0.0
    %2950 = vmatprep.subr.mxu0 0.0
    %2951 = vmatpush1.xpose.msra.mxu0 0.0
    %2952 = vmatprep.subr.mxu0 0.0
    %2953 = vmatpush1.xpose.msra.mxu0 0.0
    %2954 = vmatprep.subr.mxu0 0.0
    %2955 = vmatpush1.xpose.msra.mxu0 0.0
    %2956 = vmatprep.subr.mxu0 0.0
    %2957 = vmatpush1.xpose.msra.mxu0 0.0
    %2958 = vmatprep.subr.mxu0 0.0
    %2959 = vmatpush1.xpose.msra.mxu0 0.0
    %2960 = vmatprep.subr.mxu0 0.0
    %2961 = vmatpush1.xpose.msra.mxu0 0.0
    %2962 = vmatprep.subr.mxu0 0.0
    %2963 = vmatpush1.xpose.msra.mxu0 0.0
    %2964 = vmatprep.subr.mxu0 0.0
    %2965 = vmatpush1.xpose.msra.mxu0 0.0
    %2966 = vmatprep.subr.mxu0 0.0
    %2967 = vmatpush1.xpose.msra.mxu0 0.0
    %2968 = vmatprep.mubr.f32.mxu0 0.0
    %v2969 = vand.u32 %v2525, 4294901760
    %2970 = vmatmul.mubr.f32.gmra.mrb[0].mxu0 %v2969
    %v2971 = vpop.f32.mrb[0].mxu0
    %v2972 = vadd.f32 %v2900, %v2971
    %v2973 = vpop.f32.mrb[0].mxu0
    %2974 = vdwg.mxu0
    %v2975 = vsel %vm1134, %v2972, -3.4e+38
    %v2976 = vsel %vm683, %v2975, -inf
    %2977 = vmax.xlane.f32.xlu0 %v2976
    %v2978 = vpop.xlane.xlu0 %2977
    %v2979 = vsub.f32 %v2975, %v2978
    %v2980 = vmul.f32 %v2979, 1.442695
    %v2981 = vpow.pop %v2980
    %v2982 = vmul.f32 %v2981, %v678
    %v2983 = vsel %vm683, %v2982, 0.0
    %2984 = vadd.xlane.f32.xlu0 %v2983
    %v2985 = vpop.xlane.xlu0 %2984
    %v2986 = vmax.f32 %v2985, 1e-30
    %v2987 = vrcp.pop %v2986
    %v2988 = vmul.f32 %v2982, %v2987
    %2989 = vrot.lane.b32.xlu0 %v661, 48
    %v2990 = vpop.permute.xlu0 %2989
    %v2993 = vsel %vm683, %v2988, 0
    %2995 = vmatprep.subr.mxu0 0.0
    %v2996 = vand.u32 %v2990, 4294901760
    %2997 = vmatpush1.msra.mxu0 %v2996
    %2998 = vmatprep.subr.mxu0 0.0
    %2999 = vmatpush1.msra.mxu0 0.0
    %3000 = vmatprep.subr.mxu0 0.0
    %3001 = vmatpush1.msra.mxu0 0.0
    %3002 = vmatprep.subr.mxu0 0.0
    %3003 = vmatpush1.msra.mxu0 0.0
    %3004 = vmatprep.subr.mxu0 0.0
    %3005 = vmatpush1.msra.mxu0 0.0
    %3006 = vmatprep.subr.mxu0 0.0
    %3007 = vmatpush1.msra.mxu0 0.0
    %3008 = vmatprep.subr.mxu0 0.0
    %3009 = vmatpush1.msra.mxu0 0.0
    %3010 = vmatprep.subr.mxu0 0.0
    %3011 = vmatpush1.msra.mxu0 0.0
    %3012 = vmatprep.subr.mxu0 0.0
    %3013 = vmatpush1.msra.mxu0 0.0
    %3014 = vmatprep.subr.mxu0 0.0
    %3015 = vmatpush1.msra.mxu0 0.0
    %3016 = vmatprep.subr.mxu0 0.0
    %3017 = vmatpush1.msra.mxu0 0.0
    %3018 = vmatprep.subr.mxu0 0.0
    %3019 = vmatpush1.msra.mxu0 0.0
    %3020 = vmatprep.subr.mxu0 0.0
    %3021 = vmatpush1.msra.mxu0 0.0
    %3022 = vmatprep.subr.mxu0 0.0
    %3023 = vmatpush1.msra.mxu0 0.0
    %3024 = vmatprep.subr.mxu0 0.0
    %3025 = vmatpush1.msra.mxu0 0.0
    %3026 = vmatprep.subr.mxu0 0.0
    %3027 = vmatpush1.msra.mxu0 0.0
    %3028 = vmatprep.subr.mxu0 0.0
    %3029 = vmatpush1.msra.mxu0 0.0
    %3030 = vmatprep.subr.mxu0 0.0
    %3031 = vmatpush1.msra.mxu0 0.0
    %3032 = vmatprep.subr.mxu0 0.0
    %3033 = vmatpush1.msra.mxu0 0.0
    %3034 = vmatprep.subr.mxu0 0.0
    %3035 = vmatpush1.msra.mxu0 0.0
    %3036 = vmatprep.subr.mxu0 0.0
    %3037 = vmatpush1.msra.mxu0 0.0
    %3038 = vmatprep.subr.mxu0 0.0
    %3039 = vmatpush1.msra.mxu0 0.0
    %3040 = vmatprep.subr.mxu0 0.0
    %3041 = vmatpush1.msra.mxu0 0.0
    %3042 = vmatprep.subr.mxu0 0.0
    %3043 = vmatpush1.msra.mxu0 0.0
    %3044 = vmatprep.subr.mxu0 0.0
    %3045 = vmatpush1.msra.mxu0 0.0
    %3046 = vmatprep.subr.mxu0 0.0
    %3047 = vmatpush1.msra.mxu0 0.0
    %3048 = vmatprep.subr.mxu0 0.0
    %3049 = vmatpush1.msra.mxu0 0.0
    %3050 = vmatprep.subr.mxu0 0.0
    %3051 = vmatpush1.msra.mxu0 0.0
    %3052 = vmatprep.subr.mxu0 0.0
    %3053 = vmatpush1.msra.mxu0 0.0
    %3054 = vmatprep.subr.mxu0 0.0
    %3055 = vmatpush1.msra.mxu0 0.0
    %3056 = vmatprep.subr.mxu0 0.0
    %3057 = vmatpush1.msra.mxu0 0.0
    %3058 = vmatprep.subr.mxu0 0.0
    %3059 = vmatpush1.msra.mxu0 0.0
    %3060 = vmatprep.mubr.f32.mxu0 0.0
    %v3061 = vand.u32 %v2993, 4294901760
    %v3062 = vsub.f32 %v2993, %v3061
    %v3063 = vand.u32 %v3062, 4294901760
    %v3064 = vsub.f32 %v3062, %v3063
    %v3065 = vand.u32 %v3064, 4294901760
    %3066 = vmatmul.mubr.f32.gmra.mrb[0].mxu0 %v3065
    %v3067 = vpop.f32.mrb[0].mxu0
    %v3068 = vadd.f32 0.0, %v3067
    %v3069 = vpop.f32.mrb[0].mxu0
    %3070 = vdwg.mxu0
    %3071 = vmatprep.subr.mxu0 0.0
    %v3072 = vand.u32 %v2990, 4294901760
    %v3073 = vsub.f32 %v2990, %v3072
    %v3074 = vand.u32 %v3073, 4294901760
    %v3075 = vsub.f32 %v3073, %v3074
    %v3076 = vand.u32 %v3075, 4294901760
    %3077 = vmatpush1.msra.mxu0 %v3076
    %3078 = vmatprep.subr.mxu0 0.0
    %3079 = vmatpush1.msra.mxu0 0.0
    %3080 = vmatprep.subr.mxu0 0.0
    %3081 = vmatpush1.msra.mxu0 0.0
    %3082 = vmatprep.subr.mxu0 0.0
    %3083 = vmatpush1.msra.mxu0 0.0
    %3084 = vmatprep.subr.mxu0 0.0
    %3085 = vmatpush1.msra.mxu0 0.0
    %3086 = vmatprep.subr.mxu0 0.0
    %3087 = vmatpush1.msra.mxu0 0.0
    %3088 = vmatprep.subr.mxu0 0.0
    %3089 = vmatpush1.msra.mxu0 0.0
    %3090 = vmatprep.subr.mxu0 0.0
    %3091 = vmatpush1.msra.mxu0 0.0
    %3092 = vmatprep.subr.mxu0 0.0
    %3093 = vmatpush1.msra.mxu0 0.0
    %3094 = vmatprep.subr.mxu0 0.0
    %3095 = vmatpush1.msra.mxu0 0.0
    %3096 = vmatprep.subr.mxu0 0.0
    %3097 = vmatpush1.msra.mxu0 0.0
    %3098 = vmatprep.subr.mxu0 0.0
    %3099 = vmatpush1.msra.mxu0 0.0
    %3100 = vmatprep.subr.mxu0 0.0
    %3101 = vmatpush1.msra.mxu0 0.0
    %3102 = vmatprep.subr.mxu0 0.0
    %3103 = vmatpush1.msra.mxu0 0.0
    %3104 = vmatprep.subr.mxu0 0.0
    %3105 = vmatpush1.msra.mxu0 0.0
    %3106 = vmatprep.subr.mxu0 0.0
    %3107 = vmatpush1.msra.mxu0 0.0
    %3108 = vmatprep.subr.mxu0 0.0
    %3109 = vmatpush1.msra.mxu0 0.0
    %3110 = vmatprep.subr.mxu0 0.0
    %3111 = vmatpush1.msra.mxu0 0.0
    %3112 = vmatprep.subr.mxu0 0.0
    %3113 = vmatpush1.msra.mxu0 0.0
    %3114 = vmatprep.subr.mxu0 0.0
    %3115 = vmatpush1.msra.mxu0 0.0
    %3116 = vmatprep.subr.mxu0 0.0
    %3117 = vmatpush1.msra.mxu0 0.0
    %3118 = vmatprep.subr.mxu0 0.0
    %3119 = vmatpush1.msra.mxu0 0.0
    %3120 = vmatprep.subr.mxu0 0.0
    %3121 = vmatpush1.msra.mxu0 0.0
    %3122 = vmatprep.subr.mxu0 0.0
    %3123 = vmatpush1.msra.mxu0 0.0
    %3124 = vmatprep.subr.mxu0 0.0
    %3125 = vmatpush1.msra.mxu0 0.0
    %3126 = vmatprep.subr.mxu0 0.0
    %3127 = vmatpush1.msra.mxu0 0.0
    %3128 = vmatprep.subr.mxu0 0.0
    %3129 = vmatpush1.msra.mxu0 0.0
    %3130 = vmatprep.subr.mxu0 0.0
    %3131 = vmatpush1.msra.mxu0 0.0
    %3132 = vmatprep.subr.mxu0 0.0
    %3133 = vmatpush1.msra.mxu0 0.0
    %3134 = vmatprep.subr.mxu0 0.0
    %3135 = vmatpush1.msra.mxu0 0.0
    %3136 = vmatprep.subr.mxu0 0.0
    %3137 = vmatpush1.msra.mxu0 0.0
    %3138 = vmatprep.subr.mxu0 0.0
    %3139 = vmatpush1.msra.mxu0 0.0
    %3140 = vmatprep.mubr.f32.mxu0 0.0
    %v3141 = vand.u32 %v2993, 4294901760
    %3142 = vmatmul.mubr.f32.gmra.mrb[0].mxu0 %v3141
    %v3143 = vpop.f32.mrb[0].mxu0
    %v3144 = vadd.f32 %v3068, %v3143
    %v3145 = vpop.f32.mrb[0].mxu0
    %3146 = vdwg.mxu0
    %3147 = vmatprep.subr.mxu0 0.0
    %v3148 = vand.u32 %v2990, 4294901760
    %v3149 = vsub.f32 %v2990, %v3148
    %3150 = vmatpush1.msra.mxu0 %v3149
    %3151 = vmatprep.subr.mxu0 0.0
    %3152 = vmatpush1.msra.mxu0 0.0
    %3153 = vmatprep.subr.mxu0 0.0
    %3154 = vmatpush1.msra.mxu0 0.0
    %3155 = vmatprep.subr.mxu0 0.0
    %3156 = vmatpush1.msra.mxu0 0.0
    %3157 = vmatprep.subr.mxu0 0.0
    %3158 = vmatpush1.msra.mxu0 0.0
    %3159 = vmatprep.subr.mxu0 0.0
    %3160 = vmatpush1.msra.mxu0 0.0
    %3161 = vmatprep.subr.mxu0 0.0
    %3162 = vmatpush1.msra.mxu0 0.0
    %3163 = vmatprep.subr.mxu0 0.0
    %3164 = vmatpush1.msra.mxu0 0.0
    %3165 = vmatprep.subr.mxu0 0.0
    %3166 = vmatpush1.msra.mxu0 0.0
    %3167 = vmatprep.subr.mxu0 0.0
    %3168 = vmatpush1.msra.mxu0 0.0
    %3169 = vmatprep.subr.mxu0 0.0
    %3170 = vmatpush1.msra.mxu0 0.0
    %3171 = vmatprep.subr.mxu0 0.0
    %3172 = vmatpush1.msra.mxu0 0.0
    %3173 = vmatprep.subr.mxu0 0.0
    %3174 = vmatpush1.msra.mxu0 0.0
    %3175 = vmatprep.subr.mxu0 0.0
    %3176 = vmatpush1.msra.mxu0 0.0
    %3177 = vmatprep.subr.mxu0 0.0
    %3178 = vmatpush1.msra.mxu0 0.0
    %3179 = vmatprep.subr.mxu0 0.0
    %3180 = vmatpush1.msra.mxu0 0.0
    %3181 = vmatprep.subr.mxu0 0.0
    %3182 = vmatpush1.msra.mxu0 0.0
    %3183 = vmatprep.subr.mxu0 0.0
    %3184 = vmatpush1.msra.mxu0 0.0
    %3185 = vmatprep.subr.mxu0 0.0
    %3186 = vmatpush1.msra.mxu0 0.0
    %3187 = vmatprep.subr.mxu0 0.0
    %3188 = vmatpush1.msra.mxu0 0.0
    %3189 = vmatprep.subr.mxu0 0.0
    %3190 = vmatpush1.msra.mxu0 0.0
    %3191 = vmatprep.subr.mxu0 0.0
    %3192 = vmatpush1.msra.mxu0 0.0
    %3193 = vmatprep.subr.mxu0 0.0
    %3194 = vmatpush1.msra.mxu0 0.0
    %3195 = vmatprep.subr.mxu0 0.0
    %3196 = vmatpush1.msra.mxu0 0.0
    %3197 = vmatprep.subr.mxu0 0.0
    %3198 = vmatpush1.msra.mxu0 0.0
    %3199 = vmatprep.subr.mxu0 0.0
    %3200 = vmatpush1.msra.mxu0 0.0
    %3201 = vmatprep.subr.mxu0 0.0
    %3202 = vmatpush1.msra.mxu0 0.0
    %3203 = vmatprep.subr.mxu0 0.0
    %3204 = vmatpush1.msra.mxu0 0.0
    %3205 = vmatprep.subr.mxu0 0.0
    %3206 = vmatpush1.msra.mxu0 0.0
    %3207 = vmatprep.subr.mxu0 0.0
    %3208 = vmatpush1.msra.mxu0 0.0
    %3209 = vmatprep.subr.mxu0 0.0
    %3210 = vmatpush1.msra.mxu0 0.0
    %3211 = vmatprep.subr.mxu0 0.0
    %3212 = vmatpush1.msra.mxu0 0.0
    %3213 = vmatprep.mubr.f32.mxu0 0.0
    %v3214 = vand.u32 %v2993, 4294901760
    %v3215 = vsub.f32 %v2993, %v3214
    %3216 = vmatmul.mubr.f32.gmra.mrb[0].mxu0 %v3215
    %v3217 = vpop.f32.mrb[0].mxu0
    %v3218 = vadd.f32 %v3144, %v3217
    %v3219 = vpop.f32.mrb[0].mxu0
    %3220 = vdwg.mxu0
    %3221 = vmatprep.subr.mxu0 0.0
    %v3222 = vand.u32 %v2990, 4294901760
    %3223 = vmatpush1.msra.mxu0 %v3222
    %3224 = vmatprep.subr.mxu0 0.0
    %3225 = vmatpush1.msra.mxu0 0.0
    %3226 = vmatprep.subr.mxu0 0.0
    %3227 = vmatpush1.msra.mxu0 0.0
    %3228 = vmatprep.subr.mxu0 0.0
    %3229 = vmatpush1.msra.mxu0 0.0
    %3230 = vmatprep.subr.mxu0 0.0
    %3231 = vmatpush1.msra.mxu0 0.0
    %3232 = vmatprep.subr.mxu0 0.0
    %3233 = vmatpush1.msra.mxu0 0.0
    %3234 = vmatprep.subr.mxu0 0.0
    %3235 = vmatpush1.msra.mxu0 0.0
    %3236 = vmatprep.subr.mxu0 0.0
    %3237 = vmatpush1.msra.mxu0 0.0
    %3238 = vmatprep.subr.mxu0 0.0
    %3239 = vmatpush1.msra.mxu0 0.0
    %3240 = vmatprep.subr.mxu0 0.0
    %3241 = vmatpush1.msra.mxu0 0.0
    %3242 = vmatprep.subr.mxu0 0.0
    %3243 = vmatpush1.msra.mxu0 0.0
    %3244 = vmatprep.subr.mxu0 0.0
    %3245 = vmatpush1.msra.mxu0 0.0
    %3246 = vmatprep.subr.mxu0 0.0
    %3247 = vmatpush1.msra.mxu0 0.0
    %3248 = vmatprep.subr.mxu0 0.0
    %3249 = vmatpush1.msra.mxu0 0.0
    %3250 = vmatprep.subr.mxu0 0.0
    %3251 = vmatpush1.msra.mxu0 0.0
    %3252 = vmatprep.subr.mxu0 0.0
    %3253 = vmatpush1.msra.mxu0 0.0
    %3254 = vmatprep.subr.mxu0 0.0
    %3255 = vmatpush1.msra.mxu0 0.0
    %3256 = vmatprep.subr.mxu0 0.0
    %3257 = vmatpush1.msra.mxu0 0.0
    %3258 = vmatprep.subr.mxu0 0.0
    %3259 = vmatpush1.msra.mxu0 0.0
    %3260 = vmatprep.subr.mxu0 0.0
    %3261 = vmatpush1.msra.mxu0 0.0
    %3262 = vmatprep.subr.mxu0 0.0
    %3263 = vmatpush1.msra.mxu0 0.0
    %3264 = vmatprep.subr.mxu0 0.0
    %3265 = vmatpush1.msra.mxu0 0.0
    %3266 = vmatprep.subr.mxu0 0.0
    %3267 = vmatpush1.msra.mxu0 0.0
    %3268 = vmatprep.subr.mxu0 0.0
    %3269 = vmatpush1.msra.mxu0 0.0
    %3270 = vmatprep.subr.mxu0 0.0
    %3271 = vmatpush1.msra.mxu0 0.0
    %3272 = vmatprep.subr.mxu0 0.0
    %3273 = vmatpush1.msra.mxu0 0.0
    %3274 = vmatprep.subr.mxu0 0.0
    %3275 = vmatpush1.msra.mxu0 0.0
    %3276 = vmatprep.subr.mxu0 0.0
    %3277 = vmatpush1.msra.mxu0 0.0
    %3278 = vmatprep.subr.mxu0 0.0
    %3279 = vmatpush1.msra.mxu0 0.0
    %3280 = vmatprep.subr.mxu0 0.0
    %3281 = vmatpush1.msra.mxu0 0.0
    %3282 = vmatprep.subr.mxu0 0.0
    %3283 = vmatpush1.msra.mxu0 0.0
    %3284 = vmatprep.subr.mxu0 0.0
    %3285 = vmatpush1.msra.mxu0 0.0
    %3286 = vmatprep.mubr.f32.mxu0 0.0
    %v3287 = vand.u32 %v2993, 4294901760
    %v3288 = vsub.f32 %v2993, %v3287
    %v3289 = vand.u32 %v3288, 4294901760
    %3290 = vmatmul.mubr.f32.gmra.mrb[0].mxu0 %v3289
    %v3291 = vpop.f32.mrb[0].mxu0
    %v3292 = vadd.f32 %v3218, %v3291
    %v3293 = vpop.f32.mrb[0].mxu0
    %3294 = vdwg.mxu0
    %3295 = vmatprep.subr.mxu0 0.0
    %v3296 = vand.u32 %v2990, 4294901760
    %v3297 = vsub.f32 %v2990, %v3296
    %v3298 = vand.u32 %v3297, 4294901760
    %3299 = vmatpush1.msra.mxu0 %v3298
    %3300 = vmatprep.subr.mxu0 0.0
    %3301 = vmatpush1.msra.mxu0 0.0
    %3302 = vmatprep.subr.mxu0 0.0
    %3303 = vmatpush1.msra.mxu0 0.0
    %3304 = vmatprep.subr.mxu0 0.0
    %3305 = vmatpush1.msra.mxu0 0.0
    %3306 = vmatprep.subr.mxu0 0.0
    %3307 = vmatpush1.msra.mxu0 0.0
    %3308 = vmatprep.subr.mxu0 0.0
    %3309 = vmatpush1.msra.mxu0 0.0
    %3310 = vmatprep.subr.mxu0 0.0
    %3311 = vmatpush1.msra.mxu0 0.0
    %3312 = vmatprep.subr.mxu0 0.0
    %3313 = vmatpush1.msra.mxu0 0.0
    %3314 = vmatprep.subr.mxu0 0.0
    %3315 = vmatpush1.msra.mxu0 0.0
    %3316 = vmatprep.subr.mxu0 0.0
    %3317 = vmatpush1.msra.mxu0 0.0
    %3318 = vmatprep.subr.mxu0 0.0
    %3319 = vmatpush1.msra.mxu0 0.0
    %3320 = vmatprep.subr.mxu0 0.0
    %3321 = vmatpush1.msra.mxu0 0.0
    %3322 = vmatprep.subr.mxu0 0.0
    %3323 = vmatpush1.msra.mxu0 0.0
    %3324 = vmatprep.subr.mxu0 0.0
    %3325 = vmatpush1.msra.mxu0 0.0
    %3326 = vmatprep.subr.mxu0 0.0
    %3327 = vmatpush1.msra.mxu0 0.0
    %3328 = vmatprep.subr.mxu0 0.0
    %3329 = vmatpush1.msra.mxu0 0.0
    %3330 = vmatprep.subr.mxu0 0.0
    %3331 = vmatpush1.msra.mxu0 0.0
    %3332 = vmatprep.subr.mxu0 0.0
    %3333 = vmatpush1.msra.mxu0 0.0
    %3334 = vmatprep.subr.mxu0 0.0
    %3335 = vmatpush1.msra.mxu0 0.0
    %3336 = vmatprep.subr.mxu0 0.0
    %3337 = vmatpush1.msra.mxu0 0.0
    %3338 = vmatprep.subr.mxu0 0.0
    %3339 = vmatpush1.msra.mxu0 0.0
    %3340 = vmatprep.subr.mxu0 0.0
    %3341 = vmatpush1.msra.mxu0 0.0
    %3342 = vmatprep.subr.mxu0 0.0
    %3343 = vmatpush1.msra.mxu0 0.0
    %3344 = vmatprep.subr.mxu0 0.0
    %3345 = vmatpush1.msra.mxu0 0.0
    %3346 = vmatprep.subr.mxu0 0.0
    %3347 = vmatpush1.msra.mxu0 0.0
    %3348 = vmatprep.subr.mxu0 0.0
    %3349 = vmatpush1.msra.mxu0 0.0
    %3350 = vmatprep.subr.mxu0 0.0
    %3351 = vmatpush1.msra.mxu0 0.0
    %3352 = vmatprep.subr.mxu0 0.0
    %3353 = vmatpush1.msra.mxu0 0.0
    %3354 = vmatprep.subr.mxu0 0.0
    %3355 = vmatpush1.msra.mxu0 0.0
    %3356 = vmatprep.subr.mxu0 0.0
    %3357 = vmatpush1.msra.mxu0 0.0
    %3358 = vmatprep.subr.mxu0 0.0
    %3359 = vmatpush1.msra.mxu0 0.0
    %3360 = vmatprep.subr.mxu0 0.0
    %3361 = vmatpush1.msra.mxu0 0.0
    %3362 = vmatprep.mubr.f32.mxu0 0.0
    %v3363 = vand.u32 %v2993, 4294901760
    %3364 = vmatmul.mubr.f32.gmra.mrb[0].mxu0 %v3363
    %v3365 = vpop.f32.mrb[0].mxu0
    %v3366 = vadd.f32 %v3292, %v3365
    %v3367 = vpop.f32.mrb[0].mxu0
    %3368 = vdwg.mxu0
    %3369 = vmatprep.subr.mxu0 0.0
    %v3370 = vand.u32 %v2990, 4294901760
    %3371 = vmatpush1.msra.mxu0 %v3370
    %3372 = vmatprep.subr.mxu0 0.0
    %3373 = vmatpush1.msra.mxu0 0.0
    %3374 = vmatprep.subr.mxu0 0.0
    %3375 = vmatpush1.msra.mxu0 0.0
    %3376 = vmatprep.subr.mxu0 0.0
    %3377 = vmatpush1.msra.mxu0 0.0
    %3378 = vmatprep.subr.mxu0 0.0
    %3379 = vmatpush1.msra.mxu0 0.0
    %3380 = vmatprep.subr.mxu0 0.0
    %3381 = vmatpush1.msra.mxu0 0.0
    %3382 = vmatprep.subr.mxu0 0.0
    %3383 = vmatpush1.msra.mxu0 0.0
    %3384 = vmatprep.subr.mxu0 0.0
    %3385 = vmatpush1.msra.mxu0 0.0
    %3386 = vmatprep.subr.mxu0 0.0
    %3387 = vmatpush1.msra.mxu0 0.0
    %3388 = vmatprep.subr.mxu0 0.0
    %3389 = vmatpush1.msra.mxu0 0.0
    %3390 = vmatprep.subr.mxu0 0.0
    %3391 = vmatpush1.msra.mxu0 0.0
    %3392 = vmatprep.subr.mxu0 0.0
    %3393 = vmatpush1.msra.mxu0 0.0
    %3394 = vmatprep.subr.mxu0 0.0
    %3395 = vmatpush1.msra.mxu0 0.0
    %3396 = vmatprep.subr.mxu0 0.0
    %3397 = vmatpush1.msra.mxu0 0.0
    %3398 = vmatprep.subr.mxu0 0.0
    %3399 = vmatpush1.msra.mxu0 0.0
    %3400 = vmatprep.subr.mxu0 0.0
    %3401 = vmatpush1.msra.mxu0 0.0
    %3402 = vmatprep.subr.mxu0 0.0
    %3403 = vmatpush1.msra.mxu0 0.0
    %3404 = vmatprep.subr.mxu0 0.0
    %3405 = vmatpush1.msra.mxu0 0.0
    %3406 = vmatprep.subr.mxu0 0.0
    %3407 = vmatpush1.msra.mxu0 0.0
    %3408 = vmatprep.subr.mxu0 0.0
    %3409 = vmatpush1.msra.mxu0 0.0
    %3410 = vmatprep.subr.mxu0 0.0
    %3411 = vmatpush1.msra.mxu0 0.0
    %3412 = vmatprep.subr.mxu0 0.0
    %3413 = vmatpush1.msra.mxu0 0.0
    %3414 = vmatprep.subr.mxu0 0.0
    %3415 = vmatpush1.msra.mxu0 0.0
    %3416 = vmatprep.subr.mxu0 0.0
    %3417 = vmatpush1.msra.mxu0 0.0
    %3418 = vmatprep.subr.mxu0 0.0
    %3419 = vmatpush1.msra.mxu0 0.0
    %3420 = vmatprep.subr.mxu0 0.0
    %3421 = vmatpush1.msra.mxu0 0.0
    %3422 = vmatprep.subr.mxu0 0.0
    %3423 = vmatpush1.msra.mxu0 0.0
    %3424 = vmatprep.subr.mxu0 0.0
    %3425 = vmatpush1.msra.mxu0 0.0
    %3426 = vmatprep.subr.mxu0 0.0
    %3427 = vmatpush1.msra.mxu0 0.0
    %3428 = vmatprep.subr.mxu0 0.0
    %3429 = vmatpush1.msra.mxu0 0.0
    %3430 = vmatprep.subr.mxu0 0.0
    %3431 = vmatpush1.msra.mxu0 0.0
    %3432 = vmatprep.subr.mxu0 0.0
    %3433 = vmatpush1.msra.mxu0 0.0
    %3434 = vmatprep.mubr.f32.mxu0 0.0
    %v3435 = vand.u32 %v2993, 4294901760
    %3436 = vmatmul.mubr.f32.gmra.mrb[0].mxu0 %v3435
    %v3437 = vpop.f32.mrb[0].mxu0
    %v3438 = vadd.f32 %v3366, %v3437
    %v3439 = vpop.f32.mrb[0].mxu0
    %3440 = vdwg.mxu0
    %3441 = vrot.lane.b32.xlu0 %v661, 104
    %v3442 = vpop.permute.xlu0 %3441
    %3443 = vrot.lane.b32.xlu0 %v661, 72
    %v3444 = vpop.permute.xlu0 %3443
    %v3445 = vsel %vm683, %v3442, 0
    %v3447 = vsel %vm683, %v3444, 0
    %3449 = vmatprep.subr.mxu0 0.0
    %v3450 = vand.u32 %v3447, 4294901760
    %3451 = vmatpush1.xpose.msra.mxu0 %v3450
    %3452 = vmatprep.subr.mxu0 0.0
    %3453 = vmatpush1.xpose.msra.mxu0 0.0
    %3454 = vmatprep.subr.mxu0 0.0
    %3455 = vmatpush1.xpose.msra.mxu0 0.0
    %3456 = vmatprep.subr.mxu0 0.0
    %3457 = vmatpush1.xpose.msra.mxu0 0.0
    %3458 = vmatprep.subr.mxu0 0.0
    %3459 = vmatpush1.xpose.msra.mxu0 0.0
    %3460 = vmatprep.subr.mxu0 0.0
    %3461 = vmatpush1.xpose.msra.mxu0 0.0
    %3462 = vmatprep.subr.mxu0 0.0
    %3463 = vmatpush1.xpose.msra.mxu0 0.0
    %3464 = vmatprep.subr.mxu0 0.0
    %3465 = vmatpush1.xpose.msra.mxu0 0.0
    %3466 = vmatprep.subr.mxu0 0.0
    %3467 = vmatpush1.xpose.msra.mxu0 0.0
    %3468 = vmatprep.subr.mxu0 0.0
    %3469 = vmatpush1.xpose.msra.mxu0 0.0
    %3470 = vmatprep.subr.mxu0 0.0
    %3471 = vmatpush1.xpose.msra.mxu0 0.0
    %3472 = vmatprep.subr.mxu0 0.0
    %3473 = vmatpush1.xpose.msra.mxu0 0.0
    %3474 = vmatprep.subr.mxu0 0.0
    %3475 = vmatpush1.xpose.msra.mxu0 0.0
    %3476 = vmatprep.subr.mxu0 0.0
    %3477 = vmatpush1.xpose.msra.mxu0 0.0
    %3478 = vmatprep.subr.mxu0 0.0
    %3479 = vmatpush1.xpose.msra.mxu0 0.0
    %3480 = vmatprep.subr.mxu0 0.0
    %3481 = vmatpush1.xpose.msra.mxu0 0.0
    %3482 = vmatprep.subr.mxu0 0.0
    %3483 = vmatpush1.xpose.msra.mxu0 0.0
    %3484 = vmatprep.subr.mxu0 0.0
    %3485 = vmatpush1.xpose.msra.mxu0 0.0
    %3486 = vmatprep.subr.mxu0 0.0
    %3487 = vmatpush1.xpose.msra.mxu0 0.0
    %3488 = vmatprep.subr.mxu0 0.0
    %3489 = vmatpush1.xpose.msra.mxu0 0.0
    %3490 = vmatprep.subr.mxu0 0.0
    %3491 = vmatpush1.xpose.msra.mxu0 0.0
    %3492 = vmatprep.subr.mxu0 0.0
    %3493 = vmatpush1.xpose.msra.mxu0 0.0
    %3494 = vmatprep.subr.mxu0 0.0
    %3495 = vmatpush1.xpose.msra.mxu0 0.0
    %3496 = vmatprep.subr.mxu0 0.0
    %3497 = vmatpush1.xpose.msra.mxu0 0.0
    %3498 = vmatprep.subr.mxu0 0.0
    %3499 = vmatpush1.xpose.msra.mxu0 0.0
    %3500 = vmatprep.subr.mxu0 0.0
    %3501 = vmatpush1.xpose.msra.mxu0 0.0
    %3502 = vmatprep.subr.mxu0 0.0
    %3503 = vmatpush1.xpose.msra.mxu0 0.0
    %3504 = vmatprep.subr.mxu0 0.0
    %3505 = vmatpush1.xpose.msra.mxu0 0.0
    %3506 = vmatprep.subr.mxu0 0.0
    %3507 = vmatpush1.xpose.msra.mxu0 0.0
    %3508 = vmatprep.subr.mxu0 0.0
    %3509 = vmatpush1.xpose.msra.mxu0 0.0
    %3510 = vmatprep.subr.mxu0 0.0
    %3511 = vmatpush1.xpose.msra.mxu0 0.0
    %3512 = vmatprep.subr.mxu0 0.0
    %3513 = vmatpush1.xpose.msra.mxu0 0.0
    %3514 = vmatprep.mubr.f32.mxu0 0.0
    %v3515 = vand.u32 %v3445, 4294901760
    %v3516 = vsub.f32 %v3445, %v3515
    %v3517 = vand.u32 %v3516, 4294901760
    %v3518 = vsub.f32 %v3516, %v3517
    %v3519 = vand.u32 %v3518, 4294901760
    %3520 = vmatmul.mubr.f32.gmra.mrb[0].mxu0 %v3519
    %v3521 = vpop.f32.mrb[0].mxu0
    %v3522 = vadd.f32 0.0, %v3521
    %v3523 = vpop.f32.mrb[0].mxu0
    %3524 = vdwg.mxu0
    %3525 = vmatprep.subr.mxu0 0.0
    %v3526 = vand.u32 %v3447, 4294901760
    %v3527 = vsub.f32 %v3447, %v3526
    %v3528 = vand.u32 %v3527, 4294901760
    %v3529 = vsub.f32 %v3527, %v3528
    %v3530 = vand.u32 %v3529, 4294901760
    %3531 = vmatpush1.xpose.msra.mxu0 %v3530
    %3532 = vmatprep.subr.mxu0 0.0
    %3533 = vmatpush1.xpose.msra.mxu0 0.0
    %3534 = vmatprep.subr.mxu0 0.0
    %3535 = vmatpush1.xpose.msra.mxu0 0.0
    %3536 = vmatprep.subr.mxu0 0.0
    %3537 = vmatpush1.xpose.msra.mxu0 0.0
    %3538 = vmatprep.subr.mxu0 0.0
    %3539 = vmatpush1.xpose.msra.mxu0 0.0
    %3540 = vmatprep.subr.mxu0 0.0
    %3541 = vmatpush1.xpose.msra.mxu0 0.0
    %3542 = vmatprep.subr.mxu0 0.0
    %3543 = vmatpush1.xpose.msra.mxu0 0.0
    %3544 = vmatprep.subr.mxu0 0.0
    %3545 = vmatpush1.xpose.msra.mxu0 0.0
    %3546 = vmatprep.subr.mxu0 0.0
    %3547 = vmatpush1.xpose.msra.mxu0 0.0
    %3548 = vmatprep.subr.mxu0 0.0
    %3549 = vmatpush1.xpose.msra.mxu0 0.0
    %3550 = vmatprep.subr.mxu0 0.0
    %3551 = vmatpush1.xpose.msra.mxu0 0.0
    %3552 = vmatprep.subr.mxu0 0.0
    %3553 = vmatpush1.xpose.msra.mxu0 0.0
    %3554 = vmatprep.subr.mxu0 0.0
    %3555 = vmatpush1.xpose.msra.mxu0 0.0
    %3556 = vmatprep.subr.mxu0 0.0
    %3557 = vmatpush1.xpose.msra.mxu0 0.0
    %3558 = vmatprep.subr.mxu0 0.0
    %3559 = vmatpush1.xpose.msra.mxu0 0.0
    %3560 = vmatprep.subr.mxu0 0.0
    %3561 = vmatpush1.xpose.msra.mxu0 0.0
    %3562 = vmatprep.subr.mxu0 0.0
    %3563 = vmatpush1.xpose.msra.mxu0 0.0
    %3564 = vmatprep.subr.mxu0 0.0
    %3565 = vmatpush1.xpose.msra.mxu0 0.0
    %3566 = vmatprep.subr.mxu0 0.0
    %3567 = vmatpush1.xpose.msra.mxu0 0.0
    %3568 = vmatprep.subr.mxu0 0.0
    %3569 = vmatpush1.xpose.msra.mxu0 0.0
    %3570 = vmatprep.subr.mxu0 0.0
    %3571 = vmatpush1.xpose.msra.mxu0 0.0
    %3572 = vmatprep.subr.mxu0 0.0
    %3573 = vmatpush1.xpose.msra.mxu0 0.0
    %3574 = vmatprep.subr.mxu0 0.0
    %3575 = vmatpush1.xpose.msra.mxu0 0.0
    %3576 = vmatprep.subr.mxu0 0.0
    %3577 = vmatpush1.xpose.msra.mxu0 0.0
    %3578 = vmatprep.subr.mxu0 0.0
    %3579 = vmatpush1.xpose.msra.mxu0 0.0
    %3580 = vmatprep.subr.mxu0 0.0
    %3581 = vmatpush1.xpose.msra.mxu0 0.0
    %3582 = vmatprep.subr.mxu0 0.0
    %3583 = vmatpush1.xpose.msra.mxu0 0.0
    %3584 = vmatprep.subr.mxu0 0.0
    %3585 = vmatpush1.xpose.msra.mxu0 0.0
    %3586 = vmatprep.subr.mxu0 0.0
    %3587 = vmatpush1.xpose.msra.mxu0 0.0
    %3588 = vmatprep.subr.mxu0 0.0
    %3589 = vmatpush1.xpose.msra.mxu0 0.0
    %3590 = vmatprep.subr.mxu0 0.0
    %3591 = vmatpush1.xpose.msra.mxu0 0.0
    %3592 = vmatprep.subr.mxu0 0.0
    %3593 = vmatpush1.xpose.msra.mxu0 0.0
    %3594 = vmatprep.mubr.f32.mxu0 0.0
    %v3595 = vand.u32 %v3445, 4294901760
    %3596 = vmatmul.mubr.f32.gmra.mrb[0].mxu0 %v3595
    %v3597 = vpop.f32.mrb[0].mxu0
    %v3598 = vadd.f32 %v3522, %v3597
    %v3599 = vpop.f32.mrb[0].mxu0
    %3600 = vdwg.mxu0
    %3601 = vmatprep.subr.mxu0 0.0
    %v3602 = vand.u32 %v3447, 4294901760
    %v3603 = vsub.f32 %v3447, %v3602
    %3604 = vmatpush1.xpose.msra.mxu0 %v3603
    %3605 = vmatprep.subr.mxu0 0.0
    %3606 = vmatpush1.xpose.msra.mxu0 0.0
    %3607 = vmatprep.subr.mxu0 0.0
    %3608 = vmatpush1.xpose.msra.mxu0 0.0
    %3609 = vmatprep.subr.mxu0 0.0
    %3610 = vmatpush1.xpose.msra.mxu0 0.0
    %3611 = vmatprep.subr.mxu0 0.0
    %3612 = vmatpush1.xpose.msra.mxu0 0.0
    %3613 = vmatprep.subr.mxu0 0.0
    %3614 = vmatpush1.xpose.msra.mxu0 0.0
    %3615 = vmatprep.subr.mxu0 0.0
    %3616 = vmatpush1.xpose.msra.mxu0 0.0
    %3617 = vmatprep.subr.mxu0 0.0
    %3618 = vmatpush1.xpose.msra.mxu0 0.0
    %3619 = vmatprep.subr.mxu0 0.0
    %3620 = vmatpush1.xpose.msra.mxu0 0.0
    %3621 = vmatprep.subr.mxu0 0.0
    %3622 = vmatpush1.xpose.msra.mxu0 0.0
    %3623 = vmatprep.subr.mxu0 0.0
    %3624 = vmatpush1.xpose.msra.mxu0 0.0
    %3625 = vmatprep.subr.mxu0 0.0
    %3626 = vmatpush1.xpose.msra.mxu0 0.0
    %3627 = vmatprep.subr.mxu0 0.0
    %3628 = vmatpush1.xpose.msra.mxu0 0.0
    %3629 = vmatprep.subr.mxu0 0.0
    %3630 = vmatpush1.xpose.msra.mxu0 0.0
    %3631 = vmatprep.subr.mxu0 0.0
    %3632 = vmatpush1.xpose.msra.mxu0 0.0
    %3633 = vmatprep.subr.mxu0 0.0
    %3634 = vmatpush1.xpose.msra.mxu0 0.0
    %3635 = vmatprep.subr.mxu0 0.0
    %3636 = vmatpush1.xpose.msra.mxu0 0.0
    %3637 = vmatprep.subr.mxu0 0.0
    %3638 = vmatpush1.xpose.msra.mxu0 0.0
    %3639 = vmatprep.subr.mxu0 0.0
    %3640 = vmatpush1.xpose.msra.mxu0 0.0
    %3641 = vmatprep.subr.mxu0 0.0
    %3642 = vmatpush1.xpose.msra.mxu0 0.0
    %3643 = vmatprep.subr.mxu0 0.0
    %3644 = vmatpush1.xpose.msra.mxu0 0.0
    %3645 = vmatprep.subr.mxu0 0.0
    %3646 = vmatpush1.xpose.msra.mxu0 0.0
    %3647 = vmatprep.subr.mxu0 0.0
    %3648 = vmatpush1.xpose.msra.mxu0 0.0
    %3649 = vmatprep.subr.mxu0 0.0
    %3650 = vmatpush1.xpose.msra.mxu0 0.0
    %3651 = vmatprep.subr.mxu0 0.0
    %3652 = vmatpush1.xpose.msra.mxu0 0.0
    %3653 = vmatprep.subr.mxu0 0.0
    %3654 = vmatpush1.xpose.msra.mxu0 0.0
    %3655 = vmatprep.subr.mxu0 0.0
    %3656 = vmatpush1.xpose.msra.mxu0 0.0
    %3657 = vmatprep.subr.mxu0 0.0
    %3658 = vmatpush1.xpose.msra.mxu0 0.0
    %3659 = vmatprep.subr.mxu0 0.0
    %3660 = vmatpush1.xpose.msra.mxu0 0.0
    %3661 = vmatprep.subr.mxu0 0.0
    %3662 = vmatpush1.xpose.msra.mxu0 0.0
    %3663 = vmatprep.subr.mxu0 0.0
    %3664 = vmatpush1.xpose.msra.mxu0 0.0
    %3665 = vmatprep.subr.mxu0 0.0
    %3666 = vmatpush1.xpose.msra.mxu0 0.0
    %3667 = vmatprep.mubr.f32.mxu0 0.0
    %v3668 = vand.u32 %v3445, 4294901760
    %v3669 = vsub.f32 %v3445, %v3668
    %3670 = vmatmul.mubr.f32.gmra.mrb[0].mxu0 %v3669
    %v3671 = vpop.f32.mrb[0].mxu0
    %v3672 = vadd.f32 %v3598, %v3671
    %v3673 = vpop.f32.mrb[0].mxu0
    %3674 = vdwg.mxu0
    %3675 = vmatprep.subr.mxu0 0.0
    %v3676 = vand.u32 %v3447, 4294901760
    %3677 = vmatpush1.xpose.msra.mxu0 %v3676
    %3678 = vmatprep.subr.mxu0 0.0
    %3679 = vmatpush1.xpose.msra.mxu0 0.0
    %3680 = vmatprep.subr.mxu0 0.0
    %3681 = vmatpush1.xpose.msra.mxu0 0.0
    %3682 = vmatprep.subr.mxu0 0.0
    %3683 = vmatpush1.xpose.msra.mxu0 0.0
    %3684 = vmatprep.subr.mxu0 0.0
    %3685 = vmatpush1.xpose.msra.mxu0 0.0
    %3686 = vmatprep.subr.mxu0 0.0
    %3687 = vmatpush1.xpose.msra.mxu0 0.0
    %3688 = vmatprep.subr.mxu0 0.0
    %3689 = vmatpush1.xpose.msra.mxu0 0.0
    %3690 = vmatprep.subr.mxu0 0.0
    %3691 = vmatpush1.xpose.msra.mxu0 0.0
    %3692 = vmatprep.subr.mxu0 0.0
    %3693 = vmatpush1.xpose.msra.mxu0 0.0
    %3694 = vmatprep.subr.mxu0 0.0
    %3695 = vmatpush1.xpose.msra.mxu0 0.0
    %3696 = vmatprep.subr.mxu0 0.0
    %3697 = vmatpush1.xpose.msra.mxu0 0.0
    %3698 = vmatprep.subr.mxu0 0.0
    %3699 = vmatpush1.xpose.msra.mxu0 0.0
    %3700 = vmatprep.subr.mxu0 0.0
    %3701 = vmatpush1.xpose.msra.mxu0 0.0
    %3702 = vmatprep.subr.mxu0 0.0
    %3703 = vmatpush1.xpose.msra.mxu0 0.0
    %3704 = vmatprep.subr.mxu0 0.0
    %3705 = vmatpush1.xpose.msra.mxu0 0.0
    %3706 = vmatprep.subr.mxu0 0.0
    %3707 = vmatpush1.xpose.msra.mxu0 0.0
    %3708 = vmatprep.subr.mxu0 0.0
    %3709 = vmatpush1.xpose.msra.mxu0 0.0
    %3710 = vmatprep.subr.mxu0 0.0
    %3711 = vmatpush1.xpose.msra.mxu0 0.0
    %3712 = vmatprep.subr.mxu0 0.0
    %3713 = vmatpush1.xpose.msra.mxu0 0.0
    %3714 = vmatprep.subr.mxu0 0.0
    %3715 = vmatpush1.xpose.msra.mxu0 0.0
    %3716 = vmatprep.subr.mxu0 0.0
    %3717 = vmatpush1.xpose.msra.mxu0 0.0
    %3718 = vmatprep.subr.mxu0 0.0
    %3719 = vmatpush1.xpose.msra.mxu0 0.0
    %3720 = vmatprep.subr.mxu0 0.0
    %3721 = vmatpush1.xpose.msra.mxu0 0.0
    %3722 = vmatprep.subr.mxu0 0.0
    %3723 = vmatpush1.xpose.msra.mxu0 0.0
    %3724 = vmatprep.subr.mxu0 0.0
    %3725 = vmatpush1.xpose.msra.mxu0 0.0
    %3726 = vmatprep.subr.mxu0 0.0
    %3727 = vmatpush1.xpose.msra.mxu0 0.0
    %3728 = vmatprep.subr.mxu0 0.0
    %3729 = vmatpush1.xpose.msra.mxu0 0.0
    %3730 = vmatprep.subr.mxu0 0.0
    %3731 = vmatpush1.xpose.msra.mxu0 0.0
    %3732 = vmatprep.subr.mxu0 0.0
    %3733 = vmatpush1.xpose.msra.mxu0 0.0
    %3734 = vmatprep.subr.mxu0 0.0
    %3735 = vmatpush1.xpose.msra.mxu0 0.0
    %3736 = vmatprep.subr.mxu0 0.0
    %3737 = vmatpush1.xpose.msra.mxu0 0.0
    %3738 = vmatprep.subr.mxu0 0.0
    %3739 = vmatpush1.xpose.msra.mxu0 0.0
    %3740 = vmatprep.mubr.f32.mxu0 0.0
    %v3741 = vand.u32 %v3445, 4294901760
    %v3742 = vsub.f32 %v3445, %v3741
    %v3743 = vand.u32 %v3742, 4294901760
    %3744 = vmatmul.mubr.f32.gmra.mrb[0].mxu0 %v3743
    %v3745 = vpop.f32.mrb[0].mxu0
    %v3746 = vadd.f32 %v3672, %v3745
    %v3747 = vpop.f32.mrb[0].mxu0
    %3748 = vdwg.mxu0
    %3749 = vmatprep.subr.mxu0 0.0
    %v3750 = vand.u32 %v3447, 4294901760
    %v3751 = vsub.f32 %v3447, %v3750
    %v3752 = vand.u32 %v3751, 4294901760
    %3753 = vmatpush1.xpose.msra.mxu0 %v3752
    %3754 = vmatprep.subr.mxu0 0.0
    %3755 = vmatpush1.xpose.msra.mxu0 0.0
    %3756 = vmatprep.subr.mxu0 0.0
    %3757 = vmatpush1.xpose.msra.mxu0 0.0
    %3758 = vmatprep.subr.mxu0 0.0
    %3759 = vmatpush1.xpose.msra.mxu0 0.0
    %3760 = vmatprep.subr.mxu0 0.0
    %3761 = vmatpush1.xpose.msra.mxu0 0.0
    %3762 = vmatprep.subr.mxu0 0.0
    %3763 = vmatpush1.xpose.msra.mxu0 0.0
    %3764 = vmatprep.subr.mxu0 0.0
    %3765 = vmatpush1.xpose.msra.mxu0 0.0
    %3766 = vmatprep.subr.mxu0 0.0
    %3767 = vmatpush1.xpose.msra.mxu0 0.0
    %3768 = vmatprep.subr.mxu0 0.0
    %3769 = vmatpush1.xpose.msra.mxu0 0.0
    %3770 = vmatprep.subr.mxu0 0.0
    %3771 = vmatpush1.xpose.msra.mxu0 0.0
    %3772 = vmatprep.subr.mxu0 0.0
    %3773 = vmatpush1.xpose.msra.mxu0 0.0
    %3774 = vmatprep.subr.mxu0 0.0
    %3775 = vmatpush1.xpose.msra.mxu0 0.0
    %3776 = vmatprep.subr.mxu0 0.0
    %3777 = vmatpush1.xpose.msra.mxu0 0.0
    %3778 = vmatprep.subr.mxu0 0.0
    %3779 = vmatpush1.xpose.msra.mxu0 0.0
    %3780 = vmatprep.subr.mxu0 0.0
    %3781 = vmatpush1.xpose.msra.mxu0 0.0
    %3782 = vmatprep.subr.mxu0 0.0
    %3783 = vmatpush1.xpose.msra.mxu0 0.0
    %3784 = vmatprep.subr.mxu0 0.0
    %3785 = vmatpush1.xpose.msra.mxu0 0.0
    %3786 = vmatprep.subr.mxu0 0.0
    %3787 = vmatpush1.xpose.msra.mxu0 0.0
    %3788 = vmatprep.subr.mxu0 0.0
    %3789 = vmatpush1.xpose.msra.mxu0 0.0
    %3790 = vmatprep.subr.mxu0 0.0
    %3791 = vmatpush1.xpose.msra.mxu0 0.0
    %3792 = vmatprep.subr.mxu0 0.0
    %3793 = vmatpush1.xpose.msra.mxu0 0.0
    %3794 = vmatprep.subr.mxu0 0.0
    %3795 = vmatpush1.xpose.msra.mxu0 0.0
    %3796 = vmatprep.subr.mxu0 0.0
    %3797 = vmatpush1.xpose.msra.mxu0 0.0
    %3798 = vmatprep.subr.mxu0 0.0
    %3799 = vmatpush1.xpose.msra.mxu0 0.0
    %3800 = vmatprep.subr.mxu0 0.0
    %3801 = vmatpush1.xpose.msra.mxu0 0.0
    %3802 = vmatprep.subr.mxu0 0.0
    %3803 = vmatpush1.xpose.msra.mxu0 0.0
    %3804 = vmatprep.subr.mxu0 0.0
    %3805 = vmatpush1.xpose.msra.mxu0 0.0
    %3806 = vmatprep.subr.mxu0 0.0
    %3807 = vmatpush1.xpose.msra.mxu0 0.0
    %3808 = vmatprep.subr.mxu0 0.0
    %3809 = vmatpush1.xpose.msra.mxu0 0.0
    %3810 = vmatprep.subr.mxu0 0.0
    %3811 = vmatpush1.xpose.msra.mxu0 0.0
    %3812 = vmatprep.subr.mxu0 0.0
    %3813 = vmatpush1.xpose.msra.mxu0 0.0
    %3814 = vmatprep.subr.mxu0 0.0
    %3815 = vmatpush1.xpose.msra.mxu0 0.0
    %3816 = vmatprep.mubr.f32.mxu0 0.0
    %v3817 = vand.u32 %v3445, 4294901760
    %3818 = vmatmul.mubr.f32.gmra.mrb[0].mxu0 %v3817
    %v3819 = vpop.f32.mrb[0].mxu0
    %v3820 = vadd.f32 %v3746, %v3819
    %v3821 = vpop.f32.mrb[0].mxu0
    %3822 = vdwg.mxu0
    %3823 = vmatprep.subr.mxu0 0.0
    %v3824 = vand.u32 %v3447, 4294901760
    %3825 = vmatpush1.xpose.msra.mxu0 %v3824
    %3826 = vmatprep.subr.mxu0 0.0
    %3827 = vmatpush1.xpose.msra.mxu0 0.0
    %3828 = vmatprep.subr.mxu0 0.0
    %3829 = vmatpush1.xpose.msra.mxu0 0.0
    %3830 = vmatprep.subr.mxu0 0.0
    %3831 = vmatpush1.xpose.msra.mxu0 0.0
    %3832 = vmatprep.subr.mxu0 0.0
    %3833 = vmatpush1.xpose.msra.mxu0 0.0
    %3834 = vmatprep.subr.mxu0 0.0
    %3835 = vmatpush1.xpose.msra.mxu0 0.0
    %3836 = vmatprep.subr.mxu0 0.0
    %3837 = vmatpush1.xpose.msra.mxu0 0.0
    %3838 = vmatprep.subr.mxu0 0.0
    %3839 = vmatpush1.xpose.msra.mxu0 0.0
    %3840 = vmatprep.subr.mxu0 0.0
    %3841 = vmatpush1.xpose.msra.mxu0 0.0
    %3842 = vmatprep.subr.mxu0 0.0
    %3843 = vmatpush1.xpose.msra.mxu0 0.0
    %3844 = vmatprep.subr.mxu0 0.0
    %3845 = vmatpush1.xpose.msra.mxu0 0.0
    %3846 = vmatprep.subr.mxu0 0.0
    %3847 = vmatpush1.xpose.msra.mxu0 0.0
    %3848 = vmatprep.subr.mxu0 0.0
    %3849 = vmatpush1.xpose.msra.mxu0 0.0
    %3850 = vmatprep.subr.mxu0 0.0
    %3851 = vmatpush1.xpose.msra.mxu0 0.0
    %3852 = vmatprep.subr.mxu0 0.0
    %3853 = vmatpush1.xpose.msra.mxu0 0.0
    %3854 = vmatprep.subr.mxu0 0.0
    %3855 = vmatpush1.xpose.msra.mxu0 0.0
    %3856 = vmatprep.subr.mxu0 0.0
    %3857 = vmatpush1.xpose.msra.mxu0 0.0
    %3858 = vmatprep.subr.mxu0 0.0
    %3859 = vmatpush1.xpose.msra.mxu0 0.0
    %3860 = vmatprep.subr.mxu0 0.0
    %3861 = vmatpush1.xpose.msra.mxu0 0.0
    %3862 = vmatprep.subr.mxu0 0.0
    %3863 = vmatpush1.xpose.msra.mxu0 0.0
    %3864 = vmatprep.subr.mxu0 0.0
    %3865 = vmatpush1.xpose.msra.mxu0 0.0
    %3866 = vmatprep.subr.mxu0 0.0
    %3867 = vmatpush1.xpose.msra.mxu0 0.0
    %3868 = vmatprep.subr.mxu0 0.0
    %3869 = vmatpush1.xpose.msra.mxu0 0.0
    %3870 = vmatprep.subr.mxu0 0.0
    %3871 = vmatpush1.xpose.msra.mxu0 0.0
    %3872 = vmatprep.subr.mxu0 0.0
    %3873 = vmatpush1.xpose.msra.mxu0 0.0
    %3874 = vmatprep.subr.mxu0 0.0
    %3875 = vmatpush1.xpose.msra.mxu0 0.0
    %3876 = vmatprep.subr.mxu0 0.0
    %3877 = vmatpush1.xpose.msra.mxu0 0.0
    %3878 = vmatprep.subr.mxu0 0.0
    %3879 = vmatpush1.xpose.msra.mxu0 0.0
    %3880 = vmatprep.subr.mxu0 0.0
    %3881 = vmatpush1.xpose.msra.mxu0 0.0
    %3882 = vmatprep.subr.mxu0 0.0
    %3883 = vmatpush1.xpose.msra.mxu0 0.0
    %3884 = vmatprep.subr.mxu0 0.0
    %3885 = vmatpush1.xpose.msra.mxu0 0.0
    %3886 = vmatprep.subr.mxu0 0.0
    %3887 = vmatpush1.xpose.msra.mxu0 0.0
    %3888 = vmatprep.mubr.f32.mxu0 0.0
    %v3889 = vand.u32 %v3445, 4294901760
    %3890 = vmatmul.mubr.f32.gmra.mrb[0].mxu0 %v3889
    %v3891 = vpop.f32.mrb[0].mxu0
    %v3892 = vadd.f32 %v3820, %v3891
    %v3893 = vpop.f32.mrb[0].mxu0
    %3894 = vdwg.mxu0
    %v3895 = vsel %vm1134, %v3892, -3.4e+38
    %v3896 = vsel %vm683, %v3895, -inf
    %3897 = vmax.xlane.f32.xlu0 %v3896
    %v3898 = vpop.xlane.xlu0 %3897
    %v3899 = vsub.f32 %v3895, %v3898
    %v3900 = vmul.f32 %v3899, 1.442695
    %v3901 = vpow.pop %v3900
    %v3902 = vmul.f32 %v3901, %v678
    %v3903 = vsel %vm683, %v3902, 0.0
    %3904 = vadd.xlane.f32.xlu0 %v3903
    %v3905 = vpop.xlane.xlu0 %3904
    %v3906 = vmax.f32 %v3905, 1e-30
    %v3907 = vrcp.pop %v3906
    %v3908 = vmul.f32 %v3902, %v3907
    %3909 = vrot.lane.b32.xlu0 %v661, 40
    %v3910 = vpop.permute.xlu0 %3909
    %v3913 = vsel %vm683, %v3908, 0
    %3915 = vmatprep.subr.mxu0 0.0
    %v3916 = vand.u32 %v3910, 4294901760
    %3917 = vmatpush1.msra.mxu0 %v3916
    %3918 = vmatprep.subr.mxu0 0.0
    %3919 = vmatpush1.msra.mxu0 0.0
    %3920 = vmatprep.subr.mxu0 0.0
    %3921 = vmatpush1.msra.mxu0 0.0
    %3922 = vmatprep.subr.mxu0 0.0
    %3923 = vmatpush1.msra.mxu0 0.0
    %3924 = vmatprep.subr.mxu0 0.0
    %3925 = vmatpush1.msra.mxu0 0.0
    %3926 = vmatprep.subr.mxu0 0.0
    %3927 = vmatpush1.msra.mxu0 0.0
    %3928 = vmatprep.subr.mxu0 0.0
    %3929 = vmatpush1.msra.mxu0 0.0
    %3930 = vmatprep.subr.mxu0 0.0
    %3931 = vmatpush1.msra.mxu0 0.0
    %3932 = vmatprep.subr.mxu0 0.0
    %3933 = vmatpush1.msra.mxu0 0.0
    %3934 = vmatprep.subr.mxu0 0.0
    %3935 = vmatpush1.msra.mxu0 0.0
    %3936 = vmatprep.subr.mxu0 0.0
    %3937 = vmatpush1.msra.mxu0 0.0
    %3938 = vmatprep.subr.mxu0 0.0
    %3939 = vmatpush1.msra.mxu0 0.0
    %3940 = vmatprep.subr.mxu0 0.0
    %3941 = vmatpush1.msra.mxu0 0.0
    %3942 = vmatprep.subr.mxu0 0.0
    %3943 = vmatpush1.msra.mxu0 0.0
    %3944 = vmatprep.subr.mxu0 0.0
    %3945 = vmatpush1.msra.mxu0 0.0
    %3946 = vmatprep.subr.mxu0 0.0
    %3947 = vmatpush1.msra.mxu0 0.0
    %3948 = vmatprep.subr.mxu0 0.0
    %3949 = vmatpush1.msra.mxu0 0.0
    %3950 = vmatprep.subr.mxu0 0.0
    %3951 = vmatpush1.msra.mxu0 0.0
    %3952 = vmatprep.subr.mxu0 0.0
    %3953 = vmatpush1.msra.mxu0 0.0
    %3954 = vmatprep.subr.mxu0 0.0
    %3955 = vmatpush1.msra.mxu0 0.0
    %3956 = vmatprep.subr.mxu0 0.0
    %3957 = vmatpush1.msra.mxu0 0.0
    %3958 = vmatprep.subr.mxu0 0.0
    %3959 = vmatpush1.msra.mxu0 0.0
    %3960 = vmatprep.subr.mxu0 0.0
    %3961 = vmatpush1.msra.mxu0 0.0
    %3962 = vmatprep.subr.mxu0 0.0
    %3963 = vmatpush1.msra.mxu0 0.0
    %3964 = vmatprep.subr.mxu0 0.0
    %3965 = vmatpush1.msra.mxu0 0.0
    %3966 = vmatprep.subr.mxu0 0.0
    %3967 = vmatpush1.msra.mxu0 0.0
    %3968 = vmatprep.subr.mxu0 0.0
    %3969 = vmatpush1.msra.mxu0 0.0
    %3970 = vmatprep.subr.mxu0 0.0
    %3971 = vmatpush1.msra.mxu0 0.0
    %3972 = vmatprep.subr.mxu0 0.0
    %3973 = vmatpush1.msra.mxu0 0.0
    %3974 = vmatprep.subr.mxu0 0.0
    %3975 = vmatpush1.msra.mxu0 0.0
    %3976 = vmatprep.subr.mxu0 0.0
    %3977 = vmatpush1.msra.mxu0 0.0
    %3978 = vmatprep.subr.mxu0 0.0
    %3979 = vmatpush1.msra.mxu0 0.0
    %3980 = vmatprep.mubr.f32.mxu0 0.0
    %v3981 = vand.u32 %v3913, 4294901760
    %v3982 = vsub.f32 %v3913, %v3981
    %v3983 = vand.u32 %v3982, 4294901760
    %v3984 = vsub.f32 %v3982, %v3983
    %v3985 = vand.u32 %v3984, 4294901760
    %3986 = vmatmul.mubr.f32.gmra.mrb[0].mxu0 %v3985
    %v3987 = vpop.f32.mrb[0].mxu0
    %v3988 = vadd.f32 0.0, %v3987
    %v3989 = vpop.f32.mrb[0].mxu0
    %3990 = vdwg.mxu0
    %3991 = vmatprep.subr.mxu0 0.0
    %v3992 = vand.u32 %v3910, 4294901760
    %v3993 = vsub.f32 %v3910, %v3992
    %v3994 = vand.u32 %v3993, 4294901760
    %v3995 = vsub.f32 %v3993, %v3994
    %v3996 = vand.u32 %v3995, 4294901760
    %3997 = vmatpush1.msra.mxu0 %v3996
    %3998 = vmatprep.subr.mxu0 0.0
    %3999 = vmatpush1.msra.mxu0 0.0
    %4000 = vmatprep.subr.mxu0 0.0
    %4001 = vmatpush1.msra.mxu0 0.0
    %4002 = vmatprep.subr.mxu0 0.0
    %4003 = vmatpush1.msra.mxu0 0.0
    %4004 = vmatprep.subr.mxu0 0.0
    %4005 = vmatpush1.msra.mxu0 0.0
    %4006 = vmatprep.subr.mxu0 0.0
    %4007 = vmatpush1.msra.mxu0 0.0
    %4008 = vmatprep.subr.mxu0 0.0
    %4009 = vmatpush1.msra.mxu0 0.0
    %4010 = vmatprep.subr.mxu0 0.0
    %4011 = vmatpush1.msra.mxu0 0.0
    %4012 = vmatprep.subr.mxu0 0.0
    %4013 = vmatpush1.msra.mxu0 0.0
    %4014 = vmatprep.subr.mxu0 0.0
    %4015 = vmatpush1.msra.mxu0 0.0
    %4016 = vmatprep.subr.mxu0 0.0
    %4017 = vmatpush1.msra.mxu0 0.0
    %4018 = vmatprep.subr.mxu0 0.0
    %4019 = vmatpush1.msra.mxu0 0.0
    %4020 = vmatprep.subr.mxu0 0.0
    %4021 = vmatpush1.msra.mxu0 0.0
    %4022 = vmatprep.subr.mxu0 0.0
    %4023 = vmatpush1.msra.mxu0 0.0
    %4024 = vmatprep.subr.mxu0 0.0
    %4025 = vmatpush1.msra.mxu0 0.0
    %4026 = vmatprep.subr.mxu0 0.0
    %4027 = vmatpush1.msra.mxu0 0.0
    %4028 = vmatprep.subr.mxu0 0.0
    %4029 = vmatpush1.msra.mxu0 0.0
    %4030 = vmatprep.subr.mxu0 0.0
    %4031 = vmatpush1.msra.mxu0 0.0
    %4032 = vmatprep.subr.mxu0 0.0
    %4033 = vmatpush1.msra.mxu0 0.0
    %4034 = vmatprep.subr.mxu0 0.0
    %4035 = vmatpush1.msra.mxu0 0.0
    %4036 = vmatprep.subr.mxu0 0.0
    %4037 = vmatpush1.msra.mxu0 0.0
    %4038 = vmatprep.subr.mxu0 0.0
    %4039 = vmatpush1.msra.mxu0 0.0
    %4040 = vmatprep.subr.mxu0 0.0
    %4041 = vmatpush1.msra.mxu0 0.0
    %4042 = vmatprep.subr.mxu0 0.0
    %4043 = vmatpush1.msra.mxu0 0.0
    %4044 = vmatprep.subr.mxu0 0.0
    %4045 = vmatpush1.msra.mxu0 0.0
    %4046 = vmatprep.subr.mxu0 0.0
    %4047 = vmatpush1.msra.mxu0 0.0
    %4048 = vmatprep.subr.mxu0 0.0
    %4049 = vmatpush1.msra.mxu0 0.0
    %4050 = vmatprep.subr.mxu0 0.0
    %4051 = vmatpush1.msra.mxu0 0.0
    %4052 = vmatprep.subr.mxu0 0.0
    %4053 = vmatpush1.msra.mxu0 0.0
    %4054 = vmatprep.subr.mxu0 0.0
    %4055 = vmatpush1.msra.mxu0 0.0
    %4056 = vmatprep.subr.mxu0 0.0
    %4057 = vmatpush1.msra.mxu0 0.0
    %4058 = vmatprep.subr.mxu0 0.0
    %4059 = vmatpush1.msra.mxu0 0.0
    %4060 = vmatprep.mubr.f32.mxu0 0.0
    %v4061 = vand.u32 %v3913, 4294901760
    %4062 = vmatmul.mubr.f32.gmra.mrb[0].mxu0 %v4061
    %v4063 = vpop.f32.mrb[0].mxu0
    %v4064 = vadd.f32 %v3988, %v4063
    %v4065 = vpop.f32.mrb[0].mxu0
    %4066 = vdwg.mxu0
    %4067 = vmatprep.subr.mxu0 0.0
    %v4068 = vand.u32 %v3910, 4294901760
    %v4069 = vsub.f32 %v3910, %v4068
    %4070 = vmatpush1.msra.mxu0 %v4069
    %4071 = vmatprep.subr.mxu0 0.0
    %4072 = vmatpush1.msra.mxu0 0.0
    %4073 = vmatprep.subr.mxu0 0.0
    %4074 = vmatpush1.msra.mxu0 0.0
    %4075 = vmatprep.subr.mxu0 0.0
    %4076 = vmatpush1.msra.mxu0 0.0
    %4077 = vmatprep.subr.mxu0 0.0
    %4078 = vmatpush1.msra.mxu0 0.0
    %4079 = vmatprep.subr.mxu0 0.0
    %4080 = vmatpush1.msra.mxu0 0.0
    %4081 = vmatprep.subr.mxu0 0.0
    %4082 = vmatpush1.msra.mxu0 0.0
    %4083 = vmatprep.subr.mxu0 0.0
    %4084 = vmatpush1.msra.mxu0 0.0
    %4085 = vmatprep.subr.mxu0 0.0
    %4086 = vmatpush1.msra.mxu0 0.0
    %4087 = vmatprep.subr.mxu0 0.0
    %4088 = vmatpush1.msra.mxu0 0.0
    %4089 = vmatprep.subr.mxu0 0.0
    %4090 = vmatpush1.msra.mxu0 0.0
    %4091 = vmatprep.subr.mxu0 0.0
    %4092 = vmatpush1.msra.mxu0 0.0
    %4093 = vmatprep.subr.mxu0 0.0
    %4094 = vmatpush1.msra.mxu0 0.0
    %4095 = vmatprep.subr.mxu0 0.0
    %4096 = vmatpush1.msra.mxu0 0.0
    %4097 = vmatprep.subr.mxu0 0.0
    %4098 = vmatpush1.msra.mxu0 0.0
    %4099 = vmatprep.subr.mxu0 0.0
    %4100 = vmatpush1.msra.mxu0 0.0
    %4101 = vmatprep.subr.mxu0 0.0
    %4102 = vmatpush1.msra.mxu0 0.0
    %4103 = vmatprep.subr.mxu0 0.0
    %4104 = vmatpush1.msra.mxu0 0.0
    %4105 = vmatprep.subr.mxu0 0.0
    %4106 = vmatpush1.msra.mxu0 0.0
    %4107 = vmatprep.subr.mxu0 0.0
    %4108 = vmatpush1.msra.mxu0 0.0
    %4109 = vmatprep.subr.mxu0 0.0
    %4110 = vmatpush1.msra.mxu0 0.0
    %4111 = vmatprep.subr.mxu0 0.0
    %4112 = vmatpush1.msra.mxu0 0.0
    %4113 = vmatprep.subr.mxu0 0.0
    %4114 = vmatpush1.msra.mxu0 0.0
    %4115 = vmatprep.subr.mxu0 0.0
    %4116 = vmatpush1.msra.mxu0 0.0
    %4117 = vmatprep.subr.mxu0 0.0
    %4118 = vmatpush1.msra.mxu0 0.0
    %4119 = vmatprep.subr.mxu0 0.0
    %4120 = vmatpush1.msra.mxu0 0.0
    %4121 = vmatprep.subr.mxu0 0.0
    %4122 = vmatpush1.msra.mxu0 0.0
    %4123 = vmatprep.subr.mxu0 0.0
    %4124 = vmatpush1.msra.mxu0 0.0
    %4125 = vmatprep.subr.mxu0 0.0
    %4126 = vmatpush1.msra.mxu0 0.0
    %4127 = vmatprep.subr.mxu0 0.0
    %4128 = vmatpush1.msra.mxu0 0.0
    %4129 = vmatprep.subr.mxu0 0.0
    %4130 = vmatpush1.msra.mxu0 0.0
    %4131 = vmatprep.subr.mxu0 0.0
    %4132 = vmatpush1.msra.mxu0 0.0
    %4133 = vmatprep.mubr.f32.mxu0 0.0
    %v4134 = vand.u32 %v3913, 4294901760
    %v4135 = vsub.f32 %v3913, %v4134
    %4136 = vmatmul.mubr.f32.gmra.mrb[0].mxu0 %v4135
    %v4137 = vpop.f32.mrb[0].mxu0
    %v4138 = vadd.f32 %v4064, %v4137
    %v4139 = vpop.f32.mrb[0].mxu0
    %4140 = vdwg.mxu0
    %4141 = vmatprep.subr.mxu0 0.0
    %v4142 = vand.u32 %v3910, 4294901760
    %4143 = vmatpush1.msra.mxu0 %v4142
    %4144 = vmatprep.subr.mxu0 0.0
    %4145 = vmatpush1.msra.mxu0 0.0
    %4146 = vmatprep.subr.mxu0 0.0
    %4147 = vmatpush1.msra.mxu0 0.0
    %4148 = vmatprep.subr.mxu0 0.0
    %4149 = vmatpush1.msra.mxu0 0.0
    %4150 = vmatprep.subr.mxu0 0.0
    %4151 = vmatpush1.msra.mxu0 0.0
    %4152 = vmatprep.subr.mxu0 0.0
    %4153 = vmatpush1.msra.mxu0 0.0
    %4154 = vmatprep.subr.mxu0 0.0
    %4155 = vmatpush1.msra.mxu0 0.0
    %4156 = vmatprep.subr.mxu0 0.0
    %4157 = vmatpush1.msra.mxu0 0.0
    %4158 = vmatprep.subr.mxu0 0.0
    %4159 = vmatpush1.msra.mxu0 0.0
    %4160 = vmatprep.subr.mxu0 0.0
    %4161 = vmatpush1.msra.mxu0 0.0
    %4162 = vmatprep.subr.mxu0 0.0
    %4163 = vmatpush1.msra.mxu0 0.0
    %4164 = vmatprep.subr.mxu0 0.0
    %4165 = vmatpush1.msra.mxu0 0.0
    %4166 = vmatprep.subr.mxu0 0.0
    %4167 = vmatpush1.msra.mxu0 0.0
    %4168 = vmatprep.subr.mxu0 0.0
    %4169 = vmatpush1.msra.mxu0 0.0
    %4170 = vmatprep.subr.mxu0 0.0
    %4171 = vmatpush1.msra.mxu0 0.0
    %4172 = vmatprep.subr.mxu0 0.0
    %4173 = vmatpush1.msra.mxu0 0.0
    %4174 = vmatprep.subr.mxu0 0.0
    %4175 = vmatpush1.msra.mxu0 0.0
    %4176 = vmatprep.subr.mxu0 0.0
    %4177 = vmatpush1.msra.mxu0 0.0
    %4178 = vmatprep.subr.mxu0 0.0
    %4179 = vmatpush1.msra.mxu0 0.0
    %4180 = vmatprep.subr.mxu0 0.0
    %4181 = vmatpush1.msra.mxu0 0.0
    %4182 = vmatprep.subr.mxu0 0.0
    %4183 = vmatpush1.msra.mxu0 0.0
    %4184 = vmatprep.subr.mxu0 0.0
    %4185 = vmatpush1.msra.mxu0 0.0
    %4186 = vmatprep.subr.mxu0 0.0
    %4187 = vmatpush1.msra.mxu0 0.0
    %4188 = vmatprep.subr.mxu0 0.0
    %4189 = vmatpush1.msra.mxu0 0.0
    %4190 = vmatprep.subr.mxu0 0.0
    %4191 = vmatpush1.msra.mxu0 0.0
    %4192 = vmatprep.subr.mxu0 0.0
    %4193 = vmatpush1.msra.mxu0 0.0
    %4194 = vmatprep.subr.mxu0 0.0
    %4195 = vmatpush1.msra.mxu0 0.0
    %4196 = vmatprep.subr.mxu0 0.0
    %4197 = vmatpush1.msra.mxu0 0.0
    %4198 = vmatprep.subr.mxu0 0.0
    %4199 = vmatpush1.msra.mxu0 0.0
    %4200 = vmatprep.subr.mxu0 0.0
    %4201 = vmatpush1.msra.mxu0 0.0
    %4202 = vmatprep.subr.mxu0 0.0
    %4203 = vmatpush1.msra.mxu0 0.0
    %4204 = vmatprep.subr.mxu0 0.0
    %4205 = vmatpush1.msra.mxu0 0.0
    %4206 = vmatprep.mubr.f32.mxu0 0.0
    %v4207 = vand.u32 %v3913, 4294901760
    %v4208 = vsub.f32 %v3913, %v4207
    %v4209 = vand.u32 %v4208, 4294901760
    %4210 = vmatmul.mubr.f32.gmra.mrb[0].mxu0 %v4209
    %v4211 = vpop.f32.mrb[0].mxu0
    %v4212 = vadd.f32 %v4138, %v4211
    %v4213 = vpop.f32.mrb[0].mxu0
    %4214 = vdwg.mxu0
    %4215 = vmatprep.subr.mxu0 0.0
    %v4216 = vand.u32 %v3910, 4294901760
    %v4217 = vsub.f32 %v3910, %v4216
    %v4218 = vand.u32 %v4217, 4294901760
    %4219 = vmatpush1.msra.mxu0 %v4218
    %4220 = vmatprep.subr.mxu0 0.0
    %4221 = vmatpush1.msra.mxu0 0.0
    %4222 = vmatprep.subr.mxu0 0.0
    %4223 = vmatpush1.msra.mxu0 0.0
    %4224 = vmatprep.subr.mxu0 0.0
    %4225 = vmatpush1.msra.mxu0 0.0
    %4226 = vmatprep.subr.mxu0 0.0
    %4227 = vmatpush1.msra.mxu0 0.0
    %4228 = vmatprep.subr.mxu0 0.0
    %4229 = vmatpush1.msra.mxu0 0.0
    %4230 = vmatprep.subr.mxu0 0.0
    %4231 = vmatpush1.msra.mxu0 0.0
    %4232 = vmatprep.subr.mxu0 0.0
    %4233 = vmatpush1.msra.mxu0 0.0
    %4234 = vmatprep.subr.mxu0 0.0
    %4235 = vmatpush1.msra.mxu0 0.0
    %4236 = vmatprep.subr.mxu0 0.0
    %4237 = vmatpush1.msra.mxu0 0.0
    %4238 = vmatprep.subr.mxu0 0.0
    %4239 = vmatpush1.msra.mxu0 0.0
    %4240 = vmatprep.subr.mxu0 0.0
    %4241 = vmatpush1.msra.mxu0 0.0
    %4242 = vmatprep.subr.mxu0 0.0
    %4243 = vmatpush1.msra.mxu0 0.0
    %4244 = vmatprep.subr.mxu0 0.0
    %4245 = vmatpush1.msra.mxu0 0.0
    %4246 = vmatprep.subr.mxu0 0.0
    %4247 = vmatpush1.msra.mxu0 0.0
    %4248 = vmatprep.subr.mxu0 0.0
    %4249 = vmatpush1.msra.mxu0 0.0
    %4250 = vmatprep.subr.mxu0 0.0
    %4251 = vmatpush1.msra.mxu0 0.0
    %4252 = vmatprep.subr.mxu0 0.0
    %4253 = vmatpush1.msra.mxu0 0.0
    %4254 = vmatprep.subr.mxu0 0.0
    %4255 = vmatpush1.msra.mxu0 0.0
    %4256 = vmatprep.subr.mxu0 0.0
    %4257 = vmatpush1.msra.mxu0 0.0
    %4258 = vmatprep.subr.mxu0 0.0
    %4259 = vmatpush1.msra.mxu0 0.0
    %4260 = vmatprep.subr.mxu0 0.0
    %4261 = vmatpush1.msra.mxu0 0.0
    %4262 = vmatprep.subr.mxu0 0.0
    %4263 = vmatpush1.msra.mxu0 0.0
    %4264 = vmatprep.subr.mxu0 0.0
    %4265 = vmatpush1.msra.mxu0 0.0
    %4266 = vmatprep.subr.mxu0 0.0
    %4267 = vmatpush1.msra.mxu0 0.0
    %4268 = vmatprep.subr.mxu0 0.0
    %4269 = vmatpush1.msra.mxu0 0.0
    %4270 = vmatprep.subr.mxu0 0.0
    %4271 = vmatpush1.msra.mxu0 0.0
    %4272 = vmatprep.subr.mxu0 0.0
    %4273 = vmatpush1.msra.mxu0 0.0
    %4274 = vmatprep.subr.mxu0 0.0
    %4275 = vmatpush1.msra.mxu0 0.0
    %4276 = vmatprep.subr.mxu0 0.0
    %4277 = vmatpush1.msra.mxu0 0.0
    %4278 = vmatprep.subr.mxu0 0.0
    %4279 = vmatpush1.msra.mxu0 0.0
    %4280 = vmatprep.subr.mxu0 0.0
    %4281 = vmatpush1.msra.mxu0 0.0
    %4282 = vmatprep.mubr.f32.mxu0 0.0
    %v4283 = vand.u32 %v3913, 4294901760
    %4284 = vmatmul.mubr.f32.gmra.mrb[0].mxu0 %v4283
    %v4285 = vpop.f32.mrb[0].mxu0
    %v4286 = vadd.f32 %v4212, %v4285
    %v4287 = vpop.f32.mrb[0].mxu0
    %4288 = vdwg.mxu0
    %4289 = vmatprep.subr.mxu0 0.0
    %v4290 = vand.u32 %v3910, 4294901760
    %4291 = vmatpush1.msra.mxu0 %v4290
    %4292 = vmatprep.subr.mxu0 0.0
    %4293 = vmatpush1.msra.mxu0 0.0
    %4294 = vmatprep.subr.mxu0 0.0
    %4295 = vmatpush1.msra.mxu0 0.0
    %4296 = vmatprep.subr.mxu0 0.0
    %4297 = vmatpush1.msra.mxu0 0.0
    %4298 = vmatprep.subr.mxu0 0.0
    %4299 = vmatpush1.msra.mxu0 0.0
    %4300 = vmatprep.subr.mxu0 0.0
    %4301 = vmatpush1.msra.mxu0 0.0
    %4302 = vmatprep.subr.mxu0 0.0
    %4303 = vmatpush1.msra.mxu0 0.0
    %4304 = vmatprep.subr.mxu0 0.0
    %4305 = vmatpush1.msra.mxu0 0.0
    %4306 = vmatprep.subr.mxu0 0.0
    %4307 = vmatpush1.msra.mxu0 0.0
    %4308 = vmatprep.subr.mxu0 0.0
    %4309 = vmatpush1.msra.mxu0 0.0
    %4310 = vmatprep.subr.mxu0 0.0
    %4311 = vmatpush1.msra.mxu0 0.0
    %4312 = vmatprep.subr.mxu0 0.0
    %4313 = vmatpush1.msra.mxu0 0.0
    %4314 = vmatprep.subr.mxu0 0.0
    %4315 = vmatpush1.msra.mxu0 0.0
    %4316 = vmatprep.subr.mxu0 0.0
    %4317 = vmatpush1.msra.mxu0 0.0
    %4318 = vmatprep.subr.mxu0 0.0
    %4319 = vmatpush1.msra.mxu0 0.0
    %4320 = vmatprep.subr.mxu0 0.0
    %4321 = vmatpush1.msra.mxu0 0.0
    %4322 = vmatprep.subr.mxu0 0.0
    %4323 = vmatpush1.msra.mxu0 0.0
    %4324 = vmatprep.subr.mxu0 0.0
    %4325 = vmatpush1.msra.mxu0 0.0
    %4326 = vmatprep.subr.mxu0 0.0
    %4327 = vmatpush1.msra.mxu0 0.0
    %4328 = vmatprep.subr.mxu0 0.0
    %4329 = vmatpush1.msra.mxu0 0.0
    %4330 = vmatprep.subr.mxu0 0.0
    %4331 = vmatpush1.msra.mxu0 0.0
    %4332 = vmatprep.subr.mxu0 0.0
    %4333 = vmatpush1.msra.mxu0 0.0
    %4334 = vmatprep.subr.mxu0 0.0
    %4335 = vmatpush1.msra.mxu0 0.0
    %4336 = vmatprep.subr.mxu0 0.0
    %4337 = vmatpush1.msra.mxu0 0.0
    %4338 = vmatprep.subr.mxu0 0.0
    %4339 = vmatpush1.msra.mxu0 0.0
    %4340 = vmatprep.subr.mxu0 0.0
    %4341 = vmatpush1.msra.mxu0 0.0
    %4342 = vmatprep.subr.mxu0 0.0
    %4343 = vmatpush1.msra.mxu0 0.0
    %4344 = vmatprep.subr.mxu0 0.0
    %4345 = vmatpush1.msra.mxu0 0.0
    %4346 = vmatprep.subr.mxu0 0.0
    %4347 = vmatpush1.msra.mxu0 0.0
    %4348 = vmatprep.subr.mxu0 0.0
    %4349 = vmatpush1.msra.mxu0 0.0
    %4350 = vmatprep.subr.mxu0 0.0
    %4351 = vmatpush1.msra.mxu0 0.0
    %4352 = vmatprep.subr.mxu0 0.0
    %4353 = vmatpush1.msra.mxu0 0.0
    %4354 = vmatprep.mubr.f32.mxu0 0.0
    %v4355 = vand.u32 %v3913, 4294901760
    %4356 = vmatmul.mubr.f32.gmra.mrb[0].mxu0 %v4355
    %v4357 = vpop.f32.mrb[0].mxu0
    %v4358 = vadd.f32 %v4286, %v4357
    %v4359 = vpop.f32.mrb[0].mxu0
    %4360 = vdwg.mxu0
    %4362 = vrot.lane.b32.xlu0 %v2518, 8
    %v4363 = vpop.permute.xlu0 %4362
    %4366 = vrot.lane.b32.xlu0 %v3438, 16
    %v4367 = vpop.permute.xlu0 %4366
    %4370 = vrot.lane.b32.xlu0 %v4358, 24
    %v4371 = vpop.permute.xlu0 %4370
    %v4373 = vsel %vm683, %v1598, %v4363
    %vm4374 = vcmask 130048
    %v4375 = vsel %vm4374, %v4373, %v4367
    %vm4376 = vcmask 195584
    %v4377 = vsel %vm4376, %v4375, %v4371
    %s4378 = scalar_lea.vmem %s1, 1
    %v4379 = vld [vmem:[%s4378] sm:$0x1]
    %vm4380 = vcmp.gt.f32.partialorder %v4379, 0.5
    %v4381 = vsel %vm4380, 1, 0
    %v4382 = vcvt.s32.f32 %v4381
    %v4384 = vlaneseq
    %v4385 = vshrl.u32 %v4384, 7
    %v4386 = vsub.s32 0, %v4385
    %v4387 = vrot.slane %v4382, %v4386
    %4390 = vrot.lane.b32.xlu0 %v667, 96
    %v4391 = vpop.permute.xlu0 %4390
    %v4392 = vsel %vm683, %v667, 0
    %v4394 = vsel %vm683, %v4391, 0
    %4396 = vmatprep.subr.mxu0 0.0
    %v4397 = vand.u32 %v4394, 4294901760
    %4398 = vmatpush1.xpose.msra.mxu0 %v4397
    %4399 = vmatprep.subr.mxu0 0.0
    %4400 = vmatpush1.xpose.msra.mxu0 0.0
    %4401 = vmatprep.subr.mxu0 0.0
    %4402 = vmatpush1.xpose.msra.mxu0 0.0
    %4403 = vmatprep.subr.mxu0 0.0
    %4404 = vmatpush1.xpose.msra.mxu0 0.0
    %4405 = vmatprep.subr.mxu0 0.0
    %4406 = vmatpush1.xpose.msra.mxu0 0.0
    %4407 = vmatprep.subr.mxu0 0.0
    %4408 = vmatpush1.xpose.msra.mxu0 0.0
    %4409 = vmatprep.subr.mxu0 0.0
    %4410 = vmatpush1.xpose.msra.mxu0 0.0
    %4411 = vmatprep.subr.mxu0 0.0
    %4412 = vmatpush1.xpose.msra.mxu0 0.0
    %4413 = vmatprep.subr.mxu0 0.0
    %4414 = vmatpush1.xpose.msra.mxu0 0.0
    %4415 = vmatprep.subr.mxu0 0.0
    %4416 = vmatpush1.xpose.msra.mxu0 0.0
    %4417 = vmatprep.subr.mxu0 0.0
    %4418 = vmatpush1.xpose.msra.mxu0 0.0
    %4419 = vmatprep.subr.mxu0 0.0
    %4420 = vmatpush1.xpose.msra.mxu0 0.0
    %4421 = vmatprep.subr.mxu0 0.0
    %4422 = vmatpush1.xpose.msra.mxu0 0.0
    %4423 = vmatprep.subr.mxu0 0.0
    %4424 = vmatpush1.xpose.msra.mxu0 0.0
    %4425 = vmatprep.subr.mxu0 0.0
    %4426 = vmatpush1.xpose.msra.mxu0 0.0
    %4427 = vmatprep.subr.mxu0 0.0
    %4428 = vmatpush1.xpose.msra.mxu0 0.0
    %4429 = vmatprep.subr.mxu0 0.0
    %4430 = vmatpush1.xpose.msra.mxu0 0.0
    %4431 = vmatprep.subr.mxu0 0.0
    %4432 = vmatpush1.xpose.msra.mxu0 0.0
    %4433 = vmatprep.subr.mxu0 0.0
    %4434 = vmatpush1.xpose.msra.mxu0 0.0
    %4435 = vmatprep.subr.mxu0 0.0
    %4436 = vmatpush1.xpose.msra.mxu0 0.0
    %4437 = vmatprep.subr.mxu0 0.0
    %4438 = vmatpush1.xpose.msra.mxu0 0.0
    %4439 = vmatprep.subr.mxu0 0.0
    %4440 = vmatpush1.xpose.msra.mxu0 0.0
    %4441 = vmatprep.subr.mxu0 0.0
    %4442 = vmatpush1.xpose.msra.mxu0 0.0
    %4443 = vmatprep.subr.mxu0 0.0
    %4444 = vmatpush1.xpose.msra.mxu0 0.0
    %4445 = vmatprep.subr.mxu0 0.0
    %4446 = vmatpush1.xpose.msra.mxu0 0.0
    %4447 = vmatprep.subr.mxu0 0.0
    %4448 = vmatpush1.xpose.msra.mxu0 0.0
    %4449 = vmatprep.subr.mxu0 0.0
    %4450 = vmatpush1.xpose.msra.mxu0 0.0
    %4451 = vmatprep.subr.mxu0 0.0
    %4452 = vmatpush1.xpose.msra.mxu0 0.0
    %4453 = vmatprep.subr.mxu0 0.0
    %4454 = vmatpush1.xpose.msra.mxu0 0.0
    %4455 = vmatprep.subr.mxu0 0.0
    %4456 = vmatpush1.xpose.msra.mxu0 0.0
    %4457 = vmatprep.subr.mxu0 0.0
    %4458 = vmatpush1.xpose.msra.mxu0 0.0
    %4459 = vmatprep.subr.mxu0 0.0
    %4460 = vmatpush1.xpose.msra.mxu0 0.0
    %4461 = vmatprep.mubr.f32.mxu0 0.0
    %v4462 = vand.u32 %v4392, 4294901760
    %v4463 = vsub.f32 %v4392, %v4462
    %v4464 = vand.u32 %v4463, 4294901760
    %v4465 = vsub.f32 %v4463, %v4464
    %v4466 = vand.u32 %v4465, 4294901760
    %4467 = vmatmul.mubr.f32.gmra.mrb[0].mxu0 %v4466
    %v4468 = vpop.f32.mrb[0].mxu0
    %v4469 = vadd.f32 0.0, %v4468
    %v4470 = vpop.f32.mrb[0].mxu0
    %4471 = vdwg.mxu0
    %4472 = vmatprep.subr.mxu0 0.0
    %v4473 = vand.u32 %v4394, 4294901760
    %v4474 = vsub.f32 %v4394, %v4473
    %v4475 = vand.u32 %v4474, 4294901760
    %v4476 = vsub.f32 %v4474, %v4475
    %v4477 = vand.u32 %v4476, 4294901760
    %4478 = vmatpush1.xpose.msra.mxu0 %v4477
    %4479 = vmatprep.subr.mxu0 0.0
    %4480 = vmatpush1.xpose.msra.mxu0 0.0
    %4481 = vmatprep.subr.mxu0 0.0
    %4482 = vmatpush1.xpose.msra.mxu0 0.0
    %4483 = vmatprep.subr.mxu0 0.0
    %4484 = vmatpush1.xpose.msra.mxu0 0.0
    %4485 = vmatprep.subr.mxu0 0.0
    %4486 = vmatpush1.xpose.msra.mxu0 0.0
    %4487 = vmatprep.subr.mxu0 0.0
    %4488 = vmatpush1.xpose.msra.mxu0 0.0
    %4489 = vmatprep.subr.mxu0 0.0
    %4490 = vmatpush1.xpose.msra.mxu0 0.0
    %4491 = vmatprep.subr.mxu0 0.0
    %4492 = vmatpush1.xpose.msra.mxu0 0.0
    %4493 = vmatprep.subr.mxu0 0.0
    %4494 = vmatpush1.xpose.msra.mxu0 0.0
    %4495 = vmatprep.subr.mxu0 0.0
    %4496 = vmatpush1.xpose.msra.mxu0 0.0
    %4497 = vmatprep.subr.mxu0 0.0
    %4498 = vmatpush1.xpose.msra.mxu0 0.0
    %4499 = vmatprep.subr.mxu0 0.0
    %4500 = vmatpush1.xpose.msra.mxu0 0.0
    %4501 = vmatprep.subr.mxu0 0.0
    %4502 = vmatpush1.xpose.msra.mxu0 0.0
    %4503 = vmatprep.subr.mxu0 0.0
    %4504 = vmatpush1.xpose.msra.mxu0 0.0
    %4505 = vmatprep.subr.mxu0 0.0
    %4506 = vmatpush1.xpose.msra.mxu0 0.0
    %4507 = vmatprep.subr.mxu0 0.0
    %4508 = vmatpush1.xpose.msra.mxu0 0.0
    %4509 = vmatprep.subr.mxu0 0.0
    %4510 = vmatpush1.xpose.msra.mxu0 0.0
    %4511 = vmatprep.subr.mxu0 0.0
    %4512 = vmatpush1.xpose.msra.mxu0 0.0
    %4513 = vmatprep.subr.mxu0 0.0
    %4514 = vmatpush1.xpose.msra.mxu0 0.0
    %4515 = vmatprep.subr.mxu0 0.0
    %4516 = vmatpush1.xpose.msra.mxu0 0.0
    %4517 = vmatprep.subr.mxu0 0.0
    %4518 = vmatpush1.xpose.msra.mxu0 0.0
    %4519 = vmatprep.subr.mxu0 0.0
    %4520 = vmatpush1.xpose.msra.mxu0 0.0
    %4521 = vmatprep.subr.mxu0 0.0
    %4522 = vmatpush1.xpose.msra.mxu0 0.0
    %4523 = vmatprep.subr.mxu0 0.0
    %4524 = vmatpush1.xpose.msra.mxu0 0.0
    %4525 = vmatprep.subr.mxu0 0.0
    %4526 = vmatpush1.xpose.msra.mxu0 0.0
    %4527 = vmatprep.subr.mxu0 0.0
    %4528 = vmatpush1.xpose.msra.mxu0 0.0
    %4529 = vmatprep.subr.mxu0 0.0
    %4530 = vmatpush1.xpose.msra.mxu0 0.0
    %4531 = vmatprep.subr.mxu0 0.0
    %4532 = vmatpush1.xpose.msra.mxu0 0.0
    %4533 = vmatprep.subr.mxu0 0.0
    %4534 = vmatpush1.xpose.msra.mxu0 0.0
    %4535 = vmatprep.subr.mxu0 0.0
    %4536 = vmatpush1.xpose.msra.mxu0 0.0
    %4537 = vmatprep.subr.mxu0 0.0
    %4538 = vmatpush1.xpose.msra.mxu0 0.0
    %4539 = vmatprep.subr.mxu0 0.0
    %4540 = vmatpush1.xpose.msra.mxu0 0.0
    %4541 = vmatprep.mubr.f32.mxu0 0.0
    %v4542 = vand.u32 %v4392, 4294901760
    %4543 = vmatmul.mubr.f32.gmra.mrb[0].mxu0 %v4542
    %v4544 = vpop.f32.mrb[0].mxu0
    %v4545 = vadd.f32 %v4469, %v4544
    %v4546 = vpop.f32.mrb[0].mxu0
    %4547 = vdwg.mxu0
    %4548 = vmatprep.subr.mxu0 0.0
    %v4549 = vand.u32 %v4394, 4294901760
    %v4550 = vsub.f32 %v4394, %v4549
    %4551 = vmatpush1.xpose.msra.mxu0 %v4550
    %4552 = vmatprep.subr.mxu0 0.0
    %4553 = vmatpush1.xpose.msra.mxu0 0.0
    %4554 = vmatprep.subr.mxu0 0.0
    %4555 = vmatpush1.xpose.msra.mxu0 0.0
    %4556 = vmatprep.subr.mxu0 0.0
    %4557 = vmatpush1.xpose.msra.mxu0 0.0
    %4558 = vmatprep.subr.mxu0 0.0
    %4559 = vmatpush1.xpose.msra.mxu0 0.0
    %4560 = vmatprep.subr.mxu0 0.0
    %4561 = vmatpush1.xpose.msra.mxu0 0.0
    %4562 = vmatprep.subr.mxu0 0.0
    %4563 = vmatpush1.xpose.msra.mxu0 0.0
    %4564 = vmatprep.subr.mxu0 0.0
    %4565 = vmatpush1.xpose.msra.mxu0 0.0
    %4566 = vmatprep.subr.mxu0 0.0
    %4567 = vmatpush1.xpose.msra.mxu0 0.0
    %4568 = vmatprep.subr.mxu0 0.0
    %4569 = vmatpush1.xpose.msra.mxu0 0.0
    %4570 = vmatprep.subr.mxu0 0.0
    %4571 = vmatpush1.xpose.msra.mxu0 0.0
    %4572 = vmatprep.subr.mxu0 0.0
    %4573 = vmatpush1.xpose.msra.mxu0 0.0
    %4574 = vmatprep.subr.mxu0 0.0
    %4575 = vmatpush1.xpose.msra.mxu0 0.0
    %4576 = vmatprep.subr.mxu0 0.0
    %4577 = vmatpush1.xpose.msra.mxu0 0.0
    %4578 = vmatprep.subr.mxu0 0.0
    %4579 = vmatpush1.xpose.msra.mxu0 0.0
    %4580 = vmatprep.subr.mxu0 0.0
    %4581 = vmatpush1.xpose.msra.mxu0 0.0
    %4582 = vmatprep.subr.mxu0 0.0
    %4583 = vmatpush1.xpose.msra.mxu0 0.0
    %4584 = vmatprep.subr.mxu0 0.0
    %4585 = vmatpush1.xpose.msra.mxu0 0.0
    %4586 = vmatprep.subr.mxu0 0.0
    %4587 = vmatpush1.xpose.msra.mxu0 0.0
    %4588 = vmatprep.subr.mxu0 0.0
    %4589 = vmatpush1.xpose.msra.mxu0 0.0
    %4590 = vmatprep.subr.mxu0 0.0
    %4591 = vmatpush1.xpose.msra.mxu0 0.0
    %4592 = vmatprep.subr.mxu0 0.0
    %4593 = vmatpush1.xpose.msra.mxu0 0.0
    %4594 = vmatprep.subr.mxu0 0.0
    %4595 = vmatpush1.xpose.msra.mxu0 0.0
    %4596 = vmatprep.subr.mxu0 0.0
    %4597 = vmatpush1.xpose.msra.mxu0 0.0
    %4598 = vmatprep.subr.mxu0 0.0
    %4599 = vmatpush1.xpose.msra.mxu0 0.0
    %4600 = vmatprep.subr.mxu0 0.0
    %4601 = vmatpush1.xpose.msra.mxu0 0.0
    %4602 = vmatprep.subr.mxu0 0.0
    %4603 = vmatpush1.xpose.msra.mxu0 0.0
    %4604 = vmatprep.subr.mxu0 0.0
    %4605 = vmatpush1.xpose.msra.mxu0 0.0
    %4606 = vmatprep.subr.mxu0 0.0
    %4607 = vmatpush1.xpose.msra.mxu0 0.0
    %4608 = vmatprep.subr.mxu0 0.0
    %4609 = vmatpush1.xpose.msra.mxu0 0.0
    %4610 = vmatprep.subr.mxu0 0.0
    %4611 = vmatpush1.xpose.msra.mxu0 0.0
    %4612 = vmatprep.subr.mxu0 0.0
    %4613 = vmatpush1.xpose.msra.mxu0 0.0
    %4614 = vmatprep.mubr.f32.mxu0 0.0
    %v4615 = vand.u32 %v4392, 4294901760
    %v4616 = vsub.f32 %v4392, %v4615
    %4617 = vmatmul.mubr.f32.gmra.mrb[0].mxu0 %v4616
    %v4618 = vpop.f32.mrb[0].mxu0
    %v4619 = vadd.f32 %v4545, %v4618
    %v4620 = vpop.f32.mrb[0].mxu0
    %4621 = vdwg.mxu0
    %4622 = vmatprep.subr.mxu0 0.0
    %v4623 = vand.u32 %v4394, 4294901760
    %4624 = vmatpush1.xpose.msra.mxu0 %v4623
    %4625 = vmatprep.subr.mxu0 0.0
    %4626 = vmatpush1.xpose.msra.mxu0 0.0
    %4627 = vmatprep.subr.mxu0 0.0
    %4628 = vmatpush1.xpose.msra.mxu0 0.0
    %4629 = vmatprep.subr.mxu0 0.0
    %4630 = vmatpush1.xpose.msra.mxu0 0.0
    %4631 = vmatprep.subr.mxu0 0.0
    %4632 = vmatpush1.xpose.msra.mxu0 0.0
    %4633 = vmatprep.subr.mxu0 0.0
    %4634 = vmatpush1.xpose.msra.mxu0 0.0
    %4635 = vmatprep.subr.mxu0 0.0
    %4636 = vmatpush1.xpose.msra.mxu0 0.0
    %4637 = vmatprep.subr.mxu0 0.0
    %4638 = vmatpush1.xpose.msra.mxu0 0.0
    %4639 = vmatprep.subr.mxu0 0.0
    %4640 = vmatpush1.xpose.msra.mxu0 0.0
    %4641 = vmatprep.subr.mxu0 0.0
    %4642 = vmatpush1.xpose.msra.mxu0 0.0
    %4643 = vmatprep.subr.mxu0 0.0
    %4644 = vmatpush1.xpose.msra.mxu0 0.0
    %4645 = vmatprep.subr.mxu0 0.0
    %4646 = vmatpush1.xpose.msra.mxu0 0.0
    %4647 = vmatprep.subr.mxu0 0.0
    %4648 = vmatpush1.xpose.msra.mxu0 0.0
    %4649 = vmatprep.subr.mxu0 0.0
    %4650 = vmatpush1.xpose.msra.mxu0 0.0
    %4651 = vmatprep.subr.mxu0 0.0
    %4652 = vmatpush1.xpose.msra.mxu0 0.0
    %4653 = vmatprep.subr.mxu0 0.0
    %4654 = vmatpush1.xpose.msra.mxu0 0.0
    %4655 = vmatprep.subr.mxu0 0.0
    %4656 = vmatpush1.xpose.msra.mxu0 0.0
    %4657 = vmatprep.subr.mxu0 0.0
    %4658 = vmatpush1.xpose.msra.mxu0 0.0
    %4659 = vmatprep.subr.mxu0 0.0
    %4660 = vmatpush1.xpose.msra.mxu0 0.0
    %4661 = vmatprep.subr.mxu0 0.0
    %4662 = vmatpush1.xpose.msra.mxu0 0.0
    %4663 = vmatprep.subr.mxu0 0.0
    %4664 = vmatpush1.xpose.msra.mxu0 0.0
    %4665 = vmatprep.subr.mxu0 0.0
    %4666 = vmatpush1.xpose.msra.mxu0 0.0
    %4667 = vmatprep.subr.mxu0 0.0
    %4668 = vmatpush1.xpose.msra.mxu0 0.0
    %4669 = vmatprep.subr.mxu0 0.0
    %4670 = vmatpush1.xpose.msra.mxu0 0.0
    %4671 = vmatprep.subr.mxu0 0.0
    %4672 = vmatpush1.xpose.msra.mxu0 0.0
    %4673 = vmatprep.subr.mxu0 0.0
    %4674 = vmatpush1.xpose.msra.mxu0 0.0
    %4675 = vmatprep.subr.mxu0 0.0
    %4676 = vmatpush1.xpose.msra.mxu0 0.0
    %4677 = vmatprep.subr.mxu0 0.0
    %4678 = vmatpush1.xpose.msra.mxu0 0.0
    %4679 = vmatprep.subr.mxu0 0.0
    %4680 = vmatpush1.xpose.msra.mxu0 0.0
    %4681 = vmatprep.subr.mxu0 0.0
    %4682 = vmatpush1.xpose.msra.mxu0 0.0
    %4683 = vmatprep.subr.mxu0 0.0
    %4684 = vmatpush1.xpose.msra.mxu0 0.0
    %4685 = vmatprep.subr.mxu0 0.0
    %4686 = vmatpush1.xpose.msra.mxu0 0.0
    %4687 = vmatprep.mubr.f32.mxu0 0.0
    %v4688 = vand.u32 %v4392, 4294901760
    %v4689 = vsub.f32 %v4392, %v4688
    %v4690 = vand.u32 %v4689, 4294901760
    %4691 = vmatmul.mubr.f32.gmra.mrb[0].mxu0 %v4690
    %v4692 = vpop.f32.mrb[0].mxu0
    %v4693 = vadd.f32 %v4619, %v4692
    %v4694 = vpop.f32.mrb[0].mxu0
    %4695 = vdwg.mxu0
    %4696 = vmatprep.subr.mxu0 0.0
    %v4697 = vand.u32 %v4394, 4294901760
    %v4698 = vsub.f32 %v4394, %v4697
    %v4699 = vand.u32 %v4698, 4294901760
    %4700 = vmatpush1.xpose.msra.mxu0 %v4699
    %4701 = vmatprep.subr.mxu0 0.0
    %4702 = vmatpush1.xpose.msra.mxu0 0.0
    %4703 = vmatprep.subr.mxu0 0.0
    %4704 = vmatpush1.xpose.msra.mxu0 0.0
    %4705 = vmatprep.subr.mxu0 0.0
    %4706 = vmatpush1.xpose.msra.mxu0 0.0
    %4707 = vmatprep.subr.mxu0 0.0
    %4708 = vmatpush1.xpose.msra.mxu0 0.0
    %4709 = vmatprep.subr.mxu0 0.0
    %4710 = vmatpush1.xpose.msra.mxu0 0.0
    %4711 = vmatprep.subr.mxu0 0.0
    %4712 = vmatpush1.xpose.msra.mxu0 0.0
    %4713 = vmatprep.subr.mxu0 0.0
    %4714 = vmatpush1.xpose.msra.mxu0 0.0
    %4715 = vmatprep.subr.mxu0 0.0
    %4716 = vmatpush1.xpose.msra.mxu0 0.0
    %4717 = vmatprep.subr.mxu0 0.0
    %4718 = vmatpush1.xpose.msra.mxu0 0.0
    %4719 = vmatprep.subr.mxu0 0.0
    %4720 = vmatpush1.xpose.msra.mxu0 0.0
    %4721 = vmatprep.subr.mxu0 0.0
    %4722 = vmatpush1.xpose.msra.mxu0 0.0
    %4723 = vmatprep.subr.mxu0 0.0
    %4724 = vmatpush1.xpose.msra.mxu0 0.0
    %4725 = vmatprep.subr.mxu0 0.0
    %4726 = vmatpush1.xpose.msra.mxu0 0.0
    %4727 = vmatprep.subr.mxu0 0.0
    %4728 = vmatpush1.xpose.msra.mxu0 0.0
    %4729 = vmatprep.subr.mxu0 0.0
    %4730 = vmatpush1.xpose.msra.mxu0 0.0
    %4731 = vmatprep.subr.mxu0 0.0
    %4732 = vmatpush1.xpose.msra.mxu0 0.0
    %4733 = vmatprep.subr.mxu0 0.0
    %4734 = vmatpush1.xpose.msra.mxu0 0.0
    %4735 = vmatprep.subr.mxu0 0.0
    %4736 = vmatpush1.xpose.msra.mxu0 0.0
    %4737 = vmatprep.subr.mxu0 0.0
    %4738 = vmatpush1.xpose.msra.mxu0 0.0
    %4739 = vmatprep.subr.mxu0 0.0
    %4740 = vmatpush1.xpose.msra.mxu0 0.0
    %4741 = vmatprep.subr.mxu0 0.0
    %4742 = vmatpush1.xpose.msra.mxu0 0.0
    %4743 = vmatprep.subr.mxu0 0.0
    %4744 = vmatpush1.xpose.msra.mxu0 0.0
    %4745 = vmatprep.subr.mxu0 0.0
    %4746 = vmatpush1.xpose.msra.mxu0 0.0
    %4747 = vmatprep.subr.mxu0 0.0
    %4748 = vmatpush1.xpose.msra.mxu0 0.0
    %4749 = vmatprep.subr.mxu0 0.0
    %4750 = vmatpush1.xpose.msra.mxu0 0.0
    %4751 = vmatprep.subr.mxu0 0.0
    %4752 = vmatpush1.xpose.msra.mxu0 0.0
    %4753 = vmatprep.subr.mxu0 0.0
    %4754 = vmatpush1.xpose.msra.mxu0 0.0
    %4755 = vmatprep.subr.mxu0 0.0
    %4756 = vmatpush1.xpose.msra.mxu0 0.0
    %4757 = vmatprep.subr.mxu0 0.0
    %4758 = vmatpush1.xpose.msra.mxu0 0.0
    %4759 = vmatprep.subr.mxu0 0.0
    %4760 = vmatpush1.xpose.msra.mxu0 0.0
    %4761 = vmatprep.subr.mxu0 0.0
    %4762 = vmatpush1.xpose.msra.mxu0 0.0
    %4763 = vmatprep.mubr.f32.mxu0 0.0
    %v4764 = vand.u32 %v4392, 4294901760
    %4765 = vmatmul.mubr.f32.gmra.mrb[0].mxu0 %v4764
    %v4766 = vpop.f32.mrb[0].mxu0
    %v4767 = vadd.f32 %v4693, %v4766
    %v4768 = vpop.f32.mrb[0].mxu0
    %4769 = vdwg.mxu0
    %4770 = vmatprep.subr.mxu0 0.0
    %v4771 = vand.u32 %v4394, 4294901760
    %4772 = vmatpush1.xpose.msra.mxu0 %v4771
    %4773 = vmatprep.subr.mxu0 0.0
    %4774 = vmatpush1.xpose.msra.mxu0 0.0
    %4775 = vmatprep.subr.mxu0 0.0
    %4776 = vmatpush1.xpose.msra.mxu0 0.0
    %4777 = vmatprep.subr.mxu0 0.0
    %4778 = vmatpush1.xpose.msra.mxu0 0.0
    %4779 = vmatprep.subr.mxu0 0.0
    %4780 = vmatpush1.xpose.msra.mxu0 0.0
    %4781 = vmatprep.subr.mxu0 0.0
    %4782 = vmatpush1.xpose.msra.mxu0 0.0
    %4783 = vmatprep.subr.mxu0 0.0
    %4784 = vmatpush1.xpose.msra.mxu0 0.0
    %4785 = vmatprep.subr.mxu0 0.0
    %4786 = vmatpush1.xpose.msra.mxu0 0.0
    %4787 = vmatprep.subr.mxu0 0.0
    %4788 = vmatpush1.xpose.msra.mxu0 0.0
    %4789 = vmatprep.subr.mxu0 0.0
    %4790 = vmatpush1.xpose.msra.mxu0 0.0
    %4791 = vmatprep.subr.mxu0 0.0
    %4792 = vmatpush1.xpose.msra.mxu0 0.0
    %4793 = vmatprep.subr.mxu0 0.0
    %4794 = vmatpush1.xpose.msra.mxu0 0.0
    %4795 = vmatprep.subr.mxu0 0.0
    %4796 = vmatpush1.xpose.msra.mxu0 0.0
    %4797 = vmatprep.subr.mxu0 0.0
    %4798 = vmatpush1.xpose.msra.mxu0 0.0
    %4799 = vmatprep.subr.mxu0 0.0
    %4800 = vmatpush1.xpose.msra.mxu0 0.0
    %4801 = vmatprep.subr.mxu0 0.0
    %4802 = vmatpush1.xpose.msra.mxu0 0.0
    %4803 = vmatprep.subr.mxu0 0.0
    %4804 = vmatpush1.xpose.msra.mxu0 0.0
    %4805 = vmatprep.subr.mxu0 0.0
    %4806 = vmatpush1.xpose.msra.mxu0 0.0
    %4807 = vmatprep.subr.mxu0 0.0
    %4808 = vmatpush1.xpose.msra.mxu0 0.0
    %4809 = vmatprep.subr.mxu0 0.0
    %4810 = vmatpush1.xpose.msra.mxu0 0.0
    %4811 = vmatprep.subr.mxu0 0.0
    %4812 = vmatpush1.xpose.msra.mxu0 0.0
    %4813 = vmatprep.subr.mxu0 0.0
    %4814 = vmatpush1.xpose.msra.mxu0 0.0
    %4815 = vmatprep.subr.mxu0 0.0
    %4816 = vmatpush1.xpose.msra.mxu0 0.0
    %4817 = vmatprep.subr.mxu0 0.0
    %4818 = vmatpush1.xpose.msra.mxu0 0.0
    %4819 = vmatprep.subr.mxu0 0.0
    %4820 = vmatpush1.xpose.msra.mxu0 0.0
    %4821 = vmatprep.subr.mxu0 0.0
    %4822 = vmatpush1.xpose.msra.mxu0 0.0
    %4823 = vmatprep.subr.mxu0 0.0
    %4824 = vmatpush1.xpose.msra.mxu0 0.0
    %4825 = vmatprep.subr.mxu0 0.0
    %4826 = vmatpush1.xpose.msra.mxu0 0.0
    %4827 = vmatprep.subr.mxu0 0.0
    %4828 = vmatpush1.xpose.msra.mxu0 0.0
    %4829 = vmatprep.subr.mxu0 0.0
    %4830 = vmatpush1.xpose.msra.mxu0 0.0
    %4831 = vmatprep.subr.mxu0 0.0
    %4832 = vmatpush1.xpose.msra.mxu0 0.0
    %4833 = vmatprep.subr.mxu0 0.0
    %4834 = vmatpush1.xpose.msra.mxu0 0.0
    %4835 = vmatprep.mubr.f32.mxu0 0.0
    %v4836 = vand.u32 %v4392, 4294901760
    %4837 = vmatmul.mubr.f32.gmra.mrb[0].mxu0 %v4836
    %v4838 = vpop.f32.mrb[0].mxu0
    %v4839 = vadd.f32 %v4767, %v4838
    %v4840 = vpop.f32.mrb[0].mxu0
    %4841 = vdwg.mxu0
    %vm4842 = vcmp.gt.f32.partialorder %v4387, 0.0
    %v4843 = vsel %vm4842, %v4839, -3.4e+38
    %v4844 = vsel %vm683, %v4843, -inf
    %4845 = vmax.xlane.f32.xlu0 %v4844
    %v4846 = vpop.xlane.xlu0 %4845
    %v4847 = vsub.f32 %v4843, %v4846
    %v4848 = vmul.f32 %v4847, 1.442695
    %v4849 = vpow.pop %v4848
    %v4850 = vmul.f32 %v4849, %v4387
    %v4851 = vsel %vm683, %v4850, 0.0
    %4852 = vadd.xlane.f32.xlu0 %v4851
    %v4853 = vpop.xlane.xlu0 %4852
    %v4854 = vmax.f32 %v4853, 1e-30
    %v4855 = vrcp.pop %v4854
    %v4856 = vmul.f32 %v4850, %v4855
    %4857 = vrot.lane.b32.xlu0 %v667, 64
    %v4858 = vpop.permute.xlu0 %4857
    %v4861 = vsel %vm683, %v4856, 0
    %4863 = vmatprep.subr.mxu0 0.0
    %v4864 = vand.u32 %v4858, 4294901760
    %4865 = vmatpush1.msra.mxu0 %v4864
    %4866 = vmatprep.subr.mxu0 0.0
    %4867 = vmatpush1.msra.mxu0 0.0
    %4868 = vmatprep.subr.mxu0 0.0
    %4869 = vmatpush1.msra.mxu0 0.0
    %4870 = vmatprep.subr.mxu0 0.0
    %4871 = vmatpush1.msra.mxu0 0.0
    %4872 = vmatprep.subr.mxu0 0.0
    %4873 = vmatpush1.msra.mxu0 0.0
    %4874 = vmatprep.subr.mxu0 0.0
    %4875 = vmatpush1.msra.mxu0 0.0
    %4876 = vmatprep.subr.mxu0 0.0
    %4877 = vmatpush1.msra.mxu0 0.0
    %4878 = vmatprep.subr.mxu0 0.0
    %4879 = vmatpush1.msra.mxu0 0.0
    %4880 = vmatprep.subr.mxu0 0.0
    %4881 = vmatpush1.msra.mxu0 0.0
    %4882 = vmatprep.subr.mxu0 0.0
    %4883 = vmatpush1.msra.mxu0 0.0
    %4884 = vmatprep.subr.mxu0 0.0
    %4885 = vmatpush1.msra.mxu0 0.0
    %4886 = vmatprep.subr.mxu0 0.0
    %4887 = vmatpush1.msra.mxu0 0.0
    %4888 = vmatprep.subr.mxu0 0.0
    %4889 = vmatpush1.msra.mxu0 0.0
    %4890 = vmatprep.subr.mxu0 0.0
    %4891 = vmatpush1.msra.mxu0 0.0
    %4892 = vmatprep.subr.mxu0 0.0
    %4893 = vmatpush1.msra.mxu0 0.0
    %4894 = vmatprep.subr.mxu0 0.0
    %4895 = vmatpush1.msra.mxu0 0.0
    %4896 = vmatprep.subr.mxu0 0.0
    %4897 = vmatpush1.msra.mxu0 0.0
    %4898 = vmatprep.subr.mxu0 0.0
    %4899 = vmatpush1.msra.mxu0 0.0
    %4900 = vmatprep.subr.mxu0 0.0
    %4901 = vmatpush1.msra.mxu0 0.0
    %4902 = vmatprep.subr.mxu0 0.0
    %4903 = vmatpush1.msra.mxu0 0.0
    %4904 = vmatprep.subr.mxu0 0.0
    %4905 = vmatpush1.msra.mxu0 0.0
    %4906 = vmatprep.subr.mxu0 0.0
    %4907 = vmatpush1.msra.mxu0 0.0
    %4908 = vmatprep.subr.mxu0 0.0
    %4909 = vmatpush1.msra.mxu0 0.0
    %4910 = vmatprep.subr.mxu0 0.0
    %4911 = vmatpush1.msra.mxu0 0.0
    %4912 = vmatprep.subr.mxu0 0.0
    %4913 = vmatpush1.msra.mxu0 0.0
    %4914 = vmatprep.subr.mxu0 0.0
    %4915 = vmatpush1.msra.mxu0 0.0
    %4916 = vmatprep.subr.mxu0 0.0
    %4917 = vmatpush1.msra.mxu0 0.0
    %4918 = vmatprep.subr.mxu0 0.0
    %4919 = vmatpush1.msra.mxu0 0.0
    %4920 = vmatprep.subr.mxu0 0.0
    %4921 = vmatpush1.msra.mxu0 0.0
    %4922 = vmatprep.subr.mxu0 0.0
    %4923 = vmatpush1.msra.mxu0 0.0
    %4924 = vmatprep.subr.mxu0 0.0
    %4925 = vmatpush1.msra.mxu0 0.0
    %4926 = vmatprep.subr.mxu0 0.0
    %4927 = vmatpush1.msra.mxu0 0.0
    %4928 = vmatprep.mubr.f32.mxu0 0.0
    %v4929 = vand.u32 %v4861, 4294901760
    %v4930 = vsub.f32 %v4861, %v4929
    %v4931 = vand.u32 %v4930, 4294901760
    %v4932 = vsub.f32 %v4930, %v4931
    %v4933 = vand.u32 %v4932, 4294901760
    %4934 = vmatmul.mubr.f32.gmra.mrb[0].mxu0 %v4933
    %v4935 = vpop.f32.mrb[0].mxu0
    %v4936 = vadd.f32 0.0, %v4935
    %v4937 = vpop.f32.mrb[0].mxu0
    %4938 = vdwg.mxu0
    %4939 = vmatprep.subr.mxu0 0.0
    %v4940 = vand.u32 %v4858, 4294901760
    %v4941 = vsub.f32 %v4858, %v4940
    %v4942 = vand.u32 %v4941, 4294901760
    %v4943 = vsub.f32 %v4941, %v4942
    %v4944 = vand.u32 %v4943, 4294901760
    %4945 = vmatpush1.msra.mxu0 %v4944
    %4946 = vmatprep.subr.mxu0 0.0
    %4947 = vmatpush1.msra.mxu0 0.0
    %4948 = vmatprep.subr.mxu0 0.0
    %4949 = vmatpush1.msra.mxu0 0.0
    %4950 = vmatprep.subr.mxu0 0.0
    %4951 = vmatpush1.msra.mxu0 0.0
    %4952 = vmatprep.subr.mxu0 0.0
    %4953 = vmatpush1.msra.mxu0 0.0
    %4954 = vmatprep.subr.mxu0 0.0
    %4955 = vmatpush1.msra.mxu0 0.0
    %4956 = vmatprep.subr.mxu0 0.0
    %4957 = vmatpush1.msra.mxu0 0.0
    %4958 = vmatprep.subr.mxu0 0.0
    %4959 = vmatpush1.msra.mxu0 0.0
    %4960 = vmatprep.subr.mxu0 0.0
    %4961 = vmatpush1.msra.mxu0 0.0
    %4962 = vmatprep.subr.mxu0 0.0
    %4963 = vmatpush1.msra.mxu0 0.0
    %4964 = vmatprep.subr.mxu0 0.0
    %4965 = vmatpush1.msra.mxu0 0.0
    %4966 = vmatprep.subr.mxu0 0.0
    %4967 = vmatpush1.msra.mxu0 0.0
    %4968 = vmatprep.subr.mxu0 0.0
    %4969 = vmatpush1.msra.mxu0 0.0
    %4970 = vmatprep.subr.mxu0 0.0
    %4971 = vmatpush1.msra.mxu0 0.0
    %4972 = vmatprep.subr.mxu0 0.0
    %4973 = vmatpush1.msra.mxu0 0.0
    %4974 = vmatprep.subr.mxu0 0.0
    %4975 = vmatpush1.msra.mxu0 0.0
    %4976 = vmatprep.subr.mxu0 0.0
    %4977 = vmatpush1.msra.mxu0 0.0
    %4978 = vmatprep.subr.mxu0 0.0
    %4979 = vmatpush1.msra.mxu0 0.0
    %4980 = vmatprep.subr.mxu0 0.0
    %4981 = vmatpush1.msra.mxu0 0.0
    %4982 = vmatprep.subr.mxu0 0.0
    %4983 = vmatpush1.msra.mxu0 0.0
    %4984 = vmatprep.subr.mxu0 0.0
    %4985 = vmatpush1.msra.mxu0 0.0
    %4986 = vmatprep.subr.mxu0 0.0
    %4987 = vmatpush1.msra.mxu0 0.0
    %4988 = vmatprep.subr.mxu0 0.0
    %4989 = vmatpush1.msra.mxu0 0.0
    %4990 = vmatprep.subr.mxu0 0.0
    %4991 = vmatpush1.msra.mxu0 0.0
    %4992 = vmatprep.subr.mxu0 0.0
    %4993 = vmatpush1.msra.mxu0 0.0
    %4994 = vmatprep.subr.mxu0 0.0
    %4995 = vmatpush1.msra.mxu0 0.0
    %4996 = vmatprep.subr.mxu0 0.0
    %4997 = vmatpush1.msra.mxu0 0.0
    %4998 = vmatprep.subr.mxu0 0.0
    %4999 = vmatpush1.msra.mxu0 0.0
    %5000 = vmatprep.subr.mxu0 0.0
    %5001 = vmatpush1.msra.mxu0 0.0
    %5002 = vmatprep.subr.mxu0 0.0
    %5003 = vmatpush1.msra.mxu0 0.0
    %5004 = vmatprep.subr.mxu0 0.0
    %5005 = vmatpush1.msra.mxu0 0.0
    %5006 = vmatprep.subr.mxu0 0.0
    %5007 = vmatpush1.msra.mxu0 0.0
    %5008 = vmatprep.mubr.f32.mxu0 0.0
    %v5009 = vand.u32 %v4861, 4294901760
    %5010 = vmatmul.mubr.f32.gmra.mrb[0].mxu0 %v5009
    %v5011 = vpop.f32.mrb[0].mxu0
    %v5012 = vadd.f32 %v4936, %v5011
    %v5013 = vpop.f32.mrb[0].mxu0
    %5014 = vdwg.mxu0
    %5015 = vmatprep.subr.mxu0 0.0
    %v5016 = vand.u32 %v4858, 4294901760
    %v5017 = vsub.f32 %v4858, %v5016
    %5018 = vmatpush1.msra.mxu0 %v5017
    %5019 = vmatprep.subr.mxu0 0.0
    %5020 = vmatpush1.msra.mxu0 0.0
    %5021 = vmatprep.subr.mxu0 0.0
    %5022 = vmatpush1.msra.mxu0 0.0
    %5023 = vmatprep.subr.mxu0 0.0
    %5024 = vmatpush1.msra.mxu0 0.0
    %5025 = vmatprep.subr.mxu0 0.0
    %5026 = vmatpush1.msra.mxu0 0.0
    %5027 = vmatprep.subr.mxu0 0.0
    %5028 = vmatpush1.msra.mxu0 0.0
    %5029 = vmatprep.subr.mxu0 0.0
    %5030 = vmatpush1.msra.mxu0 0.0
    %5031 = vmatprep.subr.mxu0 0.0
    %5032 = vmatpush1.msra.mxu0 0.0
    %5033 = vmatprep.subr.mxu0 0.0
    %5034 = vmatpush1.msra.mxu0 0.0
    %5035 = vmatprep.subr.mxu0 0.0
    %5036 = vmatpush1.msra.mxu0 0.0
    %5037 = vmatprep.subr.mxu0 0.0
    %5038 = vmatpush1.msra.mxu0 0.0
    %5039 = vmatprep.subr.mxu0 0.0
    %5040 = vmatpush1.msra.mxu0 0.0
    %5041 = vmatprep.subr.mxu0 0.0
    %5042 = vmatpush1.msra.mxu0 0.0
    %5043 = vmatprep.subr.mxu0 0.0
    %5044 = vmatpush1.msra.mxu0 0.0
    %5045 = vmatprep.subr.mxu0 0.0
    %5046 = vmatpush1.msra.mxu0 0.0
    %5047 = vmatprep.subr.mxu0 0.0
    %5048 = vmatpush1.msra.mxu0 0.0
    %5049 = vmatprep.subr.mxu0 0.0
    %5050 = vmatpush1.msra.mxu0 0.0
    %5051 = vmatprep.subr.mxu0 0.0
    %5052 = vmatpush1.msra.mxu0 0.0
    %5053 = vmatprep.subr.mxu0 0.0
    %5054 = vmatpush1.msra.mxu0 0.0
    %5055 = vmatprep.subr.mxu0 0.0
    %5056 = vmatpush1.msra.mxu0 0.0
    %5057 = vmatprep.subr.mxu0 0.0
    %5058 = vmatpush1.msra.mxu0 0.0
    %5059 = vmatprep.subr.mxu0 0.0
    %5060 = vmatpush1.msra.mxu0 0.0
    %5061 = vmatprep.subr.mxu0 0.0
    %5062 = vmatpush1.msra.mxu0 0.0
    %5063 = vmatprep.subr.mxu0 0.0
    %5064 = vmatpush1.msra.mxu0 0.0
    %5065 = vmatprep.subr.mxu0 0.0
    %5066 = vmatpush1.msra.mxu0 0.0
    %5067 = vmatprep.subr.mxu0 0.0
    %5068 = vmatpush1.msra.mxu0 0.0
    %5069 = vmatprep.subr.mxu0 0.0
    %5070 = vmatpush1.msra.mxu0 0.0
    %5071 = vmatprep.subr.mxu0 0.0
    %5072 = vmatpush1.msra.mxu0 0.0
    %5073 = vmatprep.subr.mxu0 0.0
    %5074 = vmatpush1.msra.mxu0 0.0
    %5075 = vmatprep.subr.mxu0 0.0
    %5076 = vmatpush1.msra.mxu0 0.0
    %5077 = vmatprep.subr.mxu0 0.0
    %5078 = vmatpush1.msra.mxu0 0.0
    %5079 = vmatprep.subr.mxu0 0.0
    %5080 = vmatpush1.msra.mxu0 0.0
    %5081 = vmatprep.mubr.f32.mxu0 0.0
    %v5082 = vand.u32 %v4861, 4294901760
    %v5083 = vsub.f32 %v4861, %v5082
    %5084 = vmatmul.mubr.f32.gmra.mrb[0].mxu0 %v5083
    %v5085 = vpop.f32.mrb[0].mxu0
    %v5086 = vadd.f32 %v5012, %v5085
    %v5087 = vpop.f32.mrb[0].mxu0
    %5088 = vdwg.mxu0
    %5089 = vmatprep.subr.mxu0 0.0
    %v5090 = vand.u32 %v4858, 4294901760
    %5091 = vmatpush1.msra.mxu0 %v5090
    %5092 = vmatprep.subr.mxu0 0.0
    %5093 = vmatpush1.msra.mxu0 0.0
    %5094 = vmatprep.subr.mxu0 0.0
    %5095 = vmatpush1.msra.mxu0 0.0
    %5096 = vmatprep.subr.mxu0 0.0
    %5097 = vmatpush1.msra.mxu0 0.0
    %5098 = vmatprep.subr.mxu0 0.0
    %5099 = vmatpush1.msra.mxu0 0.0
    %5100 = vmatprep.subr.mxu0 0.0
    %5101 = vmatpush1.msra.mxu0 0.0
    %5102 = vmatprep.subr.mxu0 0.0
    %5103 = vmatpush1.msra.mxu0 0.0
    %5104 = vmatprep.subr.mxu0 0.0
    %5105 = vmatpush1.msra.mxu0 0.0
    %5106 = vmatprep.subr.mxu0 0.0
    %5107 = vmatpush1.msra.mxu0 0.0
    %5108 = vmatprep.subr.mxu0 0.0
    %5109 = vmatpush1.msra.mxu0 0.0
    %5110 = vmatprep.subr.mxu0 0.0
    %5111 = vmatpush1.msra.mxu0 0.0
    %5112 = vmatprep.subr.mxu0 0.0
    %5113 = vmatpush1.msra.mxu0 0.0
    %5114 = vmatprep.subr.mxu0 0.0
    %5115 = vmatpush1.msra.mxu0 0.0
    %5116 = vmatprep.subr.mxu0 0.0
    %5117 = vmatpush1.msra.mxu0 0.0
    %5118 = vmatprep.subr.mxu0 0.0
    %5119 = vmatpush1.msra.mxu0 0.0
    %5120 = vmatprep.subr.mxu0 0.0
    %5121 = vmatpush1.msra.mxu0 0.0
    %5122 = vmatprep.subr.mxu0 0.0
    %5123 = vmatpush1.msra.mxu0 0.0
    %5124 = vmatprep.subr.mxu0 0.0
    %5125 = vmatpush1.msra.mxu0 0.0
    %5126 = vmatprep.subr.mxu0 0.0
    %5127 = vmatpush1.msra.mxu0 0.0
    %5128 = vmatprep.subr.mxu0 0.0
    %5129 = vmatpush1.msra.mxu0 0.0
    %5130 = vmatprep.subr.mxu0 0.0
    %5131 = vmatpush1.msra.mxu0 0.0
    %5132 = vmatprep.subr.mxu0 0.0
    %5133 = vmatpush1.msra.mxu0 0.0
    %5134 = vmatprep.subr.mxu0 0.0
    %5135 = vmatpush1.msra.mxu0 0.0
    %5136 = vmatprep.subr.mxu0 0.0
    %5137 = vmatpush1.msra.mxu0 0.0
    %5138 = vmatprep.subr.mxu0 0.0
    %5139 = vmatpush1.msra.mxu0 0.0
    %5140 = vmatprep.subr.mxu0 0.0
    %5141 = vmatpush1.msra.mxu0 0.0
    %5142 = vmatprep.subr.mxu0 0.0
    %5143 = vmatpush1.msra.mxu0 0.0
    %5144 = vmatprep.subr.mxu0 0.0
    %5145 = vmatpush1.msra.mxu0 0.0
    %5146 = vmatprep.subr.mxu0 0.0
    %5147 = vmatpush1.msra.mxu0 0.0
    %5148 = vmatprep.subr.mxu0 0.0
    %5149 = vmatpush1.msra.mxu0 0.0
    %5150 = vmatprep.subr.mxu0 0.0
    %5151 = vmatpush1.msra.mxu0 0.0
    %5152 = vmatprep.subr.mxu0 0.0
    %5153 = vmatpush1.msra.mxu0 0.0
    %5154 = vmatprep.mubr.f32.mxu0 0.0
    %v5155 = vand.u32 %v4861, 4294901760
    %v5156 = vsub.f32 %v4861, %v5155
    %v5157 = vand.u32 %v5156, 4294901760
    %5158 = vmatmul.mubr.f32.gmra.mrb[0].mxu0 %v5157
    %v5159 = vpop.f32.mrb[0].mxu0
    %v5160 = vadd.f32 %v5086, %v5159
    %v5161 = vpop.f32.mrb[0].mxu0
    %5162 = vdwg.mxu0
    %5163 = vmatprep.subr.mxu0 0.0
    %v5164 = vand.u32 %v4858, 4294901760
    %v5165 = vsub.f32 %v4858, %v5164
    %v5166 = vand.u32 %v5165, 4294901760
    %5167 = vmatpush1.msra.mxu0 %v5166
    %5168 = vmatprep.subr.mxu0 0.0
    %5169 = vmatpush1.msra.mxu0 0.0
    %5170 = vmatprep.subr.mxu0 0.0
    %5171 = vmatpush1.msra.mxu0 0.0
    %5172 = vmatprep.subr.mxu0 0.0
    %5173 = vmatpush1.msra.mxu0 0.0
    %5174 = vmatprep.subr.mxu0 0.0
    %5175 = vmatpush1.msra.mxu0 0.0
    %5176 = vmatprep.subr.mxu0 0.0
    %5177 = vmatpush1.msra.mxu0 0.0
    %5178 = vmatprep.subr.mxu0 0.0
    %5179 = vmatpush1.msra.mxu0 0.0
    %5180 = vmatprep.subr.mxu0 0.0
    %5181 = vmatpush1.msra.mxu0 0.0
    %5182 = vmatprep.subr.mxu0 0.0
    %5183 = vmatpush1.msra.mxu0 0.0
    %5184 = vmatprep.subr.mxu0 0.0
    %5185 = vmatpush1.msra.mxu0 0.0
    %5186 = vmatprep.subr.mxu0 0.0
    %5187 = vmatpush1.msra.mxu0 0.0
    %5188 = vmatprep.subr.mxu0 0.0
    %5189 = vmatpush1.msra.mxu0 0.0
    %5190 = vmatprep.subr.mxu0 0.0
    %5191 = vmatpush1.msra.mxu0 0.0
    %5192 = vmatprep.subr.mxu0 0.0
    %5193 = vmatpush1.msra.mxu0 0.0
    %5194 = vmatprep.subr.mxu0 0.0
    %5195 = vmatpush1.msra.mxu0 0.0
    %5196 = vmatprep.subr.mxu0 0.0
    %5197 = vmatpush1.msra.mxu0 0.0
    %5198 = vmatprep.subr.mxu0 0.0
    %5199 = vmatpush1.msra.mxu0 0.0
    %5200 = vmatprep.subr.mxu0 0.0
    %5201 = vmatpush1.msra.mxu0 0.0
    %5202 = vmatprep.subr.mxu0 0.0
    %5203 = vmatpush1.msra.mxu0 0.0
    %5204 = vmatprep.subr.mxu0 0.0
    %5205 = vmatpush1.msra.mxu0 0.0
    %5206 = vmatprep.subr.mxu0 0.0
    %5207 = vmatpush1.msra.mxu0 0.0
    %5208 = vmatprep.subr.mxu0 0.0
    %5209 = vmatpush1.msra.mxu0 0.0
    %5210 = vmatprep.subr.mxu0 0.0
    %5211 = vmatpush1.msra.mxu0 0.0
    %5212 = vmatprep.subr.mxu0 0.0
    %5213 = vmatpush1.msra.mxu0 0.0
    %5214 = vmatprep.subr.mxu0 0.0
    %5215 = vmatpush1.msra.mxu0 0.0
    %5216 = vmatprep.subr.mxu0 0.0
    %5217 = vmatpush1.msra.mxu0 0.0
    %5218 = vmatprep.subr.mxu0 0.0
    %5219 = vmatpush1.msra.mxu0 0.0
    %5220 = vmatprep.subr.mxu0 0.0
    %5221 = vmatpush1.msra.mxu0 0.0
    %5222 = vmatprep.subr.mxu0 0.0
    %5223 = vmatpush1.msra.mxu0 0.0
    %5224 = vmatprep.subr.mxu0 0.0
    %5225 = vmatpush1.msra.mxu0 0.0
    %5226 = vmatprep.subr.mxu0 0.0
    %5227 = vmatpush1.msra.mxu0 0.0
    %5228 = vmatprep.subr.mxu0 0.0
    %5229 = vmatpush1.msra.mxu0 0.0
    %5230 = vmatprep.mubr.f32.mxu0 0.0
    %v5231 = vand.u32 %v4861, 4294901760
    %5232 = vmatmul.mubr.f32.gmra.mrb[0].mxu0 %v5231
    %v5233 = vpop.f32.mrb[0].mxu0
    %v5234 = vadd.f32 %v5160, %v5233
    %v5235 = vpop.f32.mrb[0].mxu0
    %5236 = vdwg.mxu0
    %5237 = vmatprep.subr.mxu0 0.0
    %v5238 = vand.u32 %v4858, 4294901760
    %5239 = vmatpush1.msra.mxu0 %v5238
    %5240 = vmatprep.subr.mxu0 0.0
    %5241 = vmatpush1.msra.mxu0 0.0
    %5242 = vmatprep.subr.mxu0 0.0
    %5243 = vmatpush1.msra.mxu0 0.0
    %5244 = vmatprep.subr.mxu0 0.0
    %5245 = vmatpush1.msra.mxu0 0.0
    %5246 = vmatprep.subr.mxu0 0.0
    %5247 = vmatpush1.msra.mxu0 0.0
    %5248 = vmatprep.subr.mxu0 0.0
    %5249 = vmatpush1.msra.mxu0 0.0
    %5250 = vmatprep.subr.mxu0 0.0
    %5251 = vmatpush1.msra.mxu0 0.0
    %5252 = vmatprep.subr.mxu0 0.0
    %5253 = vmatpush1.msra.mxu0 0.0
    %5254 = vmatprep.subr.mxu0 0.0
    %5255 = vmatpush1.msra.mxu0 0.0
    %5256 = vmatprep.subr.mxu0 0.0
    %5257 = vmatpush1.msra.mxu0 0.0
    %5258 = vmatprep.subr.mxu0 0.0
    %5259 = vmatpush1.msra.mxu0 0.0
    %5260 = vmatprep.subr.mxu0 0.0
    %5261 = vmatpush1.msra.mxu0 0.0
    %5262 = vmatprep.subr.mxu0 0.0
    %5263 = vmatpush1.msra.mxu0 0.0
    %5264 = vmatprep.subr.mxu0 0.0
    %5265 = vmatpush1.msra.mxu0 0.0
    %5266 = vmatprep.subr.mxu0 0.0
    %5267 = vmatpush1.msra.mxu0 0.0
    %5268 = vmatprep.subr.mxu0 0.0
    %5269 = vmatpush1.msra.mxu0 0.0
    %5270 = vmatprep.subr.mxu0 0.0
    %5271 = vmatpush1.msra.mxu0 0.0
    %5272 = vmatprep.subr.mxu0 0.0
    %5273 = vmatpush1.msra.mxu0 0.0
    %5274 = vmatprep.subr.mxu0 0.0
    %5275 = vmatpush1.msra.mxu0 0.0
    %5276 = vmatprep.subr.mxu0 0.0
    %5277 = vmatpush1.msra.mxu0 0.0
    %5278 = vmatprep.subr.mxu0 0.0
    %5279 = vmatpush1.msra.mxu0 0.0
    %5280 = vmatprep.subr.mxu0 0.0
    %5281 = vmatpush1.msra.mxu0 0.0
    %5282 = vmatprep.subr.mxu0 0.0
    %5283 = vmatpush1.msra.mxu0 0.0
    %5284 = vmatprep.subr.mxu0 0.0
    %5285 = vmatpush1.msra.mxu0 0.0
    %5286 = vmatprep.subr.mxu0 0.0
    %5287 = vmatpush1.msra.mxu0 0.0
    %5288 = vmatprep.subr.mxu0 0.0
    %5289 = vmatpush1.msra.mxu0 0.0
    %5290 = vmatprep.subr.mxu0 0.0
    %5291 = vmatpush1.msra.mxu0 0.0
    %5292 = vmatprep.subr.mxu0 0.0
    %5293 = vmatpush1.msra.mxu0 0.0
    %5294 = vmatprep.subr.mxu0 0.0
    %5295 = vmatpush1.msra.mxu0 0.0
    %5296 = vmatprep.subr.mxu0 0.0
    %5297 = vmatpush1.msra.mxu0 0.0
    %5298 = vmatprep.subr.mxu0 0.0
    %5299 = vmatpush1.msra.mxu0 0.0
    %5300 = vmatprep.subr.mxu0 0.0
    %5301 = vmatpush1.msra.mxu0 0.0
    %5302 = vmatprep.mubr.f32.mxu0 0.0
    %v5303 = vand.u32 %v4861, 4294901760
    %5304 = vmatmul.mubr.f32.gmra.mrb[0].mxu0 %v5303
    %v5305 = vpop.f32.mrb[0].mxu0
    %v5306 = vadd.f32 %v5234, %v5305
    %v5307 = vpop.f32.mrb[0].mxu0
    %5308 = vdwg.mxu0
    %5309 = vrot.lane.b32.xlu0 %v667, 120
    %v5310 = vpop.permute.xlu0 %5309
    %5311 = vrot.lane.b32.xlu0 %v667, 88
    %v5312 = vpop.permute.xlu0 %5311
    %v5313 = vsel %vm683, %v5310, 0
    %v5315 = vsel %vm683, %v5312, 0
    %5317 = vmatprep.subr.mxu0 0.0
    %v5318 = vand.u32 %v5315, 4294901760
    %5319 = vmatpush1.xpose.msra.mxu0 %v5318
    %5320 = vmatprep.subr.mxu0 0.0
    %5321 = vmatpush1.xpose.msra.mxu0 0.0
    %5322 = vmatprep.subr.mxu0 0.0
    %5323 = vmatpush1.xpose.msra.mxu0 0.0
    %5324 = vmatprep.subr.mxu0 0.0
    %5325 = vmatpush1.xpose.msra.mxu0 0.0
    %5326 = vmatprep.subr.mxu0 0.0
    %5327 = vmatpush1.xpose.msra.mxu0 0.0
    %5328 = vmatprep.subr.mxu0 0.0
    %5329 = vmatpush1.xpose.msra.mxu0 0.0
    %5330 = vmatprep.subr.mxu0 0.0
    %5331 = vmatpush1.xpose.msra.mxu0 0.0
    %5332 = vmatprep.subr.mxu0 0.0
    %5333 = vmatpush1.xpose.msra.mxu0 0.0
    %5334 = vmatprep.subr.mxu0 0.0
    %5335 = vmatpush1.xpose.msra.mxu0 0.0
    %5336 = vmatprep.subr.mxu0 0.0
    %5337 = vmatpush1.xpose.msra.mxu0 0.0
    %5338 = vmatprep.subr.mxu0 0.0
    %5339 = vmatpush1.xpose.msra.mxu0 0.0
    %5340 = vmatprep.subr.mxu0 0.0
    %5341 = vmatpush1.xpose.msra.mxu0 0.0
    %5342 = vmatprep.subr.mxu0 0.0
    %5343 = vmatpush1.xpose.msra.mxu0 0.0
    %5344 = vmatprep.subr.mxu0 0.0
    %5345 = vmatpush1.xpose.msra.mxu0 0.0
    %5346 = vmatprep.subr.mxu0 0.0
    %5347 = vmatpush1.xpose.msra.mxu0 0.0
    %5348 = vmatprep.subr.mxu0 0.0
    %5349 = vmatpush1.xpose.msra.mxu0 0.0
    %5350 = vmatprep.subr.mxu0 0.0
    %5351 = vmatpush1.xpose.msra.mxu0 0.0
    %5352 = vmatprep.subr.mxu0 0.0
    %5353 = vmatpush1.xpose.msra.mxu0 0.0
    %5354 = vmatprep.subr.mxu0 0.0
    %5355 = vmatpush1.xpose.msra.mxu0 0.0
    %5356 = vmatprep.subr.mxu0 0.0
    %5357 = vmatpush1.xpose.msra.mxu0 0.0
    %5358 = vmatprep.subr.mxu0 0.0
    %5359 = vmatpush1.xpose.msra.mxu0 0.0
    %5360 = vmatprep.subr.mxu0 0.0
    %5361 = vmatpush1.xpose.msra.mxu0 0.0
    %5362 = vmatprep.subr.mxu0 0.0
    %5363 = vmatpush1.xpose.msra.mxu0 0.0
    %5364 = vmatprep.subr.mxu0 0.0
    %5365 = vmatpush1.xpose.msra.mxu0 0.0
    %5366 = vmatprep.subr.mxu0 0.0
    %5367 = vmatpush1.xpose.msra.mxu0 0.0
    %5368 = vmatprep.subr.mxu0 0.0
    %5369 = vmatpush1.xpose.msra.mxu0 0.0
    %5370 = vmatprep.subr.mxu0 0.0
    %5371 = vmatpush1.xpose.msra.mxu0 0.0
    %5372 = vmatprep.subr.mxu0 0.0
    %5373 = vmatpush1.xpose.msra.mxu0 0.0
    %5374 = vmatprep.subr.mxu0 0.0
    %5375 = vmatpush1.xpose.msra.mxu0 0.0
    %5376 = vmatprep.subr.mxu0 0.0
    %5377 = vmatpush1.xpose.msra.mxu0 0.0
    %5378 = vmatprep.subr.mxu0 0.0
    %5379 = vmatpush1.xpose.msra.mxu0 0.0
    %5380 = vmatprep.subr.mxu0 0.0
    %5381 = vmatpush1.xpose.msra.mxu0 0.0
    %5382 = vmatprep.mubr.f32.mxu0 0.0
    %v5383 = vand.u32 %v5313, 4294901760
    %v5384 = vsub.f32 %v5313, %v5383
    %v5385 = vand.u32 %v5384, 4294901760
    %v5386 = vsub.f32 %v5384, %v5385
    %v5387 = vand.u32 %v5386, 4294901760
    %5388 = vmatmul.mubr.f32.gmra.mrb[0].mxu0 %v5387
    %v5389 = vpop.f32.mrb[0].mxu0
    %v5390 = vadd.f32 0.0, %v5389
    %v5391 = vpop.f32.mrb[0].mxu0
    %5392 = vdwg.mxu0
    %5393 = vmatprep.subr.mxu0 0.0
    %v5394 = vand.u32 %v5315, 4294901760
    %v5395 = vsub.f32 %v5315, %v5394
    %v5396 = vand.u32 %v5395, 4294901760
    %v5397 = vsub.f32 %v5395, %v5396
    %v5398 = vand.u32 %v5397, 4294901760
    %5399 = vmatpush1.xpose.msra.mxu0 %v5398
    %5400 = vmatprep.subr.mxu0 0.0
    %5401 = vmatpush1.xpose.msra.mxu0 0.0
    %5402 = vmatprep.subr.mxu0 0.0
    %5403 = vmatpush1.xpose.msra.mxu0 0.0
    %5404 = vmatprep.subr.mxu0 0.0
    %5405 = vmatpush1.xpose.msra.mxu0 0.0
    %5406 = vmatprep.subr.mxu0 0.0
    %5407 = vmatpush1.xpose.msra.mxu0 0.0
    %5408 = vmatprep.subr.mxu0 0.0
    %5409 = vmatpush1.xpose.msra.mxu0 0.0
    %5410 = vmatprep.subr.mxu0 0.0
    %5411 = vmatpush1.xpose.msra.mxu0 0.0
    %5412 = vmatprep.subr.mxu0 0.0
    %5413 = vmatpush1.xpose.msra.mxu0 0.0
    %5414 = vmatprep.subr.mxu0 0.0
    %5415 = vmatpush1.xpose.msra.mxu0 0.0
    %5416 = vmatprep.subr.mxu0 0.0
    %5417 = vmatpush1.xpose.msra.mxu0 0.0
    %5418 = vmatprep.subr.mxu0 0.0
    %5419 = vmatpush1.xpose.msra.mxu0 0.0
    %5420 = vmatprep.subr.mxu0 0.0
    %5421 = vmatpush1.xpose.msra.mxu0 0.0
    %5422 = vmatprep.subr.mxu0 0.0
    %5423 = vmatpush1.xpose.msra.mxu0 0.0
    %5424 = vmatprep.subr.mxu0 0.0
    %5425 = vmatpush1.xpose.msra.mxu0 0.0
    %5426 = vmatprep.subr.mxu0 0.0
    %5427 = vmatpush1.xpose.msra.mxu0 0.0
    %5428 = vmatprep.subr.mxu0 0.0
    %5429 = vmatpush1.xpose.msra.mxu0 0.0
    %5430 = vmatprep.subr.mxu0 0.0
    %5431 = vmatpush1.xpose.msra.mxu0 0.0
    %5432 = vmatprep.subr.mxu0 0.0
    %5433 = vmatpush1.xpose.msra.mxu0 0.0
    %5434 = vmatprep.subr.mxu0 0.0
    %5435 = vmatpush1.xpose.msra.mxu0 0.0
    %5436 = vmatprep.subr.mxu0 0.0
    %5437 = vmatpush1.xpose.msra.mxu0 0.0
    %5438 = vmatprep.subr.mxu0 0.0
    %5439 = vmatpush1.xpose.msra.mxu0 0.0
    %5440 = vmatprep.subr.mxu0 0.0
    %5441 = vmatpush1.xpose.msra.mxu0 0.0
    %5442 = vmatprep.subr.mxu0 0.0
    %5443 = vmatpush1.xpose.msra.mxu0 0.0
    %5444 = vmatprep.subr.mxu0 0.0
    %5445 = vmatpush1.xpose.msra.mxu0 0.0
    %5446 = vmatprep.subr.mxu0 0.0
    %5447 = vmatpush1.xpose.msra.mxu0 0.0
    %5448 = vmatprep.subr.mxu0 0.0
    %5449 = vmatpush1.xpose.msra.mxu0 0.0
    %5450 = vmatprep.subr.mxu0 0.0
    %5451 = vmatpush1.xpose.msra.mxu0 0.0
    %5452 = vmatprep.subr.mxu0 0.0
    %5453 = vmatpush1.xpose.msra.mxu0 0.0
    %5454 = vmatprep.subr.mxu0 0.0
    %5455 = vmatpush1.xpose.msra.mxu0 0.0
    %5456 = vmatprep.subr.mxu0 0.0
    %5457 = vmatpush1.xpose.msra.mxu0 0.0
    %5458 = vmatprep.subr.mxu0 0.0
    %5459 = vmatpush1.xpose.msra.mxu0 0.0
    %5460 = vmatprep.subr.mxu0 0.0
    %5461 = vmatpush1.xpose.msra.mxu0 0.0
    %5462 = vmatprep.mubr.f32.mxu0 0.0
    %v5463 = vand.u32 %v5313, 4294901760
    %5464 = vmatmul.mubr.f32.gmra.mrb[0].mxu0 %v5463
    %v5465 = vpop.f32.mrb[0].mxu0
    %v5466 = vadd.f32 %v5390, %v5465
    %v5467 = vpop.f32.mrb[0].mxu0
    %5468 = vdwg.mxu0
    %5469 = vmatprep.subr.mxu0 0.0
    %v5470 = vand.u32 %v5315, 4294901760
    %v5471 = vsub.f32 %v5315, %v5470
    %5472 = vmatpush1.xpose.msra.mxu0 %v5471
    %5473 = vmatprep.subr.mxu0 0.0
    %5474 = vmatpush1.xpose.msra.mxu0 0.0
    %5475 = vmatprep.subr.mxu0 0.0
    %5476 = vmatpush1.xpose.msra.mxu0 0.0
    %5477 = vmatprep.subr.mxu0 0.0
    %5478 = vmatpush1.xpose.msra.mxu0 0.0
    %5479 = vmatprep.subr.mxu0 0.0
    %5480 = vmatpush1.xpose.msra.mxu0 0.0
    %5481 = vmatprep.subr.mxu0 0.0
    %5482 = vmatpush1.xpose.msra.mxu0 0.0
    %5483 = vmatprep.subr.mxu0 0.0
    %5484 = vmatpush1.xpose.msra.mxu0 0.0
    %5485 = vmatprep.subr.mxu0 0.0
    %5486 = vmatpush1.xpose.msra.mxu0 0.0
    %5487 = vmatprep.subr.mxu0 0.0
    %5488 = vmatpush1.xpose.msra.mxu0 0.0
    %5489 = vmatprep.subr.mxu0 0.0
    %5490 = vmatpush1.xpose.msra.mxu0 0.0
    %5491 = vmatprep.subr.mxu0 0.0
    %5492 = vmatpush1.xpose.msra.mxu0 0.0
    %5493 = vmatprep.subr.mxu0 0.0
    %5494 = vmatpush1.xpose.msra.mxu0 0.0
    %5495 = vmatprep.subr.mxu0 0.0
    %5496 = vmatpush1.xpose.msra.mxu0 0.0
    %5497 = vmatprep.subr.mxu0 0.0
    %5498 = vmatpush1.xpose.msra.mxu0 0.0
    %5499 = vmatprep.subr.mxu0 0.0
    %5500 = vmatpush1.xpose.msra.mxu0 0.0
    %5501 = vmatprep.subr.mxu0 0.0
    %5502 = vmatpush1.xpose.msra.mxu0 0.0
    %5503 = vmatprep.subr.mxu0 0.0
    %5504 = vmatpush1.xpose.msra.mxu0 0.0
    %5505 = vmatprep.subr.mxu0 0.0
    %5506 = vmatpush1.xpose.msra.mxu0 0.0
    %5507 = vmatprep.subr.mxu0 0.0
    %5508 = vmatpush1.xpose.msra.mxu0 0.0
    %5509 = vmatprep.subr.mxu0 0.0
    %5510 = vmatpush1.xpose.msra.mxu0 0.0
    %5511 = vmatprep.subr.mxu0 0.0
    %5512 = vmatpush1.xpose.msra.mxu0 0.0
    %5513 = vmatprep.subr.mxu0 0.0
    %5514 = vmatpush1.xpose.msra.mxu0 0.0
    %5515 = vmatprep.subr.mxu0 0.0
    %5516 = vmatpush1.xpose.msra.mxu0 0.0
    %5517 = vmatprep.subr.mxu0 0.0
    %5518 = vmatpush1.xpose.msra.mxu0 0.0
    %5519 = vmatprep.subr.mxu0 0.0
    %5520 = vmatpush1.xpose.msra.mxu0 0.0
    %5521 = vmatprep.subr.mxu0 0.0
    %5522 = vmatpush1.xpose.msra.mxu0 0.0
    %5523 = vmatprep.subr.mxu0 0.0
    %5524 = vmatpush1.xpose.msra.mxu0 0.0
    %5525 = vmatprep.subr.mxu0 0.0
    %5526 = vmatpush1.xpose.msra.mxu0 0.0
    %5527 = vmatprep.subr.mxu0 0.0
    %5528 = vmatpush1.xpose.msra.mxu0 0.0
    %5529 = vmatprep.subr.mxu0 0.0
    %5530 = vmatpush1.xpose.msra.mxu0 0.0
    %5531 = vmatprep.subr.mxu0 0.0
    %5532 = vmatpush1.xpose.msra.mxu0 0.0
    %5533 = vmatprep.subr.mxu0 0.0
    %5534 = vmatpush1.xpose.msra.mxu0 0.0
    %5535 = vmatprep.mubr.f32.mxu0 0.0
    %v5536 = vand.u32 %v5313, 4294901760
    %v5537 = vsub.f32 %v5313, %v5536
    %5538 = vmatmul.mubr.f32.gmra.mrb[0].mxu0 %v5537
    %v5539 = vpop.f32.mrb[0].mxu0
    %v5540 = vadd.f32 %v5466, %v5539
    %v5541 = vpop.f32.mrb[0].mxu0
    %5542 = vdwg.mxu0
    %5543 = vmatprep.subr.mxu0 0.0
    %v5544 = vand.u32 %v5315, 4294901760
    %5545 = vmatpush1.xpose.msra.mxu0 %v5544
    %5546 = vmatprep.subr.mxu0 0.0
    %5547 = vmatpush1.xpose.msra.mxu0 0.0
    %5548 = vmatprep.subr.mxu0 0.0
    %5549 = vmatpush1.xpose.msra.mxu0 0.0
    %5550 = vmatprep.subr.mxu0 0.0
    %5551 = vmatpush1.xpose.msra.mxu0 0.0
    %5552 = vmatprep.subr.mxu0 0.0
    %5553 = vmatpush1.xpose.msra.mxu0 0.0
    %5554 = vmatprep.subr.mxu0 0.0
    %5555 = vmatpush1.xpose.msra.mxu0 0.0
    %5556 = vmatprep.subr.mxu0 0.0
    %5557 = vmatpush1.xpose.msra.mxu0 0.0
    %5558 = vmatprep.subr.mxu0 0.0
    %5559 = vmatpush1.xpose.msra.mxu0 0.0
    %5560 = vmatprep.subr.mxu0 0.0
    %5561 = vmatpush1.xpose.msra.mxu0 0.0
    %5562 = vmatprep.subr.mxu0 0.0
    %5563 = vmatpush1.xpose.msra.mxu0 0.0
    %5564 = vmatprep.subr.mxu0 0.0
    %5565 = vmatpush1.xpose.msra.mxu0 0.0
    %5566 = vmatprep.subr.mxu0 0.0
    %5567 = vmatpush1.xpose.msra.mxu0 0.0
    %5568 = vmatprep.subr.mxu0 0.0
    %5569 = vmatpush1.xpose.msra.mxu0 0.0
    %5570 = vmatprep.subr.mxu0 0.0
    %5571 = vmatpush1.xpose.msra.mxu0 0.0
    %5572 = vmatprep.subr.mxu0 0.0
    %5573 = vmatpush1.xpose.msra.mxu0 0.0
    %5574 = vmatprep.subr.mxu0 0.0
    %5575 = vmatpush1.xpose.msra.mxu0 0.0
    %5576 = vmatprep.subr.mxu0 0.0
    %5577 = vmatpush1.xpose.msra.mxu0 0.0
    %5578 = vmatprep.subr.mxu0 0.0
    %5579 = vmatpush1.xpose.msra.mxu0 0.0
    %5580 = vmatprep.subr.mxu0 0.0
    %5581 = vmatpush1.xpose.msra.mxu0 0.0
    %5582 = vmatprep.subr.mxu0 0.0
    %5583 = vmatpush1.xpose.msra.mxu0 0.0
    %5584 = vmatprep.subr.mxu0 0.0
    %5585 = vmatpush1.xpose.msra.mxu0 0.0
    %5586 = vmatprep.subr.mxu0 0.0
    %5587 = vmatpush1.xpose.msra.mxu0 0.0
    %5588 = vmatprep.subr.mxu0 0.0
    %5589 = vmatpush1.xpose.msra.mxu0 0.0
    %5590 = vmatprep.subr.mxu0 0.0
    %5591 = vmatpush1.xpose.msra.mxu0 0.0
    %5592 = vmatprep.subr.mxu0 0.0
    %5593 = vmatpush1.xpose.msra.mxu0 0.0
    %5594 = vmatprep.subr.mxu0 0.0
    %5595 = vmatpush1.xpose.msra.mxu0 0.0
    %5596 = vmatprep.subr.mxu0 0.0
    %5597 = vmatpush1.xpose.msra.mxu0 0.0
    %5598 = vmatprep.subr.mxu0 0.0
    %5599 = vmatpush1.xpose.msra.mxu0 0.0
    %5600 = vmatprep.subr.mxu0 0.0
    %5601 = vmatpush1.xpose.msra.mxu0 0.0
    %5602 = vmatprep.subr.mxu0 0.0
    %5603 = vmatpush1.xpose.msra.mxu0 0.0
    %5604 = vmatprep.subr.mxu0 0.0
    %5605 = vmatpush1.xpose.msra.mxu0 0.0
    %5606 = vmatprep.subr.mxu0 0.0
    %5607 = vmatpush1.xpose.msra.mxu0 0.0
    %5608 = vmatprep.mubr.f32.mxu0 0.0
    %v5609 = vand.u32 %v5313, 4294901760
    %v5610 = vsub.f32 %v5313, %v5609
    %v5611 = vand.u32 %v5610, 4294901760
    %5612 = vmatmul.mubr.f32.gmra.mrb[0].mxu0 %v5611
    %v5613 = vpop.f32.mrb[0].mxu0
    %v5614 = vadd.f32 %v5540, %v5613
    %v5615 = vpop.f32.mrb[0].mxu0
    %5616 = vdwg.mxu0
    %5617 = vmatprep.subr.mxu0 0.0
    %v5618 = vand.u32 %v5315, 4294901760
    %v5619 = vsub.f32 %v5315, %v5618
    %v5620 = vand.u32 %v5619, 4294901760
    %5621 = vmatpush1.xpose.msra.mxu0 %v5620
    %5622 = vmatprep.subr.mxu0 0.0
    %5623 = vmatpush1.xpose.msra.mxu0 0.0
    %5624 = vmatprep.subr.mxu0 0.0
    %5625 = vmatpush1.xpose.msra.mxu0 0.0
    %5626 = vmatprep.subr.mxu0 0.0
    %5627 = vmatpush1.xpose.msra.mxu0 0.0
    %5628 = vmatprep.subr.mxu0 0.0
    %5629 = vmatpush1.xpose.msra.mxu0 0.0
    %5630 = vmatprep.subr.mxu0 0.0
    %5631 = vmatpush1.xpose.msra.mxu0 0.0
    %5632 = vmatprep.subr.mxu0 0.0
    %5633 = vmatpush1.xpose.msra.mxu0 0.0
    %5634 = vmatprep.subr.mxu0 0.0
    %5635 = vmatpush1.xpose.msra.mxu0 0.0
    %5636 = vmatprep.subr.mxu0 0.0
    %5637 = vmatpush1.xpose.msra.mxu0 0.0
    %5638 = vmatprep.subr.mxu0 0.0
    %5639 = vmatpush1.xpose.msra.mxu0 0.0
    %5640 = vmatprep.subr.mxu0 0.0
    %5641 = vmatpush1.xpose.msra.mxu0 0.0
    %5642 = vmatprep.subr.mxu0 0.0
    %5643 = vmatpush1.xpose.msra.mxu0 0.0
    %5644 = vmatprep.subr.mxu0 0.0
    %5645 = vmatpush1.xpose.msra.mxu0 0.0
    %5646 = vmatprep.subr.mxu0 0.0
    %5647 = vmatpush1.xpose.msra.mxu0 0.0
    %5648 = vmatprep.subr.mxu0 0.0
    %5649 = vmatpush1.xpose.msra.mxu0 0.0
    %5650 = vmatprep.subr.mxu0 0.0
    %5651 = vmatpush1.xpose.msra.mxu0 0.0
    %5652 = vmatprep.subr.mxu0 0.0
    %5653 = vmatpush1.xpose.msra.mxu0 0.0
    %5654 = vmatprep.subr.mxu0 0.0
    %5655 = vmatpush1.xpose.msra.mxu0 0.0
    %5656 = vmatprep.subr.mxu0 0.0
    %5657 = vmatpush1.xpose.msra.mxu0 0.0
    %5658 = vmatprep.subr.mxu0 0.0
    %5659 = vmatpush1.xpose.msra.mxu0 0.0
    %5660 = vmatprep.subr.mxu0 0.0
    %5661 = vmatpush1.xpose.msra.mxu0 0.0
    %5662 = vmatprep.subr.mxu0 0.0
    %5663 = vmatpush1.xpose.msra.mxu0 0.0
    %5664 = vmatprep.subr.mxu0 0.0
    %5665 = vmatpush1.xpose.msra.mxu0 0.0
    %5666 = vmatprep.subr.mxu0 0.0
    %5667 = vmatpush1.xpose.msra.mxu0 0.0
    %5668 = vmatprep.subr.mxu0 0.0
    %5669 = vmatpush1.xpose.msra.mxu0 0.0
    %5670 = vmatprep.subr.mxu0 0.0
    %5671 = vmatpush1.xpose.msra.mxu0 0.0
    %5672 = vmatprep.subr.mxu0 0.0
    %5673 = vmatpush1.xpose.msra.mxu0 0.0
    %5674 = vmatprep.subr.mxu0 0.0
    %5675 = vmatpush1.xpose.msra.mxu0 0.0
    %5676 = vmatprep.subr.mxu0 0.0
    %5677 = vmatpush1.xpose.msra.mxu0 0.0
    %5678 = vmatprep.subr.mxu0 0.0
    %5679 = vmatpush1.xpose.msra.mxu0 0.0
    %5680 = vmatprep.subr.mxu0 0.0
    %5681 = vmatpush1.xpose.msra.mxu0 0.0
    %5682 = vmatprep.subr.mxu0 0.0
    %5683 = vmatpush1.xpose.msra.mxu0 0.0
    %5684 = vmatprep.mubr.f32.mxu0 0.0
    %v5685 = vand.u32 %v5313, 4294901760
    %5686 = vmatmul.mubr.f32.gmra.mrb[0].mxu0 %v5685
    %v5687 = vpop.f32.mrb[0].mxu0
    %v5688 = vadd.f32 %v5614, %v5687
    %v5689 = vpop.f32.mrb[0].mxu0
    %5690 = vdwg.mxu0
    %5691 = vmatprep.subr.mxu0 0.0
    %v5692 = vand.u32 %v5315, 4294901760
    %5693 = vmatpush1.xpose.msra.mxu0 %v5692
    %5694 = vmatprep.subr.mxu0 0.0
    %5695 = vmatpush1.xpose.msra.mxu0 0.0
    %5696 = vmatprep.subr.mxu0 0.0
    %5697 = vmatpush1.xpose.msra.mxu0 0.0
    %5698 = vmatprep.subr.mxu0 0.0
    %5699 = vmatpush1.xpose.msra.mxu0 0.0
    %5700 = vmatprep.subr.mxu0 0.0
    %5701 = vmatpush1.xpose.msra.mxu0 0.0
    %5702 = vmatprep.subr.mxu0 0.0
    %5703 = vmatpush1.xpose.msra.mxu0 0.0
    %5704 = vmatprep.subr.mxu0 0.0
    %5705 = vmatpush1.xpose.msra.mxu0 0.0
    %5706 = vmatprep.subr.mxu0 0.0
    %5707 = vmatpush1.xpose.msra.mxu0 0.0
    %5708 = vmatprep.subr.mxu0 0.0
    %5709 = vmatpush1.xpose.msra.mxu0 0.0
    %5710 = vmatprep.subr.mxu0 0.0
    %5711 = vmatpush1.xpose.msra.mxu0 0.0
    %5712 = vmatprep.subr.mxu0 0.0
    %5713 = vmatpush1.xpose.msra.mxu0 0.0
    %5714 = vmatprep.subr.mxu0 0.0
    %5715 = vmatpush1.xpose.msra.mxu0 0.0
    %5716 = vmatprep.subr.mxu0 0.0
    %5717 = vmatpush1.xpose.msra.mxu0 0.0
    %5718 = vmatprep.subr.mxu0 0.0
    %5719 = vmatpush1.xpose.msra.mxu0 0.0
    %5720 = vmatprep.subr.mxu0 0.0
    %5721 = vmatpush1.xpose.msra.mxu0 0.0
    %5722 = vmatprep.subr.mxu0 0.0
    %5723 = vmatpush1.xpose.msra.mxu0 0.0
    %5724 = vmatprep.subr.mxu0 0.0
    %5725 = vmatpush1.xpose.msra.mxu0 0.0
    %5726 = vmatprep.subr.mxu0 0.0
    %5727 = vmatpush1.xpose.msra.mxu0 0.0
    %5728 = vmatprep.subr.mxu0 0.0
    %5729 = vmatpush1.xpose.msra.mxu0 0.0
    %5730 = vmatprep.subr.mxu0 0.0
    %5731 = vmatpush1.xpose.msra.mxu0 0.0
    %5732 = vmatprep.subr.mxu0 0.0
    %5733 = vmatpush1.xpose.msra.mxu0 0.0
    %5734 = vmatprep.subr.mxu0 0.0
    %5735 = vmatpush1.xpose.msra.mxu0 0.0
    %5736 = vmatprep.subr.mxu0 0.0
    %5737 = vmatpush1.xpose.msra.mxu0 0.0
    %5738 = vmatprep.subr.mxu0 0.0
    %5739 = vmatpush1.xpose.msra.mxu0 0.0
    %5740 = vmatprep.subr.mxu0 0.0
    %5741 = vmatpush1.xpose.msra.mxu0 0.0
    %5742 = vmatprep.subr.mxu0 0.0
    %5743 = vmatpush1.xpose.msra.mxu0 0.0
    %5744 = vmatprep.subr.mxu0 0.0
    %5745 = vmatpush1.xpose.msra.mxu0 0.0
    %5746 = vmatprep.subr.mxu0 0.0
    %5747 = vmatpush1.xpose.msra.mxu0 0.0
    %5748 = vmatprep.subr.mxu0 0.0
    %5749 = vmatpush1.xpose.msra.mxu0 0.0
    %5750 = vmatprep.subr.mxu0 0.0
    %5751 = vmatpush1.xpose.msra.mxu0 0.0
    %5752 = vmatprep.subr.mxu0 0.0
    %5753 = vmatpush1.xpose.msra.mxu0 0.0
    %5754 = vmatprep.subr.mxu0 0.0
    %5755 = vmatpush1.xpose.msra.mxu0 0.0
    %5756 = vmatprep.mubr.f32.mxu0 0.0
    %v5757 = vand.u32 %v5313, 4294901760
    %5758 = vmatmul.mubr.f32.gmra.mrb[0].mxu0 %v5757
    %v5759 = vpop.f32.mrb[0].mxu0
    %v5760 = vadd.f32 %v5688, %v5759
    %v5761 = vpop.f32.mrb[0].mxu0
    %5762 = vdwg.mxu0
    %v5763 = vsel %vm4842, %v5760, -3.4e+38
    %v5764 = vsel %vm683, %v5763, -inf
    %5765 = vmax.xlane.f32.xlu0 %v5764
    %v5766 = vpop.xlane.xlu0 %5765
    %v5767 = vsub.f32 %v5763, %v5766
    %v5768 = vmul.f32 %v5767, 1.442695
    %v5769 = vpow.pop %v5768
    %v5770 = vmul.f32 %v5769, %v4387
    %v5771 = vsel %vm683, %v5770, 0.0
    %5772 = vadd.xlane.f32.xlu0 %v5771
    %v5773 = vpop.xlane.xlu0 %5772
    %v5774 = vmax.f32 %v5773, 1e-30
    %v5775 = vrcp.pop %v5774
    %v5776 = vmul.f32 %v5770, %v5775
    %5777 = vrot.lane.b32.xlu0 %v667, 56
    %v5778 = vpop.permute.xlu0 %5777
    %v5781 = vsel %vm683, %v5776, 0
    %5783 = vmatprep.subr.mxu0 0.0
    %v5784 = vand.u32 %v5778, 4294901760
    %5785 = vmatpush1.msra.mxu0 %v5784
    %5786 = vmatprep.subr.mxu0 0.0
    %5787 = vmatpush1.msra.mxu0 0.0
    %5788 = vmatprep.subr.mxu0 0.0
    %5789 = vmatpush1.msra.mxu0 0.0
    %5790 = vmatprep.subr.mxu0 0.0
    %5791 = vmatpush1.msra.mxu0 0.0
    %5792 = vmatprep.subr.mxu0 0.0
    %5793 = vmatpush1.msra.mxu0 0.0
    %5794 = vmatprep.subr.mxu0 0.0
    %5795 = vmatpush1.msra.mxu0 0.0
    %5796 = vmatprep.subr.mxu0 0.0
    %5797 = vmatpush1.msra.mxu0 0.0
    %5798 = vmatprep.subr.mxu0 0.0
    %5799 = vmatpush1.msra.mxu0 0.0
    %5800 = vmatprep.subr.mxu0 0.0
    %5801 = vmatpush1.msra.mxu0 0.0
    %5802 = vmatprep.subr.mxu0 0.0
    %5803 = vmatpush1.msra.mxu0 0.0
    %5804 = vmatprep.subr.mxu0 0.0
    %5805 = vmatpush1.msra.mxu0 0.0
    %5806 = vmatprep.subr.mxu0 0.0
    %5807 = vmatpush1.msra.mxu0 0.0
    %5808 = vmatprep.subr.mxu0 0.0
    %5809 = vmatpush1.msra.mxu0 0.0
    %5810 = vmatprep.subr.mxu0 0.0
    %5811 = vmatpush1.msra.mxu0 0.0
    %5812 = vmatprep.subr.mxu0 0.0
    %5813 = vmatpush1.msra.mxu0 0.0
    %5814 = vmatprep.subr.mxu0 0.0
    %5815 = vmatpush1.msra.mxu0 0.0
    %5816 = vmatprep.subr.mxu0 0.0
    %5817 = vmatpush1.msra.mxu0 0.0
    %5818 = vmatprep.subr.mxu0 0.0
    %5819 = vmatpush1.msra.mxu0 0.0
    %5820 = vmatprep.subr.mxu0 0.0
    %5821 = vmatpush1.msra.mxu0 0.0
    %5822 = vmatprep.subr.mxu0 0.0
    %5823 = vmatpush1.msra.mxu0 0.0
    %5824 = vmatprep.subr.mxu0 0.0
    %5825 = vmatpush1.msra.mxu0 0.0
    %5826 = vmatprep.subr.mxu0 0.0
    %5827 = vmatpush1.msra.mxu0 0.0
    %5828 = vmatprep.subr.mxu0 0.0
    %5829 = vmatpush1.msra.mxu0 0.0
    %5830 = vmatprep.subr.mxu0 0.0
    %5831 = vmatpush1.msra.mxu0 0.0
    %5832 = vmatprep.subr.mxu0 0.0
    %5833 = vmatpush1.msra.mxu0 0.0
    %5834 = vmatprep.subr.mxu0 0.0
    %5835 = vmatpush1.msra.mxu0 0.0
    %5836 = vmatprep.subr.mxu0 0.0
    %5837 = vmatpush1.msra.mxu0 0.0
    %5838 = vmatprep.subr.mxu0 0.0
    %5839 = vmatpush1.msra.mxu0 0.0
    %5840 = vmatprep.subr.mxu0 0.0
    %5841 = vmatpush1.msra.mxu0 0.0
    %5842 = vmatprep.subr.mxu0 0.0
    %5843 = vmatpush1.msra.mxu0 0.0
    %5844 = vmatprep.subr.mxu0 0.0
    %5845 = vmatpush1.msra.mxu0 0.0
    %5846 = vmatprep.subr.mxu0 0.0
    %5847 = vmatpush1.msra.mxu0 0.0
    %5848 = vmatprep.mubr.f32.mxu0 0.0
    %v5849 = vand.u32 %v5781, 4294901760
    %v5850 = vsub.f32 %v5781, %v5849
    %v5851 = vand.u32 %v5850, 4294901760
    %v5852 = vsub.f32 %v5850, %v5851
    %v5853 = vand.u32 %v5852, 4294901760
    %5854 = vmatmul.mubr.f32.gmra.mrb[0].mxu0 %v5853
    %v5855 = vpop.f32.mrb[0].mxu0
    %v5856 = vadd.f32 0.0, %v5855
    %v5857 = vpop.f32.mrb[0].mxu0
    %5858 = vdwg.mxu0
    %5859 = vmatprep.subr.mxu0 0.0
    %v5860 = vand.u32 %v5778, 4294901760
    %v5861 = vsub.f32 %v5778, %v5860
    %v5862 = vand.u32 %v5861, 4294901760
    %v5863 = vsub.f32 %v5861, %v5862
    %v5864 = vand.u32 %v5863, 4294901760
    %5865 = vmatpush1.msra.mxu0 %v5864
    %5866 = vmatprep.subr.mxu0 0.0
    %5867 = vmatpush1.msra.mxu0 0.0
    %5868 = vmatprep.subr.mxu0 0.0
    %5869 = vmatpush1.msra.mxu0 0.0
    %5870 = vmatprep.subr.mxu0 0.0
    %5871 = vmatpush1.msra.mxu0 0.0
    %5872 = vmatprep.subr.mxu0 0.0
    %5873 = vmatpush1.msra.mxu0 0.0
    %5874 = vmatprep.subr.mxu0 0.0
    %5875 = vmatpush1.msra.mxu0 0.0
    %5876 = vmatprep.subr.mxu0 0.0
    %5877 = vmatpush1.msra.mxu0 0.0
    %5878 = vmatprep.subr.mxu0 0.0
    %5879 = vmatpush1.msra.mxu0 0.0
    %5880 = vmatprep.subr.mxu0 0.0
    %5881 = vmatpush1.msra.mxu0 0.0
    %5882 = vmatprep.subr.mxu0 0.0
    %5883 = vmatpush1.msra.mxu0 0.0
    %5884 = vmatprep.subr.mxu0 0.0
    %5885 = vmatpush1.msra.mxu0 0.0
    %5886 = vmatprep.subr.mxu0 0.0
    %5887 = vmatpush1.msra.mxu0 0.0
    %5888 = vmatprep.subr.mxu0 0.0
    %5889 = vmatpush1.msra.mxu0 0.0
    %5890 = vmatprep.subr.mxu0 0.0
    %5891 = vmatpush1.msra.mxu0 0.0
    %5892 = vmatprep.subr.mxu0 0.0
    %5893 = vmatpush1.msra.mxu0 0.0
    %5894 = vmatprep.subr.mxu0 0.0
    %5895 = vmatpush1.msra.mxu0 0.0
    %5896 = vmatprep.subr.mxu0 0.0
    %5897 = vmatpush1.msra.mxu0 0.0
    %5898 = vmatprep.subr.mxu0 0.0
    %5899 = vmatpush1.msra.mxu0 0.0
    %5900 = vmatprep.subr.mxu0 0.0
    %5901 = vmatpush1.msra.mxu0 0.0
    %5902 = vmatprep.subr.mxu0 0.0
    %5903 = vmatpush1.msra.mxu0 0.0
    %5904 = vmatprep.subr.mxu0 0.0
    %5905 = vmatpush1.msra.mxu0 0.0
    %5906 = vmatprep.subr.mxu0 0.0
    %5907 = vmatpush1.msra.mxu0 0.0
    %5908 = vmatprep.subr.mxu0 0.0
    %5909 = vmatpush1.msra.mxu0 0.0
    %5910 = vmatprep.subr.mxu0 0.0
    %5911 = vmatpush1.msra.mxu0 0.0
    %5912 = vmatprep.subr.mxu0 0.0
    %5913 = vmatpush1.msra.mxu0 0.0
    %5914 = vmatprep.subr.mxu0 0.0
    %5915 = vmatpush1.msra.mxu0 0.0
    %5916 = vmatprep.subr.mxu0 0.0
    %5917 = vmatpush1.msra.mxu0 0.0
    %5918 = vmatprep.subr.mxu0 0.0
    %5919 = vmatpush1.msra.mxu0 0.0
    %5920 = vmatprep.subr.mxu0 0.0
    %5921 = vmatpush1.msra.mxu0 0.0
    %5922 = vmatprep.subr.mxu0 0.0
    %5923 = vmatpush1.msra.mxu0 0.0
    %5924 = vmatprep.subr.mxu0 0.0
    %5925 = vmatpush1.msra.mxu0 0.0
    %5926 = vmatprep.subr.mxu0 0.0
    %5927 = vmatpush1.msra.mxu0 0.0
    %5928 = vmatprep.mubr.f32.mxu0 0.0
    %v5929 = vand.u32 %v5781, 4294901760
    %5930 = vmatmul.mubr.f32.gmra.mrb[0].mxu0 %v5929
    %v5931 = vpop.f32.mrb[0].mxu0
    %v5932 = vadd.f32 %v5856, %v5931
    %v5933 = vpop.f32.mrb[0].mxu0
    %5934 = vdwg.mxu0
    %5935 = vmatprep.subr.mxu0 0.0
    %v5936 = vand.u32 %v5778, 4294901760
    %v5937 = vsub.f32 %v5778, %v5936
    %5938 = vmatpush1.msra.mxu0 %v5937
    %5939 = vmatprep.subr.mxu0 0.0
    %5940 = vmatpush1.msra.mxu0 0.0
    %5941 = vmatprep.subr.mxu0 0.0
    %5942 = vmatpush1.msra.mxu0 0.0
    %5943 = vmatprep.subr.mxu0 0.0
    %5944 = vmatpush1.msra.mxu0 0.0
    %5945 = vmatprep.subr.mxu0 0.0
    %5946 = vmatpush1.msra.mxu0 0.0
    %5947 = vmatprep.subr.mxu0 0.0
    %5948 = vmatpush1.msra.mxu0 0.0
    %5949 = vmatprep.subr.mxu0 0.0
    %5950 = vmatpush1.msra.mxu0 0.0
    %5951 = vmatprep.subr.mxu0 0.0
    %5952 = vmatpush1.msra.mxu0 0.0
    %5953 = vmatprep.subr.mxu0 0.0
    %5954 = vmatpush1.msra.mxu0 0.0
    %5955 = vmatprep.subr.mxu0 0.0
    %5956 = vmatpush1.msra.mxu0 0.0
    %5957 = vmatprep.subr.mxu0 0.0
    %5958 = vmatpush1.msra.mxu0 0.0
    %5959 = vmatprep.subr.mxu0 0.0
    %5960 = vmatpush1.msra.mxu0 0.0
    %5961 = vmatprep.subr.mxu0 0.0
    %5962 = vmatpush1.msra.mxu0 0.0
    %5963 = vmatprep.subr.mxu0 0.0
    %5964 = vmatpush1.msra.mxu0 0.0
    %5965 = vmatprep.subr.mxu0 0.0
    %5966 = vmatpush1.msra.mxu0 0.0
    %5967 = vmatprep.subr.mxu0 0.0
    %5968 = vmatpush1.msra.mxu0 0.0
    %5969 = vmatprep.subr.mxu0 0.0
    %5970 = vmatpush1.msra.mxu0 0.0
    %5971 = vmatprep.subr.mxu0 0.0
    %5972 = vmatpush1.msra.mxu0 0.0
    %5973 = vmatprep.subr.mxu0 0.0
    %5974 = vmatpush1.msra.mxu0 0.0
    %5975 = vmatprep.subr.mxu0 0.0
    %5976 = vmatpush1.msra.mxu0 0.0
    %5977 = vmatprep.subr.mxu0 0.0
    %5978 = vmatpush1.msra.mxu0 0.0
    %5979 = vmatprep.subr.mxu0 0.0
    %5980 = vmatpush1.msra.mxu0 0.0
    %5981 = vmatprep.subr.mxu0 0.0
    %5982 = vmatpush1.msra.mxu0 0.0
    %5983 = vmatprep.subr.mxu0 0.0
    %5984 = vmatpush1.msra.mxu0 0.0
    %5985 = vmatprep.subr.mxu0 0.0
    %5986 = vmatpush1.msra.mxu0 0.0
    %5987 = vmatprep.subr.mxu0 0.0
    %5988 = vmatpush1.msra.mxu0 0.0
    %5989 = vmatprep.subr.mxu0 0.0
    %5990 = vmatpush1.msra.mxu0 0.0
    %5991 = vmatprep.subr.mxu0 0.0
    %5992 = vmatpush1.msra.mxu0 0.0
    %5993 = vmatprep.subr.mxu0 0.0
    %5994 = vmatpush1.msra.mxu0 0.0
    %5995 = vmatprep.subr.mxu0 0.0
    %5996 = vmatpush1.msra.mxu0 0.0
    %5997 = vmatprep.subr.mxu0 0.0
    %5998 = vmatpush1.msra.mxu0 0.0
    %5999 = vmatprep.subr.mxu0 0.0
    %6000 = vmatpush1.msra.mxu0 0.0
    %6001 = vmatprep.mubr.f32.mxu0 0.0
    %v6002 = vand.u32 %v5781, 4294901760
    %v6003 = vsub.f32 %v5781, %v6002
    %6004 = vmatmul.mubr.f32.gmra.mrb[0].mxu0 %v6003
    %v6005 = vpop.f32.mrb[0].mxu0
    %v6006 = vadd.f32 %v5932, %v6005
    %v6007 = vpop.f32.mrb[0].mxu0
    %6008 = vdwg.mxu0
    %6009 = vmatprep.subr.mxu0 0.0
    %v6010 = vand.u32 %v5778, 4294901760
    %6011 = vmatpush1.msra.mxu0 %v6010
    %6012 = vmatprep.subr.mxu0 0.0
    %6013 = vmatpush1.msra.mxu0 0.0
    %6014 = vmatprep.subr.mxu0 0.0
    %6015 = vmatpush1.msra.mxu0 0.0
    %6016 = vmatprep.subr.mxu0 0.0
    %6017 = vmatpush1.msra.mxu0 0.0
    %6018 = vmatprep.subr.mxu0 0.0
    %6019 = vmatpush1.msra.mxu0 0.0
    %6020 = vmatprep.subr.mxu0 0.0
    %6021 = vmatpush1.msra.mxu0 0.0
    %6022 = vmatprep.subr.mxu0 0.0
    %6023 = vmatpush1.msra.mxu0 0.0
    %6024 = vmatprep.subr.mxu0 0.0
    %6025 = vmatpush1.msra.mxu0 0.0
    %6026 = vmatprep.subr.mxu0 0.0
    %6027 = vmatpush1.msra.mxu0 0.0
    %6028 = vmatprep.subr.mxu0 0.0
    %6029 = vmatpush1.msra.mxu0 0.0
    %6030 = vmatprep.subr.mxu0 0.0
    %6031 = vmatpush1.msra.mxu0 0.0
    %6032 = vmatprep.subr.mxu0 0.0
    %6033 = vmatpush1.msra.mxu0 0.0
    %6034 = vmatprep.subr.mxu0 0.0
    %6035 = vmatpush1.msra.mxu0 0.0
    %6036 = vmatprep.subr.mxu0 0.0
    %6037 = vmatpush1.msra.mxu0 0.0
    %6038 = vmatprep.subr.mxu0 0.0
    %6039 = vmatpush1.msra.mxu0 0.0
    %6040 = vmatprep.subr.mxu0 0.0
    %6041 = vmatpush1.msra.mxu0 0.0
    %6042 = vmatprep.subr.mxu0 0.0
    %6043 = vmatpush1.msra.mxu0 0.0
    %6044 = vmatprep.subr.mxu0 0.0
    %6045 = vmatpush1.msra.mxu0 0.0
    %6046 = vmatprep.subr.mxu0 0.0
    %6047 = vmatpush1.msra.mxu0 0.0
    %6048 = vmatprep.subr.mxu0 0.0
    %6049 = vmatpush1.msra.mxu0 0.0
    %6050 = vmatprep.subr.mxu0 0.0
    %6051 = vmatpush1.msra.mxu0 0.0
    %6052 = vmatprep.subr.mxu0 0.0
    %6053 = vmatpush1.msra.mxu0 0.0
    %6054 = vmatprep.subr.mxu0 0.0
    %6055 = vmatpush1.msra.mxu0 0.0
    %6056 = vmatprep.subr.mxu0 0.0
    %6057 = vmatpush1.msra.mxu0 0.0
    %6058 = vmatprep.subr.mxu0 0.0
    %6059 = vmatpush1.msra.mxu0 0.0
    %6060 = vmatprep.subr.mxu0 0.0
    %6061 = vmatpush1.msra.mxu0 0.0
    %6062 = vmatprep.subr.mxu0 0.0
    %6063 = vmatpush1.msra.mxu0 0.0
    %6064 = vmatprep.subr.mxu0 0.0
    %6065 = vmatpush1.msra.mxu0 0.0
    %6066 = vmatprep.subr.mxu0 0.0
    %6067 = vmatpush1.msra.mxu0 0.0
    %6068 = vmatprep.subr.mxu0 0.0
    %6069 = vmatpush1.msra.mxu0 0.0
    %6070 = vmatprep.subr.mxu0 0.0
    %6071 = vmatpush1.msra.mxu0 0.0
    %6072 = vmatprep.subr.mxu0 0.0
    %6073 = vmatpush1.msra.mxu0 0.0
    %6074 = vmatprep.mubr.f32.mxu0 0.0
    %v6075 = vand.u32 %v5781, 4294901760
    %v6076 = vsub.f32 %v5781, %v6075
    %v6077 = vand.u32 %v6076, 4294901760
    %6078 = vmatmul.mubr.f32.gmra.mrb[0].mxu0 %v6077
    %v6079 = vpop.f32.mrb[0].mxu0
    %v6080 = vadd.f32 %v6006, %v6079
    %v6081 = vpop.f32.mrb[0].mxu0
    %6082 = vdwg.mxu0
    %6083 = vmatprep.subr.mxu0 0.0
    %v6084 = vand.u32 %v5778, 4294901760
    %v6085 = vsub.f32 %v5778, %v6084
    %v6086 = vand.u32 %v6085, 4294901760
    %6087 = vmatpush1.msra.mxu0 %v6086
    %6088 = vmatprep.subr.mxu0 0.0
    %6089 = vmatpush1.msra.mxu0 0.0
    %6090 = vmatprep.subr.mxu0 0.0
    %6091 = vmatpush1.msra.mxu0 0.0
    %6092 = vmatprep.subr.mxu0 0.0
    %6093 = vmatpush1.msra.mxu0 0.0
    %6094 = vmatprep.subr.mxu0 0.0
    %6095 = vmatpush1.msra.mxu0 0.0
    %6096 = vmatprep.subr.mxu0 0.0
    %6097 = vmatpush1.msra.mxu0 0.0
    %6098 = vmatprep.subr.mxu0 0.0
    %6099 = vmatpush1.msra.mxu0 0.0
    %6100 = vmatprep.subr.mxu0 0.0
    %6101 = vmatpush1.msra.mxu0 0.0
    %6102 = vmatprep.subr.mxu0 0.0
    %6103 = vmatpush1.msra.mxu0 0.0
    %6104 = vmatprep.subr.mxu0 0.0
    %6105 = vmatpush1.msra.mxu0 0.0
    %6106 = vmatprep.subr.mxu0 0.0
    %6107 = vmatpush1.msra.mxu0 0.0
    %6108 = vmatprep.subr.mxu0 0.0
    %6109 = vmatpush1.msra.mxu0 0.0
    %6110 = vmatprep.subr.mxu0 0.0
    %6111 = vmatpush1.msra.mxu0 0.0
    %6112 = vmatprep.subr.mxu0 0.0
    %6113 = vmatpush1.msra.mxu0 0.0
    %6114 = vmatprep.subr.mxu0 0.0
    %6115 = vmatpush1.msra.mxu0 0.0
    %6116 = vmatprep.subr.mxu0 0.0
    %6117 = vmatpush1.msra.mxu0 0.0
    %6118 = vmatprep.subr.mxu0 0.0
    %6119 = vmatpush1.msra.mxu0 0.0
    %6120 = vmatprep.subr.mxu0 0.0
    %6121 = vmatpush1.msra.mxu0 0.0
    %6122 = vmatprep.subr.mxu0 0.0
    %6123 = vmatpush1.msra.mxu0 0.0
    %6124 = vmatprep.subr.mxu0 0.0
    %6125 = vmatpush1.msra.mxu0 0.0
    %6126 = vmatprep.subr.mxu0 0.0
    %6127 = vmatpush1.msra.mxu0 0.0
    %6128 = vmatprep.subr.mxu0 0.0
    %6129 = vmatpush1.msra.mxu0 0.0
    %6130 = vmatprep.subr.mxu0 0.0
    %6131 = vmatpush1.msra.mxu0 0.0
    %6132 = vmatprep.subr.mxu0 0.0
    %6133 = vmatpush1.msra.mxu0 0.0
    %6134 = vmatprep.subr.mxu0 0.0
    %6135 = vmatpush1.msra.mxu0 0.0
    %6136 = vmatprep.subr.mxu0 0.0
    %6137 = vmatpush1.msra.mxu0 0.0
    %6138 = vmatprep.subr.mxu0 0.0
    %6139 = vmatpush1.msra.mxu0 0.0
    %6140 = vmatprep.subr.mxu0 0.0
    %6141 = vmatpush1.msra.mxu0 0.0
    %6142 = vmatprep.subr.mxu0 0.0
    %6143 = vmatpush1.msra.mxu0 0.0
    %6144 = vmatprep.subr.mxu0 0.0
    %6145 = vmatpush1.msra.mxu0 0.0
    %6146 = vmatprep.subr.mxu0 0.0
    %6147 = vmatpush1.msra.mxu0 0.0
    %6148 = vmatprep.subr.mxu0 0.0
    %6149 = vmatpush1.msra.mxu0 0.0
    %6150 = vmatprep.mubr.f32.mxu0 0.0
    %v6151 = vand.u32 %v5781, 4294901760
    %6152 = vmatmul.mubr.f32.gmra.mrb[0].mxu0 %v6151
    %v6153 = vpop.f32.mrb[0].mxu0
    %v6154 = vadd.f32 %v6080, %v6153
    %v6155 = vpop.f32.mrb[0].mxu0
    %6156 = vdwg.mxu0
    %6157 = vmatprep.subr.mxu0 0.0
    %v6158 = vand.u32 %v5778, 4294901760
    %6159 = vmatpush1.msra.mxu0 %v6158
    %6160 = vmatprep.subr.mxu0 0.0
    %6161 = vmatpush1.msra.mxu0 0.0
    %6162 = vmatprep.subr.mxu0 0.0
    %6163 = vmatpush1.msra.mxu0 0.0
    %6164 = vmatprep.subr.mxu0 0.0
    %6165 = vmatpush1.msra.mxu0 0.0
    %6166 = vmatprep.subr.mxu0 0.0
    %6167 = vmatpush1.msra.mxu0 0.0
    %6168 = vmatprep.subr.mxu0 0.0
    %6169 = vmatpush1.msra.mxu0 0.0
    %6170 = vmatprep.subr.mxu0 0.0
    %6171 = vmatpush1.msra.mxu0 0.0
    %6172 = vmatprep.subr.mxu0 0.0
    %6173 = vmatpush1.msra.mxu0 0.0
    %6174 = vmatprep.subr.mxu0 0.0
    %6175 = vmatpush1.msra.mxu0 0.0
    %6176 = vmatprep.subr.mxu0 0.0
    %6177 = vmatpush1.msra.mxu0 0.0
    %6178 = vmatprep.subr.mxu0 0.0
    %6179 = vmatpush1.msra.mxu0 0.0
    %6180 = vmatprep.subr.mxu0 0.0
    %6181 = vmatpush1.msra.mxu0 0.0
    %6182 = vmatprep.subr.mxu0 0.0
    %6183 = vmatpush1.msra.mxu0 0.0
    %6184 = vmatprep.subr.mxu0 0.0
    %6185 = vmatpush1.msra.mxu0 0.0
    %6186 = vmatprep.subr.mxu0 0.0
    %6187 = vmatpush1.msra.mxu0 0.0
    %6188 = vmatprep.subr.mxu0 0.0
    %6189 = vmatpush1.msra.mxu0 0.0
    %6190 = vmatprep.subr.mxu0 0.0
    %6191 = vmatpush1.msra.mxu0 0.0
    %6192 = vmatprep.subr.mxu0 0.0
    %6193 = vmatpush1.msra.mxu0 0.0
    %6194 = vmatprep.subr.mxu0 0.0
    %6195 = vmatpush1.msra.mxu0 0.0
    %6196 = vmatprep.subr.mxu0 0.0
    %6197 = vmatpush1.msra.mxu0 0.0
    %6198 = vmatprep.subr.mxu0 0.0
    %6199 = vmatpush1.msra.mxu0 0.0
    %6200 = vmatprep.subr.mxu0 0.0
    %6201 = vmatpush1.msra.mxu0 0.0
    %6202 = vmatprep.subr.mxu0 0.0
    %6203 = vmatpush1.msra.mxu0 0.0
    %6204 = vmatprep.subr.mxu0 0.0
    %6205 = vmatpush1.msra.mxu0 0.0
    %6206 = vmatprep.subr.mxu0 0.0
    %6207 = vmatpush1.msra.mxu0 0.0
    %6208 = vmatprep.subr.mxu0 0.0
    %6209 = vmatpush1.msra.mxu0 0.0
    %6210 = vmatprep.subr.mxu0 0.0
    %6211 = vmatpush1.msra.mxu0 0.0
    %6212 = vmatprep.subr.mxu0 0.0
    %6213 = vmatpush1.msra.mxu0 0.0
    %6214 = vmatprep.subr.mxu0 0.0
    %6215 = vmatpush1.msra.mxu0 0.0
    %6216 = vmatprep.subr.mxu0 0.0
    %6217 = vmatpush1.msra.mxu0 0.0
    %6218 = vmatprep.subr.mxu0 0.0
    %6219 = vmatpush1.msra.mxu0 0.0
    %6220 = vmatprep.subr.mxu0 0.0
    %6221 = vmatpush1.msra.mxu0 0.0
    %6222 = vmatprep.mubr.f32.mxu0 0.0
    %v6223 = vand.u32 %v5781, 4294901760
    %6224 = vmatmul.mubr.f32.gmra.mrb[0].mxu0 %v6223
    %v6225 = vpop.f32.mrb[0].mxu0
    %v6226 = vadd.f32 %v6154, %v6225
    %v6227 = vpop.f32.mrb[0].mxu0
    %6228 = vdwg.mxu0
    %6229 = vrot.lane.b32.xlu0 %v667, 112
    %v6230 = vpop.permute.xlu0 %6229
    %6231 = vrot.lane.b32.xlu0 %v667, 80
    %v6232 = vpop.permute.xlu0 %6231
    %v6233 = vsel %vm683, %v6230, 0
    %v6235 = vsel %vm683, %v6232, 0
    %6237 = vmatprep.subr.mxu0 0.0
    %v6238 = vand.u32 %v6235, 4294901760
    %6239 = vmatpush1.xpose.msra.mxu0 %v6238
    %6240 = vmatprep.subr.mxu0 0.0
    %6241 = vmatpush1.xpose.msra.mxu0 0.0
    %6242 = vmatprep.subr.mxu0 0.0
    %6243 = vmatpush1.xpose.msra.mxu0 0.0
    %6244 = vmatprep.subr.mxu0 0.0
    %6245 = vmatpush1.xpose.msra.mxu0 0.0
    %6246 = vmatprep.subr.mxu0 0.0
    %6247 = vmatpush1.xpose.msra.mxu0 0.0
    %6248 = vmatprep.subr.mxu0 0.0
    %6249 = vmatpush1.xpose.msra.mxu0 0.0
    %6250 = vmatprep.subr.mxu0 0.0
    %6251 = vmatpush1.xpose.msra.mxu0 0.0
    %6252 = vmatprep.subr.mxu0 0.0
    %6253 = vmatpush1.xpose.msra.mxu0 0.0
    %6254 = vmatprep.subr.mxu0 0.0
    %6255 = vmatpush1.xpose.msra.mxu0 0.0
    %6256 = vmatprep.subr.mxu0 0.0
    %6257 = vmatpush1.xpose.msra.mxu0 0.0
    %6258 = vmatprep.subr.mxu0 0.0
    %6259 = vmatpush1.xpose.msra.mxu0 0.0
    %6260 = vmatprep.subr.mxu0 0.0
    %6261 = vmatpush1.xpose.msra.mxu0 0.0
    %6262 = vmatprep.subr.mxu0 0.0
    %6263 = vmatpush1.xpose.msra.mxu0 0.0
    %6264 = vmatprep.subr.mxu0 0.0
    %6265 = vmatpush1.xpose.msra.mxu0 0.0
    %6266 = vmatprep.subr.mxu0 0.0
    %6267 = vmatpush1.xpose.msra.mxu0 0.0
    %6268 = vmatprep.subr.mxu0 0.0
    %6269 = vmatpush1.xpose.msra.mxu0 0.0
    %6270 = vmatprep.subr.mxu0 0.0
    %6271 = vmatpush1.xpose.msra.mxu0 0.0
    %6272 = vmatprep.subr.mxu0 0.0
    %6273 = vmatpush1.xpose.msra.mxu0 0.0
    %6274 = vmatprep.subr.mxu0 0.0
    %6275 = vmatpush1.xpose.msra.mxu0 0.0
    %6276 = vmatprep.subr.mxu0 0.0
    %6277 = vmatpush1.xpose.msra.mxu0 0.0
    %6278 = vmatprep.subr.mxu0 0.0
    %6279 = vmatpush1.xpose.msra.mxu0 0.0
    %6280 = vmatprep.subr.mxu0 0.0
    %6281 = vmatpush1.xpose.msra.mxu0 0.0
    %6282 = vmatprep.subr.mxu0 0.0
    %6283 = vmatpush1.xpose.msra.mxu0 0.0
    %6284 = vmatprep.subr.mxu0 0.0
    %6285 = vmatpush1.xpose.msra.mxu0 0.0
    %6286 = vmatprep.subr.mxu0 0.0
    %6287 = vmatpush1.xpose.msra.mxu0 0.0
    %6288 = vmatprep.subr.mxu0 0.0
    %6289 = vmatpush1.xpose.msra.mxu0 0.0
    %6290 = vmatprep.subr.mxu0 0.0
    %6291 = vmatpush1.xpose.msra.mxu0 0.0
    %6292 = vmatprep.subr.mxu0 0.0
    %6293 = vmatpush1.xpose.msra.mxu0 0.0
    %6294 = vmatprep.subr.mxu0 0.0
    %6295 = vmatpush1.xpose.msra.mxu0 0.0
    %6296 = vmatprep.subr.mxu0 0.0
    %6297 = vmatpush1.xpose.msra.mxu0 0.0
    %6298 = vmatprep.subr.mxu0 0.0
    %6299 = vmatpush1.xpose.msra.mxu0 0.0
    %6300 = vmatprep.subr.mxu0 0.0
    %6301 = vmatpush1.xpose.msra.mxu0 0.0
    %6302 = vmatprep.mubr.f32.mxu0 0.0
    %v6303 = vand.u32 %v6233, 4294901760
    %v6304 = vsub.f32 %v6233, %v6303
    %v6305 = vand.u32 %v6304, 4294901760
    %v6306 = vsub.f32 %v6304, %v6305
    %v6307 = vand.u32 %v6306, 4294901760
    %6308 = vmatmul.mubr.f32.gmra.mrb[0].mxu0 %v6307
    %v6309 = vpop.f32.mrb[0].mxu0
    %v6310 = vadd.f32 0.0, %v6309
    %v6311 = vpop.f32.mrb[0].mxu0
    %6312 = vdwg.mxu0
    %6313 = vmatprep.subr.mxu0 0.0
    %v6314 = vand.u32 %v6235, 4294901760
    %v6315 = vsub.f32 %v6235, %v6314
    %v6316 = vand.u32 %v6315, 4294901760
    %v6317 = vsub.f32 %v6315, %v6316
    %v6318 = vand.u32 %v6317, 4294901760
    %6319 = vmatpush1.xpose.msra.mxu0 %v6318
    %6320 = vmatprep.subr.mxu0 0.0
    %6321 = vmatpush1.xpose.msra.mxu0 0.0
    %6322 = vmatprep.subr.mxu0 0.0
    %6323 = vmatpush1.xpose.msra.mxu0 0.0
    %6324 = vmatprep.subr.mxu0 0.0
    %6325 = vmatpush1.xpose.msra.mxu0 0.0
    %6326 = vmatprep.subr.mxu0 0.0
    %6327 = vmatpush1.xpose.msra.mxu0 0.0
    %6328 = vmatprep.subr.mxu0 0.0
    %6329 = vmatpush1.xpose.msra.mxu0 0.0
    %6330 = vmatprep.subr.mxu0 0.0
    %6331 = vmatpush1.xpose.msra.mxu0 0.0
    %6332 = vmatprep.subr.mxu0 0.0
    %6333 = vmatpush1.xpose.msra.mxu0 0.0
    %6334 = vmatprep.subr.mxu0 0.0
    %6335 = vmatpush1.xpose.msra.mxu0 0.0
    %6336 = vmatprep.subr.mxu0 0.0
    %6337 = vmatpush1.xpose.msra.mxu0 0.0
    %6338 = vmatprep.subr.mxu0 0.0
    %6339 = vmatpush1.xpose.msra.mxu0 0.0
    %6340 = vmatprep.subr.mxu0 0.0
    %6341 = vmatpush1.xpose.msra.mxu0 0.0
    %6342 = vmatprep.subr.mxu0 0.0
    %6343 = vmatpush1.xpose.msra.mxu0 0.0
    %6344 = vmatprep.subr.mxu0 0.0
    %6345 = vmatpush1.xpose.msra.mxu0 0.0
    %6346 = vmatprep.subr.mxu0 0.0
    %6347 = vmatpush1.xpose.msra.mxu0 0.0
    %6348 = vmatprep.subr.mxu0 0.0
    %6349 = vmatpush1.xpose.msra.mxu0 0.0
    %6350 = vmatprep.subr.mxu0 0.0
    %6351 = vmatpush1.xpose.msra.mxu0 0.0
    %6352 = vmatprep.subr.mxu0 0.0
    %6353 = vmatpush1.xpose.msra.mxu0 0.0
    %6354 = vmatprep.subr.mxu0 0.0
    %6355 = vmatpush1.xpose.msra.mxu0 0.0
    %6356 = vmatprep.subr.mxu0 0.0
    %6357 = vmatpush1.xpose.msra.mxu0 0.0
    %6358 = vmatprep.subr.mxu0 0.0
    %6359 = vmatpush1.xpose.msra.mxu0 0.0
    %6360 = vmatprep.subr.mxu0 0.0
    %6361 = vmatpush1.xpose.msra.mxu0 0.0
    %6362 = vmatprep.subr.mxu0 0.0
    %6363 = vmatpush1.xpose.msra.mxu0 0.0
    %6364 = vmatprep.subr.mxu0 0.0
    %6365 = vmatpush1.xpose.msra.mxu0 0.0
    %6366 = vmatprep.subr.mxu0 0.0
    %6367 = vmatpush1.xpose.msra.mxu0 0.0
    %6368 = vmatprep.subr.mxu0 0.0
    %6369 = vmatpush1.xpose.msra.mxu0 0.0
    %6370 = vmatprep.subr.mxu0 0.0
    %6371 = vmatpush1.xpose.msra.mxu0 0.0
    %6372 = vmatprep.subr.mxu0 0.0
    %6373 = vmatpush1.xpose.msra.mxu0 0.0
    %6374 = vmatprep.subr.mxu0 0.0
    %6375 = vmatpush1.xpose.msra.mxu0 0.0
    %6376 = vmatprep.subr.mxu0 0.0
    %6377 = vmatpush1.xpose.msra.mxu0 0.0
    %6378 = vmatprep.subr.mxu0 0.0
    %6379 = vmatpush1.xpose.msra.mxu0 0.0
    %6380 = vmatprep.subr.mxu0 0.0
    %6381 = vmatpush1.xpose.msra.mxu0 0.0
    %6382 = vmatprep.mubr.f32.mxu0 0.0
    %v6383 = vand.u32 %v6233, 4294901760
    %6384 = vmatmul.mubr.f32.gmra.mrb[0].mxu0 %v6383
    %v6385 = vpop.f32.mrb[0].mxu0
    %v6386 = vadd.f32 %v6310, %v6385
    %v6387 = vpop.f32.mrb[0].mxu0
    %6388 = vdwg.mxu0
    %6389 = vmatprep.subr.mxu0 0.0
    %v6390 = vand.u32 %v6235, 4294901760
    %v6391 = vsub.f32 %v6235, %v6390
    %6392 = vmatpush1.xpose.msra.mxu0 %v6391
    %6393 = vmatprep.subr.mxu0 0.0
    %6394 = vmatpush1.xpose.msra.mxu0 0.0
    %6395 = vmatprep.subr.mxu0 0.0
    %6396 = vmatpush1.xpose.msra.mxu0 0.0
    %6397 = vmatprep.subr.mxu0 0.0
    %6398 = vmatpush1.xpose.msra.mxu0 0.0
    %6399 = vmatprep.subr.mxu0 0.0
    %6400 = vmatpush1.xpose.msra.mxu0 0.0
    %6401 = vmatprep.subr.mxu0 0.0
    %6402 = vmatpush1.xpose.msra.mxu0 0.0
    %6403 = vmatprep.subr.mxu0 0.0
    %6404 = vmatpush1.xpose.msra.mxu0 0.0
    %6405 = vmatprep.subr.mxu0 0.0
    %6406 = vmatpush1.xpose.msra.mxu0 0.0
    %6407 = vmatprep.subr.mxu0 0.0
    %6408 = vmatpush1.xpose.msra.mxu0 0.0
    %6409 = vmatprep.subr.mxu0 0.0
    %6410 = vmatpush1.xpose.msra.mxu0 0.0
    %6411 = vmatprep.subr.mxu0 0.0
    %6412 = vmatpush1.xpose.msra.mxu0 0.0
    %6413 = vmatprep.subr.mxu0 0.0
    %6414 = vmatpush1.xpose.msra.mxu0 0.0
    %6415 = vmatprep.subr.mxu0 0.0
    %6416 = vmatpush1.xpose.msra.mxu0 0.0
    %6417 = vmatprep.subr.mxu0 0.0
    %6418 = vmatpush1.xpose.msra.mxu0 0.0
    %6419 = vmatprep.subr.mxu0 0.0
    %6420 = vmatpush1.xpose.msra.mxu0 0.0
    %6421 = vmatprep.subr.mxu0 0.0
    %6422 = vmatpush1.xpose.msra.mxu0 0.0
    %6423 = vmatprep.subr.mxu0 0.0
    %6424 = vmatpush1.xpose.msra.mxu0 0.0
    %6425 = vmatprep.subr.mxu0 0.0
    %6426 = vmatpush1.xpose.msra.mxu0 0.0
    %6427 = vmatprep.subr.mxu0 0.0
    %6428 = vmatpush1.xpose.msra.mxu0 0.0
    %6429 = vmatprep.subr.mxu0 0.0
    %6430 = vmatpush1.xpose.msra.mxu0 0.0
    %6431 = vmatprep.subr.mxu0 0.0
    %6432 = vmatpush1.xpose.msra.mxu0 0.0
    %6433 = vmatprep.subr.mxu0 0.0
    %6434 = vmatpush1.xpose.msra.mxu0 0.0
    %6435 = vmatprep.subr.mxu0 0.0
    %6436 = vmatpush1.xpose.msra.mxu0 0.0
    %6437 = vmatprep.subr.mxu0 0.0
    %6438 = vmatpush1.xpose.msra.mxu0 0.0
    %6439 = vmatprep.subr.mxu0 0.0
    %6440 = vmatpush1.xpose.msra.mxu0 0.0
    %6441 = vmatprep.subr.mxu0 0.0
    %6442 = vmatpush1.xpose.msra.mxu0 0.0
    %6443 = vmatprep.subr.mxu0 0.0
    %6444 = vmatpush1.xpose.msra.mxu0 0.0
    %6445 = vmatprep.subr.mxu0 0.0
    %6446 = vmatpush1.xpose.msra.mxu0 0.0
    %6447 = vmatprep.subr.mxu0 0.0
    %6448 = vmatpush1.xpose.msra.mxu0 0.0
    %6449 = vmatprep.subr.mxu0 0.0
    %6450 = vmatpush1.xpose.msra.mxu0 0.0
    %6451 = vmatprep.subr.mxu0 0.0
    %6452 = vmatpush1.xpose.msra.mxu0 0.0
    %6453 = vmatprep.subr.mxu0 0.0
    %6454 = vmatpush1.xpose.msra.mxu0 0.0
    %6455 = vmatprep.mubr.f32.mxu0 0.0
    %v6456 = vand.u32 %v6233, 4294901760
    %v6457 = vsub.f32 %v6233, %v6456
    %6458 = vmatmul.mubr.f32.gmra.mrb[0].mxu0 %v6457
    %v6459 = vpop.f32.mrb[0].mxu0
    %v6460 = vadd.f32 %v6386, %v6459
    %v6461 = vpop.f32.mrb[0].mxu0
    %6462 = vdwg.mxu0
    %6463 = vmatprep.subr.mxu0 0.0
    %v6464 = vand.u32 %v6235, 4294901760
    %6465 = vmatpush1.xpose.msra.mxu0 %v6464
    %6466 = vmatprep.subr.mxu0 0.0
    %6467 = vmatpush1.xpose.msra.mxu0 0.0
    %6468 = vmatprep.subr.mxu0 0.0
    %6469 = vmatpush1.xpose.msra.mxu0 0.0
    %6470 = vmatprep.subr.mxu0 0.0
    %6471 = vmatpush1.xpose.msra.mxu0 0.0
    %6472 = vmatprep.subr.mxu0 0.0
    %6473 = vmatpush1.xpose.msra.mxu0 0.0
    %6474 = vmatprep.subr.mxu0 0.0
    %6475 = vmatpush1.xpose.msra.mxu0 0.0
    %6476 = vmatprep.subr.mxu0 0.0
    %6477 = vmatpush1.xpose.msra.mxu0 0.0
    %6478 = vmatprep.subr.mxu0 0.0
    %6479 = vmatpush1.xpose.msra.mxu0 0.0
    %6480 = vmatprep.subr.mxu0 0.0
    %6481 = vmatpush1.xpose.msra.mxu0 0.0
    %6482 = vmatprep.subr.mxu0 0.0
    %6483 = vmatpush1.xpose.msra.mxu0 0.0
    %6484 = vmatprep.subr.mxu0 0.0
    %6485 = vmatpush1.xpose.msra.mxu0 0.0
    %6486 = vmatprep.subr.mxu0 0.0
    %6487 = vmatpush1.xpose.msra.mxu0 0.0
    %6488 = vmatprep.subr.mxu0 0.0
    %6489 = vmatpush1.xpose.msra.mxu0 0.0
    %6490 = vmatprep.subr.mxu0 0.0
    %6491 = vmatpush1.xpose.msra.mxu0 0.0
    %6492 = vmatprep.subr.mxu0 0.0
    %6493 = vmatpush1.xpose.msra.mxu0 0.0
    %6494 = vmatprep.subr.mxu0 0.0
    %6495 = vmatpush1.xpose.msra.mxu0 0.0
    %6496 = vmatprep.subr.mxu0 0.0
    %6497 = vmatpush1.xpose.msra.mxu0 0.0
    %6498 = vmatprep.subr.mxu0 0.0
    %6499 = vmatpush1.xpose.msra.mxu0 0.0
    %6500 = vmatprep.subr.mxu0 0.0
    %6501 = vmatpush1.xpose.msra.mxu0 0.0
    %6502 = vmatprep.subr.mxu0 0.0
    %6503 = vmatpush1.xpose.msra.mxu0 0.0
    %6504 = vmatprep.subr.mxu0 0.0
    %6505 = vmatpush1.xpose.msra.mxu0 0.0
    %6506 = vmatprep.subr.mxu0 0.0
    %6507 = vmatpush1.xpose.msra.mxu0 0.0
    %6508 = vmatprep.subr.mxu0 0.0
    %6509 = vmatpush1.xpose.msra.mxu0 0.0
    %6510 = vmatprep.subr.mxu0 0.0
    %6511 = vmatpush1.xpose.msra.mxu0 0.0
    %6512 = vmatprep.subr.mxu0 0.0
    %6513 = vmatpush1.xpose.msra.mxu0 0.0
    %6514 = vmatprep.subr.mxu0 0.0
    %6515 = vmatpush1.xpose.msra.mxu0 0.0
    %6516 = vmatprep.subr.mxu0 0.0
    %6517 = vmatpush1.xpose.msra.mxu0 0.0
    %6518 = vmatprep.subr.mxu0 0.0
    %6519 = vmatpush1.xpose.msra.mxu0 0.0
    %6520 = vmatprep.subr.mxu0 0.0
    %6521 = vmatpush1.xpose.msra.mxu0 0.0
    %6522 = vmatprep.subr.mxu0 0.0
    %6523 = vmatpush1.xpose.msra.mxu0 0.0
    %6524 = vmatprep.subr.mxu0 0.0
    %6525 = vmatpush1.xpose.msra.mxu0 0.0
    %6526 = vmatprep.subr.mxu0 0.0
    %6527 = vmatpush1.xpose.msra.mxu0 0.0
    %6528 = vmatprep.mubr.f32.mxu0 0.0
    %v6529 = vand.u32 %v6233, 4294901760
    %v6530 = vsub.f32 %v6233, %v6529
    %v6531 = vand.u32 %v6530, 4294901760
    %6532 = vmatmul.mubr.f32.gmra.mrb[0].mxu0 %v6531
    %v6533 = vpop.f32.mrb[0].mxu0
    %v6534 = vadd.f32 %v6460, %v6533
    %v6535 = vpop.f32.mrb[0].mxu0
    %6536 = vdwg.mxu0
    %6537 = vmatprep.subr.mxu0 0.0
    %v6538 = vand.u32 %v6235, 4294901760
    %v6539 = vsub.f32 %v6235, %v6538
    %v6540 = vand.u32 %v6539, 4294901760
    %6541 = vmatpush1.xpose.msra.mxu0 %v6540
    %6542 = vmatprep.subr.mxu0 0.0
    %6543 = vmatpush1.xpose.msra.mxu0 0.0
    %6544 = vmatprep.subr.mxu0 0.0
    %6545 = vmatpush1.xpose.msra.mxu0 0.0
    %6546 = vmatprep.subr.mxu0 0.0
    %6547 = vmatpush1.xpose.msra.mxu0 0.0
    %6548 = vmatprep.subr.mxu0 0.0
    %6549 = vmatpush1.xpose.msra.mxu0 0.0
    %6550 = vmatprep.subr.mxu0 0.0
    %6551 = vmatpush1.xpose.msra.mxu0 0.0
    %6552 = vmatprep.subr.mxu0 0.0
    %6553 = vmatpush1.xpose.msra.mxu0 0.0
    %6554 = vmatprep.subr.mxu0 0.0
    %6555 = vmatpush1.xpose.msra.mxu0 0.0
    %6556 = vmatprep.subr.mxu0 0.0
    %6557 = vmatpush1.xpose.msra.mxu0 0.0
    %6558 = vmatprep.subr.mxu0 0.0
    %6559 = vmatpush1.xpose.msra.mxu0 0.0
    %6560 = vmatprep.subr.mxu0 0.0
    %6561 = vmatpush1.xpose.msra.mxu0 0.0
    %6562 = vmatprep.subr.mxu0 0.0
    %6563 = vmatpush1.xpose.msra.mxu0 0.0
    %6564 = vmatprep.subr.mxu0 0.0
    %6565 = vmatpush1.xpose.msra.mxu0 0.0
    %6566 = vmatprep.subr.mxu0 0.0
    %6567 = vmatpush1.xpose.msra.mxu0 0.0
    %6568 = vmatprep.subr.mxu0 0.0
    %6569 = vmatpush1.xpose.msra.mxu0 0.0
    %6570 = vmatprep.subr.mxu0 0.0
    %6571 = vmatpush1.xpose.msra.mxu0 0.0
    %6572 = vmatprep.subr.mxu0 0.0
    %6573 = vmatpush1.xpose.msra.mxu0 0.0
    %6574 = vmatprep.subr.mxu0 0.0
    %6575 = vmatpush1.xpose.msra.mxu0 0.0
    %6576 = vmatprep.subr.mxu0 0.0
    %6577 = vmatpush1.xpose.msra.mxu0 0.0
    %6578 = vmatprep.subr.mxu0 0.0
    %6579 = vmatpush1.xpose.msra.mxu0 0.0
    %6580 = vmatprep.subr.mxu0 0.0
    %6581 = vmatpush1.xpose.msra.mxu0 0.0
    %6582 = vmatprep.subr.mxu0 0.0
    %6583 = vmatpush1.xpose.msra.mxu0 0.0
    %6584 = vmatprep.subr.mxu0 0.0
    %6585 = vmatpush1.xpose.msra.mxu0 0.0
    %6586 = vmatprep.subr.mxu0 0.0
    %6587 = vmatpush1.xpose.msra.mxu0 0.0
    %6588 = vmatprep.subr.mxu0 0.0
    %6589 = vmatpush1.xpose.msra.mxu0 0.0
    %6590 = vmatprep.subr.mxu0 0.0
    %6591 = vmatpush1.xpose.msra.mxu0 0.0
    %6592 = vmatprep.subr.mxu0 0.0
    %6593 = vmatpush1.xpose.msra.mxu0 0.0
    %6594 = vmatprep.subr.mxu0 0.0
    %6595 = vmatpush1.xpose.msra.mxu0 0.0
    %6596 = vmatprep.subr.mxu0 0.0
    %6597 = vmatpush1.xpose.msra.mxu0 0.0
    %6598 = vmatprep.subr.mxu0 0.0
    %6599 = vmatpush1.xpose.msra.mxu0 0.0
    %6600 = vmatprep.subr.mxu0 0.0
    %6601 = vmatpush1.xpose.msra.mxu0 0.0
    %6602 = vmatprep.subr.mxu0 0.0
    %6603 = vmatpush1.xpose.msra.mxu0 0.0
    %6604 = vmatprep.mubr.f32.mxu0 0.0
    %v6605 = vand.u32 %v6233, 4294901760
    %6606 = vmatmul.mubr.f32.gmra.mrb[0].mxu0 %v6605
    %v6607 = vpop.f32.mrb[0].mxu0
    %v6608 = vadd.f32 %v6534, %v6607
    %v6609 = vpop.f32.mrb[0].mxu0
    %6610 = vdwg.mxu0
    %6611 = vmatprep.subr.mxu0 0.0
    %v6612 = vand.u32 %v6235, 4294901760
    %6613 = vmatpush1.xpose.msra.mxu0 %v6612
    %6614 = vmatprep.subr.mxu0 0.0
    %6615 = vmatpush1.xpose.msra.mxu0 0.0
    %6616 = vmatprep.subr.mxu0 0.0
    %6617 = vmatpush1.xpose.msra.mxu0 0.0
    %6618 = vmatprep.subr.mxu0 0.0
    %6619 = vmatpush1.xpose.msra.mxu0 0.0
    %6620 = vmatprep.subr.mxu0 0.0
    %6621 = vmatpush1.xpose.msra.mxu0 0.0
    %6622 = vmatprep.subr.mxu0 0.0
    %6623 = vmatpush1.xpose.msra.mxu0 0.0
    %6624 = vmatprep.subr.mxu0 0.0
    %6625 = vmatpush1.xpose.msra.mxu0 0.0
    %6626 = vmatprep.subr.mxu0 0.0
    %6627 = vmatpush1.xpose.msra.mxu0 0.0
    %6628 = vmatprep.subr.mxu0 0.0
    %6629 = vmatpush1.xpose.msra.mxu0 0.0
    %6630 = vmatprep.subr.mxu0 0.0
    %6631 = vmatpush1.xpose.msra.mxu0 0.0
    %6632 = vmatprep.subr.mxu0 0.0
    %6633 = vmatpush1.xpose.msra.mxu0 0.0
    %6634 = vmatprep.subr.mxu0 0.0
    %6635 = vmatpush1.xpose.msra.mxu0 0.0
    %6636 = vmatprep.subr.mxu0 0.0
    %6637 = vmatpush1.xpose.msra.mxu0 0.0
    %6638 = vmatprep.subr.mxu0 0.0
    %6639 = vmatpush1.xpose.msra.mxu0 0.0
    %6640 = vmatprep.subr.mxu0 0.0
    %6641 = vmatpush1.xpose.msra.mxu0 0.0
    %6642 = vmatprep.subr.mxu0 0.0
    %6643 = vmatpush1.xpose.msra.mxu0 0.0
    %6644 = vmatprep.subr.mxu0 0.0
    %6645 = vmatpush1.xpose.msra.mxu0 0.0
    %6646 = vmatprep.subr.mxu0 0.0
    %6647 = vmatpush1.xpose.msra.mxu0 0.0
    %6648 = vmatprep.subr.mxu0 0.0
    %6649 = vmatpush1.xpose.msra.mxu0 0.0
    %6650 = vmatprep.subr.mxu0 0.0
    %6651 = vmatpush1.xpose.msra.mxu0 0.0
    %6652 = vmatprep.subr.mxu0 0.0
    %6653 = vmatpush1.xpose.msra.mxu0 0.0
    %6654 = vmatprep.subr.mxu0 0.0
    %6655 = vmatpush1.xpose.msra.mxu0 0.0
    %6656 = vmatprep.subr.mxu0 0.0
    %6657 = vmatpush1.xpose.msra.mxu0 0.0
    %6658 = vmatprep.subr.mxu0 0.0
    %6659 = vmatpush1.xpose.msra.mxu0 0.0
    %6660 = vmatprep.subr.mxu0 0.0
    %6661 = vmatpush1.xpose.msra.mxu0 0.0
    %6662 = vmatprep.subr.mxu0 0.0
    %6663 = vmatpush1.xpose.msra.mxu0 0.0
    %6664 = vmatprep.subr.mxu0 0.0
    %6665 = vmatpush1.xpose.msra.mxu0 0.0
    %6666 = vmatprep.subr.mxu0 0.0
    %6667 = vmatpush1.xpose.msra.mxu0 0.0
    %6668 = vmatprep.subr.mxu0 0.0
    %6669 = vmatpush1.xpose.msra.mxu0 0.0
    %6670 = vmatprep.subr.mxu0 0.0
    %6671 = vmatpush1.xpose.msra.mxu0 0.0
    %6672 = vmatprep.subr.mxu0 0.0
    %6673 = vmatpush1.xpose.msra.mxu0 0.0
    %6674 = vmatprep.subr.mxu0 0.0
    %6675 = vmatpush1.xpose.msra.mxu0 0.0
    %6676 = vmatprep.mubr.f32.mxu0 0.0
    %v6677 = vand.u32 %v6233, 4294901760
    %6678 = vmatmul.mubr.f32.gmra.mrb[0].mxu0 %v6677
    %v6679 = vpop.f32.mrb[0].mxu0
    %v6680 = vadd.f32 %v6608, %v6679
    %v6681 = vpop.f32.mrb[0].mxu0
    %6682 = vdwg.mxu0
    %v6683 = vsel %vm4842, %v6680, -3.4e+38
    %v6684 = vsel %vm683, %v6683, -inf
    %6685 = vmax.xlane.f32.xlu0 %v6684
    %v6686 = vpop.xlane.xlu0 %6685
    %v6687 = vsub.f32 %v6683, %v6686
    %v6688 = vmul.f32 %v6687, 1.442695
    %v6689 = vpow.pop %v6688
    %v6690 = vmul.f32 %v6689, %v4387
    %v6691 = vsel %vm683, %v6690, 0.0
    %6692 = vadd.xlane.f32.xlu0 %v6691
    %v6693 = vpop.xlane.xlu0 %6692
    %v6694 = vmax.f32 %v6693, 1e-30
    %v6695 = vrcp.pop %v6694
    %v6696 = vmul.f32 %v6690, %v6695
    %6697 = vrot.lane.b32.xlu0 %v667, 48
    %v6698 = vpop.permute.xlu0 %6697
    %v6701 = vsel %vm683, %v6696, 0
    %6703 = vmatprep.subr.mxu0 0.0
    %v6704 = vand.u32 %v6698, 4294901760
    %6705 = vmatpush1.msra.mxu0 %v6704
    %6706 = vmatprep.subr.mxu0 0.0
    %6707 = vmatpush1.msra.mxu0 0.0
    %6708 = vmatprep.subr.mxu0 0.0
    %6709 = vmatpush1.msra.mxu0 0.0
    %6710 = vmatprep.subr.mxu0 0.0
    %6711 = vmatpush1.msra.mxu0 0.0
    %6712 = vmatprep.subr.mxu0 0.0
    %6713 = vmatpush1.msra.mxu0 0.0
    %6714 = vmatprep.subr.mxu0 0.0
    %6715 = vmatpush1.msra.mxu0 0.0
    %6716 = vmatprep.subr.mxu0 0.0
    %6717 = vmatpush1.msra.mxu0 0.0
    %6718 = vmatprep.subr.mxu0 0.0
    %6719 = vmatpush1.msra.mxu0 0.0
    %6720 = vmatprep.subr.mxu0 0.0
    %6721 = vmatpush1.msra.mxu0 0.0
    %6722 = vmatprep.subr.mxu0 0.0
    %6723 = vmatpush1.msra.mxu0 0.0
    %6724 = vmatprep.subr.mxu0 0.0
    %6725 = vmatpush1.msra.mxu0 0.0
    %6726 = vmatprep.subr.mxu0 0.0
    %6727 = vmatpush1.msra.mxu0 0.0
    %6728 = vmatprep.subr.mxu0 0.0
    %6729 = vmatpush1.msra.mxu0 0.0
    %6730 = vmatprep.subr.mxu0 0.0
    %6731 = vmatpush1.msra.mxu0 0.0
    %6732 = vmatprep.subr.mxu0 0.0
    %6733 = vmatpush1.msra.mxu0 0.0
    %6734 = vmatprep.subr.mxu0 0.0
    %6735 = vmatpush1.msra.mxu0 0.0
    %6736 = vmatprep.subr.mxu0 0.0
    %6737 = vmatpush1.msra.mxu0 0.0
    %6738 = vmatprep.subr.mxu0 0.0
    %6739 = vmatpush1.msra.mxu0 0.0
    %6740 = vmatprep.subr.mxu0 0.0
    %6741 = vmatpush1.msra.mxu0 0.0
    %6742 = vmatprep.subr.mxu0 0.0
    %6743 = vmatpush1.msra.mxu0 0.0
    %6744 = vmatprep.subr.mxu0 0.0
    %6745 = vmatpush1.msra.mxu0 0.0
    %6746 = vmatprep.subr.mxu0 0.0
    %6747 = vmatpush1.msra.mxu0 0.0
    %6748 = vmatprep.subr.mxu0 0.0
    %6749 = vmatpush1.msra.mxu0 0.0
    %6750 = vmatprep.subr.mxu0 0.0
    %6751 = vmatpush1.msra.mxu0 0.0
    %6752 = vmatprep.subr.mxu0 0.0
    %6753 = vmatpush1.msra.mxu0 0.0
    %6754 = vmatprep.subr.mxu0 0.0
    %6755 = vmatpush1.msra.mxu0 0.0
    %6756 = vmatprep.subr.mxu0 0.0
    %6757 = vmatpush1.msra.mxu0 0.0
    %6758 = vmatprep.subr.mxu0 0.0
    %6759 = vmatpush1.msra.mxu0 0.0
    %6760 = vmatprep.subr.mxu0 0.0
    %6761 = vmatpush1.msra.mxu0 0.0
    %6762 = vmatprep.subr.mxu0 0.0
    %6763 = vmatpush1.msra.mxu0 0.0
    %6764 = vmatprep.subr.mxu0 0.0
    %6765 = vmatpush1.msra.mxu0 0.0
    %6766 = vmatprep.subr.mxu0 0.0
    %6767 = vmatpush1.msra.mxu0 0.0
    %6768 = vmatprep.mubr.f32.mxu0 0.0
    %v6769 = vand.u32 %v6701, 4294901760
    %v6770 = vsub.f32 %v6701, %v6769
    %v6771 = vand.u32 %v6770, 4294901760
    %v6772 = vsub.f32 %v6770, %v6771
    %v6773 = vand.u32 %v6772, 4294901760
    %6774 = vmatmul.mubr.f32.gmra.mrb[0].mxu0 %v6773
    %v6775 = vpop.f32.mrb[0].mxu0
    %v6776 = vadd.f32 0.0, %v6775
    %v6777 = vpop.f32.mrb[0].mxu0
    %6778 = vdwg.mxu0
    %6779 = vmatprep.subr.mxu0 0.0
    %v6780 = vand.u32 %v6698, 4294901760
    %v6781 = vsub.f32 %v6698, %v6780
    %v6782 = vand.u32 %v6781, 4294901760
    %v6783 = vsub.f32 %v6781, %v6782
    %v6784 = vand.u32 %v6783, 4294901760
    %6785 = vmatpush1.msra.mxu0 %v6784
    %6786 = vmatprep.subr.mxu0 0.0
    %6787 = vmatpush1.msra.mxu0 0.0
    %6788 = vmatprep.subr.mxu0 0.0
    %6789 = vmatpush1.msra.mxu0 0.0
    %6790 = vmatprep.subr.mxu0 0.0
    %6791 = vmatpush1.msra.mxu0 0.0
    %6792 = vmatprep.subr.mxu0 0.0
    %6793 = vmatpush1.msra.mxu0 0.0
    %6794 = vmatprep.subr.mxu0 0.0
    %6795 = vmatpush1.msra.mxu0 0.0
    %6796 = vmatprep.subr.mxu0 0.0
    %6797 = vmatpush1.msra.mxu0 0.0
    %6798 = vmatprep.subr.mxu0 0.0
    %6799 = vmatpush1.msra.mxu0 0.0
    %6800 = vmatprep.subr.mxu0 0.0
    %6801 = vmatpush1.msra.mxu0 0.0
    %6802 = vmatprep.subr.mxu0 0.0
    %6803 = vmatpush1.msra.mxu0 0.0
    %6804 = vmatprep.subr.mxu0 0.0
    %6805 = vmatpush1.msra.mxu0 0.0
    %6806 = vmatprep.subr.mxu0 0.0
    %6807 = vmatpush1.msra.mxu0 0.0
    %6808 = vmatprep.subr.mxu0 0.0
    %6809 = vmatpush1.msra.mxu0 0.0
    %6810 = vmatprep.subr.mxu0 0.0
    %6811 = vmatpush1.msra.mxu0 0.0
    %6812 = vmatprep.subr.mxu0 0.0
    %6813 = vmatpush1.msra.mxu0 0.0
    %6814 = vmatprep.subr.mxu0 0.0
    %6815 = vmatpush1.msra.mxu0 0.0
    %6816 = vmatprep.subr.mxu0 0.0
    %6817 = vmatpush1.msra.mxu0 0.0
    %6818 = vmatprep.subr.mxu0 0.0
    %6819 = vmatpush1.msra.mxu0 0.0
    %6820 = vmatprep.subr.mxu0 0.0
    %6821 = vmatpush1.msra.mxu0 0.0
    %6822 = vmatprep.subr.mxu0 0.0
    %6823 = vmatpush1.msra.mxu0 0.0
    %6824 = vmatprep.subr.mxu0 0.0
    %6825 = vmatpush1.msra.mxu0 0.0
    %6826 = vmatprep.subr.mxu0 0.0
    %6827 = vmatpush1.msra.mxu0 0.0
    %6828 = vmatprep.subr.mxu0 0.0
    %6829 = vmatpush1.msra.mxu0 0.0
    %6830 = vmatprep.subr.mxu0 0.0
    %6831 = vmatpush1.msra.mxu0 0.0
    %6832 = vmatprep.subr.mxu0 0.0
    %6833 = vmatpush1.msra.mxu0 0.0
    %6834 = vmatprep.subr.mxu0 0.0
    %6835 = vmatpush1.msra.mxu0 0.0
    %6836 = vmatprep.subr.mxu0 0.0
    %6837 = vmatpush1.msra.mxu0 0.0
    %6838 = vmatprep.subr.mxu0 0.0
    %6839 = vmatpush1.msra.mxu0 0.0
    %6840 = vmatprep.subr.mxu0 0.0
    %6841 = vmatpush1.msra.mxu0 0.0
    %6842 = vmatprep.subr.mxu0 0.0
    %6843 = vmatpush1.msra.mxu0 0.0
    %6844 = vmatprep.subr.mxu0 0.0
    %6845 = vmatpush1.msra.mxu0 0.0
    %6846 = vmatprep.subr.mxu0 0.0
    %6847 = vmatpush1.msra.mxu0 0.0
    %6848 = vmatprep.mubr.f32.mxu0 0.0
    %v6849 = vand.u32 %v6701, 4294901760
    %6850 = vmatmul.mubr.f32.gmra.mrb[0].mxu0 %v6849
    %v6851 = vpop.f32.mrb[0].mxu0
    %v6852 = vadd.f32 %v6776, %v6851
    %v6853 = vpop.f32.mrb[0].mxu0
    %6854 = vdwg.mxu0
    %6855 = vmatprep.subr.mxu0 0.0
    %v6856 = vand.u32 %v6698, 4294901760
    %v6857 = vsub.f32 %v6698, %v6856
    %6858 = vmatpush1.msra.mxu0 %v6857
    %6859 = vmatprep.subr.mxu0 0.0
    %6860 = vmatpush1.msra.mxu0 0.0
    %6861 = vmatprep.subr.mxu0 0.0
    %6862 = vmatpush1.msra.mxu0 0.0
    %6863 = vmatprep.subr.mxu0 0.0
    %6864 = vmatpush1.msra.mxu0 0.0
    %6865 = vmatprep.subr.mxu0 0.0
    %6866 = vmatpush1.msra.mxu0 0.0
    %6867 = vmatprep.subr.mxu0 0.0
    %6868 = vmatpush1.msra.mxu0 0.0
    %6869 = vmatprep.subr.mxu0 0.0
    %6870 = vmatpush1.msra.mxu0 0.0
    %6871 = vmatprep.subr.mxu0 0.0
    %6872 = vmatpush1.msra.mxu0 0.0
    %6873 = vmatprep.subr.mxu0 0.0
    %6874 = vmatpush1.msra.mxu0 0.0
    %6875 = vmatprep.subr.mxu0 0.0
    %6876 = vmatpush1.msra.mxu0 0.0
    %6877 = vmatprep.subr.mxu0 0.0
    %6878 = vmatpush1.msra.mxu0 0.0
    %6879 = vmatprep.subr.mxu0 0.0
    %6880 = vmatpush1.msra.mxu0 0.0
    %6881 = vmatprep.subr.mxu0 0.0
    %6882 = vmatpush1.msra.mxu0 0.0
    %6883 = vmatprep.subr.mxu0 0.0
    %6884 = vmatpush1.msra.mxu0 0.0
    %6885 = vmatprep.subr.mxu0 0.0
    %6886 = vmatpush1.msra.mxu0 0.0
    %6887 = vmatprep.subr.mxu0 0.0
    %6888 = vmatpush1.msra.mxu0 0.0
    %6889 = vmatprep.subr.mxu0 0.0
    %6890 = vmatpush1.msra.mxu0 0.0
    %6891 = vmatprep.subr.mxu0 0.0
    %6892 = vmatpush1.msra.mxu0 0.0
    %6893 = vmatprep.subr.mxu0 0.0
    %6894 = vmatpush1.msra.mxu0 0.0
    %6895 = vmatprep.subr.mxu0 0.0
    %6896 = vmatpush1.msra.mxu0 0.0
    %6897 = vmatprep.subr.mxu0 0.0
    %6898 = vmatpush1.msra.mxu0 0.0
    %6899 = vmatprep.subr.mxu0 0.0
    %6900 = vmatpush1.msra.mxu0 0.0
    %6901 = vmatprep.subr.mxu0 0.0
    %6902 = vmatpush1.msra.mxu0 0.0
    %6903 = vmatprep.subr.mxu0 0.0
    %6904 = vmatpush1.msra.mxu0 0.0
    %6905 = vmatprep.subr.mxu0 0.0
    %6906 = vmatpush1.msra.mxu0 0.0
    %6907 = vmatprep.subr.mxu0 0.0
    %6908 = vmatpush1.msra.mxu0 0.0
    %6909 = vmatprep.subr.mxu0 0.0
    %6910 = vmatpush1.msra.mxu0 0.0
    %6911 = vmatprep.subr.mxu0 0.0
    %6912 = vmatpush1.msra.mxu0 0.0
    %6913 = vmatprep.subr.mxu0 0.0
    %6914 = vmatpush1.msra.mxu0 0.0
    %6915 = vmatprep.subr.mxu0 0.0
    %6916 = vmatpush1.msra.mxu0 0.0
    %6917 = vmatprep.subr.mxu0 0.0
    %6918 = vmatpush1.msra.mxu0 0.0
    %6919 = vmatprep.subr.mxu0 0.0
    %6920 = vmatpush1.msra.mxu0 0.0
    %6921 = vmatprep.mubr.f32.mxu0 0.0
    %v6922 = vand.u32 %v6701, 4294901760
    %v6923 = vsub.f32 %v6701, %v6922
    %6924 = vmatmul.mubr.f32.gmra.mrb[0].mxu0 %v6923
    %v6925 = vpop.f32.mrb[0].mxu0
    %v6926 = vadd.f32 %v6852, %v6925
    %v6927 = vpop.f32.mrb[0].mxu0
    %6928 = vdwg.mxu0
    %6929 = vmatprep.subr.mxu0 0.0
    %v6930 = vand.u32 %v6698, 4294901760
    %6931 = vmatpush1.msra.mxu0 %v6930
    %6932 = vmatprep.subr.mxu0 0.0
    %6933 = vmatpush1.msra.mxu0 0.0
    %6934 = vmatprep.subr.mxu0 0.0
    %6935 = vmatpush1.msra.mxu0 0.0
    %6936 = vmatprep.subr.mxu0 0.0
    %6937 = vmatpush1.msra.mxu0 0.0
    %6938 = vmatprep.subr.mxu0 0.0
    %6939 = vmatpush1.msra.mxu0 0.0
    %6940 = vmatprep.subr.mxu0 0.0
    %6941 = vmatpush1.msra.mxu0 0.0
    %6942 = vmatprep.subr.mxu0 0.0
    %6943 = vmatpush1.msra.mxu0 0.0
    %6944 = vmatprep.subr.mxu0 0.0
    %6945 = vmatpush1.msra.mxu0 0.0
    %6946 = vmatprep.subr.mxu0 0.0
    %6947 = vmatpush1.msra.mxu0 0.0
    %6948 = vmatprep.subr.mxu0 0.0
    %6949 = vmatpush1.msra.mxu0 0.0
    %6950 = vmatprep.subr.mxu0 0.0
    %6951 = vmatpush1.msra.mxu0 0.0
    %6952 = vmatprep.subr.mxu0 0.0
    %6953 = vmatpush1.msra.mxu0 0.0
    %6954 = vmatprep.subr.mxu0 0.0
    %6955 = vmatpush1.msra.mxu0 0.0
    %6956 = vmatprep.subr.mxu0 0.0
    %6957 = vmatpush1.msra.mxu0 0.0
    %6958 = vmatprep.subr.mxu0 0.0
    %6959 = vmatpush1.msra.mxu0 0.0
    %6960 = vmatprep.subr.mxu0 0.0
    %6961 = vmatpush1.msra.mxu0 0.0
    %6962 = vmatprep.subr.mxu0 0.0
    %6963 = vmatpush1.msra.mxu0 0.0
    %6964 = vmatprep.subr.mxu0 0.0
    %6965 = vmatpush1.msra.mxu0 0.0
    %6966 = vmatprep.subr.mxu0 0.0
    %6967 = vmatpush1.msra.mxu0 0.0
    %6968 = vmatprep.subr.mxu0 0.0
    %6969 = vmatpush1.msra.mxu0 0.0
    %6970 = vmatprep.subr.mxu0 0.0
    %6971 = vmatpush1.msra.mxu0 0.0
    %6972 = vmatprep.subr.mxu0 0.0
    %6973 = vmatpush1.msra.mxu0 0.0
    %6974 = vmatprep.subr.mxu0 0.0
    %6975 = vmatpush1.msra.mxu0 0.0
    %6976 = vmatprep.subr.mxu0 0.0
    %6977 = vmatpush1.msra.mxu0 0.0
    %6978 = vmatprep.subr.mxu0 0.0
    %6979 = vmatpush1.msra.mxu0 0.0
    %6980 = vmatprep.subr.mxu0 0.0
    %6981 = vmatpush1.msra.mxu0 0.0
    %6982 = vmatprep.subr.mxu0 0.0
    %6983 = vmatpush1.msra.mxu0 0.0
    %6984 = vmatprep.subr.mxu0 0.0
    %6985 = vmatpush1.msra.mxu0 0.0
    %6986 = vmatprep.subr.mxu0 0.0
    %6987 = vmatpush1.msra.mxu0 0.0
    %6988 = vmatprep.subr.mxu0 0.0
    %6989 = vmatpush1.msra.mxu0 0.0
    %6990 = vmatprep.subr.mxu0 0.0
    %6991 = vmatpush1.msra.mxu0 0.0
    %6992 = vmatprep.subr.mxu0 0.0
    %6993 = vmatpush1.msra.mxu0 0.0
    %6994 = vmatprep.mubr.f32.mxu0 0.0
    %v6995 = vand.u32 %v6701, 4294901760
    %v6996 = vsub.f32 %v6701, %v6995
    %v6997 = vand.u32 %v6996, 4294901760
    %6998 = vmatmul.mubr.f32.gmra.mrb[0].mxu0 %v6997
    %v6999 = vpop.f32.mrb[0].mxu0
    %v7000 = vadd.f32 %v6926, %v6999
    %v7001 = vpop.f32.mrb[0].mxu0
    %7002 = vdwg.mxu0
    %7003 = vmatprep.subr.mxu0 0.0
    %v7004 = vand.u32 %v6698, 4294901760
    %v7005 = vsub.f32 %v6698, %v7004
    %v7006 = vand.u32 %v7005, 4294901760
    %7007 = vmatpush1.msra.mxu0 %v7006
    %7008 = vmatprep.subr.mxu0 0.0
    %7009 = vmatpush1.msra.mxu0 0.0
    %7010 = vmatprep.subr.mxu0 0.0
    %7011 = vmatpush1.msra.mxu0 0.0
    %7012 = vmatprep.subr.mxu0 0.0
    %7013 = vmatpush1.msra.mxu0 0.0
    %7014 = vmatprep.subr.mxu0 0.0
    %7015 = vmatpush1.msra.mxu0 0.0
    %7016 = vmatprep.subr.mxu0 0.0
    %7017 = vmatpush1.msra.mxu0 0.0
    %7018 = vmatprep.subr.mxu0 0.0
    %7019 = vmatpush1.msra.mxu0 0.0
    %7020 = vmatprep.subr.mxu0 0.0
    %7021 = vmatpush1.msra.mxu0 0.0
    %7022 = vmatprep.subr.mxu0 0.0
    %7023 = vmatpush1.msra.mxu0 0.0
    %7024 = vmatprep.subr.mxu0 0.0
    %7025 = vmatpush1.msra.mxu0 0.0
    %7026 = vmatprep.subr.mxu0 0.0
    %7027 = vmatpush1.msra.mxu0 0.0
    %7028 = vmatprep.subr.mxu0 0.0
    %7029 = vmatpush1.msra.mxu0 0.0
    %7030 = vmatprep.subr.mxu0 0.0
    %7031 = vmatpush1.msra.mxu0 0.0
    %7032 = vmatprep.subr.mxu0 0.0
    %7033 = vmatpush1.msra.mxu0 0.0
    %7034 = vmatprep.subr.mxu0 0.0
    %7035 = vmatpush1.msra.mxu0 0.0
    %7036 = vmatprep.subr.mxu0 0.0
    %7037 = vmatpush1.msra.mxu0 0.0
    %7038 = vmatprep.subr.mxu0 0.0
    %7039 = vmatpush1.msra.mxu0 0.0
    %7040 = vmatprep.subr.mxu0 0.0
    %7041 = vmatpush1.msra.mxu0 0.0
    %7042 = vmatprep.subr.mxu0 0.0
    %7043 = vmatpush1.msra.mxu0 0.0
    %7044 = vmatprep.subr.mxu0 0.0
    %7045 = vmatpush1.msra.mxu0 0.0
    %7046 = vmatprep.subr.mxu0 0.0
    %7047 = vmatpush1.msra.mxu0 0.0
    %7048 = vmatprep.subr.mxu0 0.0
    %7049 = vmatpush1.msra.mxu0 0.0
    %7050 = vmatprep.subr.mxu0 0.0
    %7051 = vmatpush1.msra.mxu0 0.0
    %7052 = vmatprep.subr.mxu0 0.0
    %7053 = vmatpush1.msra.mxu0 0.0
    %7054 = vmatprep.subr.mxu0 0.0
    %7055 = vmatpush1.msra.mxu0 0.0
    %7056 = vmatprep.subr.mxu0 0.0
    %7057 = vmatpush1.msra.mxu0 0.0
    %7058 = vmatprep.subr.mxu0 0.0
    %7059 = vmatpush1.msra.mxu0 0.0
    %7060 = vmatprep.subr.mxu0 0.0
    %7061 = vmatpush1.msra.mxu0 0.0
    %7062 = vmatprep.subr.mxu0 0.0
    %7063 = vmatpush1.msra.mxu0 0.0
    %7064 = vmatprep.subr.mxu0 0.0
    %7065 = vmatpush1.msra.mxu0 0.0
    %7066 = vmatprep.subr.mxu0 0.0
    %7067 = vmatpush1.msra.mxu0 0.0
    %7068 = vmatprep.subr.mxu0 0.0
    %7069 = vmatpush1.msra.mxu0 0.0
    %7070 = vmatprep.mubr.f32.mxu0 0.0
    %v7071 = vand.u32 %v6701, 4294901760
    %7072 = vmatmul.mubr.f32.gmra.mrb[0].mxu0 %v7071
    %v7073 = vpop.f32.mrb[0].mxu0
    %v7074 = vadd.f32 %v7000, %v7073
    %v7075 = vpop.f32.mrb[0].mxu0
    %7076 = vdwg.mxu0
    %7077 = vmatprep.subr.mxu0 0.0
    %v7078 = vand.u32 %v6698, 4294901760
    %7079 = vmatpush1.msra.mxu0 %v7078
    %7080 = vmatprep.subr.mxu0 0.0
    %7081 = vmatpush1.msra.mxu0 0.0
    %7082 = vmatprep.subr.mxu0 0.0
    %7083 = vmatpush1.msra.mxu0 0.0
    %7084 = vmatprep.subr.mxu0 0.0
    %7085 = vmatpush1.msra.mxu0 0.0
    %7086 = vmatprep.subr.mxu0 0.0
    %7087 = vmatpush1.msra.mxu0 0.0
    %7088 = vmatprep.subr.mxu0 0.0
    %7089 = vmatpush1.msra.mxu0 0.0
    %7090 = vmatprep.subr.mxu0 0.0
    %7091 = vmatpush1.msra.mxu0 0.0
    %7092 = vmatprep.subr.mxu0 0.0
    %7093 = vmatpush1.msra.mxu0 0.0
    %7094 = vmatprep.subr.mxu0 0.0
    %7095 = vmatpush1.msra.mxu0 0.0
    %7096 = vmatprep.subr.mxu0 0.0
    %7097 = vmatpush1.msra.mxu0 0.0
    %7098 = vmatprep.subr.mxu0 0.0
    %7099 = vmatpush1.msra.mxu0 0.0
    %7100 = vmatprep.subr.mxu0 0.0
    %7101 = vmatpush1.msra.mxu0 0.0
    %7102 = vmatprep.subr.mxu0 0.0
    %7103 = vmatpush1.msra.mxu0 0.0
    %7104 = vmatprep.subr.mxu0 0.0
    %7105 = vmatpush1.msra.mxu0 0.0
    %7106 = vmatprep.subr.mxu0 0.0
    %7107 = vmatpush1.msra.mxu0 0.0
    %7108 = vmatprep.subr.mxu0 0.0
    %7109 = vmatpush1.msra.mxu0 0.0
    %7110 = vmatprep.subr.mxu0 0.0
    %7111 = vmatpush1.msra.mxu0 0.0
    %7112 = vmatprep.subr.mxu0 0.0
    %7113 = vmatpush1.msra.mxu0 0.0
    %7114 = vmatprep.subr.mxu0 0.0
    %7115 = vmatpush1.msra.mxu0 0.0
    %7116 = vmatprep.subr.mxu0 0.0
    %7117 = vmatpush1.msra.mxu0 0.0
    %7118 = vmatprep.subr.mxu0 0.0
    %7119 = vmatpush1.msra.mxu0 0.0
    %7120 = vmatprep.subr.mxu0 0.0
    %7121 = vmatpush1.msra.mxu0 0.0
    %7122 = vmatprep.subr.mxu0 0.0
    %7123 = vmatpush1.msra.mxu0 0.0
    %7124 = vmatprep.subr.mxu0 0.0
    %7125 = vmatpush1.msra.mxu0 0.0
    %7126 = vmatprep.subr.mxu0 0.0
    %7127 = vmatpush1.msra.mxu0 0.0
    %7128 = vmatprep.subr.mxu0 0.0
    %7129 = vmatpush1.msra.mxu0 0.0
    %7130 = vmatprep.subr.mxu0 0.0
    %7131 = vmatpush1.msra.mxu0 0.0
    %7132 = vmatprep.subr.mxu0 0.0
    %7133 = vmatpush1.msra.mxu0 0.0
    %7134 = vmatprep.subr.mxu0 0.0
    %7135 = vmatpush1.msra.mxu0 0.0
    %7136 = vmatprep.subr.mxu0 0.0
    %7137 = vmatpush1.msra.mxu0 0.0
    %7138 = vmatprep.subr.mxu0 0.0
    %7139 = vmatpush1.msra.mxu0 0.0
    %7140 = vmatprep.subr.mxu0 0.0
    %7141 = vmatpush1.msra.mxu0 0.0
    %7142 = vmatprep.mubr.f32.mxu0 0.0
    %v7143 = vand.u32 %v6701, 4294901760
    %7144 = vmatmul.mubr.f32.gmra.mrb[0].mxu0 %v7143
    %v7145 = vpop.f32.mrb[0].mxu0
    %v7146 = vadd.f32 %v7074, %v7145
    %v7147 = vpop.f32.mrb[0].mxu0
    %7148 = vdwg.mxu0
    %7149 = vrot.lane.b32.xlu0 %v667, 104
    %v7150 = vpop.permute.xlu0 %7149
    %7151 = vrot.lane.b32.xlu0 %v667, 72
    %v7152 = vpop.permute.xlu0 %7151
    %v7153 = vsel %vm683, %v7150, 0
    %v7155 = vsel %vm683, %v7152, 0
    %7157 = vmatprep.subr.mxu0 0.0
    %v7158 = vand.u32 %v7155, 4294901760
    %7159 = vmatpush1.xpose.msra.mxu0 %v7158
    %7160 = vmatprep.subr.mxu0 0.0
    %7161 = vmatpush1.xpose.msra.mxu0 0.0
    %7162 = vmatprep.subr.mxu0 0.0
    %7163 = vmatpush1.xpose.msra.mxu0 0.0
    %7164 = vmatprep.subr.mxu0 0.0
    %7165 = vmatpush1.xpose.msra.mxu0 0.0
    %7166 = vmatprep.subr.mxu0 0.0
    %7167 = vmatpush1.xpose.msra.mxu0 0.0
    %7168 = vmatprep.subr.mxu0 0.0
    %7169 = vmatpush1.xpose.msra.mxu0 0.0
    %7170 = vmatprep.subr.mxu0 0.0
    %7171 = vmatpush1.xpose.msra.mxu0 0.0
    %7172 = vmatprep.subr.mxu0 0.0
    %7173 = vmatpush1.xpose.msra.mxu0 0.0
    %7174 = vmatprep.subr.mxu0 0.0
    %7175 = vmatpush1.xpose.msra.mxu0 0.0
    %7176 = vmatprep.subr.mxu0 0.0
    %7177 = vmatpush1.xpose.msra.mxu0 0.0
    %7178 = vmatprep.subr.mxu0 0.0
    %7179 = vmatpush1.xpose.msra.mxu0 0.0
    %7180 = vmatprep.subr.mxu0 0.0
    %7181 = vmatpush1.xpose.msra.mxu0 0.0
    %7182 = vmatprep.subr.mxu0 0.0
    %7183 = vmatpush1.xpose.msra.mxu0 0.0
    %7184 = vmatprep.subr.mxu0 0.0
    %7185 = vmatpush1.xpose.msra.mxu0 0.0
    %7186 = vmatprep.subr.mxu0 0.0
    %7187 = vmatpush1.xpose.msra.mxu0 0.0
    %7188 = vmatprep.subr.mxu0 0.0
    %7189 = vmatpush1.xpose.msra.mxu0 0.0
    %7190 = vmatprep.subr.mxu0 0.0
    %7191 = vmatpush1.xpose.msra.mxu0 0.0
    %7192 = vmatprep.subr.mxu0 0.0
    %7193 = vmatpush1.xpose.msra.mxu0 0.0
    %7194 = vmatprep.subr.mxu0 0.0
    %7195 = vmatpush1.xpose.msra.mxu0 0.0
    %7196 = vmatprep.subr.mxu0 0.0
    %7197 = vmatpush1.xpose.msra.mxu0 0.0
    %7198 = vmatprep.subr.mxu0 0.0
    %7199 = vmatpush1.xpose.msra.mxu0 0.0
    %7200 = vmatprep.subr.mxu0 0.0
    %7201 = vmatpush1.xpose.msra.mxu0 0.0
    %7202 = vmatprep.subr.mxu0 0.0
    %7203 = vmatpush1.xpose.msra.mxu0 0.0
    %7204 = vmatprep.subr.mxu0 0.0
    %7205 = vmatpush1.xpose.msra.mxu0 0.0
    %7206 = vmatprep.subr.mxu0 0.0
    %7207 = vmatpush1.xpose.msra.mxu0 0.0
    %7208 = vmatprep.subr.mxu0 0.0
    %7209 = vmatpush1.xpose.msra.mxu0 0.0
    %7210 = vmatprep.subr.mxu0 0.0
    %7211 = vmatpush1.xpose.msra.mxu0 0.0
    %7212 = vmatprep.subr.mxu0 0.0
    %7213 = vmatpush1.xpose.msra.mxu0 0.0
    %7214 = vmatprep.subr.mxu0 0.0
    %7215 = vmatpush1.xpose.msra.mxu0 0.0
    %7216 = vmatprep.subr.mxu0 0.0
    %7217 = vmatpush1.xpose.msra.mxu0 0.0
    %7218 = vmatprep.subr.mxu0 0.0
    %7219 = vmatpush1.xpose.msra.mxu0 0.0
    %7220 = vmatprep.subr.mxu0 0.0
    %7221 = vmatpush1.xpose.msra.mxu0 0.0
    %7222 = vmatprep.mubr.f32.mxu0 0.0
    %v7223 = vand.u32 %v7153, 4294901760
    %v7224 = vsub.f32 %v7153, %v7223
    %v7225 = vand.u32 %v7224, 4294901760
    %v7226 = vsub.f32 %v7224, %v7225
    %v7227 = vand.u32 %v7226, 4294901760
    %7228 = vmatmul.mubr.f32.gmra.mrb[0].mxu0 %v7227
    %v7229 = vpop.f32.mrb[0].mxu0
    %v7230 = vadd.f32 0.0, %v7229
    %v7231 = vpop.f32.mrb[0].mxu0
    %7232 = vdwg.mxu0
    %7233 = vmatprep.subr.mxu0 0.0
    %v7234 = vand.u32 %v7155, 4294901760
    %v7235 = vsub.f32 %v7155, %v7234
    %v7236 = vand.u32 %v7235, 4294901760
    %v7237 = vsub.f32 %v7235, %v7236
    %v7238 = vand.u32 %v7237, 4294901760
    %7239 = vmatpush1.xpose.msra.mxu0 %v7238
    %7240 = vmatprep.subr.mxu0 0.0
    %7241 = vmatpush1.xpose.msra.mxu0 0.0
    %7242 = vmatprep.subr.mxu0 0.0
    %7243 = vmatpush1.xpose.msra.mxu0 0.0
    %7244 = vmatprep.subr.mxu0 0.0
    %7245 = vmatpush1.xpose.msra.mxu0 0.0
    %7246 = vmatprep.subr.mxu0 0.0
    %7247 = vmatpush1.xpose.msra.mxu0 0.0
    %7248 = vmatprep.subr.mxu0 0.0
    %7249 = vmatpush1.xpose.msra.mxu0 0.0
    %7250 = vmatprep.subr.mxu0 0.0
    %7251 = vmatpush1.xpose.msra.mxu0 0.0
    %7252 = vmatprep.subr.mxu0 0.0
    %7253 = vmatpush1.xpose.msra.mxu0 0.0
    %7254 = vmatprep.subr.mxu0 0.0
    %7255 = vmatpush1.xpose.msra.mxu0 0.0
    %7256 = vmatprep.subr.mxu0 0.0
    %7257 = vmatpush1.xpose.msra.mxu0 0.0
    %7258 = vmatprep.subr.mxu0 0.0
    %7259 = vmatpush1.xpose.msra.mxu0 0.0
    %7260 = vmatprep.subr.mxu0 0.0
    %7261 = vmatpush1.xpose.msra.mxu0 0.0
    %7262 = vmatprep.subr.mxu0 0.0
    %7263 = vmatpush1.xpose.msra.mxu0 0.0
    %7264 = vmatprep.subr.mxu0 0.0
    %7265 = vmatpush1.xpose.msra.mxu0 0.0
    %7266 = vmatprep.subr.mxu0 0.0
    %7267 = vmatpush1.xpose.msra.mxu0 0.0
    %7268 = vmatprep.subr.mxu0 0.0
    %7269 = vmatpush1.xpose.msra.mxu0 0.0
    %7270 = vmatprep.subr.mxu0 0.0
    %7271 = vmatpush1.xpose.msra.mxu0 0.0
    %7272 = vmatprep.subr.mxu0 0.0
    %7273 = vmatpush1.xpose.msra.mxu0 0.0
    %7274 = vmatprep.subr.mxu0 0.0
    %7275 = vmatpush1.xpose.msra.mxu0 0.0
    %7276 = vmatprep.subr.mxu0 0.0
    %7277 = vmatpush1.xpose.msra.mxu0 0.0
    %7278 = vmatprep.subr.mxu0 0.0
    %7279 = vmatpush1.xpose.msra.mxu0 0.0
    %7280 = vmatprep.subr.mxu0 0.0
    %7281 = vmatpush1.xpose.msra.mxu0 0.0
    %7282 = vmatprep.subr.mxu0 0.0
    %7283 = vmatpush1.xpose.msra.mxu0 0.0
    %7284 = vmatprep.subr.mxu0 0.0
    %7285 = vmatpush1.xpose.msra.mxu0 0.0
    %7286 = vmatprep.subr.mxu0 0.0
    %7287 = vmatpush1.xpose.msra.mxu0 0.0
    %7288 = vmatprep.subr.mxu0 0.0
    %7289 = vmatpush1.xpose.msra.mxu0 0.0
    %7290 = vmatprep.subr.mxu0 0.0
    %7291 = vmatpush1.xpose.msra.mxu0 0.0
    %7292 = vmatprep.subr.mxu0 0.0
    %7293 = vmatpush1.xpose.msra.mxu0 0.0
    %7294 = vmatprep.subr.mxu0 0.0
    %7295 = vmatpush1.xpose.msra.mxu0 0.0
    %7296 = vmatprep.subr.mxu0 0.0
    %7297 = vmatpush1.xpose.msra.mxu0 0.0
    %7298 = vmatprep.subr.mxu0 0.0
    %7299 = vmatpush1.xpose.msra.mxu0 0.0
    %7300 = vmatprep.subr.mxu0 0.0
    %7301 = vmatpush1.xpose.msra.mxu0 0.0
    %7302 = vmatprep.mubr.f32.mxu0 0.0
    %v7303 = vand.u32 %v7153, 4294901760
    %7304 = vmatmul.mubr.f32.gmra.mrb[0].mxu0 %v7303
    %v7305 = vpop.f32.mrb[0].mxu0
    %v7306 = vadd.f32 %v7230, %v7305
    %v7307 = vpop.f32.mrb[0].mxu0
    %7308 = vdwg.mxu0
    %7309 = vmatprep.subr.mxu0 0.0
    %v7310 = vand.u32 %v7155, 4294901760
    %v7311 = vsub.f32 %v7155, %v7310
    %7312 = vmatpush1.xpose.msra.mxu0 %v7311
    %7313 = vmatprep.subr.mxu0 0.0
    %7314 = vmatpush1.xpose.msra.mxu0 0.0
    %7315 = vmatprep.subr.mxu0 0.0
    %7316 = vmatpush1.xpose.msra.mxu0 0.0
    %7317 = vmatprep.subr.mxu0 0.0
    %7318 = vmatpush1.xpose.msra.mxu0 0.0
    %7319 = vmatprep.subr.mxu0 0.0
    %7320 = vmatpush1.xpose.msra.mxu0 0.0
    %7321 = vmatprep.subr.mxu0 0.0
    %7322 = vmatpush1.xpose.msra.mxu0 0.0
    %7323 = vmatprep.subr.mxu0 0.0
    %7324 = vmatpush1.xpose.msra.mxu0 0.0
    %7325 = vmatprep.subr.mxu0 0.0
    %7326 = vmatpush1.xpose.msra.mxu0 0.0
    %7327 = vmatprep.subr.mxu0 0.0
    %7328 = vmatpush1.xpose.msra.mxu0 0.0
    %7329 = vmatprep.subr.mxu0 0.0
    %7330 = vmatpush1.xpose.msra.mxu0 0.0
    %7331 = vmatprep.subr.mxu0 0.0
    %7332 = vmatpush1.xpose.msra.mxu0 0.0
    %7333 = vmatprep.subr.mxu0 0.0
    %7334 = vmatpush1.xpose.msra.mxu0 0.0
    %7335 = vmatprep.subr.mxu0 0.0
    %7336 = vmatpush1.xpose.msra.mxu0 0.0
    %7337 = vmatprep.subr.mxu0 0.0
    %7338 = vmatpush1.xpose.msra.mxu0 0.0
    %7339 = vmatprep.subr.mxu0 0.0
    %7340 = vmatpush1.xpose.msra.mxu0 0.0
    %7341 = vmatprep.subr.mxu0 0.0
    %7342 = vmatpush1.xpose.msra.mxu0 0.0
    %7343 = vmatprep.subr.mxu0 0.0
    %7344 = vmatpush1.xpose.msra.mxu0 0.0
    %7345 = vmatprep.subr.mxu0 0.0
    %7346 = vmatpush1.xpose.msra.mxu0 0.0
    %7347 = vmatprep.subr.mxu0 0.0
    %7348 = vmatpush1.xpose.msra.mxu0 0.0
    %7349 = vmatprep.subr.mxu0 0.0
    %7350 = vmatpush1.xpose.msra.mxu0 0.0
    %7351 = vmatprep.subr.mxu0 0.0
    %7352 = vmatpush1.xpose.msra.mxu0 0.0
    %7353 = vmatprep.subr.mxu0 0.0
    %7354 = vmatpush1.xpose.msra.mxu0 0.0
    %7355 = vmatprep.subr.mxu0 0.0
    %7356 = vmatpush1.xpose.msra.mxu0 0.0
    %7357 = vmatprep.subr.mxu0 0.0
    %7358 = vmatpush1.xpose.msra.mxu0 0.0
    %7359 = vmatprep.subr.mxu0 0.0
    %7360 = vmatpush1.xpose.msra.mxu0 0.0
    %7361 = vmatprep.subr.mxu0 0.0
    %7362 = vmatpush1.xpose.msra.mxu0 0.0
    %7363 = vmatprep.subr.mxu0 0.0
    %7364 = vmatpush1.xpose.msra.mxu0 0.0
    %7365 = vmatprep.subr.mxu0 0.0
    %7366 = vmatpush1.xpose.msra.mxu0 0.0
    %7367 = vmatprep.subr.mxu0 0.0
    %7368 = vmatpush1.xpose.msra.mxu0 0.0
    %7369 = vmatprep.subr.mxu0 0.0
    %7370 = vmatpush1.xpose.msra.mxu0 0.0
    %7371 = vmatprep.subr.mxu0 0.0
    %7372 = vmatpush1.xpose.msra.mxu0 0.0
    %7373 = vmatprep.subr.mxu0 0.0
    %7374 = vmatpush1.xpose.msra.mxu0 0.0
    %7375 = vmatprep.mubr.f32.mxu0 0.0
    %v7376 = vand.u32 %v7153, 4294901760
    %v7377 = vsub.f32 %v7153, %v7376
    %7378 = vmatmul.mubr.f32.gmra.mrb[0].mxu0 %v7377
    %v7379 = vpop.f32.mrb[0].mxu0
    %v7380 = vadd.f32 %v7306, %v7379
    %v7381 = vpop.f32.mrb[0].mxu0
    %7382 = vdwg.mxu0
    %7383 = vmatprep.subr.mxu0 0.0
    %v7384 = vand.u32 %v7155, 4294901760
    %7385 = vmatpush1.xpose.msra.mxu0 %v7384
    %7386 = vmatprep.subr.mxu0 0.0
    %7387 = vmatpush1.xpose.msra.mxu0 0.0
    %7388 = vmatprep.subr.mxu0 0.0
    %7389 = vmatpush1.xpose.msra.mxu0 0.0
    %7390 = vmatprep.subr.mxu0 0.0
    %7391 = vmatpush1.xpose.msra.mxu0 0.0
    %7392 = vmatprep.subr.mxu0 0.0
    %7393 = vmatpush1.xpose.msra.mxu0 0.0
    %7394 = vmatprep.subr.mxu0 0.0
    %7395 = vmatpush1.xpose.msra.mxu0 0.0
    %7396 = vmatprep.subr.mxu0 0.0
    %7397 = vmatpush1.xpose.msra.mxu0 0.0
    %7398 = vmatprep.subr.mxu0 0.0
    %7399 = vmatpush1.xpose.msra.mxu0 0.0
    %7400 = vmatprep.subr.mxu0 0.0
    %7401 = vmatpush1.xpose.msra.mxu0 0.0
    %7402 = vmatprep.subr.mxu0 0.0
    %7403 = vmatpush1.xpose.msra.mxu0 0.0
    %7404 = vmatprep.subr.mxu0 0.0
    %7405 = vmatpush1.xpose.msra.mxu0 0.0
    %7406 = vmatprep.subr.mxu0 0.0
    %7407 = vmatpush1.xpose.msra.mxu0 0.0
    %7408 = vmatprep.subr.mxu0 0.0
    %7409 = vmatpush1.xpose.msra.mxu0 0.0
    %7410 = vmatprep.subr.mxu0 0.0
    %7411 = vmatpush1.xpose.msra.mxu0 0.0
    %7412 = vmatprep.subr.mxu0 0.0
    %7413 = vmatpush1.xpose.msra.mxu0 0.0
    %7414 = vmatprep.subr.mxu0 0.0
    %7415 = vmatpush1.xpose.msra.mxu0 0.0
    %7416 = vmatprep.subr.mxu0 0.0
    %7417 = vmatpush1.xpose.msra.mxu0 0.0
    %7418 = vmatprep.subr.mxu0 0.0
    %7419 = vmatpush1.xpose.msra.mxu0 0.0
    %7420 = vmatprep.subr.mxu0 0.0
    %7421 = vmatpush1.xpose.msra.mxu0 0.0
    %7422 = vmatprep.subr.mxu0 0.0
    %7423 = vmatpush1.xpose.msra.mxu0 0.0
    %7424 = vmatprep.subr.mxu0 0.0
    %7425 = vmatpush1.xpose.msra.mxu0 0.0
    %7426 = vmatprep.subr.mxu0 0.0
    %7427 = vmatpush1.xpose.msra.mxu0 0.0
    %7428 = vmatprep.subr.mxu0 0.0
    %7429 = vmatpush1.xpose.msra.mxu0 0.0
    %7430 = vmatprep.subr.mxu0 0.0
    %7431 = vmatpush1.xpose.msra.mxu0 0.0
    %7432 = vmatprep.subr.mxu0 0.0
    %7433 = vmatpush1.xpose.msra.mxu0 0.0
    %7434 = vmatprep.subr.mxu0 0.0
    %7435 = vmatpush1.xpose.msra.mxu0 0.0
    %7436 = vmatprep.subr.mxu0 0.0
    %7437 = vmatpush1.xpose.msra.mxu0 0.0
    %7438 = vmatprep.subr.mxu0 0.0
    %7439 = vmatpush1.xpose.msra.mxu0 0.0
    %7440 = vmatprep.subr.mxu0 0.0
    %7441 = vmatpush1.xpose.msra.mxu0 0.0
    %7442 = vmatprep.subr.mxu0 0.0
    %7443 = vmatpush1.xpose.msra.mxu0 0.0
    %7444 = vmatprep.subr.mxu0 0.0
    %7445 = vmatpush1.xpose.msra.mxu0 0.0
    %7446 = vmatprep.subr.mxu0 0.0
    %7447 = vmatpush1.xpose.msra.mxu0 0.0
    %7448 = vmatprep.mubr.f32.mxu0 0.0
    %v7449 = vand.u32 %v7153, 4294901760
    %v7450 = vsub.f32 %v7153, %v7449
    %v7451 = vand.u32 %v7450, 4294901760
    %7452 = vmatmul.mubr.f32.gmra.mrb[0].mxu0 %v7451
    %v7453 = vpop.f32.mrb[0].mxu0
    %v7454 = vadd.f32 %v7380, %v7453
    %v7455 = vpop.f32.mrb[0].mxu0
    %7456 = vdwg.mxu0
    %7457 = vmatprep.subr.mxu0 0.0
    %v7458 = vand.u32 %v7155, 4294901760
    %v7459 = vsub.f32 %v7155, %v7458
    %v7460 = vand.u32 %v7459, 4294901760
    %7461 = vmatpush1.xpose.msra.mxu0 %v7460
    %7462 = vmatprep.subr.mxu0 0.0
    %7463 = vmatpush1.xpose.msra.mxu0 0.0
    %7464 = vmatprep.subr.mxu0 0.0
    %7465 = vmatpush1.xpose.msra.mxu0 0.0
    %7466 = vmatprep.subr.mxu0 0.0
    %7467 = vmatpush1.xpose.msra.mxu0 0.0
    %7468 = vmatprep.subr.mxu0 0.0
    %7469 = vmatpush1.xpose.msra.mxu0 0.0
    %7470 = vmatprep.subr.mxu0 0.0
    %7471 = vmatpush1.xpose.msra.mxu0 0.0
    %7472 = vmatprep.subr.mxu0 0.0
    %7473 = vmatpush1.xpose.msra.mxu0 0.0
    %7474 = vmatprep.subr.mxu0 0.0
    %7475 = vmatpush1.xpose.msra.mxu0 0.0
    %7476 = vmatprep.subr.mxu0 0.0
    %7477 = vmatpush1.xpose.msra.mxu0 0.0
    %7478 = vmatprep.subr.mxu0 0.0
    %7479 = vmatpush1.xpose.msra.mxu0 0.0
    %7480 = vmatprep.subr.mxu0 0.0
    %7481 = vmatpush1.xpose.msra.mxu0 0.0
    %7482 = vmatprep.subr.mxu0 0.0
    %7483 = vmatpush1.xpose.msra.mxu0 0.0
    %7484 = vmatprep.subr.mxu0 0.0
    %7485 = vmatpush1.xpose.msra.mxu0 0.0
    %7486 = vmatprep.subr.mxu0 0.0
    %7487 = vmatpush1.xpose.msra.mxu0 0.0
    %7488 = vmatprep.subr.mxu0 0.0
    %7489 = vmatpush1.xpose.msra.mxu0 0.0
    %7490 = vmatprep.subr.mxu0 0.0
    %7491 = vmatpush1.xpose.msra.mxu0 0.0
    %7492 = vmatprep.subr.mxu0 0.0
    %7493 = vmatpush1.xpose.msra.mxu0 0.0
    %7494 = vmatprep.subr.mxu0 0.0
    %7495 = vmatpush1.xpose.msra.mxu0 0.0
    %7496 = vmatprep.subr.mxu0 0.0
    %7497 = vmatpush1.xpose.msra.mxu0 0.0
    %7498 = vmatprep.subr.mxu0 0.0
    %7499 = vmatpush1.xpose.msra.mxu0 0.0
    %7500 = vmatprep.subr.mxu0 0.0
    %7501 = vmatpush1.xpose.msra.mxu0 0.0
    %7502 = vmatprep.subr.mxu0 0.0
    %7503 = vmatpush1.xpose.msra.mxu0 0.0
    %7504 = vmatprep.subr.mxu0 0.0
    %7505 = vmatpush1.xpose.msra.mxu0 0.0
    %7506 = vmatprep.subr.mxu0 0.0
    %7507 = vmatpush1.xpose.msra.mxu0 0.0
    %7508 = vmatprep.subr.mxu0 0.0
    %7509 = vmatpush1.xpose.msra.mxu0 0.0
    %7510 = vmatprep.subr.mxu0 0.0
    %7511 = vmatpush1.xpose.msra.mxu0 0.0
    %7512 = vmatprep.subr.mxu0 0.0
    %7513 = vmatpush1.xpose.msra.mxu0 0.0
    %7514 = vmatprep.subr.mxu0 0.0
    %7515 = vmatpush1.xpose.msra.mxu0 0.0
    %7516 = vmatprep.subr.mxu0 0.0
    %7517 = vmatpush1.xpose.msra.mxu0 0.0
    %7518 = vmatprep.subr.mxu0 0.0
    %7519 = vmatpush1.xpose.msra.mxu0 0.0
    %7520 = vmatprep.subr.mxu0 0.0
    %7521 = vmatpush1.xpose.msra.mxu0 0.0
    %7522 = vmatprep.subr.mxu0 0.0
    %7523 = vmatpush1.xpose.msra.mxu0 0.0
    %7524 = vmatprep.mubr.f32.mxu0 0.0
    %v7525 = vand.u32 %v7153, 4294901760
    %7526 = vmatmul.mubr.f32.gmra.mrb[0].mxu0 %v7525
    %v7527 = vpop.f32.mrb[0].mxu0
    %v7528 = vadd.f32 %v7454, %v7527
    %v7529 = vpop.f32.mrb[0].mxu0
    %7530 = vdwg.mxu0
    %7531 = vmatprep.subr.mxu0 0.0
    %v7532 = vand.u32 %v7155, 4294901760
    %7533 = vmatpush1.xpose.msra.mxu0 %v7532
    %7534 = vmatprep.subr.mxu0 0.0
    %7535 = vmatpush1.xpose.msra.mxu0 0.0
    %7536 = vmatprep.subr.mxu0 0.0
    %7537 = vmatpush1.xpose.msra.mxu0 0.0
    %7538 = vmatprep.subr.mxu0 0.0
    %7539 = vmatpush1.xpose.msra.mxu0 0.0
    %7540 = vmatprep.subr.mxu0 0.0
    %7541 = vmatpush1.xpose.msra.mxu0 0.0
    %7542 = vmatprep.subr.mxu0 0.0
    %7543 = vmatpush1.xpose.msra.mxu0 0.0
    %7544 = vmatprep.subr.mxu0 0.0
    %7545 = vmatpush1.xpose.msra.mxu0 0.0
    %7546 = vmatprep.subr.mxu0 0.0
    %7547 = vmatpush1.xpose.msra.mxu0 0.0
    %7548 = vmatprep.subr.mxu0 0.0
    %7549 = vmatpush1.xpose.msra.mxu0 0.0
    %7550 = vmatprep.subr.mxu0 0.0
    %7551 = vmatpush1.xpose.msra.mxu0 0.0
    %7552 = vmatprep.subr.mxu0 0.0
    %7553 = vmatpush1.xpose.msra.mxu0 0.0
    %7554 = vmatprep.subr.mxu0 0.0
    %7555 = vmatpush1.xpose.msra.mxu0 0.0
    %7556 = vmatprep.subr.mxu0 0.0
    %7557 = vmatpush1.xpose.msra.mxu0 0.0
    %7558 = vmatprep.subr.mxu0 0.0
    %7559 = vmatpush1.xpose.msra.mxu0 0.0
    %7560 = vmatprep.subr.mxu0 0.0
    %7561 = vmatpush1.xpose.msra.mxu0 0.0
    %7562 = vmatprep.subr.mxu0 0.0
    %7563 = vmatpush1.xpose.msra.mxu0 0.0
    %7564 = vmatprep.subr.mxu0 0.0
    %7565 = vmatpush1.xpose.msra.mxu0 0.0
    %7566 = vmatprep.subr.mxu0 0.0
    %7567 = vmatpush1.xpose.msra.mxu0 0.0
    %7568 = vmatprep.subr.mxu0 0.0
    %7569 = vmatpush1.xpose.msra.mxu0 0.0
    %7570 = vmatprep.subr.mxu0 0.0
    %7571 = vmatpush1.xpose.msra.mxu0 0.0
    %7572 = vmatprep.subr.mxu0 0.0
    %7573 = vmatpush1.xpose.msra.mxu0 0.0
    %7574 = vmatprep.subr.mxu0 0.0
    %7575 = vmatpush1.xpose.msra.mxu0 0.0
    %7576 = vmatprep.subr.mxu0 0.0
    %7577 = vmatpush1.xpose.msra.mxu0 0.0
    %7578 = vmatprep.subr.mxu0 0.0
    %7579 = vmatpush1.xpose.msra.mxu0 0.0
    %7580 = vmatprep.subr.mxu0 0.0
    %7581 = vmatpush1.xpose.msra.mxu0 0.0
    %7582 = vmatprep.subr.mxu0 0.0
    %7583 = vmatpush1.xpose.msra.mxu0 0.0
    %7584 = vmatprep.subr.mxu0 0.0
    %7585 = vmatpush1.xpose.msra.mxu0 0.0
    %7586 = vmatprep.subr.mxu0 0.0
    %7587 = vmatpush1.xpose.msra.mxu0 0.0
    %7588 = vmatprep.subr.mxu0 0.0
    %7589 = vmatpush1.xpose.msra.mxu0 0.0
    %7590 = vmatprep.subr.mxu0 0.0
    %7591 = vmatpush1.xpose.msra.mxu0 0.0
    %7592 = vmatprep.subr.mxu0 0.0
    %7593 = vmatpush1.xpose.msra.mxu0 0.0
    %7594 = vmatprep.subr.mxu0 0.0
    %7595 = vmatpush1.xpose.msra.mxu0 0.0
    %7596 = vmatprep.mubr.f32.mxu0 0.0
    %v7597 = vand.u32 %v7153, 4294901760
    %7598 = vmatmul.mubr.f32.gmra.mrb[0].mxu0 %v7597
    %v7599 = vpop.f32.mrb[0].mxu0
    %v7600 = vadd.f32 %v7528, %v7599
    %v7601 = vpop.f32.mrb[0].mxu0
    %7602 = vdwg.mxu0
    %v7603 = vsel %vm4842, %v7600, -3.4e+38
    %v7604 = vsel %vm683, %v7603, -inf
    %7605 = vmax.xlane.f32.xlu0 %v7604
    %v7606 = vpop.xlane.xlu0 %7605
    %v7607 = vsub.f32 %v7603, %v7606
    %v7608 = vmul.f32 %v7607, 1.442695
    %v7609 = vpow.pop %v7608
    %v7610 = vmul.f32 %v7609, %v4387
    %v7611 = vsel %vm683, %v7610, 0.0
    %7612 = vadd.xlane.f32.xlu0 %v7611
    %v7613 = vpop.xlane.xlu0 %7612
    %v7614 = vmax.f32 %v7613, 1e-30
    %v7615 = vrcp.pop %v7614
    %v7616 = vmul.f32 %v7610, %v7615
    %7617 = vrot.lane.b32.xlu0 %v667, 40
    %v7618 = vpop.permute.xlu0 %7617
    %v7621 = vsel %vm683, %v7616, 0
    %7623 = vmatprep.subr.mxu0 0.0
    %v7624 = vand.u32 %v7618, 4294901760
    %7625 = vmatpush1.msra.mxu0 %v7624
    %7626 = vmatprep.subr.mxu0 0.0
    %7627 = vmatpush1.msra.mxu0 0.0
    %7628 = vmatprep.subr.mxu0 0.0
    %7629 = vmatpush1.msra.mxu0 0.0
    %7630 = vmatprep.subr.mxu0 0.0
    %7631 = vmatpush1.msra.mxu0 0.0
    %7632 = vmatprep.subr.mxu0 0.0
    %7633 = vmatpush1.msra.mxu0 0.0
    %7634 = vmatprep.subr.mxu0 0.0
    %7635 = vmatpush1.msra.mxu0 0.0
    %7636 = vmatprep.subr.mxu0 0.0
    %7637 = vmatpush1.msra.mxu0 0.0
    %7638 = vmatprep.subr.mxu0 0.0
    %7639 = vmatpush1.msra.mxu0 0.0
    %7640 = vmatprep.subr.mxu0 0.0
    %7641 = vmatpush1.msra.mxu0 0.0
    %7642 = vmatprep.subr.mxu0 0.0
    %7643 = vmatpush1.msra.mxu0 0.0
    %7644 = vmatprep.subr.mxu0 0.0
    %7645 = vmatpush1.msra.mxu0 0.0
    %7646 = vmatprep.subr.mxu0 0.0
    %7647 = vmatpush1.msra.mxu0 0.0
    %7648 = vmatprep.subr.mxu0 0.0
    %7649 = vmatpush1.msra.mxu0 0.0
    %7650 = vmatprep.subr.mxu0 0.0
    %7651 = vmatpush1.msra.mxu0 0.0
    %7652 = vmatprep.subr.mxu0 0.0
    %7653 = vmatpush1.msra.mxu0 0.0
    %7654 = vmatprep.subr.mxu0 0.0
    %7655 = vmatpush1.msra.mxu0 0.0
    %7656 = vmatprep.subr.mxu0 0.0
    %7657 = vmatpush1.msra.mxu0 0.0
    %7658 = vmatprep.subr.mxu0 0.0
    %7659 = vmatpush1.msra.mxu0 0.0
    %7660 = vmatprep.subr.mxu0 0.0
    %7661 = vmatpush1.msra.mxu0 0.0
    %7662 = vmatprep.subr.mxu0 0.0
    %7663 = vmatpush1.msra.mxu0 0.0
    %7664 = vmatprep.subr.mxu0 0.0
    %7665 = vmatpush1.msra.mxu0 0.0
    %7666 = vmatprep.subr.mxu0 0.0
    %7667 = vmatpush1.msra.mxu0 0.0
    %7668 = vmatprep.subr.mxu0 0.0
    %7669 = vmatpush1.msra.mxu0 0.0
    %7670 = vmatprep.subr.mxu0 0.0
    %7671 = vmatpush1.msra.mxu0 0.0
    %7672 = vmatprep.subr.mxu0 0.0
    %7673 = vmatpush1.msra.mxu0 0.0
    %7674 = vmatprep.subr.mxu0 0.0
    %7675 = vmatpush1.msra.mxu0 0.0
    %7676 = vmatprep.subr.mxu0 0.0
    %7677 = vmatpush1.msra.mxu0 0.0
    %7678 = vmatprep.subr.mxu0 0.0
    %7679 = vmatpush1.msra.mxu0 0.0
    %7680 = vmatprep.subr.mxu0 0.0
    %7681 = vmatpush1.msra.mxu0 0.0
    %7682 = vmatprep.subr.mxu0 0.0
    %7683 = vmatpush1.msra.mxu0 0.0
    %7684 = vmatprep.subr.mxu0 0.0
    %7685 = vmatpush1.msra.mxu0 0.0
    %7686 = vmatprep.subr.mxu0 0.0
    %7687 = vmatpush1.msra.mxu0 0.0
    %7688 = vmatprep.mubr.f32.mxu0 0.0
    %v7689 = vand.u32 %v7621, 4294901760
    %v7690 = vsub.f32 %v7621, %v7689
    %v7691 = vand.u32 %v7690, 4294901760
    %v7692 = vsub.f32 %v7690, %v7691
    %v7693 = vand.u32 %v7692, 4294901760
    %7694 = vmatmul.mubr.f32.gmra.mrb[0].mxu0 %v7693
    %v7695 = vpop.f32.mrb[0].mxu0
    %v7696 = vadd.f32 0.0, %v7695
    %v7697 = vpop.f32.mrb[0].mxu0
    %7698 = vdwg.mxu0
    %7699 = vmatprep.subr.mxu0 0.0
    %v7700 = vand.u32 %v7618, 4294901760
    %v7701 = vsub.f32 %v7618, %v7700
    %v7702 = vand.u32 %v7701, 4294901760
    %v7703 = vsub.f32 %v7701, %v7702
    %v7704 = vand.u32 %v7703, 4294901760
    %7705 = vmatpush1.msra.mxu0 %v7704
    %7706 = vmatprep.subr.mxu0 0.0
    %7707 = vmatpush1.msra.mxu0 0.0
    %7708 = vmatprep.subr.mxu0 0.0
    %7709 = vmatpush1.msra.mxu0 0.0
    %7710 = vmatprep.subr.mxu0 0.0
    %7711 = vmatpush1.msra.mxu0 0.0
    %7712 = vmatprep.subr.mxu0 0.0
    %7713 = vmatpush1.msra.mxu0 0.0
    %7714 = vmatprep.subr.mxu0 0.0
    %7715 = vmatpush1.msra.mxu0 0.0
    %7716 = vmatprep.subr.mxu0 0.0
    %7717 = vmatpush1.msra.mxu0 0.0
    %7718 = vmatprep.subr.mxu0 0.0
    %7719 = vmatpush1.msra.mxu0 0.0
    %7720 = vmatprep.subr.mxu0 0.0
    %7721 = vmatpush1.msra.mxu0 0.0
    %7722 = vmatprep.subr.mxu0 0.0
    %7723 = vmatpush1.msra.mxu0 0.0
    %7724 = vmatprep.subr.mxu0 0.0
    %7725 = vmatpush1.msra.mxu0 0.0
    %7726 = vmatprep.subr.mxu0 0.0
    %7727 = vmatpush1.msra.mxu0 0.0
    %7728 = vmatprep.subr.mxu0 0.0
    %7729 = vmatpush1.msra.mxu0 0.0
    %7730 = vmatprep.subr.mxu0 0.0
    %7731 = vmatpush1.msra.mxu0 0.0
    %7732 = vmatprep.subr.mxu0 0.0
    %7733 = vmatpush1.msra.mxu0 0.0
    %7734 = vmatprep.subr.mxu0 0.0
    %7735 = vmatpush1.msra.mxu0 0.0
    %7736 = vmatprep.subr.mxu0 0.0
    %7737 = vmatpush1.msra.mxu0 0.0
    %7738 = vmatprep.subr.mxu0 0.0
    %7739 = vmatpush1.msra.mxu0 0.0
    %7740 = vmatprep.subr.mxu0 0.0
    %7741 = vmatpush1.msra.mxu0 0.0
    %7742 = vmatprep.subr.mxu0 0.0
    %7743 = vmatpush1.msra.mxu0 0.0
    %7744 = vmatprep.subr.mxu0 0.0
    %7745 = vmatpush1.msra.mxu0 0.0
    %7746 = vmatprep.subr.mxu0 0.0
    %7747 = vmatpush1.msra.mxu0 0.0
    %7748 = vmatprep.subr.mxu0 0.0
    %7749 = vmatpush1.msra.mxu0 0.0
    %7750 = vmatprep.subr.mxu0 0.0
    %7751 = vmatpush1.msra.mxu0 0.0
    %7752 = vmatprep.subr.mxu0 0.0
    %7753 = vmatpush1.msra.mxu0 0.0
    %7754 = vmatprep.subr.mxu0 0.0
    %7755 = vmatpush1.msra.mxu0 0.0
    %7756 = vmatprep.subr.mxu0 0.0
    %7757 = vmatpush1.msra.mxu0 0.0
    %7758 = vmatprep.subr.mxu0 0.0
    %7759 = vmatpush1.msra.mxu0 0.0
    %7760 = vmatprep.subr.mxu0 0.0
    %7761 = vmatpush1.msra.mxu0 0.0
    %7762 = vmatprep.subr.mxu0 0.0
    %7763 = vmatpush1.msra.mxu0 0.0
    %7764 = vmatprep.subr.mxu0 0.0
    %7765 = vmatpush1.msra.mxu0 0.0
    %7766 = vmatprep.subr.mxu0 0.0
    %7767 = vmatpush1.msra.mxu0 0.0
    %7768 = vmatprep.mubr.f32.mxu0 0.0
    %v7769 = vand.u32 %v7621, 4294901760
    %7770 = vmatmul.mubr.f32.gmra.mrb[0].mxu0 %v7769
    %v7771 = vpop.f32.mrb[0].mxu0
    %v7772 = vadd.f32 %v7696, %v7771
    %v7773 = vpop.f32.mrb[0].mxu0
    %7774 = vdwg.mxu0
    %7775 = vmatprep.subr.mxu0 0.0
    %v7776 = vand.u32 %v7618, 4294901760
    %v7777 = vsub.f32 %v7618, %v7776
    %7778 = vmatpush1.msra.mxu0 %v7777
    %7779 = vmatprep.subr.mxu0 0.0
    %7780 = vmatpush1.msra.mxu0 0.0
    %7781 = vmatprep.subr.mxu0 0.0
    %7782 = vmatpush1.msra.mxu0 0.0
    %7783 = vmatprep.subr.mxu0 0.0
    %7784 = vmatpush1.msra.mxu0 0.0
    %7785 = vmatprep.subr.mxu0 0.0
    %7786 = vmatpush1.msra.mxu0 0.0
    %7787 = vmatprep.subr.mxu0 0.0
    %7788 = vmatpush1.msra.mxu0 0.0
    %7789 = vmatprep.subr.mxu0 0.0
    %7790 = vmatpush1.msra.mxu0 0.0
    %7791 = vmatprep.subr.mxu0 0.0
    %7792 = vmatpush1.msra.mxu0 0.0
    %7793 = vmatprep.subr.mxu0 0.0
    %7794 = vmatpush1.msra.mxu0 0.0
    %7795 = vmatprep.subr.mxu0 0.0
    %7796 = vmatpush1.msra.mxu0 0.0
    %7797 = vmatprep.subr.mxu0 0.0
    %7798 = vmatpush1.msra.mxu0 0.0
    %7799 = vmatprep.subr.mxu0 0.0
    %7800 = vmatpush1.msra.mxu0 0.0
    %7801 = vmatprep.subr.mxu0 0.0
    %7802 = vmatpush1.msra.mxu0 0.0
    %7803 = vmatprep.subr.mxu0 0.0
    %7804 = vmatpush1.msra.mxu0 0.0
    %7805 = vmatprep.subr.mxu0 0.0
    %7806 = vmatpush1.msra.mxu0 0.0
    %7807 = vmatprep.subr.mxu0 0.0
    %7808 = vmatpush1.msra.mxu0 0.0
    %7809 = vmatprep.subr.mxu0 0.0
    %7810 = vmatpush1.msra.mxu0 0.0
    %7811 = vmatprep.subr.mxu0 0.0
    %7812 = vmatpush1.msra.mxu0 0.0
    %7813 = vmatprep.subr.mxu0 0.0
    %7814 = vmatpush1.msra.mxu0 0.0
    %7815 = vmatprep.subr.mxu0 0.0
    %7816 = vmatpush1.msra.mxu0 0.0
    %7817 = vmatprep.subr.mxu0 0.0
    %7818 = vmatpush1.msra.mxu0 0.0
    %7819 = vmatprep.subr.mxu0 0.0
    %7820 = vmatpush1.msra.mxu0 0.0
    %7821 = vmatprep.subr.mxu0 0.0
    %7822 = vmatpush1.msra.mxu0 0.0
    %7823 = vmatprep.subr.mxu0 0.0
    %7824 = vmatpush1.msra.mxu0 0.0
    %7825 = vmatprep.subr.mxu0 0.0
    %7826 = vmatpush1.msra.mxu0 0.0
    %7827 = vmatprep.subr.mxu0 0.0
    %7828 = vmatpush1.msra.mxu0 0.0
    %7829 = vmatprep.subr.mxu0 0.0
    %7830 = vmatpush1.msra.mxu0 0.0
    %7831 = vmatprep.subr.mxu0 0.0
    %7832 = vmatpush1.msra.mxu0 0.0
    %7833 = vmatprep.subr.mxu0 0.0
    %7834 = vmatpush1.msra.mxu0 0.0
    %7835 = vmatprep.subr.mxu0 0.0
    %7836 = vmatpush1.msra.mxu0 0.0
    %7837 = vmatprep.subr.mxu0 0.0
    %7838 = vmatpush1.msra.mxu0 0.0
    %7839 = vmatprep.subr.mxu0 0.0
    %7840 = vmatpush1.msra.mxu0 0.0
    %7841 = vmatprep.mubr.f32.mxu0 0.0
    %v7842 = vand.u32 %v7621, 4294901760
    %v7843 = vsub.f32 %v7621, %v7842
    %7844 = vmatmul.mubr.f32.gmra.mrb[0].mxu0 %v7843
    %v7845 = vpop.f32.mrb[0].mxu0
    %v7846 = vadd.f32 %v7772, %v7845
    %v7847 = vpop.f32.mrb[0].mxu0
    %7848 = vdwg.mxu0
    %7849 = vmatprep.subr.mxu0 0.0
    %v7850 = vand.u32 %v7618, 4294901760
    %7851 = vmatpush1.msra.mxu0 %v7850
    %7852 = vmatprep.subr.mxu0 0.0
    %7853 = vmatpush1.msra.mxu0 0.0
    %7854 = vmatprep.subr.mxu0 0.0
    %7855 = vmatpush1.msra.mxu0 0.0
    %7856 = vmatprep.subr.mxu0 0.0
    %7857 = vmatpush1.msra.mxu0 0.0
    %7858 = vmatprep.subr.mxu0 0.0
    %7859 = vmatpush1.msra.mxu0 0.0
    %7860 = vmatprep.subr.mxu0 0.0
    %7861 = vmatpush1.msra.mxu0 0.0
    %7862 = vmatprep.subr.mxu0 0.0
    %7863 = vmatpush1.msra.mxu0 0.0
    %7864 = vmatprep.subr.mxu0 0.0
    %7865 = vmatpush1.msra.mxu0 0.0
    %7866 = vmatprep.subr.mxu0 0.0
    %7867 = vmatpush1.msra.mxu0 0.0
    %7868 = vmatprep.subr.mxu0 0.0
    %7869 = vmatpush1.msra.mxu0 0.0
    %7870 = vmatprep.subr.mxu0 0.0
    %7871 = vmatpush1.msra.mxu0 0.0
    %7872 = vmatprep.subr.mxu0 0.0
    %7873 = vmatpush1.msra.mxu0 0.0
    %7874 = vmatprep.subr.mxu0 0.0
    %7875 = vmatpush1.msra.mxu0 0.0
    %7876 = vmatprep.subr.mxu0 0.0
    %7877 = vmatpush1.msra.mxu0 0.0
    %7878 = vmatprep.subr.mxu0 0.0
    %7879 = vmatpush1.msra.mxu0 0.0
    %7880 = vmatprep.subr.mxu0 0.0
    %7881 = vmatpush1.msra.mxu0 0.0
    %7882 = vmatprep.subr.mxu0 0.0
    %7883 = vmatpush1.msra.mxu0 0.0
    %7884 = vmatprep.subr.mxu0 0.0
    %7885 = vmatpush1.msra.mxu0 0.0
    %7886 = vmatprep.subr.mxu0 0.0
    %7887 = vmatpush1.msra.mxu0 0.0
    %7888 = vmatprep.subr.mxu0 0.0
    %7889 = vmatpush1.msra.mxu0 0.0
    %7890 = vmatprep.subr.mxu0 0.0
    %7891 = vmatpush1.msra.mxu0 0.0
    %7892 = vmatprep.subr.mxu0 0.0
    %7893 = vmatpush1.msra.mxu0 0.0
    %7894 = vmatprep.subr.mxu0 0.0
    %7895 = vmatpush1.msra.mxu0 0.0
    %7896 = vmatprep.subr.mxu0 0.0
    %7897 = vmatpush1.msra.mxu0 0.0
    %7898 = vmatprep.subr.mxu0 0.0
    %7899 = vmatpush1.msra.mxu0 0.0
    %7900 = vmatprep.subr.mxu0 0.0
    %7901 = vmatpush1.msra.mxu0 0.0
    %7902 = vmatprep.subr.mxu0 0.0
    %7903 = vmatpush1.msra.mxu0 0.0
    %7904 = vmatprep.subr.mxu0 0.0
    %7905 = vmatpush1.msra.mxu0 0.0
    %7906 = vmatprep.subr.mxu0 0.0
    %7907 = vmatpush1.msra.mxu0 0.0
    %7908 = vmatprep.subr.mxu0 0.0
    %7909 = vmatpush1.msra.mxu0 0.0
    %7910 = vmatprep.subr.mxu0 0.0
    %7911 = vmatpush1.msra.mxu0 0.0
    %7912 = vmatprep.subr.mxu0 0.0
    %7913 = vmatpush1.msra.mxu0 0.0
    %7914 = vmatprep.mubr.f32.mxu0 0.0
    %v7915 = vand.u32 %v7621, 4294901760
    %v7916 = vsub.f32 %v7621, %v7915
    %v7917 = vand.u32 %v7916, 4294901760
    %7918 = vmatmul.mubr.f32.gmra.mrb[0].mxu0 %v7917
    %v7919 = vpop.f32.mrb[0].mxu0
    %v7920 = vadd.f32 %v7846, %v7919
    %v7921 = vpop.f32.mrb[0].mxu0
    %7922 = vdwg.mxu0
    %7923 = vmatprep.subr.mxu0 0.0
    %v7924 = vand.u32 %v7618, 4294901760
    %v7925 = vsub.f32 %v7618, %v7924
    %v7926 = vand.u32 %v7925, 4294901760
    %7927 = vmatpush1.msra.mxu0 %v7926
    %7928 = vmatprep.subr.mxu0 0.0
    %7929 = vmatpush1.msra.mxu0 0.0
    %7930 = vmatprep.subr.mxu0 0.0
    %7931 = vmatpush1.msra.mxu0 0.0
    %7932 = vmatprep.subr.mxu0 0.0
    %7933 = vmatpush1.msra.mxu0 0.0
    %7934 = vmatprep.subr.mxu0 0.0
    %7935 = vmatpush1.msra.mxu0 0.0
    %7936 = vmatprep.subr.mxu0 0.0
    %7937 = vmatpush1.msra.mxu0 0.0
    %7938 = vmatprep.subr.mxu0 0.0
    %7939 = vmatpush1.msra.mxu0 0.0
    %7940 = vmatprep.subr.mxu0 0.0
    %7941 = vmatpush1.msra.mxu0 0.0
    %7942 = vmatprep.subr.mxu0 0.0
    %7943 = vmatpush1.msra.mxu0 0.0
    %7944 = vmatprep.subr.mxu0 0.0
    %7945 = vmatpush1.msra.mxu0 0.0
    %7946 = vmatprep.subr.mxu0 0.0
    %7947 = vmatpush1.msra.mxu0 0.0
    %7948 = vmatprep.subr.mxu0 0.0
    %7949 = vmatpush1.msra.mxu0 0.0
    %7950 = vmatprep.subr.mxu0 0.0
    %7951 = vmatpush1.msra.mxu0 0.0
    %7952 = vmatprep.subr.mxu0 0.0
    %7953 = vmatpush1.msra.mxu0 0.0
    %7954 = vmatprep.subr.mxu0 0.0
    %7955 = vmatpush1.msra.mxu0 0.0
    %7956 = vmatprep.subr.mxu0 0.0
    %7957 = vmatpush1.msra.mxu0 0.0
    %7958 = vmatprep.subr.mxu0 0.0
    %7959 = vmatpush1.msra.mxu0 0.0
    %7960 = vmatprep.subr.mxu0 0.0
    %7961 = vmatpush1.msra.mxu0 0.0
    %7962 = vmatprep.subr.mxu0 0.0
    %7963 = vmatpush1.msra.mxu0 0.0
    %7964 = vmatprep.subr.mxu0 0.0
    %7965 = vmatpush1.msra.mxu0 0.0
    %7966 = vmatprep.subr.mxu0 0.0
    %7967 = vmatpush1.msra.mxu0 0.0
    %7968 = vmatprep.subr.mxu0 0.0
    %7969 = vmatpush1.msra.mxu0 0.0
    %7970 = vmatprep.subr.mxu0 0.0
    %7971 = vmatpush1.msra.mxu0 0.0
    %7972 = vmatprep.subr.mxu0 0.0
    %7973 = vmatpush1.msra.mxu0 0.0
    %7974 = vmatprep.subr.mxu0 0.0
    %7975 = vmatpush1.msra.mxu0 0.0
    %7976 = vmatprep.subr.mxu0 0.0
    %7977 = vmatpush1.msra.mxu0 0.0
    %7978 = vmatprep.subr.mxu0 0.0
    %7979 = vmatpush1.msra.mxu0 0.0
    %7980 = vmatprep.subr.mxu0 0.0
    %7981 = vmatpush1.msra.mxu0 0.0
    %7982 = vmatprep.subr.mxu0 0.0
    %7983 = vmatpush1.msra.mxu0 0.0
    %7984 = vmatprep.subr.mxu0 0.0
    %7985 = vmatpush1.msra.mxu0 0.0
    %7986 = vmatprep.subr.mxu0 0.0
    %7987 = vmatpush1.msra.mxu0 0.0
    %7988 = vmatprep.subr.mxu0 0.0
    %7989 = vmatpush1.msra.mxu0 0.0
    %7990 = vmatprep.mubr.f32.mxu0 0.0
    %v7991 = vand.u32 %v7621, 4294901760
    %7992 = vmatmul.mubr.f32.gmra.mrb[0].mxu0 %v7991
    %v7993 = vpop.f32.mrb[0].mxu0
    %v7994 = vadd.f32 %v7920, %v7993
    %v7995 = vpop.f32.mrb[0].mxu0
    %7996 = vdwg.mxu0
    %7997 = vmatprep.subr.mxu0 0.0
    %v7998 = vand.u32 %v7618, 4294901760
    %7999 = vmatpush1.msra.mxu0 %v7998
    %8000 = vmatprep.subr.mxu0 0.0
    %8001 = vmatpush1.msra.mxu0 0.0
    %8002 = vmatprep.subr.mxu0 0.0
    %8003 = vmatpush1.msra.mxu0 0.0
    %8004 = vmatprep.subr.mxu0 0.0
    %8005 = vmatpush1.msra.mxu0 0.0
    %8006 = vmatprep.subr.mxu0 0.0
    %8007 = vmatpush1.msra.mxu0 0.0
    %8008 = vmatprep.subr.mxu0 0.0
    %8009 = vmatpush1.msra.mxu0 0.0
    %8010 = vmatprep.subr.mxu0 0.0
    %8011 = vmatpush1.msra.mxu0 0.0
    %8012 = vmatprep.subr.mxu0 0.0
    %8013 = vmatpush1.msra.mxu0 0.0
    %8014 = vmatprep.subr.mxu0 0.0
    %8015 = vmatpush1.msra.mxu0 0.0
    %8016 = vmatprep.subr.mxu0 0.0
    %8017 = vmatpush1.msra.mxu0 0.0
    %8018 = vmatprep.subr.mxu0 0.0
    %8019 = vmatpush1.msra.mxu0 0.0
    %8020 = vmatprep.subr.mxu0 0.0
    %8021 = vmatpush1.msra.mxu0 0.0
    %8022 = vmatprep.subr.mxu0 0.0
    %8023 = vmatpush1.msra.mxu0 0.0
    %8024 = vmatprep.subr.mxu0 0.0
    %8025 = vmatpush1.msra.mxu0 0.0
    %8026 = vmatprep.subr.mxu0 0.0
    %8027 = vmatpush1.msra.mxu0 0.0
    %8028 = vmatprep.subr.mxu0 0.0
    %8029 = vmatpush1.msra.mxu0 0.0
    %8030 = vmatprep.subr.mxu0 0.0
    %8031 = vmatpush1.msra.mxu0 0.0
    %8032 = vmatprep.subr.mxu0 0.0
    %8033 = vmatpush1.msra.mxu0 0.0
    %8034 = vmatprep.subr.mxu0 0.0
    %8035 = vmatpush1.msra.mxu0 0.0
    %8036 = vmatprep.subr.mxu0 0.0
    %8037 = vmatpush1.msra.mxu0 0.0
    %8038 = vmatprep.subr.mxu0 0.0
    %8039 = vmatpush1.msra.mxu0 0.0
    %8040 = vmatprep.subr.mxu0 0.0
    %8041 = vmatpush1.msra.mxu0 0.0
    %8042 = vmatprep.subr.mxu0 0.0
    %8043 = vmatpush1.msra.mxu0 0.0
    %8044 = vmatprep.subr.mxu0 0.0
    %8045 = vmatpush1.msra.mxu0 0.0
    %8046 = vmatprep.subr.mxu0 0.0
    %8047 = vmatpush1.msra.mxu0 0.0
    %8048 = vmatprep.subr.mxu0 0.0
    %8049 = vmatpush1.msra.mxu0 0.0
    %8050 = vmatprep.subr.mxu0 0.0
    %8051 = vmatpush1.msra.mxu0 0.0
    %8052 = vmatprep.subr.mxu0 0.0
    %8053 = vmatpush1.msra.mxu0 0.0
    %8054 = vmatprep.subr.mxu0 0.0
    %8055 = vmatpush1.msra.mxu0 0.0
    %8056 = vmatprep.subr.mxu0 0.0
    %8057 = vmatpush1.msra.mxu0 0.0
    %8058 = vmatprep.subr.mxu0 0.0
    %8059 = vmatpush1.msra.mxu0 0.0
    %8060 = vmatprep.subr.mxu0 0.0
    %8061 = vmatpush1.msra.mxu0 0.0
    %8062 = vmatprep.mubr.f32.mxu0 0.0
    %v8063 = vand.u32 %v7621, 4294901760
    %8064 = vmatmul.mubr.f32.gmra.mrb[0].mxu0 %v8063
    %v8065 = vpop.f32.mrb[0].mxu0
    %v8066 = vadd.f32 %v7994, %v8065
    %v8067 = vpop.f32.mrb[0].mxu0
    %8068 = vdwg.mxu0
    %8070 = vrot.lane.b32.xlu0 %v6226, 8
    %v8071 = vpop.permute.xlu0 %8070
    %8074 = vrot.lane.b32.xlu0 %v7146, 16
    %v8075 = vpop.permute.xlu0 %8074
    %8078 = vrot.lane.b32.xlu0 %v8066, 24
    %v8079 = vpop.permute.xlu0 %8078
    %v8081 = vsel %vm683, %v5306, %v8071
    %v8082 = vsel %vm4374, %v8081, %v8075
    %v8083 = vsel %vm4376, %v8082, %v8079
    %v8084 = vld [vmem:[#allocation7] sm:$0xff]
    %v8085 = vld [vmem:[#allocation7 + $0x8] sm:$0xff]
    %v8086 = vld [vmem:[#allocation7 + $0x10] sm:$0xff]
    %v8087 = vld [vmem:[#allocation7 + $0x18] sm:$0xff]
    %v8088 = vld [vmem:[%s5] sm:$0x1]
    %v8090 = vlaneseq
    %v8091 = vshrl.u32 %v8090, 7
    %v8092 = vsub.s32 0, %v8091
    %v8093 = vrot.slane %v8088, %v8092
    %v8096 = vsel %vm135, %v4377, 0
    %v8099 = vsel %vm135, %v8083, 0
    %8101 = vmatprep.subr.mxu0 0.0
    %v8102 = vand.u32 %v8084, 4294901760
    %8103 = vmatpush1.msra.mxu0 %v8102
    %8104 = vmatprep.subr.mxu0 0.0
    %v8105 = vand.u32 %v8085, 4294901760
    %8106 = vmatpush1.msra.mxu0 %v8105
    %8107 = vmatprep.subr.mxu0 0.0
    %v8108 = vand.u32 %v8086, 4294901760
    %8109 = vmatpush1.msra.mxu0 %v8108
    %8110 = vmatprep.subr.mxu0 0.0
    %v8111 = vand.u32 %v8087, 4294901760
    %8112 = vmatpush1.msra.mxu0 %v8111
    %8113 = vmatprep.subr.mxu0 0.0
    %8114 = vmatpush1.msra.mxu0 0.0
    %8115 = vmatprep.subr.mxu0 0.0
    %8116 = vmatpush1.msra.mxu0 0.0
    %8117 = vmatprep.subr.mxu0 0.0
    %8118 = vmatpush1.msra.mxu0 0.0
    %8119 = vmatprep.subr.mxu0 0.0
    %8120 = vmatpush1.msra.mxu0 0.0
    %8121 = vmatprep.subr.mxu0 0.0
    %8122 = vmatpush1.msra.mxu0 0.0
    %8123 = vmatprep.subr.mxu0 0.0
    %8124 = vmatpush1.msra.mxu0 0.0
    %8125 = vmatprep.subr.mxu0 0.0
    %8126 = vmatpush1.msra.mxu0 0.0
    %8127 = vmatprep.subr.mxu0 0.0
    %8128 = vmatpush1.msra.mxu0 0.0
    %8129 = vmatprep.subr.mxu0 0.0
    %8130 = vmatpush1.msra.mxu0 0.0
    %8131 = vmatprep.subr.mxu0 0.0
    %8132 = vmatpush1.msra.mxu0 0.0
    %8133 = vmatprep.subr.mxu0 0.0
    %8134 = vmatpush1.msra.mxu0 0.0
    %8135 = vmatprep.subr.mxu0 0.0
    %8136 = vmatpush1.msra.mxu0 0.0
    %8137 = vmatprep.subr.mxu0 0.0
    %8138 = vmatpush1.msra.mxu0 0.0
    %8139 = vmatprep.subr.mxu0 0.0
    %8140 = vmatpush1.msra.mxu0 0.0
    %8141 = vmatprep.subr.mxu0 0.0
    %8142 = vmatpush1.msra.mxu0 0.0
    %8143 = vmatprep.subr.mxu0 0.0
    %8144 = vmatpush1.msra.mxu0 0.0
    %8145 = vmatprep.subr.mxu0 0.0
    %8146 = vmatpush1.msra.mxu0 0.0
    %8147 = vmatprep.subr.mxu0 0.0
    %8148 = vmatpush1.msra.mxu0 0.0
    %8149 = vmatprep.subr.mxu0 0.0
    %8150 = vmatpush1.msra.mxu0 0.0
    %8151 = vmatprep.subr.mxu0 0.0
    %8152 = vmatpush1.msra.mxu0 0.0
    %8153 = vmatprep.subr.mxu0 0.0
    %8154 = vmatpush1.msra.mxu0 0.0
    %8155 = vmatprep.subr.mxu0 0.0
    %8156 = vmatpush1.msra.mxu0 0.0
    %8157 = vmatprep.subr.mxu0 0.0
    %8158 = vmatpush1.msra.mxu0 0.0
    %8159 = vmatprep.subr.mxu0 0.0
    %8160 = vmatpush1.msra.mxu0 0.0
    %8161 = vmatprep.subr.mxu0 0.0
    %8162 = vmatpush1.msra.mxu0 0.0
    %8163 = vmatprep.subr.mxu0 0.0
    %8164 = vmatpush1.msra.mxu0 0.0
    %8165 = vmatprep.subr.mxu0 0.0
    %8166 = vmatpush1.msra.mxu0 0.0
    %8167 = vmatprep.subr.mxu0 0.0
    %8168 = vmatpush1.msra.mxu0 0.0
    %8169 = vmatprep.mubr.f32.mxu0 0.0
    %v8170 = vand.u32 %v8096, 4294901760
    %v8171 = vsub.f32 %v8096, %v8170
    %v8172 = vand.u32 %v8171, 4294901760
    %v8173 = vsub.f32 %v8171, %v8172
    %v8174 = vand.u32 %v8173, 4294901760
    %8175 = vmatmul.mubr.f32.gmra.mrb[0].mxu0 %v8174
    %v8176 = vpop.f32.mrb[0].mxu0
    %v8177 = vadd.f32 %v8093, %v8176
    %v8178 = vpop.f32.mrb[0].mxu0
    %8179 = vmatprep.mubr.f32.mxu0 0.0
    %v8180 = vand.u32 %v8099, 4294901760
    %v8181 = vsub.f32 %v8099, %v8180
    %v8182 = vand.u32 %v8181, 4294901760
    %v8183 = vsub.f32 %v8181, %v8182
    %v8184 = vand.u32 %v8183, 4294901760
    %8185 = vmatmul.mubr.f32.gmra.mrb[0].mxu0 %v8184
    %v8186 = vpop.f32.mrb[0].mxu0
    %v8187 = vadd.f32 %v8093, %v8186
    %v8188 = vpop.f32.mrb[0].mxu0
    %8189 = vdwg.mxu0
    %8190 = vmatprep.subr.mxu0 0.0
    %v8191 = vand.u32 %v8084, 4294901760
    %v8192 = vsub.f32 %v8084, %v8191
    %v8193 = vand.u32 %v8192, 4294901760
    %v8194 = vsub.f32 %v8192, %v8193
    %v8195 = vand.u32 %v8194, 4294901760
    %8196 = vmatpush1.msra.mxu0 %v8195
    %8197 = vmatprep.subr.mxu0 0.0
    %v8198 = vand.u32 %v8085, 4294901760
    %v8199 = vsub.f32 %v8085, %v8198
    %v8200 = vand.u32 %v8199, 4294901760
    %v8201 = vsub.f32 %v8199, %v8200
    %v8202 = vand.u32 %v8201, 4294901760
    %8203 = vmatpush1.msra.mxu0 %v8202
    %8204 = vmatprep.subr.mxu0 0.0
    %v8205 = vand.u32 %v8086, 4294901760
    %v8206 = vsub.f32 %v8086, %v8205
    %v8207 = vand.u32 %v8206, 4294901760
    %v8208 = vsub.f32 %v8206, %v8207
    %v8209 = vand.u32 %v8208, 4294901760
    %8210 = vmatpush1.msra.mxu0 %v8209
    %8211 = vmatprep.subr.mxu0 0.0
    %v8212 = vand.u32 %v8087, 4294901760
    %v8213 = vsub.f32 %v8087, %v8212
    %v8214 = vand.u32 %v8213, 4294901760
    %v8215 = vsub.f32 %v8213, %v8214
    %v8216 = vand.u32 %v8215, 4294901760
    %8217 = vmatpush1.msra.mxu0 %v8216
    %8218 = vmatprep.subr.mxu0 0.0
    %8219 = vmatpush1.msra.mxu0 0.0
    %8220 = vmatprep.subr.mxu0 0.0
    %8221 = vmatpush1.msra.mxu0 0.0
    %8222 = vmatprep.subr.mxu0 0.0
    %8223 = vmatpush1.msra.mxu0 0.0
    %8224 = vmatprep.subr.mxu0 0.0
    %8225 = vmatpush1.msra.mxu0 0.0
    %8226 = vmatprep.subr.mxu0 0.0
    %8227 = vmatpush1.msra.mxu0 0.0
    %8228 = vmatprep.subr.mxu0 0.0
    %8229 = vmatpush1.msra.mxu0 0.0
    %8230 = vmatprep.subr.mxu0 0.0
    %8231 = vmatpush1.msra.mxu0 0.0
    %8232 = vmatprep.subr.mxu0 0.0
    %8233 = vmatpush1.msra.mxu0 0.0
    %8234 = vmatprep.subr.mxu0 0.0
    %8235 = vmatpush1.msra.mxu0 0.0
    %8236 = vmatprep.subr.mxu0 0.0
    %8237 = vmatpush1.msra.mxu0 0.0
    %8238 = vmatprep.subr.mxu0 0.0
    %8239 = vmatpush1.msra.mxu0 0.0
    %8240 = vmatprep.subr.mxu0 0.0
    %8241 = vmatpush1.msra.mxu0 0.0
    %8242 = vmatprep.subr.mxu0 0.0
    %8243 = vmatpush1.msra.mxu0 0.0
    %8244 = vmatprep.subr.mxu0 0.0
    %8245 = vmatpush1.msra.mxu0 0.0
    %8246 = vmatprep.subr.mxu0 0.0
    %8247 = vmatpush1.msra.mxu0 0.0
    %8248 = vmatprep.subr.mxu0 0.0
    %8249 = vmatpush1.msra.mxu0 0.0
    %8250 = vmatprep.subr.mxu0 0.0
    %8251 = vmatpush1.msra.mxu0 0.0
    %8252 = vmatprep.subr.mxu0 0.0
    %8253 = vmatpush1.msra.mxu0 0.0
    %8254 = vmatprep.subr.mxu0 0.0
    %8255 = vmatpush1.msra.mxu0 0.0
    %8256 = vmatprep.subr.mxu0 0.0
    %8257 = vmatpush1.msra.mxu0 0.0
    %8258 = vmatprep.subr.mxu0 0.0
    %8259 = vmatpush1.msra.mxu0 0.0
    %8260 = vmatprep.subr.mxu0 0.0
    %8261 = vmatpush1.msra.mxu0 0.0
    %8262 = vmatprep.subr.mxu0 0.0
    %8263 = vmatpush1.msra.mxu0 0.0
    %8264 = vmatprep.subr.mxu0 0.0
    %8265 = vmatpush1.msra.mxu0 0.0
    %8266 = vmatprep.subr.mxu0 0.0
    %8267 = vmatpush1.msra.mxu0 0.0
    %8268 = vmatprep.subr.mxu0 0.0
    %8269 = vmatpush1.msra.mxu0 0.0
    %8270 = vmatprep.subr.mxu0 0.0
    %8271 = vmatpush1.msra.mxu0 0.0
    %8272 = vmatprep.subr.mxu0 0.0
    %8273 = vmatpush1.msra.mxu0 0.0
    %8274 = vmatprep.mubr.f32.mxu0 0.0
    %v8275 = vand.u32 %v8096, 4294901760
    %8276 = vmatmul.mubr.f32.gmra.mrb[0].mxu0 %v8275
    %v8277 = vpop.f32.mrb[0].mxu0
    %v8278 = vadd.f32 %v8177, %v8277
    %v8279 = vpop.f32.mrb[0].mxu0
    %8280 = vmatprep.mubr.f32.mxu0 0.0
    %v8281 = vand.u32 %v8099, 4294901760
    %8282 = vmatmul.mubr.f32.gmra.mrb[0].mxu0 %v8281
    %v8283 = vpop.f32.mrb[0].mxu0
    %v8284 = vadd.f32 %v8187, %v8283
    %v8285 = vpop.f32.mrb[0].mxu0
    %8286 = vdwg.mxu0
    %8287 = vmatprep.subr.mxu0 0.0
    %v8288 = vand.u32 %v8084, 4294901760
    %v8289 = vsub.f32 %v8084, %v8288
    %8290 = vmatpush1.msra.mxu0 %v8289
    %8291 = vmatprep.subr.mxu0 0.0
    %v8292 = vand.u32 %v8085, 4294901760
    %v8293 = vsub.f32 %v8085, %v8292
    %8294 = vmatpush1.msra.mxu0 %v8293
    %8295 = vmatprep.subr.mxu0 0.0
    %v8296 = vand.u32 %v8086, 4294901760
    %v8297 = vsub.f32 %v8086, %v8296
    %8298 = vmatpush1.msra.mxu0 %v8297
    %8299 = vmatprep.subr.mxu0 0.0
    %v8300 = vand.u32 %v8087, 4294901760
    %v8301 = vsub.f32 %v8087, %v8300
    %8302 = vmatpush1.msra.mxu0 %v8301
    %8303 = vmatprep.subr.mxu0 0.0
    %8304 = vmatpush1.msra.mxu0 0.0
    %8305 = vmatprep.subr.mxu0 0.0
    %8306 = vmatpush1.msra.mxu0 0.0
    %8307 = vmatprep.subr.mxu0 0.0
    %8308 = vmatpush1.msra.mxu0 0.0
    %8309 = vmatprep.subr.mxu0 0.0
    %8310 = vmatpush1.msra.mxu0 0.0
    %8311 = vmatprep.subr.mxu0 0.0
    %8312 = vmatpush1.msra.mxu0 0.0
    %8313 = vmatprep.subr.mxu0 0.0
    %8314 = vmatpush1.msra.mxu0 0.0
    %8315 = vmatprep.subr.mxu0 0.0
    %8316 = vmatpush1.msra.mxu0 0.0
    %8317 = vmatprep.subr.mxu0 0.0
    %8318 = vmatpush1.msra.mxu0 0.0
    %8319 = vmatprep.subr.mxu0 0.0
    %8320 = vmatpush1.msra.mxu0 0.0
    %8321 = vmatprep.subr.mxu0 0.0
    %8322 = vmatpush1.msra.mxu0 0.0
    %8323 = vmatprep.subr.mxu0 0.0
    %8324 = vmatpush1.msra.mxu0 0.0
    %8325 = vmatprep.subr.mxu0 0.0
    %8326 = vmatpush1.msra.mxu0 0.0
    %8327 = vmatprep.subr.mxu0 0.0
    %8328 = vmatpush1.msra.mxu0 0.0
    %8329 = vmatprep.subr.mxu0 0.0
    %8330 = vmatpush1.msra.mxu0 0.0
    %8331 = vmatprep.subr.mxu0 0.0
    %8332 = vmatpush1.msra.mxu0 0.0
    %8333 = vmatprep.subr.mxu0 0.0
    %8334 = vmatpush1.msra.mxu0 0.0
    %8335 = vmatprep.subr.mxu0 0.0
    %8336 = vmatpush1.msra.mxu0 0.0
    %8337 = vmatprep.subr.mxu0 0.0
    %8338 = vmatpush1.msra.mxu0 0.0
    %8339 = vmatprep.subr.mxu0 0.0
    %8340 = vmatpush1.msra.mxu0 0.0
    %8341 = vmatprep.subr.mxu0 0.0
    %8342 = vmatpush1.msra.mxu0 0.0
    %8343 = vmatprep.subr.mxu0 0.0
    %8344 = vmatpush1.msra.mxu0 0.0
    %8345 = vmatprep.subr.mxu0 0.0
    %8346 = vmatpush1.msra.mxu0 0.0
    %8347 = vmatprep.subr.mxu0 0.0
    %8348 = vmatpush1.msra.mxu0 0.0
    %8349 = vmatprep.subr.mxu0 0.0
    %8350 = vmatpush1.msra.mxu0 0.0
    %8351 = vmatprep.subr.mxu0 0.0
    %8352 = vmatpush1.msra.mxu0 0.0
    %8353 = vmatprep.subr.mxu0 0.0
    %8354 = vmatpush1.msra.mxu0 0.0
    %8355 = vmatprep.subr.mxu0 0.0
    %8356 = vmatpush1.msra.mxu0 0.0
    %8357 = vmatprep.subr.mxu0 0.0
    %8358 = vmatpush1.msra.mxu0 0.0
    %8359 = vmatprep.mubr.f32.mxu0 0.0
    %v8360 = vand.u32 %v8096, 4294901760
    %v8361 = vsub.f32 %v8096, %v8360
    %8362 = vmatmul.mubr.f32.gmra.mrb[0].mxu0 %v8361
    %v8363 = vpop.f32.mrb[0].mxu0
    %v8364 = vadd.f32 %v8278, %v8363
    %v8365 = vpop.f32.mrb[0].mxu0
    %8366 = vmatprep.mubr.f32.mxu0 0.0
    %v8367 = vand.u32 %v8099, 4294901760
    %v8368 = vsub.f32 %v8099, %v8367
    %8369 = vmatmul.mubr.f32.gmra.mrb[0].mxu0 %v8368
    %v8370 = vpop.f32.mrb[0].mxu0
    %v8371 = vadd.f32 %v8284, %v8370
    %v8372 = vpop.f32.mrb[0].mxu0
    %8373 = vdwg.mxu0
    %8374 = vmatprep.subr.mxu0 0.0
    %v8375 = vand.u32 %v8084, 4294901760
    %8376 = vmatpush1.msra.mxu0 %v8375
    %8377 = vmatprep.subr.mxu0 0.0
    %v8378 = vand.u32 %v8085, 4294901760
    %8379 = vmatpush1.msra.mxu0 %v8378
    %8380 = vmatprep.subr.mxu0 0.0
    %v8381 = vand.u32 %v8086, 4294901760
    %8382 = vmatpush1.msra.mxu0 %v8381
    %8383 = vmatprep.subr.mxu0 0.0
    %v8384 = vand.u32 %v8087, 4294901760
    %8385 = vmatpush1.msra.mxu0 %v8384
    %8386 = vmatprep.subr.mxu0 0.0
    %8387 = vmatpush1.msra.mxu0 0.0
    %8388 = vmatprep.subr.mxu0 0.0
    %8389 = vmatpush1.msra.mxu0 0.0
    %8390 = vmatprep.subr.mxu0 0.0
    %8391 = vmatpush1.msra.mxu0 0.0
    %8392 = vmatprep.subr.mxu0 0.0
    %8393 = vmatpush1.msra.mxu0 0.0
    %8394 = vmatprep.subr.mxu0 0.0
    %8395 = vmatpush1.msra.mxu0 0.0
    %8396 = vmatprep.subr.mxu0 0.0
    %8397 = vmatpush1.msra.mxu0 0.0
    %8398 = vmatprep.subr.mxu0 0.0
    %8399 = vmatpush1.msra.mxu0 0.0
    %8400 = vmatprep.subr.mxu0 0.0
    %8401 = vmatpush1.msra.mxu0 0.0
    %8402 = vmatprep.subr.mxu0 0.0
    %8403 = vmatpush1.msra.mxu0 0.0
    %8404 = vmatprep.subr.mxu0 0.0
    %8405 = vmatpush1.msra.mxu0 0.0
    %8406 = vmatprep.subr.mxu0 0.0
    %8407 = vmatpush1.msra.mxu0 0.0
    %8408 = vmatprep.subr.mxu0 0.0
    %8409 = vmatpush1.msra.mxu0 0.0
    %8410 = vmatprep.subr.mxu0 0.0
    %8411 = vmatpush1.msra.mxu0 0.0
    %8412 = vmatprep.subr.mxu0 0.0
    %8413 = vmatpush1.msra.mxu0 0.0
    %8414 = vmatprep.subr.mxu0 0.0
    %8415 = vmatpush1.msra.mxu0 0.0
    %8416 = vmatprep.subr.mxu0 0.0
    %8417 = vmatpush1.msra.mxu0 0.0
    %8418 = vmatprep.subr.mxu0 0.0
    %8419 = vmatpush1.msra.mxu0 0.0
    %8420 = vmatprep.subr.mxu0 0.0
    %8421 = vmatpush1.msra.mxu0 0.0
    %8422 = vmatprep.subr.mxu0 0.0
    %8423 = vmatpush1.msra.mxu0 0.0
    %8424 = vmatprep.subr.mxu0 0.0
    %8425 = vmatpush1.msra.mxu0 0.0
    %8426 = vmatprep.subr.mxu0 0.0
    %8427 = vmatpush1.msra.mxu0 0.0
    %8428 = vmatprep.subr.mxu0 0.0
    %8429 = vmatpush1.msra.mxu0 0.0
    %8430 = vmatprep.subr.mxu0 0.0
    %8431 = vmatpush1.msra.mxu0 0.0
    %8432 = vmatprep.subr.mxu0 0.0
    %8433 = vmatpush1.msra.mxu0 0.0
    %8434 = vmatprep.subr.mxu0 0.0
    %8435 = vmatpush1.msra.mxu0 0.0
    %8436 = vmatprep.subr.mxu0 0.0
    %8437 = vmatpush1.msra.mxu0 0.0
    %8438 = vmatprep.subr.mxu0 0.0
    %8439 = vmatpush1.msra.mxu0 0.0
    %8440 = vmatprep.subr.mxu0 0.0
    %8441 = vmatpush1.msra.mxu0 0.0
    %8442 = vmatprep.mubr.f32.mxu0 0.0
    %v8443 = vand.u32 %v8096, 4294901760
    %v8444 = vsub.f32 %v8096, %v8443
    %v8445 = vand.u32 %v8444, 4294901760
    %8446 = vmatmul.mubr.f32.gmra.mrb[0].mxu0 %v8445
    %v8447 = vpop.f32.mrb[0].mxu0
    %v8448 = vadd.f32 %v8364, %v8447
    %v8449 = vpop.f32.mrb[0].mxu0
    %8450 = vmatprep.mubr.f32.mxu0 0.0
    %v8451 = vand.u32 %v8099, 4294901760
    %v8452 = vsub.f32 %v8099, %v8451
    %v8453 = vand.u32 %v8452, 4294901760
    %8454 = vmatmul.mubr.f32.gmra.mrb[0].mxu0 %v8453
    %v8455 = vpop.f32.mrb[0].mxu0
    %v8456 = vadd.f32 %v8371, %v8455
    %v8457 = vpop.f32.mrb[0].mxu0
    %8458 = vdwg.mxu0
    %8459 = vmatprep.subr.mxu0 0.0
    %v8460 = vand.u32 %v8084, 4294901760
    %v8461 = vsub.f32 %v8084, %v8460
    %v8462 = vand.u32 %v8461, 4294901760
    %8463 = vmatpush1.msra.mxu0 %v8462
    %8464 = vmatprep.subr.mxu0 0.0
    %v8465 = vand.u32 %v8085, 4294901760
    %v8466 = vsub.f32 %v8085, %v8465
    %v8467 = vand.u32 %v8466, 4294901760
    %8468 = vmatpush1.msra.mxu0 %v8467
    %8469 = vmatprep.subr.mxu0 0.0
    %v8470 = vand.u32 %v8086, 4294901760
    %v8471 = vsub.f32 %v8086, %v8470
    %v8472 = vand.u32 %v8471, 4294901760
    %8473 = vmatpush1.msra.mxu0 %v8472
    %8474 = vmatprep.subr.mxu0 0.0
    %v8475 = vand.u32 %v8087, 4294901760
    %v8476 = vsub.f32 %v8087, %v8475
    %v8477 = vand.u32 %v8476, 4294901760
    %8478 = vmatpush1.msra.mxu0 %v8477
    %8479 = vmatprep.subr.mxu0 0.0
    %8480 = vmatpush1.msra.mxu0 0.0
    %8481 = vmatprep.subr.mxu0 0.0
    %8482 = vmatpush1.msra.mxu0 0.0
    %8483 = vmatprep.subr.mxu0 0.0
    %8484 = vmatpush1.msra.mxu0 0.0
    %8485 = vmatprep.subr.mxu0 0.0
    %8486 = vmatpush1.msra.mxu0 0.0
    %8487 = vmatprep.subr.mxu0 0.0
    %8488 = vmatpush1.msra.mxu0 0.0
    %8489 = vmatprep.subr.mxu0 0.0
    %8490 = vmatpush1.msra.mxu0 0.0
    %8491 = vmatprep.subr.mxu0 0.0
    %8492 = vmatpush1.msra.mxu0 0.0
    %8493 = vmatprep.subr.mxu0 0.0
    %8494 = vmatpush1.msra.mxu0 0.0
    %8495 = vmatprep.subr.mxu0 0.0
    %8496 = vmatpush1.msra.mxu0 0.0
    %8497 = vmatprep.subr.mxu0 0.0
    %8498 = vmatpush1.msra.mxu0 0.0
    %8499 = vmatprep.subr.mxu0 0.0
    %8500 = vmatpush1.msra.mxu0 0.0
    %8501 = vmatprep.subr.mxu0 0.0
    %8502 = vmatpush1.msra.mxu0 0.0
    %8503 = vmatprep.subr.mxu0 0.0
    %8504 = vmatpush1.msra.mxu0 0.0
    %8505 = vmatprep.subr.mxu0 0.0
    %8506 = vmatpush1.msra.mxu0 0.0
    %8507 = vmatprep.subr.mxu0 0.0
    %8508 = vmatpush1.msra.mxu0 0.0
    %8509 = vmatprep.subr.mxu0 0.0
    %8510 = vmatpush1.msra.mxu0 0.0
    %8511 = vmatprep.subr.mxu0 0.0
    %8512 = vmatpush1.msra.mxu0 0.0
    %8513 = vmatprep.subr.mxu0 0.0
    %8514 = vmatpush1.msra.mxu0 0.0
    %8515 = vmatprep.subr.mxu0 0.0
    %8516 = vmatpush1.msra.mxu0 0.0
    %8517 = vmatprep.subr.mxu0 0.0
    %8518 = vmatpush1.msra.mxu0 0.0
    %8519 = vmatprep.subr.mxu0 0.0
    %8520 = vmatpush1.msra.mxu0 0.0
    %8521 = vmatprep.subr.mxu0 0.0
    %8522 = vmatpush1.msra.mxu0 0.0
    %8523 = vmatprep.subr.mxu0 0.0
    %8524 = vmatpush1.msra.mxu0 0.0
    %8525 = vmatprep.subr.mxu0 0.0
    %8526 = vmatpush1.msra.mxu0 0.0
    %8527 = vmatprep.subr.mxu0 0.0
    %8528 = vmatpush1.msra.mxu0 0.0
    %8529 = vmatprep.subr.mxu0 0.0
    %8530 = vmatpush1.msra.mxu0 0.0
    %8531 = vmatprep.subr.mxu0 0.0
    %8532 = vmatpush1.msra.mxu0 0.0
    %8533 = vmatprep.subr.mxu0 0.0
    %8534 = vmatpush1.msra.mxu0 0.0
    %8535 = vmatprep.mubr.f32.mxu0 0.0
    %v8536 = vand.u32 %v8096, 4294901760
    %8537 = vmatmul.mubr.f32.gmra.mrb[0].mxu0 %v8536
    %v8538 = vpop.f32.mrb[0].mxu0
    %v8539 = vadd.f32 %v8448, %v8538
    %v8540 = vpop.f32.mrb[0].mxu0
    %8541 = vmatprep.mubr.f32.mxu0 0.0
    %v8542 = vand.u32 %v8099, 4294901760
    %8543 = vmatmul.mubr.f32.gmra.mrb[0].mxu0 %v8542
    %v8544 = vpop.f32.mrb[0].mxu0
    %v8545 = vadd.f32 %v8456, %v8544
    %v8546 = vpop.f32.mrb[0].mxu0
    %8547 = vdwg.mxu0
    %8548 = vmatprep.subr.mxu0 0.0
    %v8549 = vand.u32 %v8084, 4294901760
    %8550 = vmatpush1.msra.mxu0 %v8549
    %8551 = vmatprep.subr.mxu0 0.0
    %v8552 = vand.u32 %v8085, 4294901760
    %8553 = vmatpush1.msra.mxu0 %v8552
    %8554 = vmatprep.subr.mxu0 0.0
    %v8555 = vand.u32 %v8086, 4294901760
    %8556 = vmatpush1.msra.mxu0 %v8555
    %8557 = vmatprep.subr.mxu0 0.0
    %v8558 = vand.u32 %v8087, 4294901760
    %8559 = vmatpush1.msra.mxu0 %v8558
    %8560 = vmatprep.subr.mxu0 0.0
    %8561 = vmatpush1.msra.mxu0 0.0
    %8562 = vmatprep.subr.mxu0 0.0
    %8563 = vmatpush1.msra.mxu0 0.0
    %8564 = vmatprep.subr.mxu0 0.0
    %8565 = vmatpush1.msra.mxu0 0.0
    %8566 = vmatprep.subr.mxu0 0.0
    %8567 = vmatpush1.msra.mxu0 0.0
    %8568 = vmatprep.subr.mxu0 0.0
    %8569 = vmatpush1.msra.mxu0 0.0
    %8570 = vmatprep.subr.mxu0 0.0
    %8571 = vmatpush1.msra.mxu0 0.0
    %8572 = vmatprep.subr.mxu0 0.0
    %8573 = vmatpush1.msra.mxu0 0.0
    %8574 = vmatprep.subr.mxu0 0.0
    %8575 = vmatpush1.msra.mxu0 0.0
    %8576 = vmatprep.subr.mxu0 0.0
    %8577 = vmatpush1.msra.mxu0 0.0
    %8578 = vmatprep.subr.mxu0 0.0
    %8579 = vmatpush1.msra.mxu0 0.0
    %8580 = vmatprep.subr.mxu0 0.0
    %8581 = vmatpush1.msra.mxu0 0.0
    %8582 = vmatprep.subr.mxu0 0.0
    %8583 = vmatpush1.msra.mxu0 0.0
    %8584 = vmatprep.subr.mxu0 0.0
    %8585 = vmatpush1.msra.mxu0 0.0
    %8586 = vmatprep.subr.mxu0 0.0
    %8587 = vmatpush1.msra.mxu0 0.0
    %8588 = vmatprep.subr.mxu0 0.0
    %8589 = vmatpush1.msra.mxu0 0.0
    %8590 = vmatprep.subr.mxu0 0.0
    %8591 = vmatpush1.msra.mxu0 0.0
    %8592 = vmatprep.subr.mxu0 0.0
    %8593 = vmatpush1.msra.mxu0 0.0
    %8594 = vmatprep.subr.mxu0 0.0
    %8595 = vmatpush1.msra.mxu0 0.0
    %8596 = vmatprep.subr.mxu0 0.0
    %8597 = vmatpush1.msra.mxu0 0.0
    %8598 = vmatprep.subr.mxu0 0.0
    %8599 = vmatpush1.msra.mxu0 0.0
    %8600 = vmatprep.subr.mxu0 0.0
    %8601 = vmatpush1.msra.mxu0 0.0
    %8602 = vmatprep.subr.mxu0 0.0
    %8603 = vmatpush1.msra.mxu0 0.0
    %8604 = vmatprep.subr.mxu0 0.0
    %8605 = vmatpush1.msra.mxu0 0.0
    %8606 = vmatprep.subr.mxu0 0.0
    %8607 = vmatpush1.msra.mxu0 0.0
    %8608 = vmatprep.subr.mxu0 0.0
    %8609 = vmatpush1.msra.mxu0 0.0
    %8610 = vmatprep.subr.mxu0 0.0
    %8611 = vmatpush1.msra.mxu0 0.0
    %8612 = vmatprep.subr.mxu0 0.0
    %8613 = vmatpush1.msra.mxu0 0.0
    %8614 = vmatprep.subr.mxu0 0.0
    %8615 = vmatpush1.msra.mxu0 0.0
    %8616 = vmatprep.mubr.f32.mxu0 0.0
    %v8617 = vand.u32 %v8096, 4294901760
    %8618 = vmatmul.mubr.f32.gmra.mrb[0].mxu0 %v8617
    %v8619 = vpop.f32.mrb[0].mxu0
    %v8620 = vadd.f32 %v8539, %v8619
    %v8621 = vpop.f32.mrb[0].mxu0
    %8622 = vmatprep.mubr.f32.mxu0 0.0
    %v8623 = vand.u32 %v8099, 4294901760
    %8624 = vmatmul.mubr.f32.gmra.mrb[0].mxu0 %v8623
    %v8625 = vpop.f32.mrb[0].mxu0
    %v8626 = vadd.f32 %v8545, %v8625
    %v8627 = vpop.f32.mrb[0].mxu0
    %8628 = vdwg.mxu0
    %v8629 = vmul.f32 %v8620, 0.5
    %v8630 = vmul.f32 %v8626, 0.5
    %v8631 = vmul.f32 %v8620, 0.70710677
    %v8632 = vmul.f32 %v8626, 0.70710677
    %vm8633 = vcmp.ge.f32.partialorder %v8631, 0.0
    %vm8634 = vcmp.ge.f32.partialorder %v8632, 0.0
    %v8635 = vsel %vm8633, 1.0, -1.0
    %v8636 = vsel %vm8634, 1.0, -1.0
    %v8637 = vand.u32 2147483647, %v8631
    %v8638 = vand.u32 2147483647, %v8632
    %v8639 = vmul.f32 %v8637, 0.3275911
    %v8640 = vmul.f32 %v8638, 0.3275911
    %v8641 = vadd.f32 %v8639, 1.0
    %v8642 = vadd.f32 %v8640, 1.0
    %v8643 = vrcp.pop %v8641
    %v8644 = vmul.f32 1.0, %v8643
    %v8645 = vrcp.pop %v8642
    %v8646 = vmul.f32 1.0, %v8645
    %v8647 = vmul.f32 %v8644, 1.0614054
    %v8648 = vmul.f32 %v8646, 1.0614054
    %v8649 = vadd.f32 %v8647, -1.4531521
    %v8650 = vadd.f32 %v8648, -1.4531521
    %v8651 = vmul.f32 %v8649, %v8644
    %v8652 = vmul.f32 %v8650, %v8646
    %v8653 = vadd.f32 %v8651, 1.4214138
    %v8654 = vadd.f32 %v8652, 1.4214138
    %v8655 = vmul.f32 %v8653, %v8644
    %v8656 = vmul.f32 %v8654, %v8646
    %v8657 = vadd.f32 %v8655, -0.28449672
    %v8658 = vadd.f32 %v8656, -0.28449672
    %v8659 = vmul.f32 %v8657, %v8644
    %v8660 = vmul.f32 %v8658, %v8646
    %v8661 = vadd.f32 %v8659, 0.2548296
    %v8662 = vadd.f32 %v8660, 0.2548296
    %v8663 = vmul.f32 %v8661, %v8644
    %v8664 = vmul.f32 %v8662, %v8646
    %v8665 = vsub.f32 0.0, %v8637
    %v8666 = vsub.f32 0.0, %v8638
    %v8667 = vmul.f32 %v8665, %v8637
    %v8668 = vmul.f32 %v8666, %v8638
    %v8669 = vmul.f32 %v8667, 1.442695
    %v8670 = vpow.pop %v8669
    %v8671 = vmul.f32 %v8668, 1.442695
    %v8672 = vpow.pop %v8671
    %v8673 = vmul.f32 %v8663, %v8670
    %v8674 = vmul.f32 %v8664, %v8672
    %v8675 = vsub.f32 1.0, %v8673
    %v8676 = vsub.f32 1.0, %v8674
    %v8677 = vmul.f32 %v8635, %v8675
    %v8678 = vmul.f32 %v8636, %v8676
    %v8679 = vadd.f32 %v8677, 1.0
    %v8680 = vadd.f32 %v8678, 1.0
    %v8681 = vmul.f32 %v8629, %v8679
    %v8682 = vmul.f32 %v8630, %v8680
    %v8683 = vld [vmem:[#allocation8] sm:$0xff]
    %v8684 = vld [vmem:[#allocation8 + $0x8] sm:$0xff]
    %v8685 = vld [vmem:[#allocation8 + $0x10] sm:$0xff]
    %v8686 = vld [vmem:[#allocation8 + $0x18] sm:$0xff]
    %v8687 = vld [vmem:[%s7] sm:$0x1]
    %v8689 = vlaneseq
    %v8690 = vshrl.u32 %v8689, 7
    %v8691 = vsub.s32 0, %v8690
    %v8692 = vrot.slane %v8687, %v8691
    %v8695 = vsel %vm135, %v8681, 0
    %v8698 = vsel %vm135, %v8682, 0
    %8700 = vmatprep.subr.mxu0 0.0
    %v8701 = vand.u32 %v8683, 4294901760
    %8702 = vmatpush1.msra.mxu0 %v8701
    %8703 = vmatprep.subr.mxu0 0.0
    %v8704 = vand.u32 %v8684, 4294901760
    %8705 = vmatpush1.msra.mxu0 %v8704
    %8706 = vmatprep.subr.mxu0 0.0
    %v8707 = vand.u32 %v8685, 4294901760
    %8708 = vmatpush1.msra.mxu0 %v8707
    %8709 = vmatprep.subr.mxu0 0.0
    %v8710 = vand.u32 %v8686, 4294901760
    %8711 = vmatpush1.msra.mxu0 %v8710
    %8712 = vmatprep.subr.mxu0 0.0
    %8713 = vmatpush1.msra.mxu0 0.0
    %8714 = vmatprep.subr.mxu0 0.0
    %8715 = vmatpush1.msra.mxu0 0.0
    %8716 = vmatprep.subr.mxu0 0.0
    %8717 = vmatpush1.msra.mxu0 0.0
    %8718 = vmatprep.subr.mxu0 0.0
    %8719 = vmatpush1.msra.mxu0 0.0
    %8720 = vmatprep.subr.mxu0 0.0
    %8721 = vmatpush1.msra.mxu0 0.0
    %8722 = vmatprep.subr.mxu0 0.0
    %8723 = vmatpush1.msra.mxu0 0.0
    %8724 = vmatprep.subr.mxu0 0.0
    %8725 = vmatpush1.msra.mxu0 0.0
    %8726 = vmatprep.subr.mxu0 0.0
    %8727 = vmatpush1.msra.mxu0 0.0
    %8728 = vmatprep.subr.mxu0 0.0
    %8729 = vmatpush1.msra.mxu0 0.0
    %8730 = vmatprep.subr.mxu0 0.0
    %8731 = vmatpush1.msra.mxu0 0.0
    %8732 = vmatprep.subr.mxu0 0.0
    %8733 = vmatpush1.msra.mxu0 0.0
    %8734 = vmatprep.subr.mxu0 0.0
    %8735 = vmatpush1.msra.mxu0 0.0
    %8736 = vmatprep.subr.mxu0 0.0
    %8737 = vmatpush1.msra.mxu0 0.0
    %8738 = vmatprep.subr.mxu0 0.0
    %8739 = vmatpush1.msra.mxu0 0.0
    %8740 = vmatprep.subr.mxu0 0.0
    %8741 = vmatpush1.msra.mxu0 0.0
    %8742 = vmatprep.subr.mxu0 0.0
    %8743 = vmatpush1.msra.mxu0 0.0
    %8744 = vmatprep.subr.mxu0 0.0
    %8745 = vmatpush1.msra.mxu0 0.0
    %8746 = vmatprep.subr.mxu0 0.0
    %8747 = vmatpush1.msra.mxu0 0.0
    %8748 = vmatprep.subr.mxu0 0.0
    %8749 = vmatpush1.msra.mxu0 0.0
    %8750 = vmatprep.subr.mxu0 0.0
    %8751 = vmatpush1.msra.mxu0 0.0
    %8752 = vmatprep.subr.mxu0 0.0
    %8753 = vmatpush1.msra.mxu0 0.0
    %8754 = vmatprep.subr.mxu0 0.0
    %8755 = vmatpush1.msra.mxu0 0.0
    %8756 = vmatprep.subr.mxu0 0.0
    %8757 = vmatpush1.msra.mxu0 0.0
    %8758 = vmatprep.subr.mxu0 0.0
    %8759 = vmatpush1.msra.mxu0 0.0
    %8760 = vmatprep.subr.mxu0 0.0
    %8761 = vmatpush1.msra.mxu0 0.0
    %8762 = vmatprep.subr.mxu0 0.0
    %8763 = vmatpush1.msra.mxu0 0.0
    %8764 = vmatprep.subr.mxu0 0.0
    %8765 = vmatpush1.msra.mxu0 0.0
    %8766 = vmatprep.subr.mxu0 0.0
    %8767 = vmatpush1.msra.mxu0 0.0
    %8768 = vmatprep.mubr.f32.mxu0 0.0
    %v8769 = vand.u32 %v8695, 4294901760
    %v8770 = vsub.f32 %v8695, %v8769
    %v8771 = vand.u32 %v8770, 4294901760
    %v8772 = vsub.f32 %v8770, %v8771
    %v8773 = vand.u32 %v8772, 4294901760
    %8774 = vmatmul.mubr.f32.gmra.mrb[0].mxu0 %v8773
    %v8775 = vpop.f32.mrb[0].mxu0
    %v8776 = vadd.f32 %v8692, %v8775
    %v8777 = vpop.f32.mrb[0].mxu0
    %8778 = vmatprep.mubr.f32.mxu0 0.0
    %v8779 = vand.u32 %v8698, 4294901760
    %v8780 = vsub.f32 %v8698, %v8779
    %v8781 = vand.u32 %v8780, 4294901760
    %v8782 = vsub.f32 %v8780, %v8781
    %v8783 = vand.u32 %v8782, 4294901760
    %8784 = vmatmul.mubr.f32.gmra.mrb[0].mxu0 %v8783
    %v8785 = vpop.f32.mrb[0].mxu0
    %v8786 = vadd.f32 %v8692, %v8785
    %v8787 = vpop.f32.mrb[0].mxu0
    %8788 = vdwg.mxu0
    %8789 = vmatprep.subr.mxu0 0.0
    %v8790 = vand.u32 %v8683, 4294901760
    %v8791 = vsub.f32 %v8683, %v8790
    %v8792 = vand.u32 %v8791, 4294901760
    %v8793 = vsub.f32 %v8791, %v8792
    %v8794 = vand.u32 %v8793, 4294901760
    %8795 = vmatpush1.msra.mxu0 %v8794
    %8796 = vmatprep.subr.mxu0 0.0
    %v8797 = vand.u32 %v8684, 4294901760
    %v8798 = vsub.f32 %v8684, %v8797
    %v8799 = vand.u32 %v8798, 4294901760
    %v8800 = vsub.f32 %v8798, %v8799
    %v8801 = vand.u32 %v8800, 4294901760
    %8802 = vmatpush1.msra.mxu0 %v8801
    %8803 = vmatprep.subr.mxu0 0.0
    %v8804 = vand.u32 %v8685, 4294901760
    %v8805 = vsub.f32 %v8685, %v8804
    %v8806 = vand.u32 %v8805, 4294901760
    %v8807 = vsub.f32 %v8805, %v8806
    %v8808 = vand.u32 %v8807, 4294901760
    %8809 = vmatpush1.msra.mxu0 %v8808
    %8810 = vmatprep.subr.mxu0 0.0
    %v8811 = vand.u32 %v8686, 4294901760
    %v8812 = vsub.f32 %v8686, %v8811
    %v8813 = vand.u32 %v8812, 4294901760
    %v8814 = vsub.f32 %v8812, %v8813
    %v8815 = vand.u32 %v8814, 4294901760
    %8816 = vmatpush1.msra.mxu0 %v8815
    %8817 = vmatprep.subr.mxu0 0.0
    %8818 = vmatpush1.msra.mxu0 0.0
    %8819 = vmatprep.subr.mxu0 0.0
    %8820 = vmatpush1.msra.mxu0 0.0
    %8821 = vmatprep.subr.mxu0 0.0
    %8822 = vmatpush1.msra.mxu0 0.0
    %8823 = vmatprep.subr.mxu0 0.0
    %8824 = vmatpush1.msra.mxu0 0.0
    %8825 = vmatprep.subr.mxu0 0.0
    %8826 = vmatpush1.msra.mxu0 0.0
    %8827 = vmatprep.subr.mxu0 0.0
    %8828 = vmatpush1.msra.mxu0 0.0
    %8829 = vmatprep.subr.mxu0 0.0
    %8830 = vmatpush1.msra.mxu0 0.0
    %8831 = vmatprep.subr.mxu0 0.0
    %8832 = vmatpush1.msra.mxu0 0.0
    %8833 = vmatprep.subr.mxu0 0.0
    %8834 = vmatpush1.msra.mxu0 0.0
    %8835 = vmatprep.subr.mxu0 0.0
    %8836 = vmatpush1.msra.mxu0 0.0
    %8837 = vmatprep.subr.mxu0 0.0
    %8838 = vmatpush1.msra.mxu0 0.0
    %8839 = vmatprep.subr.mxu0 0.0
    %8840 = vmatpush1.msra.mxu0 0.0
    %8841 = vmatprep.subr.mxu0 0.0
    %8842 = vmatpush1.msra.mxu0 0.0
    %8843 = vmatprep.subr.mxu0 0.0
    %8844 = vmatpush1.msra.mxu0 0.0
    %8845 = vmatprep.subr.mxu0 0.0
    %8846 = vmatpush1.msra.mxu0 0.0
    %8847 = vmatprep.subr.mxu0 0.0
    %8848 = vmatpush1.msra.mxu0 0.0
    %8849 = vmatprep.subr.mxu0 0.0
    %8850 = vmatpush1.msra.mxu0 0.0
    %8851 = vmatprep.subr.mxu0 0.0
    %8852 = vmatpush1.msra.mxu0 0.0
    %8853 = vmatprep.subr.mxu0 0.0
    %8854 = vmatpush1.msra.mxu0 0.0
    %8855 = vmatprep.subr.mxu0 0.0
    %8856 = vmatpush1.msra.mxu0 0.0
    %8857 = vmatprep.subr.mxu0 0.0
    %8858 = vmatpush1.msra.mxu0 0.0
    %8859 = vmatprep.subr.mxu0 0.0
    %8860 = vmatpush1.msra.mxu0 0.0
    %8861 = vmatprep.subr.mxu0 0.0
    %8862 = vmatpush1.msra.mxu0 0.0
    %8863 = vmatprep.subr.mxu0 0.0
    %8864 = vmatpush1.msra.mxu0 0.0
    %8865 = vmatprep.subr.mxu0 0.0
    %8866 = vmatpush1.msra.mxu0 0.0
    %8867 = vmatprep.subr.mxu0 0.0
    %8868 = vmatpush1.msra.mxu0 0.0
    %8869 = vmatprep.subr.mxu0 0.0
    %8870 = vmatpush1.msra.mxu0 0.0
    %8871 = vmatprep.subr.mxu0 0.0
    %8872 = vmatpush1.msra.mxu0 0.0
    %8873 = vmatprep.mubr.f32.mxu0 0.0
    %v8874 = vand.u32 %v8695, 4294901760
    %8875 = vmatmul.mubr.f32.gmra.mrb[0].mxu0 %v8874
    %v8876 = vpop.f32.mrb[0].mxu0
    %v8877 = vadd.f32 %v8776, %v8876
    %v8878 = vpop.f32.mrb[0].mxu0
    %8879 = vmatprep.mubr.f32.mxu0 0.0
    %v8880 = vand.u32 %v8698, 4294901760
    %8881 = vmatmul.mubr.f32.gmra.mrb[0].mxu0 %v8880
    %v8882 = vpop.f32.mrb[0].mxu0
    %v8883 = vadd.f32 %v8786, %v8882
    %v8884 = vpop.f32.mrb[0].mxu0
    %8885 = vdwg.mxu0
    %8886 = vmatprep.subr.mxu0 0.0
    %v8887 = vand.u32 %v8683, 4294901760
    %v8888 = vsub.f32 %v8683, %v8887
    %8889 = vmatpush1.msra.mxu0 %v8888
    %8890 = vmatprep.subr.mxu0 0.0
    %v8891 = vand.u32 %v8684, 4294901760
    %v8892 = vsub.f32 %v8684, %v8891
    %8893 = vmatpush1.msra.mxu0 %v8892
    %8894 = vmatprep.subr.mxu0 0.0
    %v8895 = vand.u32 %v8685, 4294901760
    %v8896 = vsub.f32 %v8685, %v8895
    %8897 = vmatpush1.msra.mxu0 %v8896
    %8898 = vmatprep.subr.mxu0 0.0
    %v8899 = vand.u32 %v8686, 4294901760
    %v8900 = vsub.f32 %v8686, %v8899
    %8901 = vmatpush1.msra.mxu0 %v8900
    %8902 = vmatprep.subr.mxu0 0.0
    %8903 = vmatpush1.msra.mxu0 0.0
    %8904 = vmatprep.subr.mxu0 0.0
    %8905 = vmatpush1.msra.mxu0 0.0
    %8906 = vmatprep.subr.mxu0 0.0
    %8907 = vmatpush1.msra.mxu0 0.0
    %8908 = vmatprep.subr.mxu0 0.0
    %8909 = vmatpush1.msra.mxu0 0.0
    %8910 = vmatprep.subr.mxu0 0.0
    %8911 = vmatpush1.msra.mxu0 0.0
    %8912 = vmatprep.subr.mxu0 0.0
    %8913 = vmatpush1.msra.mxu0 0.0
    %8914 = vmatprep.subr.mxu0 0.0
    %8915 = vmatpush1.msra.mxu0 0.0
    %8916 = vmatprep.subr.mxu0 0.0
    %8917 = vmatpush1.msra.mxu0 0.0
    %8918 = vmatprep.subr.mxu0 0.0
    %8919 = vmatpush1.msra.mxu0 0.0
    %8920 = vmatprep.subr.mxu0 0.0
    %8921 = vmatpush1.msra.mxu0 0.0
    %8922 = vmatprep.subr.mxu0 0.0
    %8923 = vmatpush1.msra.mxu0 0.0
    %8924 = vmatprep.subr.mxu0 0.0
    %8925 = vmatpush1.msra.mxu0 0.0
    %8926 = vmatprep.subr.mxu0 0.0
    %8927 = vmatpush1.msra.mxu0 0.0
    %8928 = vmatprep.subr.mxu0 0.0
    %8929 = vmatpush1.msra.mxu0 0.0
    %8930 = vmatprep.subr.mxu0 0.0
    %8931 = vmatpush1.msra.mxu0 0.0
    %8932 = vmatprep.subr.mxu0 0.0
    %8933 = vmatpush1.msra.mxu0 0.0
    %8934 = vmatprep.subr.mxu0 0.0
    %8935 = vmatpush1.msra.mxu0 0.0
    %8936 = vmatprep.subr.mxu0 0.0
    %8937 = vmatpush1.msra.mxu0 0.0
    %8938 = vmatprep.subr.mxu0 0.0
    %8939 = vmatpush1.msra.mxu0 0.0
    %8940 = vmatprep.subr.mxu0 0.0
    %8941 = vmatpush1.msra.mxu0 0.0
    %8942 = vmatprep.subr.mxu0 0.0
    %8943 = vmatpush1.msra.mxu0 0.0
    %8944 = vmatprep.subr.mxu0 0.0
    %8945 = vmatpush1.msra.mxu0 0.0
    %8946 = vmatprep.subr.mxu0 0.0
    %8947 = vmatpush1.msra.mxu0 0.0
    %8948 = vmatprep.subr.mxu0 0.0
    %8949 = vmatpush1.msra.mxu0 0.0
    %8950 = vmatprep.subr.mxu0 0.0
    %8951 = vmatpush1.msra.mxu0 0.0
    %8952 = vmatprep.subr.mxu0 0.0
    %8953 = vmatpush1.msra.mxu0 0.0
    %8954 = vmatprep.subr.mxu0 0.0
    %8955 = vmatpush1.msra.mxu0 0.0
    %8956 = vmatprep.subr.mxu0 0.0
    %8957 = vmatpush1.msra.mxu0 0.0
    %8958 = vmatprep.mubr.f32.mxu0 0.0
    %v8959 = vand.u32 %v8695, 4294901760
    %v8960 = vsub.f32 %v8695, %v8959
    %8961 = vmatmul.mubr.f32.gmra.mrb[0].mxu0 %v8960
    %v8962 = vpop.f32.mrb[0].mxu0
    %v8963 = vadd.f32 %v8877, %v8962
    %v8964 = vpop.f32.mrb[0].mxu0
    %8965 = vmatprep.mubr.f32.mxu0 0.0
    %v8966 = vand.u32 %v8698, 4294901760
    %v8967 = vsub.f32 %v8698, %v8966
    %8968 = vmatmul.mubr.f32.gmra.mrb[0].mxu0 %v8967
    %v8969 = vpop.f32.mrb[0].mxu0
    %v8970 = vadd.f32 %v8883, %v8969
    %v8971 = vpop.f32.mrb[0].mxu0
    %8972 = vdwg.mxu0
    %8973 = vmatprep.subr.mxu0 0.0
    %v8974 = vand.u32 %v8683, 4294901760
    %8975 = vmatpush1.msra.mxu0 %v8974
    %8976 = vmatprep.subr.mxu0 0.0
    %v8977 = vand.u32 %v8684, 4294901760
    %8978 = vmatpush1.msra.mxu0 %v8977
    %8979 = vmatprep.subr.mxu0 0.0
    %v8980 = vand.u32 %v8685, 4294901760
    %8981 = vmatpush1.msra.mxu0 %v8980
    %8982 = vmatprep.subr.mxu0 0.0
    %v8983 = vand.u32 %v8686, 4294901760
    %8984 = vmatpush1.msra.mxu0 %v8983
    %8985 = vmatprep.subr.mxu0 0.0
    %8986 = vmatpush1.msra.mxu0 0.0
    %8987 = vmatprep.subr.mxu0 0.0
    %8988 = vmatpush1.msra.mxu0 0.0
    %8989 = vmatprep.subr.mxu0 0.0
    %8990 = vmatpush1.msra.mxu0 0.0
    %8991 = vmatprep.subr.mxu0 0.0
    %8992 = vmatpush1.msra.mxu0 0.0
    %8993 = vmatprep.subr.mxu0 0.0
    %8994 = vmatpush1.msra.mxu0 0.0
    %8995 = vmatprep.subr.mxu0 0.0
    %8996 = vmatpush1.msra.mxu0 0.0
    %8997 = vmatprep.subr.mxu0 0.0
    %8998 = vmatpush1.msra.mxu0 0.0
    %8999 = vmatprep.subr.mxu0 0.0
    %9000 = vmatpush1.msra.mxu0 0.0
    %9001 = vmatprep.subr.mxu0 0.0
    %9002 = vmatpush1.msra.mxu0 0.0
    %9003 = vmatprep.subr.mxu0 0.0
    %9004 = vmatpush1.msra.mxu0 0.0
    %9005 = vmatprep.subr.mxu0 0.0
    %9006 = vmatpush1.msra.mxu0 0.0
    %9007 = vmatprep.subr.mxu0 0.0
    %9008 = vmatpush1.msra.mxu0 0.0
    %9009 = vmatprep.subr.mxu0 0.0
    %9010 = vmatpush1.msra.mxu0 0.0
    %9011 = vmatprep.subr.mxu0 0.0
    %9012 = vmatpush1.msra.mxu0 0.0
    %9013 = vmatprep.subr.mxu0 0.0
    %9014 = vmatpush1.msra.mxu0 0.0
    %9015 = vmatprep.subr.mxu0 0.0
    %9016 = vmatpush1.msra.mxu0 0.0
    %9017 = vmatprep.subr.mxu0 0.0
    %9018 = vmatpush1.msra.mxu0 0.0
    %9019 = vmatprep.subr.mxu0 0.0
    %9020 = vmatpush1.msra.mxu0 0.0
    %9021 = vmatprep.subr.mxu0 0.0
    %9022 = vmatpush1.msra.mxu0 0.0
    %9023 = vmatprep.subr.mxu0 0.0
    %9024 = vmatpush1.msra.mxu0 0.0
    %9025 = vmatprep.subr.mxu0 0.0
    %9026 = vmatpush1.msra.mxu0 0.0
    %9027 = vmatprep.subr.mxu0 0.0
    %9028 = vmatpush1.msra.mxu0 0.0
    %9029 = vmatprep.subr.mxu0 0.0
    %9030 = vmatpush1.msra.mxu0 0.0
    %9031 = vmatprep.subr.mxu0 0.0
    %9032 = vmatpush1.msra.mxu0 0.0
    %9033 = vmatprep.subr.mxu0 0.0
    %9034 = vmatpush1.msra.mxu0 0.0
    %9035 = vmatprep.subr.mxu0 0.0
    %9036 = vmatpush1.msra.mxu0 0.0
    %9037 = vmatprep.subr.mxu0 0.0
    %9038 = vmatpush1.msra.mxu0 0.0
    %9039 = vmatprep.subr.mxu0 0.0
    %9040 = vmatpush1.msra.mxu0 0.0
    %9041 = vmatprep.mubr.f32.mxu0 0.0
    %v9042 = vand.u32 %v8695, 4294901760
    %v9043 = vsub.f32 %v8695, %v9042
    %v9044 = vand.u32 %v9043, 4294901760
    %9045 = vmatmul.mubr.f32.gmra.mrb[0].mxu0 %v9044
    %v9046 = vpop.f32.mrb[0].mxu0
    %v9047 = vadd.f32 %v8963, %v9046
    %v9048 = vpop.f32.mrb[0].mxu0
    %9049 = vmatprep.mubr.f32.mxu0 0.0
    %v9050 = vand.u32 %v8698, 4294901760
    %v9051 = vsub.f32 %v8698, %v9050
    %v9052 = vand.u32 %v9051, 4294901760
    %9053 = vmatmul.mubr.f32.gmra.mrb[0].mxu0 %v9052
    %v9054 = vpop.f32.mrb[0].mxu0
    %v9055 = vadd.f32 %v8970, %v9054
    %v9056 = vpop.f32.mrb[0].mxu0
    %9057 = vdwg.mxu0
    %9058 = vmatprep.subr.mxu0 0.0
    %v9059 = vand.u32 %v8683, 4294901760
    %v9060 = vsub.f32 %v8683, %v9059
    %v9061 = vand.u32 %v9060, 4294901760
    %9062 = vmatpush1.msra.mxu0 %v9061
    %9063 = vmatprep.subr.mxu0 0.0
    %v9064 = vand.u32 %v8684, 4294901760
    %v9065 = vsub.f32 %v8684, %v9064
    %v9066 = vand.u32 %v9065, 4294901760
    %9067 = vmatpush1.msra.mxu0 %v9066
    %9068 = vmatprep.subr.mxu0 0.0
    %v9069 = vand.u32 %v8685, 4294901760
    %v9070 = vsub.f32 %v8685, %v9069
    %v9071 = vand.u32 %v9070, 4294901760
    %9072 = vmatpush1.msra.mxu0 %v9071
    %9073 = vmatprep.subr.mxu0 0.0
    %v9074 = vand.u32 %v8686, 4294901760
    %v9075 = vsub.f32 %v8686, %v9074
    %v9076 = vand.u32 %v9075, 4294901760
    %9077 = vmatpush1.msra.mxu0 %v9076
    %9078 = vmatprep.subr.mxu0 0.0
    %9079 = vmatpush1.msra.mxu0 0.0
    %9080 = vmatprep.subr.mxu0 0.0
    %9081 = vmatpush1.msra.mxu0 0.0
    %9082 = vmatprep.subr.mxu0 0.0
    %9083 = vmatpush1.msra.mxu0 0.0
    %9084 = vmatprep.subr.mxu0 0.0
    %9085 = vmatpush1.msra.mxu0 0.0
    %9086 = vmatprep.subr.mxu0 0.0
    %9087 = vmatpush1.msra.mxu0 0.0
    %9088 = vmatprep.subr.mxu0 0.0
    %9089 = vmatpush1.msra.mxu0 0.0
    %9090 = vmatprep.subr.mxu0 0.0
    %9091 = vmatpush1.msra.mxu0 0.0
    %9092 = vmatprep.subr.mxu0 0.0
    %9093 = vmatpush1.msra.mxu0 0.0
    %9094 = vmatprep.subr.mxu0 0.0
    %9095 = vmatpush1.msra.mxu0 0.0
    %9096 = vmatprep.subr.mxu0 0.0
    %9097 = vmatpush1.msra.mxu0 0.0
    %9098 = vmatprep.subr.mxu0 0.0
    %9099 = vmatpush1.msra.mxu0 0.0
    %9100 = vmatprep.subr.mxu0 0.0
    %9101 = vmatpush1.msra.mxu0 0.0
    %9102 = vmatprep.subr.mxu0 0.0
    %9103 = vmatpush1.msra.mxu0 0.0
    %9104 = vmatprep.subr.mxu0 0.0
    %9105 = vmatpush1.msra.mxu0 0.0
    %9106 = vmatprep.subr.mxu0 0.0
    %9107 = vmatpush1.msra.mxu0 0.0
    %9108 = vmatprep.subr.mxu0 0.0
    %9109 = vmatpush1.msra.mxu0 0.0
    %9110 = vmatprep.subr.mxu0 0.0
    %9111 = vmatpush1.msra.mxu0 0.0
    %9112 = vmatprep.subr.mxu0 0.0
    %9113 = vmatpush1.msra.mxu0 0.0
    %9114 = vmatprep.subr.mxu0 0.0
    %9115 = vmatpush1.msra.mxu0 0.0
    %9116 = vmatprep.subr.mxu0 0.0
    %9117 = vmatpush1.msra.mxu0 0.0
    %9118 = vmatprep.subr.mxu0 0.0
    %9119 = vmatpush1.msra.mxu0 0.0
    %9120 = vmatprep.subr.mxu0 0.0
    %9121 = vmatpush1.msra.mxu0 0.0
    %9122 = vmatprep.subr.mxu0 0.0
    %9123 = vmatpush1.msra.mxu0 0.0
    %9124 = vmatprep.subr.mxu0 0.0
    %9125 = vmatpush1.msra.mxu0 0.0
    %9126 = vmatprep.subr.mxu0 0.0
    %9127 = vmatpush1.msra.mxu0 0.0
    %9128 = vmatprep.subr.mxu0 0.0
    %9129 = vmatpush1.msra.mxu0 0.0
    %9130 = vmatprep.subr.mxu0 0.0
    %9131 = vmatpush1.msra.mxu0 0.0
    %9132 = vmatprep.subr.mxu0 0.0
    %9133 = vmatpush1.msra.mxu0 0.0
    %9134 = vmatprep.mubr.f32.mxu0 0.0
    %v9135 = vand.u32 %v8695, 4294901760
    %9136 = vmatmul.mubr.f32.gmra.mrb[0].mxu0 %v9135
    %v9137 = vpop.f32.mrb[0].mxu0
    %v9138 = vadd.f32 %v9047, %v9137
    %v9139 = vpop.f32.mrb[0].mxu0
    %9140 = vmatprep.mubr.f32.mxu0 0.0
    %v9141 = vand.u32 %v8698, 4294901760
    %9142 = vmatmul.mubr.f32.gmra.mrb[0].mxu0 %v9141
    %v9143 = vpop.f32.mrb[0].mxu0
    %v9144 = vadd.f32 %v9055, %v9143
    %v9145 = vpop.f32.mrb[0].mxu0
    %9146 = vdwg.mxu0
    %9147 = vmatprep.subr.mxu0 0.0
    %v9148 = vand.u32 %v8683, 4294901760
    %9149 = vmatpush1.msra.mxu0 %v9148
    %9150 = vmatprep.subr.mxu0 0.0
    %v9151 = vand.u32 %v8684, 4294901760
    %9152 = vmatpush1.msra.mxu0 %v9151
    %9153 = vmatprep.subr.mxu0 0.0
    %v9154 = vand.u32 %v8685, 4294901760
    %9155 = vmatpush1.msra.mxu0 %v9154
    %9156 = vmatprep.subr.mxu0 0.0
    %v9157 = vand.u32 %v8686, 4294901760
    %9158 = vmatpush1.msra.mxu0 %v9157
    %9159 = vmatprep.subr.mxu0 0.0
    %9160 = vmatpush1.msra.mxu0 0.0
    %9161 = vmatprep.subr.mxu0 0.0
    %9162 = vmatpush1.msra.mxu0 0.0
    %9163 = vmatprep.subr.mxu0 0.0
    %9164 = vmatpush1.msra.mxu0 0.0
    %9165 = vmatprep.subr.mxu0 0.0
    %9166 = vmatpush1.msra.mxu0 0.0
    %9167 = vmatprep.subr.mxu0 0.0
    %9168 = vmatpush1.msra.mxu0 0.0
    %9169 = vmatprep.subr.mxu0 0.0
    %9170 = vmatpush1.msra.mxu0 0.0
    %9171 = vmatprep.subr.mxu0 0.0
    %9172 = vmatpush1.msra.mxu0 0.0
    %9173 = vmatprep.subr.mxu0 0.0
    %9174 = vmatpush1.msra.mxu0 0.0
    %9175 = vmatprep.subr.mxu0 0.0
    %9176 = vmatpush1.msra.mxu0 0.0
    %9177 = vmatprep.subr.mxu0 0.0
    %9178 = vmatpush1.msra.mxu0 0.0
    %9179 = vmatprep.subr.mxu0 0.0
    %9180 = vmatpush1.msra.mxu0 0.0
    %9181 = vmatprep.subr.mxu0 0.0
    %9182 = vmatpush1.msra.mxu0 0.0
    %9183 = vmatprep.subr.mxu0 0.0
    %9184 = vmatpush1.msra.mxu0 0.0
    %9185 = vmatprep.subr.mxu0 0.0
    %9186 = vmatpush1.msra.mxu0 0.0
    %9187 = vmatprep.subr.mxu0 0.0
    %9188 = vmatpush1.msra.mxu0 0.0
    %9189 = vmatprep.subr.mxu0 0.0
    %9190 = vmatpush1.msra.mxu0 0.0
    %9191 = vmatprep.subr.mxu0 0.0
    %9192 = vmatpush1.msra.mxu0 0.0
    %9193 = vmatprep.subr.mxu0 0.0
    %9194 = vmatpush1.msra.mxu0 0.0
    %9195 = vmatprep.subr.mxu0 0.0
    %9196 = vmatpush1.msra.mxu0 0.0
    %9197 = vmatprep.subr.mxu0 0.0
    %9198 = vmatpush1.msra.mxu0 0.0
    %9199 = vmatprep.subr.mxu0 0.0
    %9200 = vmatpush1.msra.mxu0 0.0
    %9201 = vmatprep.subr.mxu0 0.0
    %9202 = vmatpush1.msra.mxu0 0.0
    %9203 = vmatprep.subr.mxu0 0.0
    %9204 = vmatpush1.msra.mxu0 0.0
    %9205 = vmatprep.subr.mxu0 0.0
    %9206 = vmatpush1.msra.mxu0 0.0
    %9207 = vmatprep.subr.mxu0 0.0
    %9208 = vmatpush1.msra.mxu0 0.0
    %9209 = vmatprep.subr.mxu0 0.0
    %9210 = vmatpush1.msra.mxu0 0.0
    %9211 = vmatprep.subr.mxu0 0.0
    %9212 = vmatpush1.msra.mxu0 0.0
    %9213 = vmatprep.subr.mxu0 0.0
    %9214 = vmatpush1.msra.mxu0 0.0
    %9215 = vmatprep.mubr.f32.mxu0 0.0
    %v9216 = vand.u32 %v8695, 4294901760
    %9217 = vmatmul.mubr.f32.gmra.mrb[0].mxu0 %v9216
    %v9218 = vpop.f32.mrb[0].mxu0
    %v9219 = vadd.f32 %v9138, %v9218
    %v9220 = vpop.f32.mrb[0].mxu0
    %9221 = vmatprep.mubr.f32.mxu0 0.0
    %v9222 = vand.u32 %v8698, 4294901760
    %9223 = vmatmul.mubr.f32.gmra.mrb[0].mxu0 %v9222
    %v9224 = vpop.f32.mrb[0].mxu0
    %v9225 = vadd.f32 %v9144, %v9224
    %v9226 = vpop.f32.mrb[0].mxu0
    %9227 = vdwg.mxu0
    %v9228 = vmul.f32 %v9219, 0.5
    %v9229 = vmul.f32 %v9225, 0.5
    %v9230 = vmul.f32 %v9219, 0.70710677
    %v9231 = vmul.f32 %v9225, 0.70710677
    %vm9232 = vcmp.ge.f32.partialorder %v9230, 0.0
    %vm9233 = vcmp.ge.f32.partialorder %v9231, 0.0
    %v9234 = vsel %vm9232, 1.0, -1.0
    %v9235 = vsel %vm9233, 1.0, -1.0
    %v9236 = vand.u32 2147483647, %v9230
    %v9237 = vand.u32 2147483647, %v9231
    %v9238 = vmul.f32 %v9236, 0.3275911
    %v9239 = vmul.f32 %v9237, 0.3275911
    %v9240 = vadd.f32 %v9238, 1.0
    %v9241 = vadd.f32 %v9239, 1.0
    %v9242 = vrcp.pop %v9240
    %v9243 = vmul.f32 1.0, %v9242
    %v9244 = vrcp.pop %v9241
    %v9245 = vmul.f32 1.0, %v9244
    %v9246 = vmul.f32 %v9243, 1.0614054
    %v9247 = vmul.f32 %v9245, 1.0614054
    %v9248 = vadd.f32 %v9246, -1.4531521
    %v9249 = vadd.f32 %v9247, -1.4531521
    %v9250 = vmul.f32 %v9248, %v9243
    %v9251 = vmul.f32 %v9249, %v9245
    %v9252 = vadd.f32 %v9250, 1.4214138
    %v9253 = vadd.f32 %v9251, 1.4214138
    %v9254 = vmul.f32 %v9252, %v9243
    %v9255 = vmul.f32 %v9253, %v9245
    %v9256 = vadd.f32 %v9254, -0.28449672
    %v9257 = vadd.f32 %v9255, -0.28449672
    %v9258 = vmul.f32 %v9256, %v9243
    %v9259 = vmul.f32 %v9257, %v9245
    %v9260 = vadd.f32 %v9258, 0.2548296
    %v9261 = vadd.f32 %v9259, 0.2548296
    %v9262 = vmul.f32 %v9260, %v9243
    %v9263 = vmul.f32 %v9261, %v9245
    %v9264 = vsub.f32 0.0, %v9236
    %v9265 = vsub.f32 0.0, %v9237
    %v9266 = vmul.f32 %v9264, %v9236
    %v9267 = vmul.f32 %v9265, %v9237
    %v9268 = vmul.f32 %v9266, 1.442695
    %v9269 = vpow.pop %v9268
    %v9270 = vmul.f32 %v9267, 1.442695
    %v9271 = vpow.pop %v9270
    %v9272 = vmul.f32 %v9262, %v9269
    %v9273 = vmul.f32 %v9263, %v9271
    %v9274 = vsub.f32 1.0, %v9272
    %v9275 = vsub.f32 1.0, %v9273
    %v9276 = vmul.f32 %v9234, %v9274
    %v9277 = vmul.f32 %v9235, %v9275
    %v9278 = vadd.f32 %v9276, 1.0
    %v9279 = vadd.f32 %v9277, 1.0
    %v9280 = vmul.f32 %v9228, %v9278
    %v9281 = vmul.f32 %v9229, %v9279
    %v9282 = vld [vmem:[#allocation10] sm:$0xff]
    %v9283 = vld [vmem:[#allocation10 + $0x8] sm:$0xff]
    %v9284 = vld [vmem:[#allocation10 + $0x10] sm:$0xff]
    %v9285 = vld [vmem:[#allocation10 + $0x18] sm:$0xff]
    %v9286 = vld [vmem:[#allocation11] sm:$0x1]
    %v9288 = vlaneseq
    %v9289 = vshrl.u32 %v9288, 7
    %v9290 = vsub.s32 0, %v9289
    %v9291 = vrot.slane %v9286, %v9290
    %v9294 = vsel %vm135, %v9280, 0
    %v9297 = vsel %vm135, %v9281, 0
    %9299 = vmatprep.subr.mxu0 0.0
    %v9300 = vand.u32 %v9282, 4294901760
    %9301 = vmatpush1.msra.mxu0 %v9300
    %9302 = vmatprep.subr.mxu0 0.0
    %v9303 = vand.u32 %v9283, 4294901760
    %9304 = vmatpush1.msra.mxu0 %v9303
    %9305 = vmatprep.subr.mxu0 0.0
    %v9306 = vand.u32 %v9284, 4294901760
    %9307 = vmatpush1.msra.mxu0 %v9306
    %9308 = vmatprep.subr.mxu0 0.0
    %v9309 = vand.u32 %v9285, 4294901760
    %9310 = vmatpush1.msra.mxu0 %v9309
    %9311 = vmatprep.subr.mxu0 0.0
    %9312 = vmatpush1.msra.mxu0 0.0
    %9313 = vmatprep.subr.mxu0 0.0
    %9314 = vmatpush1.msra.mxu0 0.0
    %9315 = vmatprep.subr.mxu0 0.0
    %9316 = vmatpush1.msra.mxu0 0.0
    %9317 = vmatprep.subr.mxu0 0.0
    %9318 = vmatpush1.msra.mxu0 0.0
    %9319 = vmatprep.subr.mxu0 0.0
    %9320 = vmatpush1.msra.mxu0 0.0
    %9321 = vmatprep.subr.mxu0 0.0
    %9322 = vmatpush1.msra.mxu0 0.0
    %9323 = vmatprep.subr.mxu0 0.0
    %9324 = vmatpush1.msra.mxu0 0.0
    %9325 = vmatprep.subr.mxu0 0.0
    %9326 = vmatpush1.msra.mxu0 0.0
    %9327 = vmatprep.subr.mxu0 0.0
    %9328 = vmatpush1.msra.mxu0 0.0
    %9329 = vmatprep.subr.mxu0 0.0
    %9330 = vmatpush1.msra.mxu0 0.0
    %9331 = vmatprep.subr.mxu0 0.0
    %9332 = vmatpush1.msra.mxu0 0.0
    %9333 = vmatprep.subr.mxu0 0.0
    %9334 = vmatpush1.msra.mxu0 0.0
    %9335 = vmatprep.subr.mxu0 0.0
    %9336 = vmatpush1.msra.mxu0 0.0
    %9337 = vmatprep.subr.mxu0 0.0
    %9338 = vmatpush1.msra.mxu0 0.0
    %9339 = vmatprep.subr.mxu0 0.0
    %9340 = vmatpush1.msra.mxu0 0.0
    %9341 = vmatprep.subr.mxu0 0.0
    %9342 = vmatpush1.msra.mxu0 0.0
    %9343 = vmatprep.subr.mxu0 0.0
    %9344 = vmatpush1.msra.mxu0 0.0
    %9345 = vmatprep.subr.mxu0 0.0
    %9346 = vmatpush1.msra.mxu0 0.0
    %9347 = vmatprep.subr.mxu0 0.0
    %9348 = vmatpush1.msra.mxu0 0.0
    %9349 = vmatprep.subr.mxu0 0.0
    %9350 = vmatpush1.msra.mxu0 0.0
    %9351 = vmatprep.subr.mxu0 0.0
    %9352 = vmatpush1.msra.mxu0 0.0
    %9353 = vmatprep.subr.mxu0 0.0
    %9354 = vmatpush1.msra.mxu0 0.0
    %9355 = vmatprep.subr.mxu0 0.0
    %9356 = vmatpush1.msra.mxu0 0.0
    %9357 = vmatprep.subr.mxu0 0.0
    %9358 = vmatpush1.msra.mxu0 0.0
    %9359 = vmatprep.subr.mxu0 0.0
    %9360 = vmatpush1.msra.mxu0 0.0
    %9361 = vmatprep.subr.mxu0 0.0
    %9362 = vmatpush1.msra.mxu0 0.0
    %9363 = vmatprep.subr.mxu0 0.0
    %9364 = vmatpush1.msra.mxu0 0.0
    %9365 = vmatprep.subr.mxu0 0.0
    %9366 = vmatpush1.msra.mxu0 0.0
    %9367 = vmatprep.mubr.f32.mxu0 0.0
    %v9368 = vand.u32 %v9294, 4294901760
    %v9369 = vsub.f32 %v9294, %v9368
    %v9370 = vand.u32 %v9369, 4294901760
    %v9371 = vsub.f32 %v9369, %v9370
    %v9372 = vand.u32 %v9371, 4294901760
    %9373 = vmatmul.mubr.f32.gmra.mrb[0].mxu0 %v9372
    %v9374 = vpop.f32.mrb[0].mxu0
    %v9375 = vadd.f32 %v9291, %v9374
    %v9376 = vpop.f32.mrb[0].mxu0
    %9377 = vmatprep.mubr.f32.mxu0 0.0
    %v9378 = vand.u32 %v9297, 4294901760
    %v9379 = vsub.f32 %v9297, %v9378
    %v9380 = vand.u32 %v9379, 4294901760
    %v9381 = vsub.f32 %v9379, %v9380
    %v9382 = vand.u32 %v9381, 4294901760
    %9383 = vmatmul.mubr.f32.gmra.mrb[0].mxu0 %v9382
    %v9384 = vpop.f32.mrb[0].mxu0
    %v9385 = vadd.f32 %v9291, %v9384
    %v9386 = vpop.f32.mrb[0].mxu0
    %9387 = vdwg.mxu0
    %9388 = vmatprep.subr.mxu0 0.0
    %v9389 = vand.u32 %v9282, 4294901760
    %v9390 = vsub.f32 %v9282, %v9389
    %v9391 = vand.u32 %v9390, 4294901760
    %v9392 = vsub.f32 %v9390, %v9391
    %v9393 = vand.u32 %v9392, 4294901760
    %9394 = vmatpush1.msra.mxu0 %v9393
    %9395 = vmatprep.subr.mxu0 0.0
    %v9396 = vand.u32 %v9283, 4294901760
    %v9397 = vsub.f32 %v9283, %v9396
    %v9398 = vand.u32 %v9397, 4294901760
    %v9399 = vsub.f32 %v9397, %v9398
    %v9400 = vand.u32 %v9399, 4294901760
    %9401 = vmatpush1.msra.mxu0 %v9400
    %9402 = vmatprep.subr.mxu0 0.0
    %v9403 = vand.u32 %v9284, 4294901760
    %v9404 = vsub.f32 %v9284, %v9403
    %v9405 = vand.u32 %v9404, 4294901760
    %v9406 = vsub.f32 %v9404, %v9405
    %v9407 = vand.u32 %v9406, 4294901760
    %9408 = vmatpush1.msra.mxu0 %v9407
    %9409 = vmatprep.subr.mxu0 0.0
    %v9410 = vand.u32 %v9285, 4294901760
    %v9411 = vsub.f32 %v9285, %v9410
    %v9412 = vand.u32 %v9411, 4294901760
    %v9413 = vsub.f32 %v9411, %v9412
    %v9414 = vand.u32 %v9413, 4294901760
    %9415 = vmatpush1.msra.mxu0 %v9414
    %9416 = vmatprep.subr.mxu0 0.0
    %9417 = vmatpush1.msra.mxu0 0.0
    %9418 = vmatprep.subr.mxu0 0.0
    %9419 = vmatpush1.msra.mxu0 0.0
    %9420 = vmatprep.subr.mxu0 0.0
    %9421 = vmatpush1.msra.mxu0 0.0
    %9422 = vmatprep.subr.mxu0 0.0
    %9423 = vmatpush1.msra.mxu0 0.0
    %9424 = vmatprep.subr.mxu0 0.0
    %9425 = vmatpush1.msra.mxu0 0.0
    %9426 = vmatprep.subr.mxu0 0.0
    %9427 = vmatpush1.msra.mxu0 0.0
    %9428 = vmatprep.subr.mxu0 0.0
    %9429 = vmatpush1.msra.mxu0 0.0
    %9430 = vmatprep.subr.mxu0 0.0
    %9431 = vmatpush1.msra.mxu0 0.0
    %9432 = vmatprep.subr.mxu0 0.0
    %9433 = vmatpush1.msra.mxu0 0.0
    %9434 = vmatprep.subr.mxu0 0.0
    %9435 = vmatpush1.msra.mxu0 0.0
    %9436 = vmatprep.subr.mxu0 0.0
    %9437 = vmatpush1.msra.mxu0 0.0
    %9438 = vmatprep.subr.mxu0 0.0
    %9439 = vmatpush1.msra.mxu0 0.0
    %9440 = vmatprep.subr.mxu0 0.0
    %9441 = vmatpush1.msra.mxu0 0.0
    %9442 = vmatprep.subr.mxu0 0.0
    %9443 = vmatpush1.msra.mxu0 0.0
    %9444 = vmatprep.subr.mxu0 0.0
    %9445 = vmatpush1.msra.mxu0 0.0
    %9446 = vmatprep.subr.mxu0 0.0
    %9447 = vmatpush1.msra.mxu0 0.0
    %9448 = vmatprep.subr.mxu0 0.0
    %9449 = vmatpush1.msra.mxu0 0.0
    %9450 = vmatprep.subr.mxu0 0.0
    %9451 = vmatpush1.msra.mxu0 0.0
    %9452 = vmatprep.subr.mxu0 0.0
    %9453 = vmatpush1.msra.mxu0 0.0
    %9454 = vmatprep.subr.mxu0 0.0
    %9455 = vmatpush1.msra.mxu0 0.0
    %9456 = vmatprep.subr.mxu0 0.0
    %9457 = vmatpush1.msra.mxu0 0.0
    %9458 = vmatprep.subr.mxu0 0.0
    %9459 = vmatpush1.msra.mxu0 0.0
    %9460 = vmatprep.subr.mxu0 0.0
    %9461 = vmatpush1.msra.mxu0 0.0
    %9462 = vmatprep.subr.mxu0 0.0
    %9463 = vmatpush1.msra.mxu0 0.0
    %9464 = vmatprep.subr.mxu0 0.0
    %9465 = vmatpush1.msra.mxu0 0.0
    %9466 = vmatprep.subr.mxu0 0.0
    %9467 = vmatpush1.msra.mxu0 0.0
    %9468 = vmatprep.subr.mxu0 0.0
    %9469 = vmatpush1.msra.mxu0 0.0
    %9470 = vmatprep.subr.mxu0 0.0
    %9471 = vmatpush1.msra.mxu0 0.0
    %9472 = vmatprep.mubr.f32.mxu0 0.0
    %v9473 = vand.u32 %v9294, 4294901760
    %9474 = vmatmul.mubr.f32.gmra.mrb[0].mxu0 %v9473
    %v9475 = vpop.f32.mrb[0].mxu0
    %v9476 = vadd.f32 %v9375, %v9475
    %v9477 = vpop.f32.mrb[0].mxu0
    %9478 = vmatprep.mubr.f32.mxu0 0.0
    %v9479 = vand.u32 %v9297, 4294901760
    %9480 = vmatmul.mubr.f32.gmra.mrb[0].mxu0 %v9479
    %v9481 = vpop.f32.mrb[0].mxu0
    %v9482 = vadd.f32 %v9385, %v9481
    %v9483 = vpop.f32.mrb[0].mxu0
    %9484 = vdwg.mxu0
    %9485 = vmatprep.subr.mxu0 0.0
    %v9486 = vand.u32 %v9282, 4294901760
    %v9487 = vsub.f32 %v9282, %v9486
    %9488 = vmatpush1.msra.mxu0 %v9487
    %9489 = vmatprep.subr.mxu0 0.0
    %v9490 = vand.u32 %v9283, 4294901760
    %v9491 = vsub.f32 %v9283, %v9490
    %9492 = vmatpush1.msra.mxu0 %v9491
    %9493 = vmatprep.subr.mxu0 0.0
    %v9494 = vand.u32 %v9284, 4294901760
    %v9495 = vsub.f32 %v9284, %v9494
    %9496 = vmatpush1.msra.mxu0 %v9495
    %9497 = vmatprep.subr.mxu0 0.0
    %v9498 = vand.u32 %v9285, 4294901760
    %v9499 = vsub.f32 %v9285, %v9498
    %9500 = vmatpush1.msra.mxu0 %v9499
    %9501 = vmatprep.subr.mxu0 0.0
    %9502 = vmatpush1.msra.mxu0 0.0
    %9503 = vmatprep.subr.mxu0 0.0
    %9504 = vmatpush1.msra.mxu0 0.0
    %9505 = vmatprep.subr.mxu0 0.0
    %9506 = vmatpush1.msra.mxu0 0.0
    %9507 = vmatprep.subr.mxu0 0.0
    %9508 = vmatpush1.msra.mxu0 0.0
    %9509 = vmatprep.subr.mxu0 0.0
    %9510 = vmatpush1.msra.mxu0 0.0
    %9511 = vmatprep.subr.mxu0 0.0
    %9512 = vmatpush1.msra.mxu0 0.0
    %9513 = vmatprep.subr.mxu0 0.0
    %9514 = vmatpush1.msra.mxu0 0.0
    %9515 = vmatprep.subr.mxu0 0.0
    %9516 = vmatpush1.msra.mxu0 0.0
    %9517 = vmatprep.subr.mxu0 0.0
    %9518 = vmatpush1.msra.mxu0 0.0
    %9519 = vmatprep.subr.mxu0 0.0
    %9520 = vmatpush1.msra.mxu0 0.0
    %9521 = vmatprep.subr.mxu0 0.0
    %9522 = vmatpush1.msra.mxu0 0.0
    %9523 = vmatprep.subr.mxu0 0.0
    %9524 = vmatpush1.msra.mxu0 0.0
    %9525 = vmatprep.subr.mxu0 0.0
    %9526 = vmatpush1.msra.mxu0 0.0
    %9527 = vmatprep.subr.mxu0 0.0
    %9528 = vmatpush1.msra.mxu0 0.0
    %9529 = vmatprep.subr.mxu0 0.0
    %9530 = vmatpush1.msra.mxu0 0.0
    %9531 = vmatprep.subr.mxu0 0.0
    %9532 = vmatpush1.msra.mxu0 0.0
    %9533 = vmatprep.subr.mxu0 0.0
    %9534 = vmatpush1.msra.mxu0 0.0
    %9535 = vmatprep.subr.mxu0 0.0
    %9536 = vmatpush1.msra.mxu0 0.0
    %9537 = vmatprep.subr.mxu0 0.0
    %9538 = vmatpush1.msra.mxu0 0.0
    %9539 = vmatprep.subr.mxu0 0.0
    %9540 = vmatpush1.msra.mxu0 0.0
    %9541 = vmatprep.subr.mxu0 0.0
    %9542 = vmatpush1.msra.mxu0 0.0
    %9543 = vmatprep.subr.mxu0 0.0
    %9544 = vmatpush1.msra.mxu0 0.0
    %9545 = vmatprep.subr.mxu0 0.0
    %9546 = vmatpush1.msra.mxu0 0.0
    %9547 = vmatprep.subr.mxu0 0.0
    %9548 = vmatpush1.msra.mxu0 0.0
    %9549 = vmatprep.subr.mxu0 0.0
    %9550 = vmatpush1.msra.mxu0 0.0
    %9551 = vmatprep.subr.mxu0 0.0
    %9552 = vmatpush1.msra.mxu0 0.0
    %9553 = vmatprep.subr.mxu0 0.0
    %9554 = vmatpush1.msra.mxu0 0.0
    %9555 = vmatprep.subr.mxu0 0.0
    %9556 = vmatpush1.msra.mxu0 0.0
    %9557 = vmatprep.mubr.f32.mxu0 0.0
    %v9558 = vand.u32 %v9294, 4294901760
    %v9559 = vsub.f32 %v9294, %v9558
    %9560 = vmatmul.mubr.f32.gmra.mrb[0].mxu0 %v9559
    %v9561 = vpop.f32.mrb[0].mxu0
    %v9562 = vadd.f32 %v9476, %v9561
    %v9563 = vpop.f32.mrb[0].mxu0
    %9564 = vmatprep.mubr.f32.mxu0 0.0
    %v9565 = vand.u32 %v9297, 4294901760
    %v9566 = vsub.f32 %v9297, %v9565
    %9567 = vmatmul.mubr.f32.gmra.mrb[0].mxu0 %v9566
    %v9568 = vpop.f32.mrb[0].mxu0
    %v9569 = vadd.f32 %v9482, %v9568
    %v9570 = vpop.f32.mrb[0].mxu0
    %9571 = vdwg.mxu0
    %9572 = vmatprep.subr.mxu0 0.0
    %v9573 = vand.u32 %v9282, 4294901760
    %9574 = vmatpush1.msra.mxu0 %v9573
    %9575 = vmatprep.subr.mxu0 0.0
    %v9576 = vand.u32 %v9283, 4294901760
    %9577 = vmatpush1.msra.mxu0 %v9576
    %9578 = vmatprep.subr.mxu0 0.0
    %v9579 = vand.u32 %v9284, 4294901760
    %9580 = vmatpush1.msra.mxu0 %v9579
    %9581 = vmatprep.subr.mxu0 0.0
    %v9582 = vand.u32 %v9285, 4294901760
    %9583 = vmatpush1.msra.mxu0 %v9582
    %9584 = vmatprep.subr.mxu0 0.0
    %9585 = vmatpush1.msra.mxu0 0.0
    %9586 = vmatprep.subr.mxu0 0.0
    %9587 = vmatpush1.msra.mxu0 0.0
    %9588 = vmatprep.subr.mxu0 0.0
    %9589 = vmatpush1.msra.mxu0 0.0
    %9590 = vmatprep.subr.mxu0 0.0
    %9591 = vmatpush1.msra.mxu0 0.0
    %9592 = vmatprep.subr.mxu0 0.0
    %9593 = vmatpush1.msra.mxu0 0.0
    %9594 = vmatprep.subr.mxu0 0.0
    %9595 = vmatpush1.msra.mxu0 0.0
    %9596 = vmatprep.subr.mxu0 0.0
    %9597 = vmatpush1.msra.mxu0 0.0
    %9598 = vmatprep.subr.mxu0 0.0
    %9599 = vmatpush1.msra.mxu0 0.0
    %9600 = vmatprep.subr.mxu0 0.0
    %9601 = vmatpush1.msra.mxu0 0.0
    %9602 = vmatprep.subr.mxu0 0.0
    %9603 = vmatpush1.msra.mxu0 0.0
    %9604 = vmatprep.subr.mxu0 0.0
    %9605 = vmatpush1.msra.mxu0 0.0
    %9606 = vmatprep.subr.mxu0 0.0
    %9607 = vmatpush1.msra.mxu0 0.0
    %9608 = vmatprep.subr.mxu0 0.0
    %9609 = vmatpush1.msra.mxu0 0.0
    %9610 = vmatprep.subr.mxu0 0.0
    %9611 = vmatpush1.msra.mxu0 0.0
    %9612 = vmatprep.subr.mxu0 0.0
    %9613 = vmatpush1.msra.mxu0 0.0
    %9614 = vmatprep.subr.mxu0 0.0
    %9615 = vmatpush1.msra.mxu0 0.0
    %9616 = vmatprep.subr.mxu0 0.0
    %9617 = vmatpush1.msra.mxu0 0.0
    %9618 = vmatprep.subr.mxu0 0.0
    %9619 = vmatpush1.msra.mxu0 0.0
    %9620 = vmatprep.subr.mxu0 0.0
    %9621 = vmatpush1.msra.mxu0 0.0
    %9622 = vmatprep.subr.mxu0 0.0
    %9623 = vmatpush1.msra.mxu0 0.0
    %9624 = vmatprep.subr.mxu0 0.0
    %9625 = vmatpush1.msra.mxu0 0.0
    %9626 = vmatprep.subr.mxu0 0.0
    %9627 = vmatpush1.msra.mxu0 0.0
    %9628 = vmatprep.subr.mxu0 0.0
    %9629 = vmatpush1.msra.mxu0 0.0
    %9630 = vmatprep.subr.mxu0 0.0
    %9631 = vmatpush1.msra.mxu0 0.0
    %9632 = vmatprep.subr.mxu0 0.0
    %9633 = vmatpush1.msra.mxu0 0.0
    %9634 = vmatprep.subr.mxu0 0.0
    %9635 = vmatpush1.msra.mxu0 0.0
    %9636 = vmatprep.subr.mxu0 0.0
    %9637 = vmatpush1.msra.mxu0 0.0
    %9638 = vmatprep.subr.mxu0 0.0
    %9639 = vmatpush1.msra.mxu0 0.0
    %9640 = vmatprep.mubr.f32.mxu0 0.0
    %v9641 = vand.u32 %v9294, 4294901760
    %v9642 = vsub.f32 %v9294, %v9641
    %v9643 = vand.u32 %v9642, 4294901760
    %9644 = vmatmul.mubr.f32.gmra.mrb[0].mxu0 %v9643
    %v9645 = vpop.f32.mrb[0].mxu0
    %v9646 = vadd.f32 %v9562, %v9645
    %v9647 = vpop.f32.mrb[0].mxu0
    %9648 = vmatprep.mubr.f32.mxu0 0.0
    %v9649 = vand.u32 %v9297, 4294901760
    %v9650 = vsub.f32 %v9297, %v9649
    %v9651 = vand.u32 %v9650, 4294901760
    %9652 = vmatmul.mubr.f32.gmra.mrb[0].mxu0 %v9651
    %v9653 = vpop.f32.mrb[0].mxu0
    %v9654 = vadd.f32 %v9569, %v9653
    %v9655 = vpop.f32.mrb[0].mxu0
    %9656 = vdwg.mxu0
    %9657 = vmatprep.subr.mxu0 0.0
    %v9658 = vand.u32 %v9282, 4294901760
    %v9659 = vsub.f32 %v9282, %v9658
    %v9660 = vand.u32 %v9659, 4294901760
    %9661 = vmatpush1.msra.mxu0 %v9660
    %9662 = vmatprep.subr.mxu0 0.0
    %v9663 = vand.u32 %v9283, 4294901760
    %v9664 = vsub.f32 %v9283, %v9663
    %v9665 = vand.u32 %v9664, 4294901760
    %9666 = vmatpush1.msra.mxu0 %v9665
    %9667 = vmatprep.subr.mxu0 0.0
    %v9668 = vand.u32 %v9284, 4294901760
    %v9669 = vsub.f32 %v9284, %v9668
    %v9670 = vand.u32 %v9669, 4294901760
    %9671 = vmatpush1.msra.mxu0 %v9670
    %9672 = vmatprep.subr.mxu0 0.0
    %v9673 = vand.u32 %v9285, 4294901760
    %v9674 = vsub.f32 %v9285, %v9673
    %v9675 = vand.u32 %v9674, 4294901760
    %9676 = vmatpush1.msra.mxu0 %v9675
    %9677 = vmatprep.subr.mxu0 0.0
    %9678 = vmatpush1.msra.mxu0 0.0
    %9679 = vmatprep.subr.mxu0 0.0
    %9680 = vmatpush1.msra.mxu0 0.0
    %9681 = vmatprep.subr.mxu0 0.0
    %9682 = vmatpush1.msra.mxu0 0.0
    %9683 = vmatprep.subr.mxu0 0.0
    %9684 = vmatpush1.msra.mxu0 0.0
    %9685 = vmatprep.subr.mxu0 0.0
    %9686 = vmatpush1.msra.mxu0 0.0
    %9687 = vmatprep.subr.mxu0 0.0
    %9688 = vmatpush1.msra.mxu0 0.0
    %9689 = vmatprep.subr.mxu0 0.0
    %9690 = vmatpush1.msra.mxu0 0.0
    %9691 = vmatprep.subr.mxu0 0.0
    %9692 = vmatpush1.msra.mxu0 0.0
    %9693 = vmatprep.subr.mxu0 0.0
    %9694 = vmatpush1.msra.mxu0 0.0
    %9695 = vmatprep.subr.mxu0 0.0
    %9696 = vmatpush1.msra.mxu0 0.0
    %9697 = vmatprep.subr.mxu0 0.0
    %9698 = vmatpush1.msra.mxu0 0.0
    %9699 = vmatprep.subr.mxu0 0.0
    %9700 = vmatpush1.msra.mxu0 0.0
    %9701 = vmatprep.subr.mxu0 0.0
    %9702 = vmatpush1.msra.mxu0 0.0
    %9703 = vmatprep.subr.mxu0 0.0
    %9704 = vmatpush1.msra.mxu0 0.0
    %9705 = vmatprep.subr.mxu0 0.0
    %9706 = vmatpush1.msra.mxu0 0.0
    %9707 = vmatprep.subr.mxu0 0.0
    %9708 = vmatpush1.msra.mxu0 0.0
    %9709 = vmatprep.subr.mxu0 0.0
    %9710 = vmatpush1.msra.mxu0 0.0
    %9711 = vmatprep.subr.mxu0 0.0
    %9712 = vmatpush1.msra.mxu0 0.0
    %9713 = vmatprep.subr.mxu0 0.0
    %9714 = vmatpush1.msra.mxu0 0.0
    %9715 = vmatprep.subr.mxu0 0.0
    %9716 = vmatpush1.msra.mxu0 0.0
    %9717 = vmatprep.subr.mxu0 0.0
    %9718 = vmatpush1.msra.mxu0 0.0
    %9719 = vmatprep.subr.mxu0 0.0
    %9720 = vmatpush1.msra.mxu0 0.0
    %9721 = vmatprep.subr.mxu0 0.0
    %9722 = vmatpush1.msra.mxu0 0.0
    %9723 = vmatprep.subr.mxu0 0.0
    %9724 = vmatpush1.msra.mxu0 0.0
    %9725 = vmatprep.subr.mxu0 0.0
    %9726 = vmatpush1.msra.mxu0 0.0
    %9727 = vmatprep.subr.mxu0 0.0
    %9728 = vmatpush1.msra.mxu0 0.0
    %9729 = vmatprep.subr.mxu0 0.0
    %9730 = vmatpush1.msra.mxu0 0.0
    %9731 = vmatprep.subr.mxu0 0.0
    %9732 = vmatpush1.msra.mxu0 0.0
    %9733 = vmatprep.mubr.f32.mxu0 0.0
    %v9734 = vand.u32 %v9294, 4294901760
    %9735 = vmatmul.mubr.f32.gmra.mrb[0].mxu0 %v9734
    %v9736 = vpop.f32.mrb[0].mxu0
    %v9737 = vadd.f32 %v9646, %v9736
    %v9738 = vpop.f32.mrb[0].mxu0
    %9739 = vmatprep.mubr.f32.mxu0 0.0
    %v9740 = vand.u32 %v9297, 4294901760
    %9741 = vmatmul.mubr.f32.gmra.mrb[0].mxu0 %v9740
    %v9742 = vpop.f32.mrb[0].mxu0
    %v9743 = vadd.f32 %v9654, %v9742
    %v9744 = vpop.f32.mrb[0].mxu0
    %9745 = vdwg.mxu0
    %9746 = vmatprep.subr.mxu0 0.0
    %v9747 = vand.u32 %v9282, 4294901760
    %9748 = vmatpush1.msra.mxu0 %v9747
    %9749 = vmatprep.subr.mxu0 0.0
    %v9750 = vand.u32 %v9283, 4294901760
    %9751 = vmatpush1.msra.mxu0 %v9750
    %9752 = vmatprep.subr.mxu0 0.0
    %v9753 = vand.u32 %v9284, 4294901760
    %9754 = vmatpush1.msra.mxu0 %v9753
    %9755 = vmatprep.subr.mxu0 0.0
    %v9756 = vand.u32 %v9285, 4294901760
    %9757 = vmatpush1.msra.mxu0 %v9756
    %9758 = vmatprep.subr.mxu0 0.0
    %9759 = vmatpush1.msra.mxu0 0.0
    %9760 = vmatprep.subr.mxu0 0.0
    %9761 = vmatpush1.msra.mxu0 0.0
    %9762 = vmatprep.subr.mxu0 0.0
    %9763 = vmatpush1.msra.mxu0 0.0
    %9764 = vmatprep.subr.mxu0 0.0
    %9765 = vmatpush1.msra.mxu0 0.0
    %9766 = vmatprep.subr.mxu0 0.0
    %9767 = vmatpush1.msra.mxu0 0.0
    %9768 = vmatprep.subr.mxu0 0.0
    %9769 = vmatpush1.msra.mxu0 0.0
    %9770 = vmatprep.subr.mxu0 0.0
    %9771 = vmatpush1.msra.mxu0 0.0
    %9772 = vmatprep.subr.mxu0 0.0
    %9773 = vmatpush1.msra.mxu0 0.0
    %9774 = vmatprep.subr.mxu0 0.0
    %9775 = vmatpush1.msra.mxu0 0.0
    %9776 = vmatprep.subr.mxu0 0.0
    %9777 = vmatpush1.msra.mxu0 0.0
    %9778 = vmatprep.subr.mxu0 0.0
    %9779 = vmatpush1.msra.mxu0 0.0
    %9780 = vmatprep.subr.mxu0 0.0
    %9781 = vmatpush1.msra.mxu0 0.0
    %9782 = vmatprep.subr.mxu0 0.0
    %9783 = vmatpush1.msra.mxu0 0.0
    %9784 = vmatprep.subr.mxu0 0.0
    %9785 = vmatpush1.msra.mxu0 0.0
    %9786 = vmatprep.subr.mxu0 0.0
    %9787 = vmatpush1.msra.mxu0 0.0
    %9788 = vmatprep.subr.mxu0 0.0
    %9789 = vmatpush1.msra.mxu0 0.0
    %9790 = vmatprep.subr.mxu0 0.0
    %9791 = vmatpush1.msra.mxu0 0.0
    %9792 = vmatprep.subr.mxu0 0.0
    %9793 = vmatpush1.msra.mxu0 0.0
    %9794 = vmatprep.subr.mxu0 0.0
    %9795 = vmatpush1.msra.mxu0 0.0
    %9796 = vmatprep.subr.mxu0 0.0
    %9797 = vmatpush1.msra.mxu0 0.0
    %9798 = vmatprep.subr.mxu0 0.0
    %9799 = vmatpush1.msra.mxu0 0.0
    %9800 = vmatprep.subr.mxu0 0.0
    %9801 = vmatpush1.msra.mxu0 0.0
    %9802 = vmatprep.subr.mxu0 0.0
    %9803 = vmatpush1.msra.mxu0 0.0
    %9804 = vmatprep.subr.mxu0 0.0
    %9805 = vmatpush1.msra.mxu0 0.0
    %9806 = vmatprep.subr.mxu0 0.0
    %9807 = vmatpush1.msra.mxu0 0.0
    %9808 = vmatprep.subr.mxu0 0.0
    %9809 = vmatpush1.msra.mxu0 0.0
    %9810 = vmatprep.subr.mxu0 0.0
    %9811 = vmatpush1.msra.mxu0 0.0
    %9812 = vmatprep.subr.mxu0 0.0
    %9813 = vmatpush1.msra.mxu0 0.0
    %9814 = vmatprep.mubr.f32.mxu0 0.0
    %v9815 = vand.u32 %v9294, 4294901760
    %9816 = vmatmul.mubr.f32.gmra.mrb[0].mxu0 %v9815
    %v9817 = vpop.f32.mrb[0].mxu0
    %v9818 = vadd.f32 %v9737, %v9817
    %v9819 = vpop.f32.mrb[0].mxu0
    %9820 = vmatprep.mubr.f32.mxu0 0.0
    %v9821 = vand.u32 %v9297, 4294901760
    %9822 = vmatmul.mubr.f32.gmra.mrb[0].mxu0 %v9821
    %v9823 = vpop.f32.mrb[0].mxu0
    %v9824 = vadd.f32 %v9743, %v9823
    %v9825 = vpop.f32.mrb[0].mxu0
    %9826 = vdwg.mxu0
    %v9827 = vmul.f32 %v9818, 0.5
    %v9828 = vmul.f32 %v9824, 0.5
    %v9829 = vmul.f32 %v9818, 0.70710677
    %v9830 = vmul.f32 %v9824, 0.70710677
    %vm9831 = vcmp.ge.f32.partialorder %v9829, 0.0
    %vm9832 = vcmp.ge.f32.partialorder %v9830, 0.0
    %v9833 = vsel %vm9831, 1.0, -1.0
    %v9834 = vsel %vm9832, 1.0, -1.0
    %v9835 = vand.u32 2147483647, %v9829
    %v9836 = vand.u32 2147483647, %v9830
    %v9837 = vmul.f32 %v9835, 0.3275911
    %v9838 = vmul.f32 %v9836, 0.3275911
    %v9839 = vadd.f32 %v9837, 1.0
    %v9840 = vadd.f32 %v9838, 1.0
    %v9841 = vrcp.pop %v9839
    %v9842 = vmul.f32 1.0, %v9841
    %v9843 = vrcp.pop %v9840
    %v9844 = vmul.f32 1.0, %v9843
    %v9845 = vmul.f32 %v9842, 1.0614054
    %v9846 = vmul.f32 %v9844, 1.0614054
    %v9847 = vadd.f32 %v9845, -1.4531521
    %v9848 = vadd.f32 %v9846, -1.4531521
    %v9849 = vmul.f32 %v9847, %v9842
    %v9850 = vmul.f32 %v9848, %v9844
    %v9851 = vadd.f32 %v9849, 1.4214138
    %v9852 = vadd.f32 %v9850, 1.4214138
    %v9853 = vmul.f32 %v9851, %v9842
    %v9854 = vmul.f32 %v9852, %v9844
    %v9855 = vadd.f32 %v9853, -0.28449672
    %v9856 = vadd.f32 %v9854, -0.28449672
    %v9857 = vmul.f32 %v9855, %v9842
    %v9858 = vmul.f32 %v9856, %v9844
    %v9859 = vadd.f32 %v9857, 0.2548296
    %v9860 = vadd.f32 %v9858, 0.2548296
    %v9861 = vmul.f32 %v9859, %v9842
    %v9862 = vmul.f32 %v9860, %v9844
    %v9863 = vsub.f32 0.0, %v9835
    %v9864 = vsub.f32 0.0, %v9836
    %v9865 = vmul.f32 %v9863, %v9835
    %v9866 = vmul.f32 %v9864, %v9836
    %v9867 = vmul.f32 %v9865, 1.442695
    %v9868 = vpow.pop %v9867
    %v9869 = vmul.f32 %v9866, 1.442695
    %v9870 = vpow.pop %v9869
    %v9871 = vmul.f32 %v9861, %v9868
    %v9872 = vmul.f32 %v9862, %v9870
    %v9873 = vsub.f32 1.0, %v9871
    %v9874 = vsub.f32 1.0, %v9872
    %v9875 = vmul.f32 %v9833, %v9873
    %v9876 = vmul.f32 %v9834, %v9874
    %v9877 = vadd.f32 %v9875, 1.0
    %v9878 = vadd.f32 %v9876, 1.0
    %v9879 = vmul.f32 %v9827, %v9877
    %v9880 = vmul.f32 %v9828, %v9878
    %v9881 = vld [vmem:[%s10] sm:$0xff]
    %v9882 = vld [vmem:[%s10 + $0x8] sm:$0xff]
    %v9883 = vld [vmem:[%s10 + $0x10] sm:$0xff]
    %v9884 = vld [vmem:[%s10 + $0x18] sm:$0xff]
    %v9885 = vld [vmem:[%s11] sm:$0x1]
    %v9887 = vlaneseq
    %v9888 = vshrl.u32 %v9887, 7
    %v9889 = vsub.s32 0, %v9888
    %v9890 = vrot.slane %v9885, %v9889
    %v9893 = vsel %vm135, %v9879, 0
    %v9896 = vsel %vm135, %v9880, 0
    %9898 = vmatprep.subr.mxu0 0.0
    %v9899 = vand.u32 %v9881, 4294901760
    %9900 = vmatpush1.msra.mxu0 %v9899
    %9901 = vmatprep.subr.mxu0 0.0
    %v9902 = vand.u32 %v9882, 4294901760
    %9903 = vmatpush1.msra.mxu0 %v9902
    %9904 = vmatprep.subr.mxu0 0.0
    %v9905 = vand.u32 %v9883, 4294901760
    %9906 = vmatpush1.msra.mxu0 %v9905
    %9907 = vmatprep.subr.mxu0 0.0
    %v9908 = vand.u32 %v9884, 4294901760
    %9909 = vmatpush1.msra.mxu0 %v9908
    %9910 = vmatprep.subr.mxu0 0.0
    %9911 = vmatpush1.msra.mxu0 0.0
    %9912 = vmatprep.subr.mxu0 0.0
    %9913 = vmatpush1.msra.mxu0 0.0
    %9914 = vmatprep.subr.mxu0 0.0
    %9915 = vmatpush1.msra.mxu0 0.0
    %9916 = vmatprep.subr.mxu0 0.0
    %9917 = vmatpush1.msra.mxu0 0.0
    %9918 = vmatprep.subr.mxu0 0.0
    %9919 = vmatpush1.msra.mxu0 0.0
    %9920 = vmatprep.subr.mxu0 0.0
    %9921 = vmatpush1.msra.mxu0 0.0
    %9922 = vmatprep.subr.mxu0 0.0
    %9923 = vmatpush1.msra.mxu0 0.0
    %9924 = vmatprep.subr.mxu0 0.0
    %9925 = vmatpush1.msra.mxu0 0.0
    %9926 = vmatprep.subr.mxu0 0.0
    %9927 = vmatpush1.msra.mxu0 0.0
    %9928 = vmatprep.subr.mxu0 0.0
    %9929 = vmatpush1.msra.mxu0 0.0
    %9930 = vmatprep.subr.mxu0 0.0
    %9931 = vmatpush1.msra.mxu0 0.0
    %9932 = vmatprep.subr.mxu0 0.0
    %9933 = vmatpush1.msra.mxu0 0.0
    %9934 = vmatprep.subr.mxu0 0.0
    %9935 = vmatpush1.msra.mxu0 0.0
    %9936 = vmatprep.subr.mxu0 0.0
    %9937 = vmatpush1.msra.mxu0 0.0
    %9938 = vmatprep.subr.mxu0 0.0
    %9939 = vmatpush1.msra.mxu0 0.0
    %9940 = vmatprep.subr.mxu0 0.0
    %9941 = vmatpush1.msra.mxu0 0.0
    %9942 = vmatprep.subr.mxu0 0.0
    %9943 = vmatpush1.msra.mxu0 0.0
    %9944 = vmatprep.subr.mxu0 0.0
    %9945 = vmatpush1.msra.mxu0 0.0
    %9946 = vmatprep.subr.mxu0 0.0
    %9947 = vmatpush1.msra.mxu0 0.0
    %9948 = vmatprep.subr.mxu0 0.0
    %9949 = vmatpush1.msra.mxu0 0.0
    %9950 = vmatprep.subr.mxu0 0.0
    %9951 = vmatpush1.msra.mxu0 0.0
    %9952 = vmatprep.subr.mxu0 0.0
    %9953 = vmatpush1.msra.mxu0 0.0
    %9954 = vmatprep.subr.mxu0 0.0
    %9955 = vmatpush1.msra.mxu0 0.0
    %9956 = vmatprep.subr.mxu0 0.0
    %9957 = vmatpush1.msra.mxu0 0.0
    %9958 = vmatprep.subr.mxu0 0.0
    %9959 = vmatpush1.msra.mxu0 0.0
    %9960 = vmatprep.subr.mxu0 0.0
    %9961 = vmatpush1.msra.mxu0 0.0
    %9962 = vmatprep.subr.mxu0 0.0
    %9963 = vmatpush1.msra.mxu0 0.0
    %9964 = vmatprep.subr.mxu0 0.0
    %9965 = vmatpush1.msra.mxu0 0.0
    %9966 = vmatprep.mubr.f32.mxu0 0.0
    %v9967 = vand.u32 %v9893, 4294901760
    %v9968 = vsub.f32 %v9893, %v9967
    %v9969 = vand.u32 %v9968, 4294901760
    %v9970 = vsub.f32 %v9968, %v9969
    %v9971 = vand.u32 %v9970, 4294901760
    %9972 = vmatmul.mubr.f32.gmra.mrb[0].mxu0 %v9971
    %v9973 = vpop.f32.mrb[0].mxu0
    %v9974 = vadd.f32 %v9890, %v9973
    %v9975 = vpop.f32.mrb[0].mxu0
    %9976 = vmatprep.mubr.f32.mxu0 0.0
    %v9977 = vand.u32 %v9896, 4294901760
    %v9978 = vsub.f32 %v9896, %v9977
    %v9979 = vand.u32 %v9978, 4294901760
    %v9980 = vsub.f32 %v9978, %v9979
    %v9981 = vand.u32 %v9980, 4294901760
    %9982 = vmatmul.mubr.f32.gmra.mrb[0].mxu0 %v9981
    %v9983 = vpop.f32.mrb[0].mxu0
    %v9984 = vadd.f32 %v9890, %v9983
    %v9985 = vpop.f32.mrb[0].mxu0
    %9986 = vdwg.mxu0
    %9987 = vmatprep.subr.mxu0 0.0
    %v9988 = vand.u32 %v9881, 4294901760
    %v9989 = vsub.f32 %v9881, %v9988
    %v9990 = vand.u32 %v9989, 4294901760
    %v9991 = vsub.f32 %v9989, %v9990
    %v9992 = vand.u32 %v9991, 4294901760
    %9993 = vmatpush1.msra.mxu0 %v9992
    %9994 = vmatprep.subr.mxu0 0.0
    %v9995 = vand.u32 %v9882, 4294901760
    %v9996 = vsub.f32 %v9882, %v9995
    %v9997 = vand.u32 %v9996, 4294901760
    %v9998 = vsub.f32 %v9996, %v9997
    %v9999 = vand.u32 %v9998, 4294901760
    %10000 = vmatpush1.msra.mxu0 %v9999
    %10001 = vmatprep.subr.mxu0 0.0
    %v10002 = vand.u32 %v9883, 4294901760
    %v10003 = vsub.f32 %v9883, %v10002
    %v10004 = vand.u32 %v10003, 4294901760
    %v10005 = vsub.f32 %v10003, %v10004
    %v10006 = vand.u32 %v10005, 4294901760
    %10007 = vmatpush1.msra.mxu0 %v10006
    %10008 = vmatprep.subr.mxu0 0.0
    %v10009 = vand.u32 %v9884, 4294901760
    %v10010 = vsub.f32 %v9884, %v10009
    %v10011 = vand.u32 %v10010, 4294901760
    %v10012 = vsub.f32 %v10010, %v10011
    %v10013 = vand.u32 %v10012, 4294901760
    %10014 = vmatpush1.msra.mxu0 %v10013
    %10015 = vmatprep.subr.mxu0 0.0
    %10016 = vmatpush1.msra.mxu0 0.0
    %10017 = vmatprep.subr.mxu0 0.0
    %10018 = vmatpush1.msra.mxu0 0.0
    %10019 = vmatprep.subr.mxu0 0.0
    %10020 = vmatpush1.msra.mxu0 0.0
    %10021 = vmatprep.subr.mxu0 0.0
    %10022 = vmatpush1.msra.mxu0 0.0
    %10023 = vmatprep.subr.mxu0 0.0
    %10024 = vmatpush1.msra.mxu0 0.0
    %10025 = vmatprep.subr.mxu0 0.0
    %10026 = vmatpush1.msra.mxu0 0.0
    %10027 = vmatprep.subr.mxu0 0.0
    %10028 = vmatpush1.msra.mxu0 0.0
    %10029 = vmatprep.subr.mxu0 0.0
    %10030 = vmatpush1.msra.mxu0 0.0
    %10031 = vmatprep.subr.mxu0 0.0
    %10032 = vmatpush1.msra.mxu0 0.0
    %10033 = vmatprep.subr.mxu0 0.0
    %10034 = vmatpush1.msra.mxu0 0.0
    %10035 = vmatprep.subr.mxu0 0.0
    %10036 = vmatpush1.msra.mxu0 0.0
    %10037 = vmatprep.subr.mxu0 0.0
    %10038 = vmatpush1.msra.mxu0 0.0
    %10039 = vmatprep.subr.mxu0 0.0
    %10040 = vmatpush1.msra.mxu0 0.0
    %10041 = vmatprep.subr.mxu0 0.0
    %10042 = vmatpush1.msra.mxu0 0.0
    %10043 = vmatprep.subr.mxu0 0.0
    %10044 = vmatpush1.msra.mxu0 0.0
    %10045 = vmatprep.subr.mxu0 0.0
    %10046 = vmatpush1.msra.mxu0 0.0
    %10047 = vmatprep.subr.mxu0 0.0
    %10048 = vmatpush1.msra.mxu0 0.0
    %10049 = vmatprep.subr.mxu0 0.0
    %10050 = vmatpush1.msra.mxu0 0.0
    %10051 = vmatprep.subr.mxu0 0.0
    %10052 = vmatpush1.msra.mxu0 0.0
    %10053 = vmatprep.subr.mxu0 0.0
    %10054 = vmatpush1.msra.mxu0 0.0
    %10055 = vmatprep.subr.mxu0 0.0
    %10056 = vmatpush1.msra.mxu0 0.0
    %10057 = vmatprep.subr.mxu0 0.0
    %10058 = vmatpush1.msra.mxu0 0.0
    %10059 = vmatprep.subr.mxu0 0.0
    %10060 = vmatpush1.msra.mxu0 0.0
    %10061 = vmatprep.subr.mxu0 0.0
    %10062 = vmatpush1.msra.mxu0 0.0
    %10063 = vmatprep.subr.mxu0 0.0
    %10064 = vmatpush1.msra.mxu0 0.0
    %10065 = vmatprep.subr.mxu0 0.0
    %10066 = vmatpush1.msra.mxu0 0.0
    %10067 = vmatprep.subr.mxu0 0.0
    %10068 = vmatpush1.msra.mxu0 0.0
    %10069 = vmatprep.subr.mxu0 0.0
    %10070 = vmatpush1.msra.mxu0 0.0
    %10071 = vmatprep.mubr.f32.mxu0 0.0
    %v10072 = vand.u32 %v9893, 4294901760
    %10073 = vmatmul.mubr.f32.gmra.mrb[0].mxu0 %v10072
    %v10074 = vpop.f32.mrb[0].mxu0
    %v10075 = vadd.f32 %v9974, %v10074
    %v10076 = vpop.f32.mrb[0].mxu0
    %10077 = vmatprep.mubr.f32.mxu0 0.0
    %v10078 = vand.u32 %v9896, 4294901760
    %10079 = vmatmul.mubr.f32.gmra.mrb[0].mxu0 %v10078
    %v10080 = vpop.f32.mrb[0].mxu0
    %v10081 = vadd.f32 %v9984, %v10080
    %v10082 = vpop.f32.mrb[0].mxu0
    %10083 = vdwg.mxu0
    %10084 = vmatprep.subr.mxu0 0.0
    %v10085 = vand.u32 %v9881, 4294901760
    %v10086 = vsub.f32 %v9881, %v10085
    %10087 = vmatpush1.msra.mxu0 %v10086
    %10088 = vmatprep.subr.mxu0 0.0
    %v10089 = vand.u32 %v9882, 4294901760
    %v10090 = vsub.f32 %v9882, %v10089
    %10091 = vmatpush1.msra.mxu0 %v10090
    %10092 = vmatprep.subr.mxu0 0.0
    %v10093 = vand.u32 %v9883, 4294901760
    %v10094 = vsub.f32 %v9883, %v10093
    %10095 = vmatpush1.msra.mxu0 %v10094
    %10096 = vmatprep.subr.mxu0 0.0
    %v10097 = vand.u32 %v9884, 4294901760
    %v10098 = vsub.f32 %v9884, %v10097
    %10099 = vmatpush1.msra.mxu0 %v10098
    %10100 = vmatprep.subr.mxu0 0.0
    %10101 = vmatpush1.msra.mxu0 0.0
    %10102 = vmatprep.subr.mxu0 0.0
    %10103 = vmatpush1.msra.mxu0 0.0
    %10104 = vmatprep.subr.mxu0 0.0
    %10105 = vmatpush1.msra.mxu0 0.0
    %10106 = vmatprep.subr.mxu0 0.0
    %10107 = vmatpush1.msra.mxu0 0.0
    %10108 = vmatprep.subr.mxu0 0.0
    %10109 = vmatpush1.msra.mxu0 0.0
    %10110 = vmatprep.subr.mxu0 0.0
    %10111 = vmatpush1.msra.mxu0 0.0
    %10112 = vmatprep.subr.mxu0 0.0
    %10113 = vmatpush1.msra.mxu0 0.0
    %10114 = vmatprep.subr.mxu0 0.0
    %10115 = vmatpush1.msra.mxu0 0.0
    %10116 = vmatprep.subr.mxu0 0.0
    %10117 = vmatpush1.msra.mxu0 0.0
    %10118 = vmatprep.subr.mxu0 0.0
    %10119 = vmatpush1.msra.mxu0 0.0
    %10120 = vmatprep.subr.mxu0 0.0
    %10121 = vmatpush1.msra.mxu0 0.0
    %10122 = vmatprep.subr.mxu0 0.0
    %10123 = vmatpush1.msra.mxu0 0.0
    %10124 = vmatprep.subr.mxu0 0.0
    %10125 = vmatpush1.msra.mxu0 0.0
    %10126 = vmatprep.subr.mxu0 0.0
    %10127 = vmatpush1.msra.mxu0 0.0
    %10128 = vmatprep.subr.mxu0 0.0
    %10129 = vmatpush1.msra.mxu0 0.0
    %10130 = vmatprep.subr.mxu0 0.0
    %10131 = vmatpush1.msra.mxu0 0.0
    %10132 = vmatprep.subr.mxu0 0.0
    %10133 = vmatpush1.msra.mxu0 0.0
    %10134 = vmatprep.subr.mxu0 0.0
    %10135 = vmatpush1.msra.mxu0 0.0
    %10136 = vmatprep.subr.mxu0 0.0
    %10137 = vmatpush1.msra.mxu0 0.0
    %10138 = vmatprep.subr.mxu0 0.0
    %10139 = vmatpush1.msra.mxu0 0.0
    %10140 = vmatprep.subr.mxu0 0.0
    %10141 = vmatpush1.msra.mxu0 0.0
    %10142 = vmatprep.subr.mxu0 0.0
    %10143 = vmatpush1.msra.mxu0 0.0
    %10144 = vmatprep.subr.mxu0 0.0
    %10145 = vmatpush1.msra.mxu0 0.0
    %10146 = vmatprep.subr.mxu0 0.0
    %10147 = vmatpush1.msra.mxu0 0.0
    %10148 = vmatprep.subr.mxu0 0.0
    %10149 = vmatpush1.msra.mxu0 0.0
    %10150 = vmatprep.subr.mxu0 0.0
    %10151 = vmatpush1.msra.mxu0 0.0
    %10152 = vmatprep.subr.mxu0 0.0
    %10153 = vmatpush1.msra.mxu0 0.0
    %10154 = vmatprep.subr.mxu0 0.0
    %10155 = vmatpush1.msra.mxu0 0.0
    %10156 = vmatprep.mubr.f32.mxu0 0.0
    %v10157 = vand.u32 %v9893, 4294901760
    %v10158 = vsub.f32 %v9893, %v10157
    %10159 = vmatmul.mubr.f32.gmra.mrb[0].mxu0 %v10158
    %v10160 = vpop.f32.mrb[0].mxu0
    %v10161 = vadd.f32 %v10075, %v10160
    %v10162 = vpop.f32.mrb[0].mxu0
    %10163 = vmatprep.mubr.f32.mxu0 0.0
    %v10164 = vand.u32 %v9896, 4294901760
    %v10165 = vsub.f32 %v9896, %v10164
    %10166 = vmatmul.mubr.f32.gmra.mrb[0].mxu0 %v10165
    %v10167 = vpop.f32.mrb[0].mxu0
    %v10168 = vadd.f32 %v10081, %v10167
    %v10169 = vpop.f32.mrb[0].mxu0
    %10170 = vdwg.mxu0
    %10171 = vmatprep.subr.mxu0 0.0
    %v10172 = vand.u32 %v9881, 4294901760
    %10173 = vmatpush1.msra.mxu0 %v10172
    %10174 = vmatprep.subr.mxu0 0.0
    %v10175 = vand.u32 %v9882, 4294901760
    %10176 = vmatpush1.msra.mxu0 %v10175
    %10177 = vmatprep.subr.mxu0 0.0
    %v10178 = vand.u32 %v9883, 4294901760
    %10179 = vmatpush1.msra.mxu0 %v10178
    %10180 = vmatprep.subr.mxu0 0.0
    %v10181 = vand.u32 %v9884, 4294901760
    %10182 = vmatpush1.msra.mxu0 %v10181
    %10183 = vmatprep.subr.mxu0 0.0
    %10184 = vmatpush1.msra.mxu0 0.0
    %10185 = vmatprep.subr.mxu0 0.0
    %10186 = vmatpush1.msra.mxu0 0.0
    %10187 = vmatprep.subr.mxu0 0.0
    %10188 = vmatpush1.msra.mxu0 0.0
    %10189 = vmatprep.subr.mxu0 0.0
    %10190 = vmatpush1.msra.mxu0 0.0
    %10191 = vmatprep.subr.mxu0 0.0
    %10192 = vmatpush1.msra.mxu0 0.0
    %10193 = vmatprep.subr.mxu0 0.0
    %10194 = vmatpush1.msra.mxu0 0.0
    %10195 = vmatprep.subr.mxu0 0.0
    %10196 = vmatpush1.msra.mxu0 0.0
    %10197 = vmatprep.subr.mxu0 0.0
    %10198 = vmatpush1.msra.mxu0 0.0
    %10199 = vmatprep.subr.mxu0 0.0
    %10200 = vmatpush1.msra.mxu0 0.0
    %10201 = vmatprep.subr.mxu0 0.0
    %10202 = vmatpush1.msra.mxu0 0.0
    %10203 = vmatprep.subr.mxu0 0.0
    %10204 = vmatpush1.msra.mxu0 0.0
    %10205 = vmatprep.subr.mxu0 0.0
    %10206 = vmatpush1.msra.mxu0 0.0
    %10207 = vmatprep.subr.mxu0 0.0
    %10208 = vmatpush1.msra.mxu0 0.0
    %10209 = vmatprep.subr.mxu0 0.0
    %10210 = vmatpush1.msra.mxu0 0.0
    %10211 = vmatprep.subr.mxu0 0.0
    %10212 = vmatpush1.msra.mxu0 0.0
    %10213 = vmatprep.subr.mxu0 0.0
    %10214 = vmatpush1.msra.mxu0 0.0
    %10215 = vmatprep.subr.mxu0 0.0
    %10216 = vmatpush1.msra.mxu0 0.0
    %10217 = vmatprep.subr.mxu0 0.0
    %10218 = vmatpush1.msra.mxu0 0.0
    %10219 = vmatprep.subr.mxu0 0.0
    %10220 = vmatpush1.msra.mxu0 0.0
    %10221 = vmatprep.subr.mxu0 0.0
    %10222 = vmatpush1.msra.mxu0 0.0
    %10223 = vmatprep.subr.mxu0 0.0
    %10224 = vmatpush1.msra.mxu0 0.0
    %10225 = vmatprep.subr.mxu0 0.0
    %10226 = vmatpush1.msra.mxu0 0.0
    %10227 = vmatprep.subr.mxu0 0.0
    %10228 = vmatpush1.msra.mxu0 0.0
    %10229 = vmatprep.subr.mxu0 0.0
    %10230 = vmatpush1.msra.mxu0 0.0
    %10231 = vmatprep.subr.mxu0 0.0
    %10232 = vmatpush1.msra.mxu0 0.0
    %10233 = vmatprep.subr.mxu0 0.0
    %10234 = vmatpush1.msra.mxu0 0.0
    %10235 = vmatprep.subr.mxu0 0.0
    %10236 = vmatpush1.msra.mxu0 0.0
    %10237 = vmatprep.subr.mxu0 0.0
    %10238 = vmatpush1.msra.mxu0 0.0
    %10239 = vmatprep.mubr.f32.mxu0 0.0
    %v10240 = vand.u32 %v9893, 4294901760
    %v10241 = vsub.f32 %v9893, %v10240
    %v10242 = vand.u32 %v10241, 4294901760
    %10243 = vmatmul.mubr.f32.gmra.mrb[0].mxu0 %v10242
    %v10244 = vpop.f32.mrb[0].mxu0
    %v10245 = vadd.f32 %v10161, %v10244
    %v10246 = vpop.f32.mrb[0].mxu0
    %10247 = vmatprep.mubr.f32.mxu0 0.0
    %v10248 = vand.u32 %v9896, 4294901760
    %v10249 = vsub.f32 %v9896, %v10248
    %v10250 = vand.u32 %v10249, 4294901760
    %10251 = vmatmul.mubr.f32.gmra.mrb[0].mxu0 %v10250
    %v10252 = vpop.f32.mrb[0].mxu0
    %v10253 = vadd.f32 %v10168, %v10252
    %v10254 = vpop.f32.mrb[0].mxu0
    %10255 = vdwg.mxu0
    %10256 = vmatprep.subr.mxu0 0.0
    %v10257 = vand.u32 %v9881, 4294901760
    %v10258 = vsub.f32 %v9881, %v10257
    %v10259 = vand.u32 %v10258, 4294901760
    %10260 = vmatpush1.msra.mxu0 %v10259
    %10261 = vmatprep.subr.mxu0 0.0
    %v10262 = vand.u32 %v9882, 4294901760
    %v10263 = vsub.f32 %v9882, %v10262
    %v10264 = vand.u32 %v10263, 4294901760
    %10265 = vmatpush1.msra.mxu0 %v10264
    %10266 = vmatprep.subr.mxu0 0.0
    %v10267 = vand.u32 %v9883, 4294901760
    %v10268 = vsub.f32 %v9883, %v10267
    %v10269 = vand.u32 %v10268, 4294901760
    %10270 = vmatpush1.msra.mxu0 %v10269
    %10271 = vmatprep.subr.mxu0 0.0
    %v10272 = vand.u32 %v9884, 4294901760
    %v10273 = vsub.f32 %v9884, %v10272
    %v10274 = vand.u32 %v10273, 4294901760
    %10275 = vmatpush1.msra.mxu0 %v10274
    %10276 = vmatprep.subr.mxu0 0.0
    %10277 = vmatpush1.msra.mxu0 0.0
    %10278 = vmatprep.subr.mxu0 0.0
    %10279 = vmatpush1.msra.mxu0 0.0
    %10280 = vmatprep.subr.mxu0 0.0
    %10281 = vmatpush1.msra.mxu0 0.0
    %10282 = vmatprep.subr.mxu0 0.0
    %10283 = vmatpush1.msra.mxu0 0.0
    %10284 = vmatprep.subr.mxu0 0.0
    %10285 = vmatpush1.msra.mxu0 0.0
    %10286 = vmatprep.subr.mxu0 0.0
    %10287 = vmatpush1.msra.mxu0 0.0
    %10288 = vmatprep.subr.mxu0 0.0
    %10289 = vmatpush1.msra.mxu0 0.0
    %10290 = vmatprep.subr.mxu0 0.0
    %10291 = vmatpush1.msra.mxu0 0.0
    %10292 = vmatprep.subr.mxu0 0.0
    %10293 = vmatpush1.msra.mxu0 0.0
    %10294 = vmatprep.subr.mxu0 0.0
    %10295 = vmatpush1.msra.mxu0 0.0
    %10296 = vmatprep.subr.mxu0 0.0
    %10297 = vmatpush1.msra.mxu0 0.0
    %10298 = vmatprep.subr.mxu0 0.0
    %10299 = vmatpush1.msra.mxu0 0.0
    %10300 = vmatprep.subr.mxu0 0.0
    %10301 = vmatpush1.msra.mxu0 0.0
    %10302 = vmatprep.subr.mxu0 0.0
    %10303 = vmatpush1.msra.mxu0 0.0
    %10304 = vmatprep.subr.mxu0 0.0
    %10305 = vmatpush1.msra.mxu0 0.0
    %10306 = vmatprep.subr.mxu0 0.0
    %10307 = vmatpush1.msra.mxu0 0.0
    %10308 = vmatprep.subr.mxu0 0.0
    %10309 = vmatpush1.msra.mxu0 0.0
    %10310 = vmatprep.subr.mxu0 0.0
    %10311 = vmatpush1.msra.mxu0 0.0
    %10312 = vmatprep.subr.mxu0 0.0
    %10313 = vmatpush1.msra.mxu0 0.0
    %10314 = vmatprep.subr.mxu0 0.0
    %10315 = vmatpush1.msra.mxu0 0.0
    %10316 = vmatprep.subr.mxu0 0.0
    %10317 = vmatpush1.msra.mxu0 0.0
    %10318 = vmatprep.subr.mxu0 0.0
    %10319 = vmatpush1.msra.mxu0 0.0
    %10320 = vmatprep.subr.mxu0 0.0
    %10321 = vmatpush1.msra.mxu0 0.0
    %10322 = vmatprep.subr.mxu0 0.0
    %10323 = vmatpush1.msra.mxu0 0.0
    %10324 = vmatprep.subr.mxu0 0.0
    %10325 = vmatpush1.msra.mxu0 0.0
    %10326 = vmatprep.subr.mxu0 0.0
    %10327 = vmatpush1.msra.mxu0 0.0
    %10328 = vmatprep.subr.mxu0 0.0
    %10329 = vmatpush1.msra.mxu0 0.0
    %10330 = vmatprep.subr.mxu0 0.0
    %10331 = vmatpush1.msra.mxu0 0.0
    %10332 = vmatprep.mubr.f32.mxu0 0.0
    %v10333 = vand.u32 %v9893, 4294901760
    %10334 = vmatmul.mubr.f32.gmra.mrb[0].mxu0 %v10333
    %v10335 = vpop.f32.mrb[0].mxu0
    %v10336 = vadd.f32 %v10245, %v10335
    %v10337 = vpop.f32.mrb[0].mxu0
    %10338 = vmatprep.mubr.f32.mxu0 0.0
    %v10339 = vand.u32 %v9896, 4294901760
    %10340 = vmatmul.mubr.f32.gmra.mrb[0].mxu0 %v10339
    %v10341 = vpop.f32.mrb[0].mxu0
    %v10342 = vadd.f32 %v10253, %v10341
    %v10343 = vpop.f32.mrb[0].mxu0
    %10344 = vdwg.mxu0
    %10345 = vmatprep.subr.mxu0 0.0
    %v10346 = vand.u32 %v9881, 4294901760
    %10347 = vmatpush1.msra.mxu0 %v10346
    %10348 = vmatprep.subr.mxu0 0.0
    %v10349 = vand.u32 %v9882, 4294901760
    %10350 = vmatpush1.msra.mxu0 %v10349
    %10351 = vmatprep.subr.mxu0 0.0
    %v10352 = vand.u32 %v9883, 4294901760
    %10353 = vmatpush1.msra.mxu0 %v10352
    %10354 = vmatprep.subr.mxu0 0.0
    %v10355 = vand.u32 %v9884, 4294901760
    %10356 = vmatpush1.msra.mxu0 %v10355
    %10357 = vmatprep.subr.mxu0 0.0
    %10358 = vmatpush1.msra.mxu0 0.0
    %10359 = vmatprep.subr.mxu0 0.0
    %10360 = vmatpush1.msra.mxu0 0.0
    %10361 = vmatprep.subr.mxu0 0.0
    %10362 = vmatpush1.msra.mxu0 0.0
    %10363 = vmatprep.subr.mxu0 0.0
    %10364 = vmatpush1.msra.mxu0 0.0
    %10365 = vmatprep.subr.mxu0 0.0
    %10366 = vmatpush1.msra.mxu0 0.0
    %10367 = vmatprep.subr.mxu0 0.0
    %10368 = vmatpush1.msra.mxu0 0.0
    %10369 = vmatprep.subr.mxu0 0.0
    %10370 = vmatpush1.msra.mxu0 0.0
    %10371 = vmatprep.subr.mxu0 0.0
    %10372 = vmatpush1.msra.mxu0 0.0
    %10373 = vmatprep.subr.mxu0 0.0
    %10374 = vmatpush1.msra.mxu0 0.0
    %10375 = vmatprep.subr.mxu0 0.0
    %10376 = vmatpush1.msra.mxu0 0.0
    %10377 = vmatprep.subr.mxu0 0.0
    %10378 = vmatpush1.msra.mxu0 0.0
    %10379 = vmatprep.subr.mxu0 0.0
    %10380 = vmatpush1.msra.mxu0 0.0
    %10381 = vmatprep.subr.mxu0 0.0
    %10382 = vmatpush1.msra.mxu0 0.0
    %10383 = vmatprep.subr.mxu0 0.0
    %10384 = vmatpush1.msra.mxu0 0.0
    %10385 = vmatprep.subr.mxu0 0.0
    %10386 = vmatpush1.msra.mxu0 0.0
    %10387 = vmatprep.subr.mxu0 0.0
    %10388 = vmatpush1.msra.mxu0 0.0
    %10389 = vmatprep.subr.mxu0 0.0
    %10390 = vmatpush1.msra.mxu0 0.0
    %10391 = vmatprep.subr.mxu0 0.0
    %10392 = vmatpush1.msra.mxu0 0.0
    %10393 = vmatprep.subr.mxu0 0.0
    %10394 = vmatpush1.msra.mxu0 0.0
    %10395 = vmatprep.subr.mxu0 0.0
    %10396 = vmatpush1.msra.mxu0 0.0
    %10397 = vmatprep.subr.mxu0 0.0
    %10398 = vmatpush1.msra.mxu0 0.0
    %10399 = vmatprep.subr.mxu0 0.0
    %10400 = vmatpush1.msra.mxu0 0.0
    %10401 = vmatprep.subr.mxu0 0.0
    %10402 = vmatpush1.msra.mxu0 0.0
    %10403 = vmatprep.subr.mxu0 0.0
    %10404 = vmatpush1.msra.mxu0 0.0
    %10405 = vmatprep.subr.mxu0 0.0
    %10406 = vmatpush1.msra.mxu0 0.0
    %10407 = vmatprep.subr.mxu0 0.0
    %10408 = vmatpush1.msra.mxu0 0.0
    %10409 = vmatprep.subr.mxu0 0.0
    %10410 = vmatpush1.msra.mxu0 0.0
    %10411 = vmatprep.subr.mxu0 0.0
    %10412 = vmatpush1.msra.mxu0 0.0
    %10413 = vmatprep.mubr.f32.mxu0 0.0
    %v10414 = vand.u32 %v9893, 4294901760
    %10415 = vmatmul.mubr.f32.gmra.mrb[0].mxu0 %v10414
    %v10416 = vpop.f32.mrb[0].mxu0
    %v10417 = vadd.f32 %v10336, %v10416
    %v10418 = vpop.f32.mrb[0].mxu0
    %10419 = vmatprep.mubr.f32.mxu0 0.0
    %v10420 = vand.u32 %v9896, 4294901760
    %10421 = vmatmul.mubr.f32.gmra.mrb[0].mxu0 %v10420
    %v10422 = vpop.f32.mrb[0].mxu0
    %v10423 = vadd.f32 %v10342, %v10422
    %v10424 = vpop.f32.mrb[0].mxu0
    %10425 = vdwg.mxu0
    %v10426 = vadd.f32 %v10417, %v4377
    %v10427 = vadd.f32 %v10423, %v8083
    %v10428 = vadd.f32 %v4377, %v10426
    %v10429 = vadd.f32 %v8083, %v10427
    %10430 = vst.msk [vmem:[#allocation13] sm:$0xff] %vm135, %v10428
    %10431 = vst.msk [vmem:[#allocation13 + $0x8] sm:$0xff] %vm135, %v10429
    // Predicated region
    $region74: #{tpu_custom_call.1} parent=1 // pred_check
      _
    $region75: #{tpu_custom_call.1} parent=1 // pred_check_branch
      %10433 = sbr.rel (0) target = $region77
    $region76: #{tpu_custom_call.1} parent=1 // pred_region
      %s10435 = ssub.s32 256, 256
      %10436 = vsyncadd [#allocation4], %s10435
      %s10437 = sshll.u32 [#allocation13], 4
      %s10438 = int_to_ptr.vmem [resolvable:$true] %s10437
      %10443 = dma.vmem_to_hbm [thread:$0]  %s10438, 256, %s12, [#allocation4], 128, 128, 8
    $region77: #{tpu_custom_call.1} parent=1 // pred_fallthru
      _
    // Predicated region
    $region78: #{tpu_custom_call.1} parent=1 // pred_check
      _
    $region79: #{tpu_custom_call.1} parent=1 // pred_check_branch
      %10445 = sbr.rel (0) target = $region81
    $region80: #{tpu_custom_call.1} parent=1 // pred_region
      %10446 = dma.done [#allocation4], 256
    $region81: #{tpu_custom_call.1} parent=1 // pred_fallthru
      _
    %10447 = vsyncpa [#allocation3], 1
    %10448 = vsyncpa [#allocation6], 1
    %10449 = vsyncpa [#allocation9], 1
    %10450 = vsyncpa [#allocation12], 1
    %10451 = vsyncpa [#allocation4], 1

</llo_original>
